<compile_context>
chip_gen: v7x
topology: tpu7x:2x2x1
jax: 0.10.0
libtpu: 0.0.40
codegen_flags: <defaults>
</compile_context>

<pallas_src>
import functools

import jax
import jax.numpy as jnp
from jax.experimental import pallas as pl
from jax.experimental.pallas import tpu as pltpu

BN_EPS = 1e-5
NEG_SLOPE = 0.01           # nn.LeakyReLU default
OUT_PER_ACTION = 800


def _bn_lrelu(h, gamma, beta):
    """Training-mode BatchNorm1d folded to one scale/shift, then LeakyReLU (f32)."""
    mu = jnp.mean(h, axis=0, keepdims=True)
    var = jnp.mean((h - mu) * (h - mu), axis=0, keepdims=True)   # biased variance
    scale = gamma * jax.lax.rsqrt(var + BN_EPS)
    shift = beta - mu * scale
    h = h * scale + shift
    return jnp.where(h >= 0, h, NEG_SLOPE * h)


def generator_w6_kernel(x_ref,
                        w1_ref, g1_ref, be1_ref,
                        w2_ref, g2_ref, be2_ref,
                        w3_ref, s3_ref, g3_ref, be3_ref,
                        w4_ref, s4_ref, b4_ref,
                        out_ref):
    # Layer 1: Linear(z, 512) -> BN -> LeakyReLU.  Tiny (K=z), kept fully f32.
    h = jnp.dot(x_ref[...], w1_ref[...], preferred_element_type=jnp.float32)
    h = _bn_lrelu(h, g1_ref[...], be1_ref[...])

    # Layer 2: Linear(512, 1024) -> BN -> LeakyReLU  (bf16 weights/activations).
    h = jnp.dot(h.astype(jnp.bfloat16), w2_ref[...],
                preferred_element_type=jnp.float32)
    h = _bn_lrelu(h, g2_ref[...], be2_ref[...])

    # Layer 3: Linear(1024, 2048) -> BN -> LeakyReLU.
    # int8 weights dequantized to bf16 (exact for |q|<=127); per-column scale is
    # applied to the small [B, 2048] matmul output (exact, one VPU multiply).
    w3 = w3_ref[...].astype(jnp.bfloat16)
    h = jnp.dot(h.astype(jnp.bfloat16), w3,
                preferred_element_type=jnp.float32) * s3_ref[...]
    h = _bn_lrelu(h, g3_ref[...], be3_ref[...])

    # Layer 4: Linear(2048, 800*n_actions), int8 weights + per-column scale + bias.
    w4 = w4_ref[...].astype(jnp.bfloat16)
    out = jnp.dot(h.astype(jnp.bfloat16), w4,
                  preferred_element_type=jnp.float32)
    out = out * s4_ref[...] + b4_ref[...]
    out_ref[...] = out.astype(out_ref.dtype)


def _quantize_per_col_int8(w_t):
    """Symmetric per-output-column int8 quantization of a [in, out] f32 matrix."""
    s = jnp.max(jnp.abs(w_t), axis=0, keepdims=True) / 127.0       # [1, out]
    s = jnp.maximum(s, 1e-12)
    q = jnp.clip(jnp.round(w_t / s), -127.0, 127.0).astype(jnp.int8)
    return q, s.astype(jnp.float32)


def prepare_params(params, n_actions):
    """One-time conversion of PyTorch-layout f32 params into kernel layout:
    [in,out] weights (f32 / bf16 / int8+scale), [1,F] f32 BN rows, f32 b4 row."""
    (w1, b1, g1, be1, w2, b2, g2, be2, w3, b3, g3, be3, w4, b4) = params
    del b1, b2, b3  # exactly cancelled by training-mode BatchNorm mean subtraction
    del n_actions   # no output padding any more; shapes carry n_actions implicitly

    q3, s3 = _quantize_per_col_int8(w3.T)        # [1024, 2048] int8, [1, 2048] f32
    q4, s4 = _quantize_per_col_int8(w4.T)        # [2048, 800n] int8, [1, 800n] f32

    return (
        w1.T,                                     # [z, 512] f32 (tiny, keep full precision)
        g1[None, :], be1[None, :],
        w2.T.astype(jnp.bfloat16),                # [512, 1024] bf16
        g2[None, :], be2[None, :],
        q3, s3, g3[None, :], be3[None, :],
        q4, s4, b4[None, :],
    )


def generator_w6_forward(x, kparams, n_actions):
    """x: [B, z] f32. kparams: output of prepare_params. Returns [B, n_actions, 800]."""
    B, Z = x.shape
    out_f = OUT_PER_ACTION * n_actions

    args = (x,) + tuple(kparams)
    vmem = pl.BlockSpec(memory_space=pltpu.MemorySpace.VMEM)

    flops = 2 * B * (Z * 512 + 512 * 1024 + 1024 * 2048 + 2048 * out_f)
    bytes_accessed = sum(int(a.size) * int(a.dtype.itemsize) for a in args) \
        + B * out_f * 4

    y = pl.pallas_call(
        generator_w6_kernel,
        out_shape=jax.ShapeDtypeStruct((B, out_f), jnp.float32),
        in_specs=[vmem] * len(args),
        out_specs=vmem,
        compiler_params=pltpu.CompilerParams(vmem_limit_bytes=16 << 20),
        cost_estimate=pl.CostEstimate(
            flops=flops,
            transcendentals=512 + 1024 + 2048,   # the three rsqrt rows
            bytes_accessed=bytes_accessed),
    )(*args)

    return y.reshape(-1, n_actions, OUT_PER_ACTION)


def init_params(key, z, n_actions):
    """Deterministic init mimicking PyTorch defaults (uniform +/- 1/sqrt(fan_in))."""
    ks = jax.random.split(key, 8)

    def lin(kw, kb, fan_in, fan_out):
        bound = 1.0 / jnp.sqrt(jnp.float32(fan_in))
        w = jax.random.uniform(kw, (fan_out, fan_in), jnp.float32, -bound, bound)
        b = jax.random.uniform(kb, (fan_out,), jnp.float32, -bound, bound)
        return w, b

    w1, b1 = lin(ks[0], ks[1], z, 512)
    w2, b2 = lin(ks[2], ks[3], 512, 1024)
    w3, b3 = lin(ks[4], ks[5], 1024, 2048)
    w4, b4 = lin(ks[6], ks[7], 2048, OUT_PER_ACTION * n_actions)
    return (w1, b1, jnp.ones((512,), jnp.float32), jnp.zeros((512,), jnp.float32),
            w2, b2, jnp.ones((1024,), jnp.float32), jnp.zeros((1024,), jnp.float32),
            w3, b3, jnp.ones((2048,), jnp.float32), jnp.zeros((2048,), jnp.float32),
            w4, b4)


def reference_forward(x, params, n_actions):
    """Pure-JAX f32 reference of the PyTorch forward (training-mode BN)."""
    (w1, b1, g1, be1, w2, b2, g2, be2, w3, b3, g3, be3, w4, b4) = params

    def bn(h, g, be):
        mu = jnp.mean(h, axis=0, keepdims=True)
        var = jnp.mean((h - mu) ** 2, axis=0, keepdims=True)
        return (h - mu) / jnp.sqrt(var + BN_EPS) * g + be

    def lrelu(h):
        return jnp.where(h >= 0, h, NEG_SLOPE * h)

    h = lrelu(bn(x @ w1.T + b1, g1, be1))
    h = lrelu(bn(h @ w2.T + b2, g2, be2))
    h = lrelu(bn(h @ w3.T + b3, g3, be3))
    h = h @ w4.T + b4
    return h.reshape(-1, n_actions, OUT_PER_ACTION)


if __name__ == "__main__":
    key = jax.random.PRNGKey(0)
    k_param, k_x = jax.random.split(key)

    Z = 32          # args.z (latent dim)
    N_ACTIONS = 1   # args.n_actions
    BATCH = 8       # small batch (matches sublane granularity)

    params = init_params(k_param, Z, N_ACTIONS)
    kparams = prepare_params(params, N_ACTIONS)   # one-time layout/dtype/quant conversion
    x = jax.random.normal(k_x, (BATCH, Z), jnp.float32)

    fwd = jax.jit(functools.partial(generator_w6_forward,
                                    kparams=kparams, n_actions=N_ACTIONS))
    out = fwd(x)
    jax.block_until_ready(out)

    assert out.shape == (BATCH, N_ACTIONS, OUT_PER_ACTION), out.shape

    # --- Check 1: quantization-aware reference (same weights the kernel actually
    #     uses, in f32 math).  Only the bf16 activation/matmul path differs.
    (w1, b1, g1, be1, w2, b2, g2, be2, w3, b3, g3, be3, w4, b4) = params
    q3, s3 = _quantize_per_col_int8(w3.T)
    q4, s4 = _quantize_per_col_int8(w4.T)
    params_dq = (w1, b1, g1, be1,
                 w2.astype(jnp.bfloat16).astype(jnp.float32), b2, g2, be2,
                 (q3.astype(jnp.float32) * s3).T, b3, g3, be3,
                 (q4.astype(jnp.float32) * s4).T, b4)
    ref_dq = reference_forward(x, params_dq, N_ACTIONS)
    err_dq = float(jnp.max(jnp.abs(out - ref_dq)))
    assert jnp.allclose(out, ref_dq, atol=5e-2, rtol=5e-2), err_dq

    # --- Check 2: full-precision f32 reference (PyTorch semantics).  Looser
    #     tolerance accounts for the int8 per-column weight quantization of w3/w4.
    ref = reference_forward(x, params, N_ACTIONS)
    err_f32 = float(jnp.max(jnp.abs(out - ref)))
    assert jnp.allclose(out, ref, atol=1e-1, rtol=1e-1), err_f32

    print("KERNEL_OK")
</pallas_src>

<mosaic_0001>
module attributes {stable_mosaic.version = 11 : i64} {
  func.func @generator_w6_kernel(%arg0: memref<8x32xf32, #tpu.memory_space<vmem>>, %arg1: memref<32x512xf32, #tpu.memory_space<vmem>>, %arg2: memref<1x512xf32, #tpu.memory_space<vmem>>, %arg3: memref<1x512xf32, #tpu.memory_space<vmem>>, %arg4: memref<512x1024xbf16, #tpu.memory_space<vmem>>, %arg5: memref<1x1024xf32, #tpu.memory_space<vmem>>, %arg6: memref<1x1024xf32, #tpu.memory_space<vmem>>, %arg7: memref<1024x2048xi8, #tpu.memory_space<vmem>>, %arg8: memref<1x2048xf32, #tpu.memory_space<vmem>>, %arg9: memref<1x2048xf32, #tpu.memory_space<vmem>>, %arg10: memref<1x2048xf32, #tpu.memory_space<vmem>>, %arg11: memref<2048x800xi8, #tpu.memory_space<vmem>>, %arg12: memref<1x800xf32, #tpu.memory_space<vmem>>, %arg13: memref<1x800xf32, #tpu.memory_space<vmem>>, %arg14: memref<8x800xf32, #tpu.memory_space<vmem>>) attributes {dimension_semantics = [], scalar_prefetch = 0 : i64, scratch_operands = 0 : i64, tpu.core_type = #tpu.core_type<tc>} {
    %c0 = arith.constant 0 : index
    %c0_0 = arith.constant 0 : index
    %0 = vector.load %arg0[%c0, %c0_0] : memref<8x32xf32, #tpu.memory_space<vmem>>, vector<8x32xf32>
    %c0_1 = arith.constant 0 : index
    %c0_2 = arith.constant 0 : index
    %1 = vector.load %arg1[%c0_1, %c0_2] : memref<32x512xf32, #tpu.memory_space<vmem>>, vector<32x512xf32>
    %cst = arith.constant dense<0.000000e+00> : vector<8x512xf32>
    %2 = tpu.matmul %0, %1, %cst {dimension_numbers = #tpu.dot_dimension_numbers<[1], [0], [0], [1], [0, 0, 1, 1], [], []>} : vector<8x32xf32>, vector<32x512xf32>, vector<8x512xf32> -> vector<8x512xf32>
    %c0_3 = arith.constant 0 : index
    %c0_4 = arith.constant 0 : index
    %3 = vector.load %arg2[%c0_3, %c0_4] : memref<1x512xf32, #tpu.memory_space<vmem>>, vector<1x512xf32>
    %c0_5 = arith.constant 0 : index
    %c0_6 = arith.constant 0 : index
    %4 = vector.load %arg3[%c0_5, %c0_6] : memref<1x512xf32, #tpu.memory_space<vmem>>, vector<1x512xf32>
    %cst_7 = arith.constant dense<0.000000e+00> : vector<512xf32>
    %5 = vector.multi_reduction <add>, %2, %cst_7 [0] : vector<8x512xf32> to vector<512xf32>
    %6 = vector.shape_cast %5 : vector<512xf32> to vector<1x512xf32>
    %cst_8 = arith.constant 8.000000e+00 : f32
    %7 = vector.broadcast %cst_8 : f32 to vector<1x512xf32>
    %8 = arith.divf %6, %7 : vector<1x512xf32>
    %9 = vector.broadcast %8 : vector<1x512xf32> to vector<8x512xf32>
    %10 = arith.subf %2, %9 : vector<8x512xf32>
    %11 = vector.broadcast %8 : vector<1x512xf32> to vector<8x512xf32>
    %12 = arith.subf %2, %11 : vector<8x512xf32>
    %13 = arith.mulf %10, %12 : vector<8x512xf32>
    %cst_9 = arith.constant dense<0.000000e+00> : vector<512xf32>
    %14 = vector.multi_reduction <add>, %13, %cst_9 [0] : vector<8x512xf32> to vector<512xf32>
    %15 = vector.shape_cast %14 : vector<512xf32> to vector<1x512xf32>
    %cst_10 = arith.constant 8.000000e+00 : f32
    %16 = vector.broadcast %cst_10 : f32 to vector<1x512xf32>
    %17 = arith.divf %15, %16 : vector<1x512xf32>
    %cst_11 = arith.constant 9.99999974E-6 : f32
    %18 = vector.broadcast %cst_11 : f32 to vector<1x512xf32>
    %19 = arith.addf %17, %18 : vector<1x512xf32>
    %20 = math.rsqrt %19 : vector<1x512xf32>
    %21 = arith.mulf %3, %20 : vector<1x512xf32>
    %22 = arith.mulf %8, %21 : vector<1x512xf32>
    %23 = arith.subf %4, %22 : vector<1x512xf32>
    %24 = vector.broadcast %21 : vector<1x512xf32> to vector<8x512xf32>
    %25 = arith.mulf %2, %24 : vector<8x512xf32>
    %26 = vector.broadcast %23 : vector<1x512xf32> to vector<8x512xf32>
    %27 = arith.addf %25, %26 : vector<8x512xf32>
    %cst_12 = arith.constant 0.000000e+00 : f32
    %28 = vector.broadcast %cst_12 : f32 to vector<8x512xf32>
    %29 = arith.cmpf oge, %27, %28 : vector<8x512xf32>
    %cst_13 = arith.constant 0.00999999977 : f32
    %30 = vector.broadcast %cst_13 : f32 to vector<8x512xf32>
    %31 = arith.mulf %30, %27 : vector<8x512xf32>
    %32 = arith.select %29, %27, %31 : vector<8x512xi1>, vector<8x512xf32>
    %33 = arith.truncf %32 : vector<8x512xf32> to vector<8x512xbf16>
    %c0_14 = arith.constant 0 : index
    %c0_15 = arith.constant 0 : index
    %34 = vector.load %arg4[%c0_14, %c0_15] : memref<512x1024xbf16, #tpu.memory_space<vmem>>, vector<512x1024xbf16>
    %cst_16 = arith.constant dense<0.000000e+00> : vector<8x1024xf32>
    %35 = tpu.matmul %33, %34, %cst_16 {dimension_numbers = #tpu.dot_dimension_numbers<[1], [0], [0], [1], [0, 0, 1, 1], [], []>} : vector<8x512xbf16>, vector<512x1024xbf16>, vector<8x1024xf32> -> vector<8x1024xf32>
    %c0_17 = arith.constant 0 : index
    %c0_18 = arith.constant 0 : index
    %36 = vector.load %arg5[%c0_17, %c0_18] : memref<1x1024xf32, #tpu.memory_space<vmem>>, vector<1x1024xf32>
    %c0_19 = arith.constant 0 : index
    %c0_20 = arith.constant 0 : index
    %37 = vector.load %arg6[%c0_19, %c0_20] : memref<1x1024xf32, #tpu.memory_space<vmem>>, vector<1x1024xf32>
    %cst_21 = arith.constant dense<0.000000e+00> : vector<1024xf32>
    %38 = vector.multi_reduction <add>, %35, %cst_21 [0] : vector<8x1024xf32> to vector<1024xf32>
    %39 = vector.shape_cast %38 : vector<1024xf32> to vector<1x1024xf32>
    %cst_22 = arith.constant 8.000000e+00 : f32
    %40 = vector.broadcast %cst_22 : f32 to vector<1x1024xf32>
    %41 = arith.divf %39, %40 : vector<1x1024xf32>
    %42 = vector.broadcast %41 : vector<1x1024xf32> to vector<8x1024xf32>
    %43 = arith.subf %35, %42 : vector<8x1024xf32>
    %44 = vector.broadcast %41 : vector<1x1024xf32> to vector<8x1024xf32>
    %45 = arith.subf %35, %44 : vector<8x1024xf32>
    %46 = arith.mulf %43, %45 : vector<8x1024xf32>
    %cst_23 = arith.constant dense<0.000000e+00> : vector<1024xf32>
    %47 = vector.multi_reduction <add>, %46, %cst_23 [0] : vector<8x1024xf32> to vector<1024xf32>
    %48 = vector.shape_cast %47 : vector<1024xf32> to vector<1x1024xf32>
    %cst_24 = arith.constant 8.000000e+00 : f32
    %49 = vector.broadcast %cst_24 : f32 to vector<1x1024xf32>
    %50 = arith.divf %48, %49 : vector<1x1024xf32>
    %cst_25 = arith.constant 9.99999974E-6 : f32
    %51 = vector.broadcast %cst_25 : f32 to vector<1x1024xf32>
    %52 = arith.addf %50, %51 : vector<1x1024xf32>
    %53 = math.rsqrt %52 : vector<1x1024xf32>
    %54 = arith.mulf %36, %53 : vector<1x1024xf32>
    %55 = arith.mulf %41, %54 : vector<1x1024xf32>
    %56 = arith.subf %37, %55 : vector<1x1024xf32>
    %57 = vector.broadcast %54 : vector<1x1024xf32> to vector<8x1024xf32>
    %58 = arith.mulf %35, %57 : vector<8x1024xf32>
    %59 = vector.broadcast %56 : vector<1x1024xf32> to vector<8x1024xf32>
    %60 = arith.addf %58, %59 : vector<8x1024xf32>
    %cst_26 = arith.constant 0.000000e+00 : f32
    %61 = vector.broadcast %cst_26 : f32 to vector<8x1024xf32>
    %62 = arith.cmpf oge, %60, %61 : vector<8x1024xf32>
    %cst_27 = arith.constant 0.00999999977 : f32
    %63 = vector.broadcast %cst_27 : f32 to vector<8x1024xf32>
    %64 = arith.mulf %63, %60 : vector<8x1024xf32>
    %65 = arith.select %62, %60, %64 : vector<8x1024xi1>, vector<8x1024xf32>
    %c0_28 = arith.constant 0 : index
    %c0_29 = arith.constant 0 : index
    %66 = vector.load %arg7[%c0_28, %c0_29] : memref<1024x2048xi8, #tpu.memory_space<vmem>>, vector<1024x2048xi8>
    %67 = arith.sitofp %66 : vector<1024x2048xi8> to vector<1024x2048xbf16>
    %68 = arith.truncf %65 : vector<8x1024xf32> to vector<8x1024xbf16>
    %cst_30 = arith.constant dense<0.000000e+00> : vector<8x2048xf32>
    %69 = tpu.matmul %68, %67, %cst_30 {dimension_numbers = #tpu.dot_dimension_numbers<[1], [0], [0], [1], [0, 0, 1, 1], [], []>} : vector<8x1024xbf16>, vector<1024x2048xbf16>, vector<8x2048xf32> -> vector<8x2048xf32>
    %c0_31 = arith.constant 0 : index
    %c0_32 = arith.constant 0 : index
    %70 = vector.load %arg8[%c0_31, %c0_32] : memref<1x2048xf32, #tpu.memory_space<vmem>>, vector<1x2048xf32>
    %71 = vector.broadcast %70 : vector<1x2048xf32> to vector<8x2048xf32>
    %72 = arith.mulf %69, %71 : vector<8x2048xf32>
    %c0_33 = arith.constant 0 : index
    %c0_34 = arith.constant 0 : index
    %73 = vector.load %arg9[%c0_33, %c0_34] : memref<1x2048xf32, #tpu.memory_space<vmem>>, vector<1x2048xf32>
    %c0_35 = arith.constant 0 : index
    %c0_36 = arith.constant 0 : index
    %74 = vector.load %arg10[%c0_35, %c0_36] : memref<1x2048xf32, #tpu.memory_space<vmem>>, vector<1x2048xf32>
    %cst_37 = arith.constant dense<0.000000e+00> : vector<2048xf32>
    %75 = vector.multi_reduction <add>, %72, %cst_37 [0] : vector<8x2048xf32> to vector<2048xf32>
    %76 = vector.shape_cast %75 : vector<2048xf32> to vector<1x2048xf32>
    %cst_38 = arith.constant 8.000000e+00 : f32
    %77 = vector.broadcast %cst_38 : f32 to vector<1x2048xf32>
    %78 = arith.divf %76, %77 : vector<1x2048xf32>
    %79 = vector.broadcast %78 : vector<1x2048xf32> to vector<8x2048xf32>
    %80 = arith.subf %72, %79 : vector<8x2048xf32>
    %81 = vector.broadcast %78 : vector<1x2048xf32> to vector<8x2048xf32>
    %82 = arith.subf %72, %81 : vector<8x2048xf32>
    %83 = arith.mulf %80, %82 : vector<8x2048xf32>
    %cst_39 = arith.constant dense<0.000000e+00> : vector<2048xf32>
    %84 = vector.multi_reduction <add>, %83, %cst_39 [0] : vector<8x2048xf32> to vector<2048xf32>
    %85 = vector.shape_cast %84 : vector<2048xf32> to vector<1x2048xf32>
    %cst_40 = arith.constant 8.000000e+00 : f32
    %86 = vector.broadcast %cst_40 : f32 to vector<1x2048xf32>
    %87 = arith.divf %85, %86 : vector<1x2048xf32>
    %cst_41 = arith.constant 9.99999974E-6 : f32
    %88 = vector.broadcast %cst_41 : f32 to vector<1x2048xf32>
    %89 = arith.addf %87, %88 : vector<1x2048xf32>
    %90 = math.rsqrt %89 : vector<1x2048xf32>
    %91 = arith.mulf %73, %90 : vector<1x2048xf32>
    %92 = arith.mulf %78, %91 : vector<1x2048xf32>
    %93 = arith.subf %74, %92 : vector<1x2048xf32>
    %94 = vector.broadcast %91 : vector<1x2048xf32> to vector<8x2048xf32>
    %95 = arith.mulf %72, %94 : vector<8x2048xf32>
    %96 = vector.broadcast %93 : vector<1x2048xf32> to vector<8x2048xf32>
    %97 = arith.addf %95, %96 : vector<8x2048xf32>
    %cst_42 = arith.constant 0.000000e+00 : f32
    %98 = vector.broadcast %cst_42 : f32 to vector<8x2048xf32>
    %99 = arith.cmpf oge, %97, %98 : vector<8x2048xf32>
    %cst_43 = arith.constant 0.00999999977 : f32
    %100 = vector.broadcast %cst_43 : f32 to vector<8x2048xf32>
    %101 = arith.mulf %100, %97 : vector<8x2048xf32>
    %102 = arith.select %99, %97, %101 : vector<8x2048xi1>, vector<8x2048xf32>
    %c0_44 = arith.constant 0 : index
    %c0_45 = arith.constant 0 : index
    %103 = vector.load %arg11[%c0_44, %c0_45] : memref<2048x800xi8, #tpu.memory_space<vmem>>, vector<2048x800xi8>
    %104 = arith.sitofp %103 : vector<2048x800xi8> to vector<2048x800xbf16>
    %105 = arith.truncf %102 : vector<8x2048xf32> to vector<8x2048xbf16>
    %cst_46 = arith.constant dense<0.000000e+00> : vector<8x800xf32>
    %106 = tpu.matmul %105, %104, %cst_46 {dimension_numbers = #tpu.dot_dimension_numbers<[1], [0], [0], [1], [0, 0, 1, 1], [], []>} : vector<8x2048xbf16>, vector<2048x800xbf16>, vector<8x800xf32> -> vector<8x800xf32>
    %c0_47 = arith.constant 0 : index
    %c0_48 = arith.constant 0 : index
    %107 = vector.load %arg12[%c0_47, %c0_48] : memref<1x800xf32, #tpu.memory_space<vmem>>, vector<1x800xf32>
    %108 = vector.broadcast %107 : vector<1x800xf32> to vector<8x800xf32>
    %109 = arith.mulf %106, %108 : vector<8x800xf32>
    %c0_49 = arith.constant 0 : index
    %c0_50 = arith.constant 0 : index
    %110 = vector.load %arg13[%c0_49, %c0_50] : memref<1x800xf32, #tpu.memory_space<vmem>>, vector<1x800xf32>
    %111 = vector.broadcast %110 : vector<1x800xf32> to vector<8x800xf32>
    %112 = arith.addf %109, %111 : vector<8x800xf32>
    %c0_51 = arith.constant 0 : index
    %c0_52 = arith.constant 0 : index
    %113 = vector.load %arg14[%c0_51, %c0_52] : memref<8x800xf32, #tpu.memory_space<vmem>>, vector<8x800xf32>
    tpu.vector_store %arg14[%c0_51, %c0_52], %112 {strides = array<i32>} : memref<8x800xf32, #tpu.memory_space<vmem>>, vector<8x800xf32>,
    return
  }
}

</mosaic_0001>

<llo_original>
// kernel: generator_w6_forward.1
$region0: #{generator_w6_forward.1}
  #allocation0 [shape = 'u32[]', space=smem, size = 0x4, offset = 0x4, fixed_abs, tag = 'smem constant byte address 0x4 - core index']
  #allocation1 [shape = 'u32[144,128]{1,0:T(1,128)}', space=vmem, size = 0x12000, scoped, tag = 'internal scratch']
  %s0 = inlined_call_operand.vmem [shape: f32[8,32], index: 0, kind: input, shape index: {}]
  %s1 = inlined_call_operand.hbm [shape: f32[32,512], index: 1, kind: input, shape index: {}]
  %s2 = inlined_call_operand.vmem [shape: f32[1,512], index: 2, kind: input, shape index: {}]
  %s3 = inlined_call_operand.vmem [shape: f32[1,512], index: 3, kind: input, shape index: {}]
  %s4 = inlined_call_operand.vmem [shape: bf16[512,1024], index: 4, kind: input, shape index: {}]
  %s5 = inlined_call_operand.vmem [shape: f32[1,1024], index: 5, kind: input, shape index: {}]
  %s6 = inlined_call_operand.vmem [shape: f32[1,1024], index: 6, kind: input, shape index: {}]
  %s7 = inlined_call_operand.vmem [shape: s8[1024,2048], index: 7, kind: input, shape index: {}]
  %s8 = inlined_call_operand.vmem [shape: f32[1,2048], index: 8, kind: input, shape index: {}]
  %s9 = inlined_call_operand.vmem [shape: f32[1,2048], index: 9, kind: input, shape index: {}]
  %s10 = inlined_call_operand.vmem [shape: f32[1,2048], index: 10, kind: input, shape index: {}]
  %s11 = inlined_call_operand.hbm [shape: s8[2048,800], index: 11, kind: input, shape index: {}]
  %s12 = inlined_call_operand.vmem [shape: f32[1,800], index: 12, kind: input, shape index: {}]
  %s13 = inlined_call_operand.vmem [shape: f32[1,800], index: 13, kind: input, shape index: {}]
  %s14 = inlined_call_operand.vmem [shape: f32[8,800], index: 14, kind: output, shape index: {}]
  %s15 = sld [smem:[#allocation0]]
  $region74: #{generator_w6_forward.1} parent=0
    _
  %s17 = ssub.s32 1, %s15
  %s18 = scalar_select 0, %s17, %s15
  $region1: #{generator_w6_forward.1} parent=0
    #allocation2 [shape = 'u8[65536]{0}', space=vmem, size = 0x10000, scoped, tag = 'input window, operand 1, single buffered']
    #allocation3 [shape = 's32[1]{0}', space=sflag, size = 0x4, scoped, tag = 'scoped memory for generator_w6_forward.1']
    #allocation4 [shape = 'u8[1835008]{0}', space=vmem, size = 0x1c0000, scoped, tag = 'input window, operand 11, single buffered']
    #allocation5 [shape = 's32[1]{0}', space=sflag, size = 0x4, scoped, tag = 'scoped memory for generator_w6_forward.1']
    %19 = vsyncpa [#allocation3], 0
    %20 = vsyncpa [#allocation5], 0
    // Predicated region
    $region2: #{generator_w6_forward.1} parent=1 // pred_check
      _
    $region3: #{generator_w6_forward.1} parent=1 // pred_check_branch
      %22 = sbr.rel (0) target = $region5
    $region4: #{generator_w6_forward.1} parent=1 // pred_region
      _
    $region5: #{generator_w6_forward.1} parent=1 // pred_fallthru
      _
    // Predicated region
    $region6: #{generator_w6_forward.1} parent=1 // pred_check
      _
    $region7: #{generator_w6_forward.1} parent=1 // pred_check_branch
      %24 = sbr.rel (0) target = $region9
    $region8: #{generator_w6_forward.1} parent=1 // pred_region
      %s26 = ssub.s32 2048, 2048
      %27 = vsyncadd [#allocation3], %s26
      %s28 = sshll.u32 [#allocation2], 4
      %s29 = int_to_ptr.vmem [resolvable:$true] %s28
      %34 = dma.hbm_to_vmem [thread:$0]  %s1, 2048, %s29, [#allocation3], 512, 512, 32
    $region9: #{generator_w6_forward.1} parent=1 // pred_fallthru
      _
    // Predicated region
    $region10: #{generator_w6_forward.1} parent=1 // pred_check
      _
    $region11: #{generator_w6_forward.1} parent=1 // pred_check_branch
      %36 = sbr.rel (0) target = $region13
    $region12: #{generator_w6_forward.1} parent=1 // pred_region
      _
    $region13: #{generator_w6_forward.1} parent=1 // pred_fallthru
      _
    // Predicated region
    $region14: #{generator_w6_forward.1} parent=1 // pred_check
      _
    $region15: #{generator_w6_forward.1} parent=1 // pred_check_branch
      %38 = sbr.rel (0) target = $region17
    $region16: #{generator_w6_forward.1} parent=1 // pred_region
      _
    $region17: #{generator_w6_forward.1} parent=1 // pred_fallthru
      _
    // Predicated region
    $region18: #{generator_w6_forward.1} parent=1 // pred_check
      _
    $region19: #{generator_w6_forward.1} parent=1 // pred_check_branch
      %40 = sbr.rel (0) target = $region21
    $region20: #{generator_w6_forward.1} parent=1 // pred_region
      _
    $region21: #{generator_w6_forward.1} parent=1 // pred_fallthru
      _
    // Predicated region
    $region22: #{generator_w6_forward.1} parent=1 // pred_check
      _
    $region23: #{generator_w6_forward.1} parent=1 // pred_check_branch
      %42 = sbr.rel (0) target = $region25
    $region24: #{generator_w6_forward.1} parent=1 // pred_region
      _
    $region25: #{generator_w6_forward.1} parent=1 // pred_fallthru
      _
    // Predicated region
    $region26: #{generator_w6_forward.1} parent=1 // pred_check
      _
    $region27: #{generator_w6_forward.1} parent=1 // pred_check_branch
      %44 = sbr.rel (0) target = $region29
    $region28: #{generator_w6_forward.1} parent=1 // pred_region
      _
    $region29: #{generator_w6_forward.1} parent=1 // pred_fallthru
      _
    // Predicated region
    $region30: #{generator_w6_forward.1} parent=1 // pred_check
      _
    $region31: #{generator_w6_forward.1} parent=1 // pred_check_branch
      %46 = sbr.rel (0) target = $region33
    $region32: #{generator_w6_forward.1} parent=1 // pred_region
      _
    $region33: #{generator_w6_forward.1} parent=1 // pred_fallthru
      _
    // Predicated region
    $region34: #{generator_w6_forward.1} parent=1 // pred_check
      _
    $region35: #{generator_w6_forward.1} parent=1 // pred_check_branch
      %48 = sbr.rel (0) target = $region37
    $region36: #{generator_w6_forward.1} parent=1 // pred_region
      _
    $region37: #{generator_w6_forward.1} parent=1 // pred_fallthru
      _
    // Predicated region
    $region38: #{generator_w6_forward.1} parent=1 // pred_check
      _
    $region39: #{generator_w6_forward.1} parent=1 // pred_check_branch
      %50 = sbr.rel (0) target = $region41
    $region40: #{generator_w6_forward.1} parent=1 // pred_region
      _
    $region41: #{generator_w6_forward.1} parent=1 // pred_fallthru
      _
    // Predicated region
    $region42: #{generator_w6_forward.1} parent=1 // pred_check
      _
    $region43: #{generator_w6_forward.1} parent=1 // pred_check_branch
      %52 = sbr.rel (0) target = $region45
    $region44: #{generator_w6_forward.1} parent=1 // pred_region
      _
    $region45: #{generator_w6_forward.1} parent=1 // pred_fallthru
      _
    // Predicated region
    $region46: #{generator_w6_forward.1} parent=1 // pred_check
      _
    $region47: #{generator_w6_forward.1} parent=1 // pred_check_branch
      %54 = sbr.rel (0) target = $region49
    $region48: #{generator_w6_forward.1} parent=1 // pred_region
      %s56 = ssub.s32 57344, 57344
      %57 = vsyncadd [#allocation5], %s56
      %s58 = sshll.u32 [#allocation4], 4
      %s59 = int_to_ptr.vmem [resolvable:$true] %s58
      %64 = dma.hbm_to_vmem [thread:$0]  %s11, 57344, %s59, [#allocation5], 896, 896, 56
    $region49: #{generator_w6_forward.1} parent=1 // pred_fallthru
      _
    // Predicated region
    $region50: #{generator_w6_forward.1} parent=1 // pred_check
      _
    $region51: #{generator_w6_forward.1} parent=1 // pred_check_branch
      %66 = sbr.rel (0) target = $region53
    $region52: #{generator_w6_forward.1} parent=1 // pred_region
      _
    $region53: #{generator_w6_forward.1} parent=1 // pred_fallthru
      _
    // Predicated region
    $region54: #{generator_w6_forward.1} parent=1 // pred_check
      _
    $region55: #{generator_w6_forward.1} parent=1 // pred_check_branch
      %68 = sbr.rel (0) target = $region57
    $region56: #{generator_w6_forward.1} parent=1 // pred_region
      _
    $region57: #{generator_w6_forward.1} parent=1 // pred_fallthru
      _
    // Predicated region
    $region58: #{generator_w6_forward.1} parent=1 // pred_check
      _
    $region59: #{generator_w6_forward.1} parent=1 // pred_check_branch
      %70 = sbr.rel (0) target = $region61
    $region60: #{generator_w6_forward.1} parent=1 // pred_region
      %71 = dma.done [#allocation3], 2048
    $region61: #{generator_w6_forward.1} parent=1 // pred_fallthru
      _
    // Predicated region
    $region62: #{generator_w6_forward.1} parent=1 // pred_check
      _
    $region63: #{generator_w6_forward.1} parent=1 // pred_check_branch
      %73 = sbr.rel (0) target = $region65
    $region64: #{generator_w6_forward.1} parent=1 // pred_region
      %74 = dma.done [#allocation5], 57344
    $region65: #{generator_w6_forward.1} parent=1 // pred_fallthru
      _
    %v76 = vld [vmem:[%s0] sm:$0xff]
    %v77 = vld [vmem:[#allocation2] sm:$0xff]
    %v78 = vld [vmem:[#allocation2 + $0x8] sm:$0xff]
    %v79 = vld [vmem:[#allocation2 + $0x10] sm:$0xff]
    %v80 = vld [vmem:[#allocation2 + $0x18] sm:$0xff]
    %v81 = vld [vmem:[#allocation2 + $0x20] sm:$0xff]
    %v82 = vld [vmem:[#allocation2 + $0x28] sm:$0xff]
    %v83 = vld [vmem:[#allocation2 + $0x30] sm:$0xff]
    %v84 = vld [vmem:[#allocation2 + $0x38] sm:$0xff]
    %v85 = vld [vmem:[#allocation2 + $0x40] sm:$0xff]
    %v86 = vld [vmem:[#allocation2 + $0x48] sm:$0xff]
    %v87 = vld [vmem:[#allocation2 + $0x50] sm:$0xff]
    %v88 = vld [vmem:[#allocation2 + $0x58] sm:$0xff]
    %v89 = vld [vmem:[#allocation2 + $0x60] sm:$0xff]
    %v90 = vld [vmem:[#allocation2 + $0x68] sm:$0xff]
    %v91 = vld [vmem:[#allocation2 + $0x70] sm:$0xff]
    %v92 = vld [vmem:[#allocation2 + $0x78] sm:$0xff]
    %vm93 = vcmask 261120
    %v95 = vsel %vm93, %v76, 0
    %97 = vmatprep.subr.mxu0 %v78
    %98 = vmatpush1.msra.mxu0 %v77
    %99 = vmatprep.subr.mxu0 %v82
    %100 = vmatpush1.msra.mxu0 %v81
    %101 = vmatprep.subr.mxu0 %v86
    %102 = vmatpush1.msra.mxu0 %v85
    %103 = vmatprep.subr.mxu0 %v90
    %104 = vmatpush1.msra.mxu0 %v89
    %105 = vmatprep.subr.mxu0 0.0
    %106 = vmatpush1.msra.mxu0 0.0
    %107 = vmatprep.subr.mxu0 0.0
    %108 = vmatpush1.msra.mxu0 0.0
    %109 = vmatprep.subr.mxu0 0.0
    %110 = vmatpush1.msra.mxu0 0.0
    %111 = vmatprep.subr.mxu0 0.0
    %112 = vmatpush1.msra.mxu0 0.0
    %113 = vmatprep.subr.mxu0 0.0
    %114 = vmatpush1.msra.mxu0 0.0
    %115 = vmatprep.subr.mxu0 0.0
    %116 = vmatpush1.msra.mxu0 0.0
    %117 = vmatprep.subr.mxu0 0.0
    %118 = vmatpush1.msra.mxu0 0.0
    %119 = vmatprep.subr.mxu0 0.0
    %120 = vmatpush1.msra.mxu0 0.0
    %121 = vmatprep.subr.mxu0 0.0
    %122 = vmatpush1.msra.mxu0 0.0
    %123 = vmatprep.subr.mxu0 0.0
    %124 = vmatpush1.msra.mxu0 0.0
    %125 = vmatprep.subr.mxu0 0.0
    %126 = vmatpush1.msra.mxu0 0.0
    %127 = vmatprep.subr.mxu0 0.0
    %128 = vmatpush1.msra.mxu0 0.0
    %129 = vmatprep.subr.mxu0 0.0
    %130 = vmatpush1.msra.mxu0 0.0
    %131 = vmatprep.subr.mxu0 0.0
    %132 = vmatpush1.msra.mxu0 0.0
    %133 = vmatprep.subr.mxu0 0.0
    %134 = vmatpush1.msra.mxu0 0.0
    %135 = vmatprep.subr.mxu0 0.0
    %136 = vmatpush1.msra.mxu0 0.0
    %137 = vmatprep.subr.mxu0 0.0
    %138 = vmatpush1.msra.mxu0 0.0
    %139 = vmatprep.subr.mxu0 0.0
    %140 = vmatpush1.msra.mxu0 0.0
    %141 = vmatprep.subr.mxu0 0.0
    %142 = vmatpush1.msra.mxu0 0.0
    %143 = vmatprep.subr.mxu0 0.0
    %144 = vmatpush1.msra.mxu0 0.0
    %145 = vmatprep.subr.mxu0 0.0
    %146 = vmatpush1.msra.mxu0 0.0
    %147 = vmatprep.subr.mxu0 0.0
    %148 = vmatpush1.msra.mxu0 0.0
    %149 = vmatprep.subr.mxu0 0.0
    %150 = vmatpush1.msra.mxu0 0.0
    %151 = vmatprep.subr.mxu0 0.0
    %152 = vmatpush1.msra.mxu0 0.0
    %153 = vmatprep.subr.mxu0 0.0
    %154 = vmatpush1.msra.mxu0 0.0
    %155 = vmatprep.subr.mxu0 0.0
    %156 = vmatpush1.msra.mxu0 0.0
    %157 = vmatprep.subr.mxu0 0.0
    %158 = vmatpush1.msra.mxu0 0.0
    %159 = vmatprep.subr.mxu0 0.0
    %160 = vmatpush1.msra.mxu0 0.0
    %161 = vmatprep.mubr.f32.mxu0 0.0
    %162 = vmatmul.mubr.f32.gmra.mrb[0].mxu0 %v95
    %v163 = vpop.f32.mrb[0].mxu0
    %v164 = vadd.f32 0.0, %v163
    %v165 = vpop.f32.mrb[0].mxu0
    %v166 = vadd.f32 0.0, %v165
    %167 = vdwg.mxu0
    %168 = vmatprep.subr.mxu0 %v80
    %169 = vmatpush1.msra.mxu0 %v79
    %170 = vmatprep.subr.mxu0 %v84
    %171 = vmatpush1.msra.mxu0 %v83
    %172 = vmatprep.subr.mxu0 %v88
    %173 = vmatpush1.msra.mxu0 %v87
    %174 = vmatprep.subr.mxu0 %v92
    %175 = vmatpush1.msra.mxu0 %v91
    %176 = vmatprep.subr.mxu0 0.0
    %177 = vmatpush1.msra.mxu0 0.0
    %178 = vmatprep.subr.mxu0 0.0
    %179 = vmatpush1.msra.mxu0 0.0
    %180 = vmatprep.subr.mxu0 0.0
    %181 = vmatpush1.msra.mxu0 0.0
    %182 = vmatprep.subr.mxu0 0.0
    %183 = vmatpush1.msra.mxu0 0.0
    %184 = vmatprep.subr.mxu0 0.0
    %185 = vmatpush1.msra.mxu0 0.0
    %186 = vmatprep.subr.mxu0 0.0
    %187 = vmatpush1.msra.mxu0 0.0
    %188 = vmatprep.subr.mxu0 0.0
    %189 = vmatpush1.msra.mxu0 0.0
    %190 = vmatprep.subr.mxu0 0.0
    %191 = vmatpush1.msra.mxu0 0.0
    %192 = vmatprep.subr.mxu0 0.0
    %193 = vmatpush1.msra.mxu0 0.0
    %194 = vmatprep.subr.mxu0 0.0
    %195 = vmatpush1.msra.mxu0 0.0
    %196 = vmatprep.subr.mxu0 0.0
    %197 = vmatpush1.msra.mxu0 0.0
    %198 = vmatprep.subr.mxu0 0.0
    %199 = vmatpush1.msra.mxu0 0.0
    %200 = vmatprep.subr.mxu0 0.0
    %201 = vmatpush1.msra.mxu0 0.0
    %202 = vmatprep.subr.mxu0 0.0
    %203 = vmatpush1.msra.mxu0 0.0
    %204 = vmatprep.subr.mxu0 0.0
    %205 = vmatpush1.msra.mxu0 0.0
    %206 = vmatprep.subr.mxu0 0.0
    %207 = vmatpush1.msra.mxu0 0.0
    %208 = vmatprep.subr.mxu0 0.0
    %209 = vmatpush1.msra.mxu0 0.0
    %210 = vmatprep.subr.mxu0 0.0
    %211 = vmatpush1.msra.mxu0 0.0
    %212 = vmatprep.subr.mxu0 0.0
    %213 = vmatpush1.msra.mxu0 0.0
    %214 = vmatprep.subr.mxu0 0.0
    %215 = vmatpush1.msra.mxu0 0.0
    %216 = vmatprep.subr.mxu0 0.0
    %217 = vmatpush1.msra.mxu0 0.0
    %218 = vmatprep.subr.mxu0 0.0
    %219 = vmatpush1.msra.mxu0 0.0
    %220 = vmatprep.subr.mxu0 0.0
    %221 = vmatpush1.msra.mxu0 0.0
    %222 = vmatprep.subr.mxu0 0.0
    %223 = vmatpush1.msra.mxu0 0.0
    %224 = vmatprep.subr.mxu0 0.0
    %225 = vmatpush1.msra.mxu0 0.0
    %226 = vmatprep.subr.mxu0 0.0
    %227 = vmatpush1.msra.mxu0 0.0
    %228 = vmatprep.subr.mxu0 0.0
    %229 = vmatpush1.msra.mxu0 0.0
    %230 = vmatprep.subr.mxu0 0.0
    %231 = vmatpush1.msra.mxu0 0.0
    %232 = vmatprep.mubr.f32.mxu0 0.0
    %233 = vmatmul.mubr.f32.gmra.mrb[0].mxu0 %v95
    %v234 = vpop.f32.mrb[0].mxu0
    %v235 = vadd.f32 0.0, %v234
    %v236 = vpop.f32.mrb[0].mxu0
    %v237 = vadd.f32 0.0, %v236
    %238 = vdwg.mxu0
    %v239 = vld [vmem:[%s2] sm:$0xf]
    %v240 = vld [vmem:[%s3] sm:$0xf]
    %v241 = vrot.slane %v164, 4
    %v242 = vadd.f32 %v164, %v241
    %v243 = vrot.slane %v242, 2
    %v244 = vadd.f32 %v242, %v243
    %v245 = vrot.slane %v244, 1
    %v246 = vadd.f32 %v244, %v245
    %v247 = vrot.slane %v166, 4
    %v248 = vadd.f32 %v166, %v247
    %v249 = vrot.slane %v248, 2
    %v250 = vadd.f32 %v248, %v249
    %v251 = vrot.slane %v250, 1
    %v252 = vadd.f32 %v250, %v251
    %v253 = vrot.slane %v235, 4
    %v254 = vadd.f32 %v235, %v253
    %v255 = vrot.slane %v254, 2
    %v256 = vadd.f32 %v254, %v255
    %v257 = vrot.slane %v256, 1
    %v258 = vadd.f32 %v256, %v257
    %v259 = vrot.slane %v237, 4
    %v260 = vadd.f32 %v237, %v259
    %v261 = vrot.slane %v260, 2
    %v262 = vadd.f32 %v260, %v261
    %v263 = vrot.slane %v262, 1
    %v264 = vadd.f32 %v262, %v263
    %v265 = vrcp.pop 8.0
    %v266 = vmul.f32 %v246, %v265
    %v267 = vmul.f32 %v252, %v265
    %v268 = vmul.f32 %v258, %v265
    %v269 = vmul.f32 %v264, %v265
    %v270 = vsub.f32 %v164, %v266
    %v271 = vsub.f32 %v166, %v267
    %v272 = vsub.f32 %v235, %v268
    %v273 = vsub.f32 %v237, %v269
    %v274 = vmul.f32 %v270, %v270
    %v275 = vmul.f32 %v271, %v271
    %v276 = vmul.f32 %v272, %v272
    %v277 = vmul.f32 %v273, %v273
    %v278 = vrot.slane %v274, 4
    %v279 = vadd.f32 %v274, %v278
    %v280 = vrot.slane %v279, 2
    %v281 = vadd.f32 %v279, %v280
    %v282 = vrot.slane %v281, 1
    %v283 = vadd.f32 %v281, %v282
    %v284 = vrot.slane %v275, 4
    %v285 = vadd.f32 %v275, %v284
    %v286 = vrot.slane %v285, 2
    %v287 = vadd.f32 %v285, %v286
    %v288 = vrot.slane %v287, 1
    %v289 = vadd.f32 %v287, %v288
    %v290 = vrot.slane %v276, 4
    %v291 = vadd.f32 %v276, %v290
    %v292 = vrot.slane %v291, 2
    %v293 = vadd.f32 %v291, %v292
    %v294 = vrot.slane %v293, 1
    %v295 = vadd.f32 %v293, %v294
    %v296 = vrot.slane %v277, 4
    %v297 = vadd.f32 %v277, %v296
    %v298 = vrot.slane %v297, 2
    %v299 = vadd.f32 %v297, %v298
    %v300 = vrot.slane %v299, 1
    %v301 = vadd.f32 %v299, %v300
    %v302 = vmul.f32 %v283, %v265
    %v303 = vmul.f32 %v289, %v265
    %v304 = vmul.f32 %v295, %v265
    %v305 = vmul.f32 %v301, %v265
    %v306 = vadd.f32 %v302, 1e-05
    %v307 = vadd.f32 %v303, 1e-05
    %v308 = vadd.f32 %v304, 1e-05
    %v309 = vadd.f32 %v305, 1e-05
    %v310 = vrsqrt.pop %v306
    %v311 = vrsqrt.pop %v307
    %v312 = vrsqrt.pop %v308
    %v313 = vrsqrt.pop %v309
    %v318 = vcombine.low %v310, %v311
    %v319 = vcombine.low %v312, %v313
    %v321 = vunpack.c.l.s4 1966171168
    %v322 = vunpack.c.0.s8 %v321
    %v323 = vlaneseq
    %v324 = vshrl.u32 %v323, 7
    %v325 = vsub.s32 %v322, %v324
    %v326 = vrot.slane %v318, %v325
    %v328 = vunpack.c.l.s4 1966171168
    %v329 = vunpack.c.0.s8 %v328
    %v330 = vlaneseq
    %v331 = vshrl.u32 %v330, 7
    %v332 = vsub.s32 %v329, %v331
    %v333 = vrot.slane %v319, %v332
    %v334 = vcombine.low %v326, %v333
    %v336 = vunpack.c.l.s4 1966171168
    %v337 = vunpack.c.0.s8 %v336
    %v338 = vlaneseq
    %v339 = vshrl.u32 %v338, 7
    %v340 = vsub.s32 %v337, %v339
    %v341 = vrot.slane %v334, %v340
    %v343 = vmul.f32 %v239, %v341
    %v345 = vlaneseq
    %v346 = vshrl.u32 %v345, 7
    %v347 = vsub.s32 0, %v346
    %v348 = vrot.slane %v343, %v347
    %v349 = vlaneseq
    %v350 = vshrl.u32 %v349, 7
    %v351 = vsub.s32 1, %v350
    %v352 = vrot.slane %v343, %v351
    %v353 = vlaneseq
    %v354 = vshrl.u32 %v353, 7
    %v355 = vsub.s32 2, %v354
    %v356 = vrot.slane %v343, %v355
    %v357 = vlaneseq
    %v358 = vshrl.u32 %v357, 7
    %v359 = vsub.s32 3, %v358
    %v360 = vrot.slane %v343, %v359
    %v365 = vmul.f32 %v266, %v348
    %v366 = vmul.f32 %v267, %v352
    %v367 = vmul.f32 %v268, %v356
    %v368 = vmul.f32 %v269, %v360
    %v373 = vcombine.low %v365, %v366
    %v374 = vcombine.low %v367, %v368
    %v376 = vunpack.c.l.s4 1966171168
    %v377 = vunpack.c.0.s8 %v376
    %v378 = vlaneseq
    %v379 = vshrl.u32 %v378, 7
    %v380 = vsub.s32 %v377, %v379
    %v381 = vrot.slane %v373, %v380
    %v383 = vunpack.c.l.s4 1966171168
    %v384 = vunpack.c.0.s8 %v383
    %v385 = vlaneseq
    %v386 = vshrl.u32 %v385, 7
    %v387 = vsub.s32 %v384, %v386
    %v388 = vrot.slane %v374, %v387
    %v389 = vcombine.low %v381, %v388
    %v391 = vunpack.c.l.s4 1966171168
    %v392 = vunpack.c.0.s8 %v391
    %v393 = vlaneseq
    %v394 = vshrl.u32 %v393, 7
    %v395 = vsub.s32 %v392, %v394
    %v396 = vrot.slane %v389, %v395
    %v398 = vsub.f32 %v240, %v396
    %v399 = vmul.f32 %v164, %v348
    %v400 = vmul.f32 %v166, %v352
    %v401 = vmul.f32 %v235, %v356
    %v402 = vmul.f32 %v237, %v360
    %v404 = vlaneseq
    %v405 = vshrl.u32 %v404, 7
    %v406 = vsub.s32 0, %v405
    %v407 = vrot.slane %v398, %v406
    %v408 = vlaneseq
    %v409 = vshrl.u32 %v408, 7
    %v410 = vsub.s32 1, %v409
    %v411 = vrot.slane %v398, %v410
    %v412 = vlaneseq
    %v413 = vshrl.u32 %v412, 7
    %v414 = vsub.s32 2, %v413
    %v415 = vrot.slane %v398, %v414
    %v416 = vlaneseq
    %v417 = vshrl.u32 %v416, 7
    %v418 = vsub.s32 3, %v417
    %v419 = vrot.slane %v398, %v418
    %v424 = vadd.f32 %v399, %v407
    %v425 = vadd.f32 %v400, %v411
    %v426 = vadd.f32 %v401, %v415
    %v427 = vadd.f32 %v402, %v419
    %vm428 = vcmp.ge.f32.partialorder %v424, 0.0
    %vm429 = vcmp.ge.f32.partialorder %v425, 0.0
    %vm430 = vcmp.ge.f32.partialorder %v426, 0.0
    %vm431 = vcmp.ge.f32.partialorder %v427, 0.0
    %v432 = vmul.f32 %v424, 0.01
    %v433 = vmul.f32 %v425, 0.01
    %v434 = vmul.f32 %v426, 0.01
    %v435 = vmul.f32 %v427, 0.01
    %v436 = vsel %vm428, %v424, %v432
    %v437 = vsel %vm429, %v425, %v433
    %v438 = vsel %vm430, %v426, %v434
    %v439 = vsel %vm431, %v427, %v435
    %v440 = vpack.c.bf16 %v436, %v436
    %v441 = vpack.c.bf16 %v437, %v437
    %v442 = vpack.c.bf16 %v438, %v438
    %v443 = vpack.c.bf16 %v439, %v439
    %v444 = vld [vmem:[%s4] sm:$0xff]
    %v445 = vld [vmem:[%s4 + $0x8] sm:$0xff]
    %v446 = vld [vmem:[%s4 + $0x10] sm:$0xff]
    %v447 = vld [vmem:[%s4 + $0x18] sm:$0xff]
    %v448 = vld [vmem:[%s4 + $0x20] sm:$0xff]
    %v449 = vld [vmem:[%s4 + $0x28] sm:$0xff]
    %v450 = vld [vmem:[%s4 + $0x30] sm:$0xff]
    %v451 = vld [vmem:[%s4 + $0x38] sm:$0xff]
    %v452 = vld [vmem:[%s4 + $0x40] sm:$0xff]
    %v453 = vld [vmem:[%s4 + $0x48] sm:$0xff]
    %v454 = vld [vmem:[%s4 + $0x50] sm:$0xff]
    %v455 = vld [vmem:[%s4 + $0x58] sm:$0xff]
    %v456 = vld [vmem:[%s4 + $0x60] sm:$0xff]
    %v457 = vld [vmem:[%s4 + $0x68] sm:$0xff]
    %v458 = vld [vmem:[%s4 + $0x70] sm:$0xff]
    %v459 = vld [vmem:[%s4 + $0x78] sm:$0xff]
    %v460 = vld [vmem:[%s4 + $0x80] sm:$0xff]
    %v461 = vld [vmem:[%s4 + $0x88] sm:$0xff]
    %v462 = vld [vmem:[%s4 + $0x90] sm:$0xff]
    %v463 = vld [vmem:[%s4 + $0x98] sm:$0xff]
    %v464 = vld [vmem:[%s4 + $0xa0] sm:$0xff]
    %v465 = vld [vmem:[%s4 + $0xa8] sm:$0xff]
    %v466 = vld [vmem:[%s4 + $0xb0] sm:$0xff]
    %v467 = vld [vmem:[%s4 + $0xb8] sm:$0xff]
    %v468 = vld [vmem:[%s4 + $0xc0] sm:$0xff]
    %v469 = vld [vmem:[%s4 + $0xc8] sm:$0xff]
    %v470 = vld [vmem:[%s4 + $0xd0] sm:$0xff]
    %v471 = vld [vmem:[%s4 + $0xd8] sm:$0xff]
    %v472 = vld [vmem:[%s4 + $0xe0] sm:$0xff]
    %v473 = vld [vmem:[%s4 + $0xe8] sm:$0xff]
    %v474 = vld [vmem:[%s4 + $0xf0] sm:$0xff]
    %v475 = vld [vmem:[%s4 + $0xf8] sm:$0xff]
    %v476 = vld [vmem:[%s4 + $0x100] sm:$0xff]
    %v477 = vld [vmem:[%s4 + $0x108] sm:$0xff]
    %v478 = vld [vmem:[%s4 + $0x110] sm:$0xff]
    %v479 = vld [vmem:[%s4 + $0x118] sm:$0xff]
    %v480 = vld [vmem:[%s4 + $0x120] sm:$0xff]
    %v481 = vld [vmem:[%s4 + $0x128] sm:$0xff]
    %v482 = vld [vmem:[%s4 + $0x130] sm:$0xff]
    %v483 = vld [vmem:[%s4 + $0x138] sm:$0xff]
    %v484 = vld [vmem:[%s4 + $0x140] sm:$0xff]
    %v485 = vld [vmem:[%s4 + $0x148] sm:$0xff]
    %v486 = vld [vmem:[%s4 + $0x150] sm:$0xff]
    %v487 = vld [vmem:[%s4 + $0x158] sm:$0xff]
    %v488 = vld [vmem:[%s4 + $0x160] sm:$0xff]
    %v489 = vld [vmem:[%s4 + $0x168] sm:$0xff]
    %v490 = vld [vmem:[%s4 + $0x170] sm:$0xff]
    %v491 = vld [vmem:[%s4 + $0x178] sm:$0xff]
    %v492 = vld [vmem:[%s4 + $0x180] sm:$0xff]
    %v493 = vld [vmem:[%s4 + $0x188] sm:$0xff]
    %v494 = vld [vmem:[%s4 + $0x190] sm:$0xff]
    %v495 = vld [vmem:[%s4 + $0x198] sm:$0xff]
    %v496 = vld [vmem:[%s4 + $0x1a0] sm:$0xff]
    %v497 = vld [vmem:[%s4 + $0x1a8] sm:$0xff]
    %v498 = vld [vmem:[%s4 + $0x1b0] sm:$0xff]
    %v499 = vld [vmem:[%s4 + $0x1b8] sm:$0xff]
    %v500 = vld [vmem:[%s4 + $0x1c0] sm:$0xff]
    %v501 = vld [vmem:[%s4 + $0x1c8] sm:$0xff]
    %v502 = vld [vmem:[%s4 + $0x1d0] sm:$0xff]
    %v503 = vld [vmem:[%s4 + $0x1d8] sm:$0xff]
    %v504 = vld [vmem:[%s4 + $0x1e0] sm:$0xff]
    %v505 = vld [vmem:[%s4 + $0x1e8] sm:$0xff]
    %v506 = vld [vmem:[%s4 + $0x1f0] sm:$0xff]
    %v507 = vld [vmem:[%s4 + $0x1f8] sm:$0xff]
    %v508 = vld [vmem:[%s4 + $0x200] sm:$0xff]
    %v509 = vld [vmem:[%s4 + $0x208] sm:$0xff]
    %v510 = vld [vmem:[%s4 + $0x210] sm:$0xff]
    %v511 = vld [vmem:[%s4 + $0x218] sm:$0xff]
    %v512 = vld [vmem:[%s4 + $0x220] sm:$0xff]
    %v513 = vld [vmem:[%s4 + $0x228] sm:$0xff]
    %v514 = vld [vmem:[%s4 + $0x230] sm:$0xff]
    %v515 = vld [vmem:[%s4 + $0x238] sm:$0xff]
    %v516 = vld [vmem:[%s4 + $0x240] sm:$0xff]
    %v517 = vld [vmem:[%s4 + $0x248] sm:$0xff]
    %v518 = vld [vmem:[%s4 + $0x250] sm:$0xff]
    %v519 = vld [vmem:[%s4 + $0x258] sm:$0xff]
    %v520 = vld [vmem:[%s4 + $0x260] sm:$0xff]
    %v521 = vld [vmem:[%s4 + $0x268] sm:$0xff]
    %v522 = vld [vmem:[%s4 + $0x270] sm:$0xff]
    %v523 = vld [vmem:[%s4 + $0x278] sm:$0xff]
    %v524 = vld [vmem:[%s4 + $0x280] sm:$0xff]
    %v525 = vld [vmem:[%s4 + $0x288] sm:$0xff]
    %v526 = vld [vmem:[%s4 + $0x290] sm:$0xff]
    %v527 = vld [vmem:[%s4 + $0x298] sm:$0xff]
    %v528 = vld [vmem:[%s4 + $0x2a0] sm:$0xff]
    %v529 = vld [vmem:[%s4 + $0x2a8] sm:$0xff]
    %v530 = vld [vmem:[%s4 + $0x2b0] sm:$0xff]
    %v531 = vld [vmem:[%s4 + $0x2b8] sm:$0xff]
    %v532 = vld [vmem:[%s4 + $0x2c0] sm:$0xff]
    %v533 = vld [vmem:[%s4 + $0x2c8] sm:$0xff]
    %v534 = vld [vmem:[%s4 + $0x2d0] sm:$0xff]
    %v535 = vld [vmem:[%s4 + $0x2d8] sm:$0xff]
    %v536 = vld [vmem:[%s4 + $0x2e0] sm:$0xff]
    %v537 = vld [vmem:[%s4 + $0x2e8] sm:$0xff]
    %v538 = vld [vmem:[%s4 + $0x2f0] sm:$0xff]
    %v539 = vld [vmem:[%s4 + $0x2f8] sm:$0xff]
    %v540 = vld [vmem:[%s4 + $0x300] sm:$0xff]
    %v541 = vld [vmem:[%s4 + $0x308] sm:$0xff]
    %v542 = vld [vmem:[%s4 + $0x310] sm:$0xff]
    %v543 = vld [vmem:[%s4 + $0x318] sm:$0xff]
    %v544 = vld [vmem:[%s4 + $0x320] sm:$0xff]
    %v545 = vld [vmem:[%s4 + $0x328] sm:$0xff]
    %v546 = vld [vmem:[%s4 + $0x330] sm:$0xff]
    %v547 = vld [vmem:[%s4 + $0x338] sm:$0xff]
    %v548 = vld [vmem:[%s4 + $0x340] sm:$0xff]
    %v549 = vld [vmem:[%s4 + $0x348] sm:$0xff]
    %v550 = vld [vmem:[%s4 + $0x350] sm:$0xff]
    %v551 = vld [vmem:[%s4 + $0x358] sm:$0xff]
    %v552 = vld [vmem:[%s4 + $0x360] sm:$0xff]
    %v553 = vld [vmem:[%s4 + $0x368] sm:$0xff]
    %v554 = vld [vmem:[%s4 + $0x370] sm:$0xff]
    %v555 = vld [vmem:[%s4 + $0x378] sm:$0xff]
    %v556 = vld [vmem:[%s4 + $0x380] sm:$0xff]
    %v557 = vld [vmem:[%s4 + $0x388] sm:$0xff]
    %v558 = vld [vmem:[%s4 + $0x390] sm:$0xff]
    %v559 = vld [vmem:[%s4 + $0x398] sm:$0xff]
    %v560 = vld [vmem:[%s4 + $0x3a0] sm:$0xff]
    %v561 = vld [vmem:[%s4 + $0x3a8] sm:$0xff]
    %v562 = vld [vmem:[%s4 + $0x3b0] sm:$0xff]
    %v563 = vld [vmem:[%s4 + $0x3b8] sm:$0xff]
    %v564 = vld [vmem:[%s4 + $0x3c0] sm:$0xff]
    %v565 = vld [vmem:[%s4 + $0x3c8] sm:$0xff]
    %v566 = vld [vmem:[%s4 + $0x3d0] sm:$0xff]
    %v567 = vld [vmem:[%s4 + $0x3d8] sm:$0xff]
    %v568 = vld [vmem:[%s4 + $0x3e0] sm:$0xff]
    %v569 = vld [vmem:[%s4 + $0x3e8] sm:$0xff]
    %v570 = vld [vmem:[%s4 + $0x3f0] sm:$0xff]
    %v571 = vld [vmem:[%s4 + $0x3f8] sm:$0xff]
    %v572 = vld [vmem:[%s4 + $0x400] sm:$0xff]
    %v573 = vld [vmem:[%s4 + $0x408] sm:$0xff]
    %v574 = vld [vmem:[%s4 + $0x410] sm:$0xff]
    %v575 = vld [vmem:[%s4 + $0x418] sm:$0xff]
    %v576 = vld [vmem:[%s4 + $0x420] sm:$0xff]
    %v577 = vld [vmem:[%s4 + $0x428] sm:$0xff]
    %v578 = vld [vmem:[%s4 + $0x430] sm:$0xff]
    %v579 = vld [vmem:[%s4 + $0x438] sm:$0xff]
    %v580 = vld [vmem:[%s4 + $0x440] sm:$0xff]
    %v581 = vld [vmem:[%s4 + $0x448] sm:$0xff]
    %v582 = vld [vmem:[%s4 + $0x450] sm:$0xff]
    %v583 = vld [vmem:[%s4 + $0x458] sm:$0xff]
    %v584 = vld [vmem:[%s4 + $0x460] sm:$0xff]
    %v585 = vld [vmem:[%s4 + $0x468] sm:$0xff]
    %v586 = vld [vmem:[%s4 + $0x470] sm:$0xff]
    %v587 = vld [vmem:[%s4 + $0x478] sm:$0xff]
    %v588 = vld [vmem:[%s4 + $0x480] sm:$0xff]
    %v589 = vld [vmem:[%s4 + $0x488] sm:$0xff]
    %v590 = vld [vmem:[%s4 + $0x490] sm:$0xff]
    %v591 = vld [vmem:[%s4 + $0x498] sm:$0xff]
    %v592 = vld [vmem:[%s4 + $0x4a0] sm:$0xff]
    %v593 = vld [vmem:[%s4 + $0x4a8] sm:$0xff]
    %v594 = vld [vmem:[%s4 + $0x4b0] sm:$0xff]
    %v595 = vld [vmem:[%s4 + $0x4b8] sm:$0xff]
    %v596 = vld [vmem:[%s4 + $0x4c0] sm:$0xff]
    %v597 = vld [vmem:[%s4 + $0x4c8] sm:$0xff]
    %v598 = vld [vmem:[%s4 + $0x4d0] sm:$0xff]
    %v599 = vld [vmem:[%s4 + $0x4d8] sm:$0xff]
    %v600 = vld [vmem:[%s4 + $0x4e0] sm:$0xff]
    %v601 = vld [vmem:[%s4 + $0x4e8] sm:$0xff]
    %v602 = vld [vmem:[%s4 + $0x4f0] sm:$0xff]
    %v603 = vld [vmem:[%s4 + $0x4f8] sm:$0xff]
    %v604 = vld [vmem:[%s4 + $0x500] sm:$0xff]
    %v605 = vld [vmem:[%s4 + $0x508] sm:$0xff]
    %v606 = vld [vmem:[%s4 + $0x510] sm:$0xff]
    %v607 = vld [vmem:[%s4 + $0x518] sm:$0xff]
    %v608 = vld [vmem:[%s4 + $0x520] sm:$0xff]
    %v609 = vld [vmem:[%s4 + $0x528] sm:$0xff]
    %v610 = vld [vmem:[%s4 + $0x530] sm:$0xff]
    %v611 = vld [vmem:[%s4 + $0x538] sm:$0xff]
    %v612 = vld [vmem:[%s4 + $0x540] sm:$0xff]
    %v613 = vld [vmem:[%s4 + $0x548] sm:$0xff]
    %v614 = vld [vmem:[%s4 + $0x550] sm:$0xff]
    %v615 = vld [vmem:[%s4 + $0x558] sm:$0xff]
    %v616 = vld [vmem:[%s4 + $0x560] sm:$0xff]
    %v617 = vld [vmem:[%s4 + $0x568] sm:$0xff]
    %v618 = vld [vmem:[%s4 + $0x570] sm:$0xff]
    %v619 = vld [vmem:[%s4 + $0x578] sm:$0xff]
    %v620 = vld [vmem:[%s4 + $0x580] sm:$0xff]
    %v621 = vld [vmem:[%s4 + $0x588] sm:$0xff]
    %v622 = vld [vmem:[%s4 + $0x590] sm:$0xff]
    %v623 = vld [vmem:[%s4 + $0x598] sm:$0xff]
    %v624 = vld [vmem:[%s4 + $0x5a0] sm:$0xff]
    %v625 = vld [vmem:[%s4 + $0x5a8] sm:$0xff]
    %v626 = vld [vmem:[%s4 + $0x5b0] sm:$0xff]
    %v627 = vld [vmem:[%s4 + $0x5b8] sm:$0xff]
    %v628 = vld [vmem:[%s4 + $0x5c0] sm:$0xff]
    %v629 = vld [vmem:[%s4 + $0x5c8] sm:$0xff]
    %v630 = vld [vmem:[%s4 + $0x5d0] sm:$0xff]
    %v631 = vld [vmem:[%s4 + $0x5d8] sm:$0xff]
    %v632 = vld [vmem:[%s4 + $0x5e0] sm:$0xff]
    %v633 = vld [vmem:[%s4 + $0x5e8] sm:$0xff]
    %v634 = vld [vmem:[%s4 + $0x5f0] sm:$0xff]
    %v635 = vld [vmem:[%s4 + $0x5f8] sm:$0xff]
    %v636 = vld [vmem:[%s4 + $0x600] sm:$0xff]
    %v637 = vld [vmem:[%s4 + $0x608] sm:$0xff]
    %v638 = vld [vmem:[%s4 + $0x610] sm:$0xff]
    %v639 = vld [vmem:[%s4 + $0x618] sm:$0xff]
    %v640 = vld [vmem:[%s4 + $0x620] sm:$0xff]
    %v641 = vld [vmem:[%s4 + $0x628] sm:$0xff]
    %v642 = vld [vmem:[%s4 + $0x630] sm:$0xff]
    %v643 = vld [vmem:[%s4 + $0x638] sm:$0xff]
    %v644 = vld [vmem:[%s4 + $0x640] sm:$0xff]
    %v645 = vld [vmem:[%s4 + $0x648] sm:$0xff]
    %v646 = vld [vmem:[%s4 + $0x650] sm:$0xff]
    %v647 = vld [vmem:[%s4 + $0x658] sm:$0xff]
    %v648 = vld [vmem:[%s4 + $0x660] sm:$0xff]
    %v649 = vld [vmem:[%s4 + $0x668] sm:$0xff]
    %v650 = vld [vmem:[%s4 + $0x670] sm:$0xff]
    %v651 = vld [vmem:[%s4 + $0x678] sm:$0xff]
    %v652 = vld [vmem:[%s4 + $0x680] sm:$0xff]
    %v653 = vld [vmem:[%s4 + $0x688] sm:$0xff]
    %v654 = vld [vmem:[%s4 + $0x690] sm:$0xff]
    %v655 = vld [vmem:[%s4 + $0x698] sm:$0xff]
    %v656 = vld [vmem:[%s4 + $0x6a0] sm:$0xff]
    %v657 = vld [vmem:[%s4 + $0x6a8] sm:$0xff]
    %v658 = vld [vmem:[%s4 + $0x6b0] sm:$0xff]
    %v659 = vld [vmem:[%s4 + $0x6b8] sm:$0xff]
    %v660 = vld [vmem:[%s4 + $0x6c0] sm:$0xff]
    %v661 = vld [vmem:[%s4 + $0x6c8] sm:$0xff]
    %v662 = vld [vmem:[%s4 + $0x6d0] sm:$0xff]
    %v663 = vld [vmem:[%s4 + $0x6d8] sm:$0xff]
    %v664 = vld [vmem:[%s4 + $0x6e0] sm:$0xff]
    %v665 = vld [vmem:[%s4 + $0x6e8] sm:$0xff]
    %v666 = vld [vmem:[%s4 + $0x6f0] sm:$0xff]
    %v667 = vld [vmem:[%s4 + $0x6f8] sm:$0xff]
    %v668 = vld [vmem:[%s4 + $0x700] sm:$0xff]
    %v669 = vld [vmem:[%s4 + $0x708] sm:$0xff]
    %v670 = vld [vmem:[%s4 + $0x710] sm:$0xff]
    %v671 = vld [vmem:[%s4 + $0x718] sm:$0xff]
    %v672 = vld [vmem:[%s4 + $0x720] sm:$0xff]
    %v673 = vld [vmem:[%s4 + $0x728] sm:$0xff]
    %v674 = vld [vmem:[%s4 + $0x730] sm:$0xff]
    %v675 = vld [vmem:[%s4 + $0x738] sm:$0xff]
    %v676 = vld [vmem:[%s4 + $0x740] sm:$0xff]
    %v677 = vld [vmem:[%s4 + $0x748] sm:$0xff]
    %v678 = vld [vmem:[%s4 + $0x750] sm:$0xff]
    %v679 = vld [vmem:[%s4 + $0x758] sm:$0xff]
    %v680 = vld [vmem:[%s4 + $0x760] sm:$0xff]
    %v681 = vld [vmem:[%s4 + $0x768] sm:$0xff]
    %v682 = vld [vmem:[%s4 + $0x770] sm:$0xff]
    %v683 = vld [vmem:[%s4 + $0x778] sm:$0xff]
    %v684 = vld [vmem:[%s4 + $0x780] sm:$0xff]
    %v685 = vld [vmem:[%s4 + $0x788] sm:$0xff]
    %v686 = vld [vmem:[%s4 + $0x790] sm:$0xff]
    %v687 = vld [vmem:[%s4 + $0x798] sm:$0xff]
    %v688 = vld [vmem:[%s4 + $0x7a0] sm:$0xff]
    %v689 = vld [vmem:[%s4 + $0x7a8] sm:$0xff]
    %v690 = vld [vmem:[%s4 + $0x7b0] sm:$0xff]
    %v691 = vld [vmem:[%s4 + $0x7b8] sm:$0xff]
    %v692 = vld [vmem:[%s4 + $0x7c0] sm:$0xff]
    %v693 = vld [vmem:[%s4 + $0x7c8] sm:$0xff]
    %v694 = vld [vmem:[%s4 + $0x7d0] sm:$0xff]
    %v695 = vld [vmem:[%s4 + $0x7d8] sm:$0xff]
    %v696 = vld [vmem:[%s4 + $0x7e0] sm:$0xff]
    %v697 = vld [vmem:[%s4 + $0x7e8] sm:$0xff]
    %v698 = vld [vmem:[%s4 + $0x7f0] sm:$0xff]
    %v699 = vld [vmem:[%s4 + $0x7f8] sm:$0xff]
    %v956 = vunpack.c.l.b16 %v444
    %v957 = vunpack.c.h.b16 %v444
    %v958 = vunpack.c.l.b16 %v445
    %v959 = vunpack.c.h.b16 %v445
    %v960 = vunpack.c.l.b16 %v446
    %v961 = vunpack.c.h.b16 %v446
    %v962 = vunpack.c.l.b16 %v447
    %v963 = vunpack.c.h.b16 %v447
    %v964 = vunpack.c.l.b16 %v448
    %v965 = vunpack.c.h.b16 %v448
    %v966 = vunpack.c.l.b16 %v449
    %v967 = vunpack.c.h.b16 %v449
    %v968 = vunpack.c.l.b16 %v450
    %v969 = vunpack.c.h.b16 %v450
    %v970 = vunpack.c.l.b16 %v451
    %v971 = vunpack.c.h.b16 %v451
    %v972 = vunpack.c.l.b16 %v452
    %v973 = vunpack.c.h.b16 %v452
    %v974 = vunpack.c.l.b16 %v453
    %v975 = vunpack.c.h.b16 %v453
    %v976 = vunpack.c.l.b16 %v454
    %v977 = vunpack.c.h.b16 %v454
    %v978 = vunpack.c.l.b16 %v455
    %v979 = vunpack.c.h.b16 %v455
    %v980 = vunpack.c.l.b16 %v456
    %v981 = vunpack.c.h.b16 %v456
    %v982 = vunpack.c.l.b16 %v457
    %v983 = vunpack.c.h.b16 %v457
    %v984 = vunpack.c.l.b16 %v458
    %v985 = vunpack.c.h.b16 %v458
    %v986 = vunpack.c.l.b16 %v459
    %v987 = vunpack.c.h.b16 %v459
    %v988 = vunpack.c.l.b16 %v460
    %v989 = vunpack.c.h.b16 %v460
    %v990 = vunpack.c.l.b16 %v461
    %v991 = vunpack.c.h.b16 %v461
    %v992 = vunpack.c.l.b16 %v462
    %v993 = vunpack.c.h.b16 %v462
    %v994 = vunpack.c.l.b16 %v463
    %v995 = vunpack.c.h.b16 %v463
    %v996 = vunpack.c.l.b16 %v464
    %v997 = vunpack.c.h.b16 %v464
    %v998 = vunpack.c.l.b16 %v465
    %v999 = vunpack.c.h.b16 %v465
    %v1000 = vunpack.c.l.b16 %v466
    %v1001 = vunpack.c.h.b16 %v466
    %v1002 = vunpack.c.l.b16 %v467
    %v1003 = vunpack.c.h.b16 %v467
    %v1004 = vunpack.c.l.b16 %v468
    %v1005 = vunpack.c.h.b16 %v468
    %v1006 = vunpack.c.l.b16 %v469
    %v1007 = vunpack.c.h.b16 %v469
    %v1008 = vunpack.c.l.b16 %v470
    %v1009 = vunpack.c.h.b16 %v470
    %v1010 = vunpack.c.l.b16 %v471
    %v1011 = vunpack.c.h.b16 %v471
    %v1012 = vunpack.c.l.b16 %v472
    %v1013 = vunpack.c.h.b16 %v472
    %v1014 = vunpack.c.l.b16 %v473
    %v1015 = vunpack.c.h.b16 %v473
    %v1016 = vunpack.c.l.b16 %v474
    %v1017 = vunpack.c.h.b16 %v474
    %v1018 = vunpack.c.l.b16 %v475
    %v1019 = vunpack.c.h.b16 %v475
    %v1020 = vunpack.c.l.b16 %v476
    %v1021 = vunpack.c.h.b16 %v476
    %v1022 = vunpack.c.l.b16 %v477
    %v1023 = vunpack.c.h.b16 %v477
    %v1024 = vunpack.c.l.b16 %v478
    %v1025 = vunpack.c.h.b16 %v478
    %v1026 = vunpack.c.l.b16 %v479
    %v1027 = vunpack.c.h.b16 %v479
    %v1028 = vunpack.c.l.b16 %v480
    %v1029 = vunpack.c.h.b16 %v480
    %v1030 = vunpack.c.l.b16 %v481
    %v1031 = vunpack.c.h.b16 %v481
    %v1032 = vunpack.c.l.b16 %v482
    %v1033 = vunpack.c.h.b16 %v482
    %v1034 = vunpack.c.l.b16 %v483
    %v1035 = vunpack.c.h.b16 %v483
    %v1036 = vunpack.c.l.b16 %v484
    %v1037 = vunpack.c.h.b16 %v484
    %v1038 = vunpack.c.l.b16 %v485
    %v1039 = vunpack.c.h.b16 %v485
    %v1040 = vunpack.c.l.b16 %v486
    %v1041 = vunpack.c.h.b16 %v486
    %v1042 = vunpack.c.l.b16 %v487
    %v1043 = vunpack.c.h.b16 %v487
    %v1044 = vunpack.c.l.b16 %v488
    %v1045 = vunpack.c.h.b16 %v488
    %v1046 = vunpack.c.l.b16 %v489
    %v1047 = vunpack.c.h.b16 %v489
    %v1048 = vunpack.c.l.b16 %v490
    %v1049 = vunpack.c.h.b16 %v490
    %v1050 = vunpack.c.l.b16 %v491
    %v1051 = vunpack.c.h.b16 %v491
    %v1052 = vunpack.c.l.b16 %v492
    %v1053 = vunpack.c.h.b16 %v492
    %v1054 = vunpack.c.l.b16 %v493
    %v1055 = vunpack.c.h.b16 %v493
    %v1056 = vunpack.c.l.b16 %v494
    %v1057 = vunpack.c.h.b16 %v494
    %v1058 = vunpack.c.l.b16 %v495
    %v1059 = vunpack.c.h.b16 %v495
    %v1060 = vunpack.c.l.b16 %v496
    %v1061 = vunpack.c.h.b16 %v496
    %v1062 = vunpack.c.l.b16 %v497
    %v1063 = vunpack.c.h.b16 %v497
    %v1064 = vunpack.c.l.b16 %v498
    %v1065 = vunpack.c.h.b16 %v498
    %v1066 = vunpack.c.l.b16 %v499
    %v1067 = vunpack.c.h.b16 %v499
    %v1068 = vunpack.c.l.b16 %v500
    %v1069 = vunpack.c.h.b16 %v500
    %v1070 = vunpack.c.l.b16 %v501
    %v1071 = vunpack.c.h.b16 %v501
    %v1072 = vunpack.c.l.b16 %v502
    %v1073 = vunpack.c.h.b16 %v502
    %v1074 = vunpack.c.l.b16 %v503
    %v1075 = vunpack.c.h.b16 %v503
    %v1076 = vunpack.c.l.b16 %v504
    %v1077 = vunpack.c.h.b16 %v504
    %v1078 = vunpack.c.l.b16 %v505
    %v1079 = vunpack.c.h.b16 %v505
    %v1080 = vunpack.c.l.b16 %v506
    %v1081 = vunpack.c.h.b16 %v506
    %v1082 = vunpack.c.l.b16 %v507
    %v1083 = vunpack.c.h.b16 %v507
    %v1084 = vunpack.c.l.b16 %v508
    %v1085 = vunpack.c.h.b16 %v508
    %v1086 = vunpack.c.l.b16 %v509
    %v1087 = vunpack.c.h.b16 %v509
    %v1088 = vunpack.c.l.b16 %v510
    %v1089 = vunpack.c.h.b16 %v510
    %v1090 = vunpack.c.l.b16 %v511
    %v1091 = vunpack.c.h.b16 %v511
    %v1092 = vunpack.c.l.b16 %v512
    %v1093 = vunpack.c.h.b16 %v512
    %v1094 = vunpack.c.l.b16 %v513
    %v1095 = vunpack.c.h.b16 %v513
    %v1096 = vunpack.c.l.b16 %v514
    %v1097 = vunpack.c.h.b16 %v514
    %v1098 = vunpack.c.l.b16 %v515
    %v1099 = vunpack.c.h.b16 %v515
    %v1100 = vunpack.c.l.b16 %v516
    %v1101 = vunpack.c.h.b16 %v516
    %v1102 = vunpack.c.l.b16 %v517
    %v1103 = vunpack.c.h.b16 %v517
    %v1104 = vunpack.c.l.b16 %v518
    %v1105 = vunpack.c.h.b16 %v518
    %v1106 = vunpack.c.l.b16 %v519
    %v1107 = vunpack.c.h.b16 %v519
    %v1108 = vunpack.c.l.b16 %v520
    %v1109 = vunpack.c.h.b16 %v520
    %v1110 = vunpack.c.l.b16 %v521
    %v1111 = vunpack.c.h.b16 %v521
    %v1112 = vunpack.c.l.b16 %v522
    %v1113 = vunpack.c.h.b16 %v522
    %v1114 = vunpack.c.l.b16 %v523
    %v1115 = vunpack.c.h.b16 %v523
    %v1116 = vunpack.c.l.b16 %v524
    %v1117 = vunpack.c.h.b16 %v524
    %v1118 = vunpack.c.l.b16 %v525
    %v1119 = vunpack.c.h.b16 %v525
    %v1120 = vunpack.c.l.b16 %v526
    %v1121 = vunpack.c.h.b16 %v526
    %v1122 = vunpack.c.l.b16 %v527
    %v1123 = vunpack.c.h.b16 %v527
    %v1124 = vunpack.c.l.b16 %v528
    %v1125 = vunpack.c.h.b16 %v528
    %v1126 = vunpack.c.l.b16 %v529
    %v1127 = vunpack.c.h.b16 %v529
    %v1128 = vunpack.c.l.b16 %v530
    %v1129 = vunpack.c.h.b16 %v530
    %v1130 = vunpack.c.l.b16 %v531
    %v1131 = vunpack.c.h.b16 %v531
    %v1132 = vunpack.c.l.b16 %v532
    %v1133 = vunpack.c.h.b16 %v532
    %v1134 = vunpack.c.l.b16 %v533
    %v1135 = vunpack.c.h.b16 %v533
    %v1136 = vunpack.c.l.b16 %v534
    %v1137 = vunpack.c.h.b16 %v534
    %v1138 = vunpack.c.l.b16 %v535
    %v1139 = vunpack.c.h.b16 %v535
    %v1140 = vunpack.c.l.b16 %v536
    %v1141 = vunpack.c.h.b16 %v536
    %v1142 = vunpack.c.l.b16 %v537
    %v1143 = vunpack.c.h.b16 %v537
    %v1144 = vunpack.c.l.b16 %v538
    %v1145 = vunpack.c.h.b16 %v538
    %v1146 = vunpack.c.l.b16 %v539
    %v1147 = vunpack.c.h.b16 %v539
    %v1148 = vunpack.c.l.b16 %v540
    %v1149 = vunpack.c.h.b16 %v540
    %v1150 = vunpack.c.l.b16 %v541
    %v1151 = vunpack.c.h.b16 %v541
    %v1152 = vunpack.c.l.b16 %v542
    %v1153 = vunpack.c.h.b16 %v542
    %v1154 = vunpack.c.l.b16 %v543
    %v1155 = vunpack.c.h.b16 %v543
    %v1156 = vunpack.c.l.b16 %v544
    %v1157 = vunpack.c.h.b16 %v544
    %v1158 = vunpack.c.l.b16 %v545
    %v1159 = vunpack.c.h.b16 %v545
    %v1160 = vunpack.c.l.b16 %v546
    %v1161 = vunpack.c.h.b16 %v546
    %v1162 = vunpack.c.l.b16 %v547
    %v1163 = vunpack.c.h.b16 %v547
    %v1164 = vunpack.c.l.b16 %v548
    %v1165 = vunpack.c.h.b16 %v548
    %v1166 = vunpack.c.l.b16 %v549
    %v1167 = vunpack.c.h.b16 %v549
    %v1168 = vunpack.c.l.b16 %v550
    %v1169 = vunpack.c.h.b16 %v550
    %v1170 = vunpack.c.l.b16 %v551
    %v1171 = vunpack.c.h.b16 %v551
    %v1172 = vunpack.c.l.b16 %v552
    %v1173 = vunpack.c.h.b16 %v552
    %v1174 = vunpack.c.l.b16 %v553
    %v1175 = vunpack.c.h.b16 %v553
    %v1176 = vunpack.c.l.b16 %v554
    %v1177 = vunpack.c.h.b16 %v554
    %v1178 = vunpack.c.l.b16 %v555
    %v1179 = vunpack.c.h.b16 %v555
    %v1180 = vunpack.c.l.b16 %v556
    %v1181 = vunpack.c.h.b16 %v556
    %v1182 = vunpack.c.l.b16 %v557
    %v1183 = vunpack.c.h.b16 %v557
    %v1184 = vunpack.c.l.b16 %v558
    %v1185 = vunpack.c.h.b16 %v558
    %v1186 = vunpack.c.l.b16 %v559
    %v1187 = vunpack.c.h.b16 %v559
    %v1188 = vunpack.c.l.b16 %v560
    %v1189 = vunpack.c.h.b16 %v560
    %v1190 = vunpack.c.l.b16 %v561
    %v1191 = vunpack.c.h.b16 %v561
    %v1192 = vunpack.c.l.b16 %v562
    %v1193 = vunpack.c.h.b16 %v562
    %v1194 = vunpack.c.l.b16 %v563
    %v1195 = vunpack.c.h.b16 %v563
    %v1196 = vunpack.c.l.b16 %v564
    %v1197 = vunpack.c.h.b16 %v564
    %v1198 = vunpack.c.l.b16 %v565
    %v1199 = vunpack.c.h.b16 %v565
    %v1200 = vunpack.c.l.b16 %v566
    %v1201 = vunpack.c.h.b16 %v566
    %v1202 = vunpack.c.l.b16 %v567
    %v1203 = vunpack.c.h.b16 %v567
    %v1204 = vunpack.c.l.b16 %v568
    %v1205 = vunpack.c.h.b16 %v568
    %v1206 = vunpack.c.l.b16 %v569
    %v1207 = vunpack.c.h.b16 %v569
    %v1208 = vunpack.c.l.b16 %v570
    %v1209 = vunpack.c.h.b16 %v570
    %v1210 = vunpack.c.l.b16 %v571
    %v1211 = vunpack.c.h.b16 %v571
    %v1212 = vunpack.c.l.b16 %v572
    %v1213 = vunpack.c.h.b16 %v572
    %v1214 = vunpack.c.l.b16 %v573
    %v1215 = vunpack.c.h.b16 %v573
    %v1216 = vunpack.c.l.b16 %v574
    %v1217 = vunpack.c.h.b16 %v574
    %v1218 = vunpack.c.l.b16 %v575
    %v1219 = vunpack.c.h.b16 %v575
    %v1220 = vunpack.c.l.b16 %v576
    %v1221 = vunpack.c.h.b16 %v576
    %v1222 = vunpack.c.l.b16 %v577
    %v1223 = vunpack.c.h.b16 %v577
    %v1224 = vunpack.c.l.b16 %v578
    %v1225 = vunpack.c.h.b16 %v578
    %v1226 = vunpack.c.l.b16 %v579
    %v1227 = vunpack.c.h.b16 %v579
    %v1228 = vunpack.c.l.b16 %v580
    %v1229 = vunpack.c.h.b16 %v580
    %v1230 = vunpack.c.l.b16 %v581
    %v1231 = vunpack.c.h.b16 %v581
    %v1232 = vunpack.c.l.b16 %v582
    %v1233 = vunpack.c.h.b16 %v582
    %v1234 = vunpack.c.l.b16 %v583
    %v1235 = vunpack.c.h.b16 %v583
    %v1236 = vunpack.c.l.b16 %v584
    %v1237 = vunpack.c.h.b16 %v584
    %v1238 = vunpack.c.l.b16 %v585
    %v1239 = vunpack.c.h.b16 %v585
    %v1240 = vunpack.c.l.b16 %v586
    %v1241 = vunpack.c.h.b16 %v586
    %v1242 = vunpack.c.l.b16 %v587
    %v1243 = vunpack.c.h.b16 %v587
    %v1244 = vunpack.c.l.b16 %v588
    %v1245 = vunpack.c.h.b16 %v588
    %v1246 = vunpack.c.l.b16 %v589
    %v1247 = vunpack.c.h.b16 %v589
    %v1248 = vunpack.c.l.b16 %v590
    %v1249 = vunpack.c.h.b16 %v590
    %v1250 = vunpack.c.l.b16 %v591
    %v1251 = vunpack.c.h.b16 %v591
    %v1252 = vunpack.c.l.b16 %v592
    %v1253 = vunpack.c.h.b16 %v592
    %v1254 = vunpack.c.l.b16 %v593
    %v1255 = vunpack.c.h.b16 %v593
    %v1256 = vunpack.c.l.b16 %v594
    %v1257 = vunpack.c.h.b16 %v594
    %v1258 = vunpack.c.l.b16 %v595
    %v1259 = vunpack.c.h.b16 %v595
    %v1260 = vunpack.c.l.b16 %v596
    %v1261 = vunpack.c.h.b16 %v596
    %v1262 = vunpack.c.l.b16 %v597
    %v1263 = vunpack.c.h.b16 %v597
    %v1264 = vunpack.c.l.b16 %v598
    %v1265 = vunpack.c.h.b16 %v598
    %v1266 = vunpack.c.l.b16 %v599
    %v1267 = vunpack.c.h.b16 %v599
    %v1268 = vunpack.c.l.b16 %v600
    %v1269 = vunpack.c.h.b16 %v600
    %v1270 = vunpack.c.l.b16 %v601
    %v1271 = vunpack.c.h.b16 %v601
    %v1272 = vunpack.c.l.b16 %v602
    %v1273 = vunpack.c.h.b16 %v602
    %v1274 = vunpack.c.l.b16 %v603
    %v1275 = vunpack.c.h.b16 %v603
    %v1276 = vunpack.c.l.b16 %v604
    %v1277 = vunpack.c.h.b16 %v604
    %v1278 = vunpack.c.l.b16 %v605
    %v1279 = vunpack.c.h.b16 %v605
    %v1280 = vunpack.c.l.b16 %v606
    %v1281 = vunpack.c.h.b16 %v606
    %v1282 = vunpack.c.l.b16 %v607
    %v1283 = vunpack.c.h.b16 %v607
    %v1284 = vunpack.c.l.b16 %v608
    %v1285 = vunpack.c.h.b16 %v608
    %v1286 = vunpack.c.l.b16 %v609
    %v1287 = vunpack.c.h.b16 %v609
    %v1288 = vunpack.c.l.b16 %v610
    %v1289 = vunpack.c.h.b16 %v610
    %v1290 = vunpack.c.l.b16 %v611
    %v1291 = vunpack.c.h.b16 %v611
    %v1292 = vunpack.c.l.b16 %v612
    %v1293 = vunpack.c.h.b16 %v612
    %v1294 = vunpack.c.l.b16 %v613
    %v1295 = vunpack.c.h.b16 %v613
    %v1296 = vunpack.c.l.b16 %v614
    %v1297 = vunpack.c.h.b16 %v614
    %v1298 = vunpack.c.l.b16 %v615
    %v1299 = vunpack.c.h.b16 %v615
    %v1300 = vunpack.c.l.b16 %v616
    %v1301 = vunpack.c.h.b16 %v616
    %v1302 = vunpack.c.l.b16 %v617
    %v1303 = vunpack.c.h.b16 %v617
    %v1304 = vunpack.c.l.b16 %v618
    %v1305 = vunpack.c.h.b16 %v618
    %v1306 = vunpack.c.l.b16 %v619
    %v1307 = vunpack.c.h.b16 %v619
    %v1308 = vunpack.c.l.b16 %v620
    %v1309 = vunpack.c.h.b16 %v620
    %v1310 = vunpack.c.l.b16 %v621
    %v1311 = vunpack.c.h.b16 %v621
    %v1312 = vunpack.c.l.b16 %v622
    %v1313 = vunpack.c.h.b16 %v622
    %v1314 = vunpack.c.l.b16 %v623
    %v1315 = vunpack.c.h.b16 %v623
    %v1316 = vunpack.c.l.b16 %v624
    %v1317 = vunpack.c.h.b16 %v624
    %v1318 = vunpack.c.l.b16 %v625
    %v1319 = vunpack.c.h.b16 %v625
    %v1320 = vunpack.c.l.b16 %v626
    %v1321 = vunpack.c.h.b16 %v626
    %v1322 = vunpack.c.l.b16 %v627
    %v1323 = vunpack.c.h.b16 %v627
    %v1324 = vunpack.c.l.b16 %v628
    %v1325 = vunpack.c.h.b16 %v628
    %v1326 = vunpack.c.l.b16 %v629
    %v1327 = vunpack.c.h.b16 %v629
    %v1328 = vunpack.c.l.b16 %v630
    %v1329 = vunpack.c.h.b16 %v630
    %v1330 = vunpack.c.l.b16 %v631
    %v1331 = vunpack.c.h.b16 %v631
    %v1332 = vunpack.c.l.b16 %v632
    %v1333 = vunpack.c.h.b16 %v632
    %v1334 = vunpack.c.l.b16 %v633
    %v1335 = vunpack.c.h.b16 %v633
    %v1336 = vunpack.c.l.b16 %v634
    %v1337 = vunpack.c.h.b16 %v634
    %v1338 = vunpack.c.l.b16 %v635
    %v1339 = vunpack.c.h.b16 %v635
    %v1340 = vunpack.c.l.b16 %v636
    %v1341 = vunpack.c.h.b16 %v636
    %v1342 = vunpack.c.l.b16 %v637
    %v1343 = vunpack.c.h.b16 %v637
    %v1344 = vunpack.c.l.b16 %v638
    %v1345 = vunpack.c.h.b16 %v638
    %v1346 = vunpack.c.l.b16 %v639
    %v1347 = vunpack.c.h.b16 %v639
    %v1348 = vunpack.c.l.b16 %v640
    %v1349 = vunpack.c.h.b16 %v640
    %v1350 = vunpack.c.l.b16 %v641
    %v1351 = vunpack.c.h.b16 %v641
    %v1352 = vunpack.c.l.b16 %v642
    %v1353 = vunpack.c.h.b16 %v642
    %v1354 = vunpack.c.l.b16 %v643
    %v1355 = vunpack.c.h.b16 %v643
    %v1356 = vunpack.c.l.b16 %v644
    %v1357 = vunpack.c.h.b16 %v644
    %v1358 = vunpack.c.l.b16 %v645
    %v1359 = vunpack.c.h.b16 %v645
    %v1360 = vunpack.c.l.b16 %v646
    %v1361 = vunpack.c.h.b16 %v646
    %v1362 = vunpack.c.l.b16 %v647
    %v1363 = vunpack.c.h.b16 %v647
    %v1364 = vunpack.c.l.b16 %v648
    %v1365 = vunpack.c.h.b16 %v648
    %v1366 = vunpack.c.l.b16 %v649
    %v1367 = vunpack.c.h.b16 %v649
    %v1368 = vunpack.c.l.b16 %v650
    %v1369 = vunpack.c.h.b16 %v650
    %v1370 = vunpack.c.l.b16 %v651
    %v1371 = vunpack.c.h.b16 %v651
    %v1372 = vunpack.c.l.b16 %v652
    %v1373 = vunpack.c.h.b16 %v652
    %v1374 = vunpack.c.l.b16 %v653
    %v1375 = vunpack.c.h.b16 %v653
    %v1376 = vunpack.c.l.b16 %v654
    %v1377 = vunpack.c.h.b16 %v654
    %v1378 = vunpack.c.l.b16 %v655
    %v1379 = vunpack.c.h.b16 %v655
    %v1380 = vunpack.c.l.b16 %v656
    %v1381 = vunpack.c.h.b16 %v656
    %v1382 = vunpack.c.l.b16 %v657
    %v1383 = vunpack.c.h.b16 %v657
    %v1384 = vunpack.c.l.b16 %v658
    %v1385 = vunpack.c.h.b16 %v658
    %v1386 = vunpack.c.l.b16 %v659
    %v1387 = vunpack.c.h.b16 %v659
    %v1388 = vunpack.c.l.b16 %v660
    %v1389 = vunpack.c.h.b16 %v660
    %v1390 = vunpack.c.l.b16 %v661
    %v1391 = vunpack.c.h.b16 %v661
    %v1392 = vunpack.c.l.b16 %v662
    %v1393 = vunpack.c.h.b16 %v662
    %v1394 = vunpack.c.l.b16 %v663
    %v1395 = vunpack.c.h.b16 %v663
    %v1396 = vunpack.c.l.b16 %v664
    %v1397 = vunpack.c.h.b16 %v664
    %v1398 = vunpack.c.l.b16 %v665
    %v1399 = vunpack.c.h.b16 %v665
    %v1400 = vunpack.c.l.b16 %v666
    %v1401 = vunpack.c.h.b16 %v666
    %v1402 = vunpack.c.l.b16 %v667
    %v1403 = vunpack.c.h.b16 %v667
    %v1404 = vunpack.c.l.b16 %v668
    %v1405 = vunpack.c.h.b16 %v668
    %v1406 = vunpack.c.l.b16 %v669
    %v1407 = vunpack.c.h.b16 %v669
    %v1408 = vunpack.c.l.b16 %v670
    %v1409 = vunpack.c.h.b16 %v670
    %v1410 = vunpack.c.l.b16 %v671
    %v1411 = vunpack.c.h.b16 %v671
    %v1412 = vunpack.c.l.b16 %v672
    %v1413 = vunpack.c.h.b16 %v672
    %v1414 = vunpack.c.l.b16 %v673
    %v1415 = vunpack.c.h.b16 %v673
    %v1416 = vunpack.c.l.b16 %v674
    %v1417 = vunpack.c.h.b16 %v674
    %v1418 = vunpack.c.l.b16 %v675
    %v1419 = vunpack.c.h.b16 %v675
    %v1420 = vunpack.c.l.b16 %v676
    %v1421 = vunpack.c.h.b16 %v676
    %v1422 = vunpack.c.l.b16 %v677
    %v1423 = vunpack.c.h.b16 %v677
    %v1424 = vunpack.c.l.b16 %v678
    %v1425 = vunpack.c.h.b16 %v678
    %v1426 = vunpack.c.l.b16 %v679
    %v1427 = vunpack.c.h.b16 %v679
    %v1428 = vunpack.c.l.b16 %v680
    %v1429 = vunpack.c.h.b16 %v680
    %v1430 = vunpack.c.l.b16 %v681
    %v1431 = vunpack.c.h.b16 %v681
    %v1432 = vunpack.c.l.b16 %v682
    %v1433 = vunpack.c.h.b16 %v682
    %v1434 = vunpack.c.l.b16 %v683
    %v1435 = vunpack.c.h.b16 %v683
    %v1436 = vunpack.c.l.b16 %v684
    %v1437 = vunpack.c.h.b16 %v684
    %v1438 = vunpack.c.l.b16 %v685
    %v1439 = vunpack.c.h.b16 %v685
    %v1440 = vunpack.c.l.b16 %v686
    %v1441 = vunpack.c.h.b16 %v686
    %v1442 = vunpack.c.l.b16 %v687
    %v1443 = vunpack.c.h.b16 %v687
    %v1444 = vunpack.c.l.b16 %v688
    %v1445 = vunpack.c.h.b16 %v688
    %v1446 = vunpack.c.l.b16 %v689
    %v1447 = vunpack.c.h.b16 %v689
    %v1448 = vunpack.c.l.b16 %v690
    %v1449 = vunpack.c.h.b16 %v690
    %v1450 = vunpack.c.l.b16 %v691
    %v1451 = vunpack.c.h.b16 %v691
    %v1452 = vunpack.c.l.b16 %v692
    %v1453 = vunpack.c.h.b16 %v692
    %v1454 = vunpack.c.l.b16 %v693
    %v1455 = vunpack.c.h.b16 %v693
    %v1456 = vunpack.c.l.b16 %v694
    %v1457 = vunpack.c.h.b16 %v694
    %v1458 = vunpack.c.l.b16 %v695
    %v1459 = vunpack.c.h.b16 %v695
    %v1460 = vunpack.c.l.b16 %v696
    %v1461 = vunpack.c.h.b16 %v696
    %v1462 = vunpack.c.l.b16 %v697
    %v1463 = vunpack.c.h.b16 %v697
    %v1464 = vunpack.c.l.b16 %v698
    %v1465 = vunpack.c.h.b16 %v698
    %v1466 = vunpack.c.l.b16 %v699
    %v1467 = vunpack.c.h.b16 %v699
    %v1468 = vpack.c.b16 %v964, %v956
    %v1469 = vpack.c.b16 %v965, %v957
    %v1470 = vpack.c.b16 %v966, %v958
    %v1471 = vpack.c.b16 %v967, %v959
    %v1472 = vpack.c.b16 %v968, %v960
    %v1473 = vpack.c.b16 %v969, %v961
    %v1474 = vpack.c.b16 %v970, %v962
    %v1475 = vpack.c.b16 %v971, %v963
    %v1476 = vpack.c.b16 %v980, %v972
    %v1477 = vpack.c.b16 %v981, %v973
    %v1478 = vpack.c.b16 %v982, %v974
    %v1479 = vpack.c.b16 %v983, %v975
    %v1480 = vpack.c.b16 %v984, %v976
    %v1481 = vpack.c.b16 %v985, %v977
    %v1482 = vpack.c.b16 %v986, %v978
    %v1483 = vpack.c.b16 %v987, %v979
    %v1484 = vpack.c.b16 %v996, %v988
    %v1485 = vpack.c.b16 %v997, %v989
    %v1486 = vpack.c.b16 %v998, %v990
    %v1487 = vpack.c.b16 %v999, %v991
    %v1488 = vpack.c.b16 %v1000, %v992
    %v1489 = vpack.c.b16 %v1001, %v993
    %v1490 = vpack.c.b16 %v1002, %v994
    %v1491 = vpack.c.b16 %v1003, %v995
    %v1492 = vpack.c.b16 %v1012, %v1004
    %v1493 = vpack.c.b16 %v1013, %v1005
    %v1494 = vpack.c.b16 %v1014, %v1006
    %v1495 = vpack.c.b16 %v1015, %v1007
    %v1496 = vpack.c.b16 %v1016, %v1008
    %v1497 = vpack.c.b16 %v1017, %v1009
    %v1498 = vpack.c.b16 %v1018, %v1010
    %v1499 = vpack.c.b16 %v1019, %v1011
    %v1500 = vpack.c.b16 %v1028, %v1020
    %v1501 = vpack.c.b16 %v1029, %v1021
    %v1502 = vpack.c.b16 %v1030, %v1022
    %v1503 = vpack.c.b16 %v1031, %v1023
    %v1504 = vpack.c.b16 %v1032, %v1024
    %v1505 = vpack.c.b16 %v1033, %v1025
    %v1506 = vpack.c.b16 %v1034, %v1026
    %v1507 = vpack.c.b16 %v1035, %v1027
    %v1508 = vpack.c.b16 %v1044, %v1036
    %v1509 = vpack.c.b16 %v1045, %v1037
    %v1510 = vpack.c.b16 %v1046, %v1038
    %v1511 = vpack.c.b16 %v1047, %v1039
    %v1512 = vpack.c.b16 %v1048, %v1040
    %v1513 = vpack.c.b16 %v1049, %v1041
    %v1514 = vpack.c.b16 %v1050, %v1042
    %v1515 = vpack.c.b16 %v1051, %v1043
    %v1516 = vpack.c.b16 %v1060, %v1052
    %v1517 = vpack.c.b16 %v1061, %v1053
    %v1518 = vpack.c.b16 %v1062, %v1054
    %v1519 = vpack.c.b16 %v1063, %v1055
    %v1520 = vpack.c.b16 %v1064, %v1056
    %v1521 = vpack.c.b16 %v1065, %v1057
    %v1522 = vpack.c.b16 %v1066, %v1058
    %v1523 = vpack.c.b16 %v1067, %v1059
    %v1524 = vpack.c.b16 %v1076, %v1068
    %v1525 = vpack.c.b16 %v1077, %v1069
    %v1526 = vpack.c.b16 %v1078, %v1070
    %v1527 = vpack.c.b16 %v1079, %v1071
    %v1528 = vpack.c.b16 %v1080, %v1072
    %v1529 = vpack.c.b16 %v1081, %v1073
    %v1530 = vpack.c.b16 %v1082, %v1074
    %v1531 = vpack.c.b16 %v1083, %v1075
    %v1532 = vpack.c.b16 %v1092, %v1084
    %v1533 = vpack.c.b16 %v1093, %v1085
    %v1534 = vpack.c.b16 %v1094, %v1086
    %v1535 = vpack.c.b16 %v1095, %v1087
    %v1536 = vpack.c.b16 %v1096, %v1088
    %v1537 = vpack.c.b16 %v1097, %v1089
    %v1538 = vpack.c.b16 %v1098, %v1090
    %v1539 = vpack.c.b16 %v1099, %v1091
    %v1540 = vpack.c.b16 %v1108, %v1100
    %v1541 = vpack.c.b16 %v1109, %v1101
    %v1542 = vpack.c.b16 %v1110, %v1102
    %v1543 = vpack.c.b16 %v1111, %v1103
    %v1544 = vpack.c.b16 %v1112, %v1104
    %v1545 = vpack.c.b16 %v1113, %v1105
    %v1546 = vpack.c.b16 %v1114, %v1106
    %v1547 = vpack.c.b16 %v1115, %v1107
    %v1548 = vpack.c.b16 %v1124, %v1116
    %v1549 = vpack.c.b16 %v1125, %v1117
    %v1550 = vpack.c.b16 %v1126, %v1118
    %v1551 = vpack.c.b16 %v1127, %v1119
    %v1552 = vpack.c.b16 %v1128, %v1120
    %v1553 = vpack.c.b16 %v1129, %v1121
    %v1554 = vpack.c.b16 %v1130, %v1122
    %v1555 = vpack.c.b16 %v1131, %v1123
    %v1556 = vpack.c.b16 %v1140, %v1132
    %v1557 = vpack.c.b16 %v1141, %v1133
    %v1558 = vpack.c.b16 %v1142, %v1134
    %v1559 = vpack.c.b16 %v1143, %v1135
    %v1560 = vpack.c.b16 %v1144, %v1136
    %v1561 = vpack.c.b16 %v1145, %v1137
    %v1562 = vpack.c.b16 %v1146, %v1138
    %v1563 = vpack.c.b16 %v1147, %v1139
    %v1564 = vpack.c.b16 %v1156, %v1148
    %v1565 = vpack.c.b16 %v1157, %v1149
    %v1566 = vpack.c.b16 %v1158, %v1150
    %v1567 = vpack.c.b16 %v1159, %v1151
    %v1568 = vpack.c.b16 %v1160, %v1152
    %v1569 = vpack.c.b16 %v1161, %v1153
    %v1570 = vpack.c.b16 %v1162, %v1154
    %v1571 = vpack.c.b16 %v1163, %v1155
    %v1572 = vpack.c.b16 %v1172, %v1164
    %v1573 = vpack.c.b16 %v1173, %v1165
    %v1574 = vpack.c.b16 %v1174, %v1166
    %v1575 = vpack.c.b16 %v1175, %v1167
    %v1576 = vpack.c.b16 %v1176, %v1168
    %v1577 = vpack.c.b16 %v1177, %v1169
    %v1578 = vpack.c.b16 %v1178, %v1170
    %v1579 = vpack.c.b16 %v1179, %v1171
    %v1580 = vpack.c.b16 %v1188, %v1180
    %v1581 = vpack.c.b16 %v1189, %v1181
    %v1582 = vpack.c.b16 %v1190, %v1182
    %v1583 = vpack.c.b16 %v1191, %v1183
    %v1584 = vpack.c.b16 %v1192, %v1184
    %v1585 = vpack.c.b16 %v1193, %v1185
    %v1586 = vpack.c.b16 %v1194, %v1186
    %v1587 = vpack.c.b16 %v1195, %v1187
    %v1588 = vpack.c.b16 %v1204, %v1196
    %v1589 = vpack.c.b16 %v1205, %v1197
    %v1590 = vpack.c.b16 %v1206, %v1198
    %v1591 = vpack.c.b16 %v1207, %v1199
    %v1592 = vpack.c.b16 %v1208, %v1200
    %v1593 = vpack.c.b16 %v1209, %v1201
    %v1594 = vpack.c.b16 %v1210, %v1202
    %v1595 = vpack.c.b16 %v1211, %v1203
    %v1596 = vpack.c.b16 %v1220, %v1212
    %v1597 = vpack.c.b16 %v1221, %v1213
    %v1598 = vpack.c.b16 %v1222, %v1214
    %v1599 = vpack.c.b16 %v1223, %v1215
    %v1600 = vpack.c.b16 %v1224, %v1216
    %v1601 = vpack.c.b16 %v1225, %v1217
    %v1602 = vpack.c.b16 %v1226, %v1218
    %v1603 = vpack.c.b16 %v1227, %v1219
    %v1604 = vpack.c.b16 %v1236, %v1228
    %v1605 = vpack.c.b16 %v1237, %v1229
    %v1606 = vpack.c.b16 %v1238, %v1230
    %v1607 = vpack.c.b16 %v1239, %v1231
    %v1608 = vpack.c.b16 %v1240, %v1232
    %v1609 = vpack.c.b16 %v1241, %v1233
    %v1610 = vpack.c.b16 %v1242, %v1234
    %v1611 = vpack.c.b16 %v1243, %v1235
    %v1612 = vpack.c.b16 %v1252, %v1244
    %v1613 = vpack.c.b16 %v1253, %v1245
    %v1614 = vpack.c.b16 %v1254, %v1246
    %v1615 = vpack.c.b16 %v1255, %v1247
    %v1616 = vpack.c.b16 %v1256, %v1248
    %v1617 = vpack.c.b16 %v1257, %v1249
    %v1618 = vpack.c.b16 %v1258, %v1250
    %v1619 = vpack.c.b16 %v1259, %v1251
    %v1620 = vpack.c.b16 %v1268, %v1260
    %v1621 = vpack.c.b16 %v1269, %v1261
    %v1622 = vpack.c.b16 %v1270, %v1262
    %v1623 = vpack.c.b16 %v1271, %v1263
    %v1624 = vpack.c.b16 %v1272, %v1264
    %v1625 = vpack.c.b16 %v1273, %v1265
    %v1626 = vpack.c.b16 %v1274, %v1266
    %v1627 = vpack.c.b16 %v1275, %v1267
    %v1628 = vpack.c.b16 %v1284, %v1276
    %v1629 = vpack.c.b16 %v1285, %v1277
    %v1630 = vpack.c.b16 %v1286, %v1278
    %v1631 = vpack.c.b16 %v1287, %v1279
    %v1632 = vpack.c.b16 %v1288, %v1280
    %v1633 = vpack.c.b16 %v1289, %v1281
    %v1634 = vpack.c.b16 %v1290, %v1282
    %v1635 = vpack.c.b16 %v1291, %v1283
    %v1636 = vpack.c.b16 %v1300, %v1292
    %v1637 = vpack.c.b16 %v1301, %v1293
    %v1638 = vpack.c.b16 %v1302, %v1294
    %v1639 = vpack.c.b16 %v1303, %v1295
    %v1640 = vpack.c.b16 %v1304, %v1296
    %v1641 = vpack.c.b16 %v1305, %v1297
    %v1642 = vpack.c.b16 %v1306, %v1298
    %v1643 = vpack.c.b16 %v1307, %v1299
    %v1644 = vpack.c.b16 %v1316, %v1308
    %v1645 = vpack.c.b16 %v1317, %v1309
    %v1646 = vpack.c.b16 %v1318, %v1310
    %v1647 = vpack.c.b16 %v1319, %v1311
    %v1648 = vpack.c.b16 %v1320, %v1312
    %v1649 = vpack.c.b16 %v1321, %v1313
    %v1650 = vpack.c.b16 %v1322, %v1314
    %v1651 = vpack.c.b16 %v1323, %v1315
    %v1652 = vpack.c.b16 %v1332, %v1324
    %v1653 = vpack.c.b16 %v1333, %v1325
    %v1654 = vpack.c.b16 %v1334, %v1326
    %v1655 = vpack.c.b16 %v1335, %v1327
    %v1656 = vpack.c.b16 %v1336, %v1328
    %v1657 = vpack.c.b16 %v1337, %v1329
    %v1658 = vpack.c.b16 %v1338, %v1330
    %v1659 = vpack.c.b16 %v1339, %v1331
    %v1660 = vpack.c.b16 %v1348, %v1340
    %v1661 = vpack.c.b16 %v1349, %v1341
    %v1662 = vpack.c.b16 %v1350, %v1342
    %v1663 = vpack.c.b16 %v1351, %v1343
    %v1664 = vpack.c.b16 %v1352, %v1344
    %v1665 = vpack.c.b16 %v1353, %v1345
    %v1666 = vpack.c.b16 %v1354, %v1346
    %v1667 = vpack.c.b16 %v1355, %v1347
    %v1668 = vpack.c.b16 %v1364, %v1356
    %v1669 = vpack.c.b16 %v1365, %v1357
    %v1670 = vpack.c.b16 %v1366, %v1358
    %v1671 = vpack.c.b16 %v1367, %v1359
    %v1672 = vpack.c.b16 %v1368, %v1360
    %v1673 = vpack.c.b16 %v1369, %v1361
    %v1674 = vpack.c.b16 %v1370, %v1362
    %v1675 = vpack.c.b16 %v1371, %v1363
    %v1676 = vpack.c.b16 %v1380, %v1372
    %v1677 = vpack.c.b16 %v1381, %v1373
    %v1678 = vpack.c.b16 %v1382, %v1374
    %v1679 = vpack.c.b16 %v1383, %v1375
    %v1680 = vpack.c.b16 %v1384, %v1376
    %v1681 = vpack.c.b16 %v1385, %v1377
    %v1682 = vpack.c.b16 %v1386, %v1378
    %v1683 = vpack.c.b16 %v1387, %v1379
    %v1684 = vpack.c.b16 %v1396, %v1388
    %v1685 = vpack.c.b16 %v1397, %v1389
    %v1686 = vpack.c.b16 %v1398, %v1390
    %v1687 = vpack.c.b16 %v1399, %v1391
    %v1688 = vpack.c.b16 %v1400, %v1392
    %v1689 = vpack.c.b16 %v1401, %v1393
    %v1690 = vpack.c.b16 %v1402, %v1394
    %v1691 = vpack.c.b16 %v1403, %v1395
    %v1692 = vpack.c.b16 %v1412, %v1404
    %v1693 = vpack.c.b16 %v1413, %v1405
    %v1694 = vpack.c.b16 %v1414, %v1406
    %v1695 = vpack.c.b16 %v1415, %v1407
    %v1696 = vpack.c.b16 %v1416, %v1408
    %v1697 = vpack.c.b16 %v1417, %v1409
    %v1698 = vpack.c.b16 %v1418, %v1410
    %v1699 = vpack.c.b16 %v1419, %v1411
    %v1700 = vpack.c.b16 %v1428, %v1420
    %v1701 = vpack.c.b16 %v1429, %v1421
    %v1702 = vpack.c.b16 %v1430, %v1422
    %v1703 = vpack.c.b16 %v1431, %v1423
    %v1704 = vpack.c.b16 %v1432, %v1424
    %v1705 = vpack.c.b16 %v1433, %v1425
    %v1706 = vpack.c.b16 %v1434, %v1426
    %v1707 = vpack.c.b16 %v1435, %v1427
    %v1708 = vpack.c.b16 %v1444, %v1436
    %v1709 = vpack.c.b16 %v1445, %v1437
    %v1710 = vpack.c.b16 %v1446, %v1438
    %v1711 = vpack.c.b16 %v1447, %v1439
    %v1712 = vpack.c.b16 %v1448, %v1440
    %v1713 = vpack.c.b16 %v1449, %v1441
    %v1714 = vpack.c.b16 %v1450, %v1442
    %v1715 = vpack.c.b16 %v1451, %v1443
    %v1716 = vpack.c.b16 %v1460, %v1452
    %v1717 = vpack.c.b16 %v1461, %v1453
    %v1718 = vpack.c.b16 %v1462, %v1454
    %v1719 = vpack.c.b16 %v1463, %v1455
    %v1720 = vpack.c.b16 %v1464, %v1456
    %v1721 = vpack.c.b16 %v1465, %v1457
    %v1722 = vpack.c.b16 %v1466, %v1458
    %v1723 = vpack.c.b16 %v1467, %v1459
    %1980 = vmatprep.subr.bf16.mxu0 %v1469
    %1981 = vmatpush1.bf16.msra.mxu0 %v1468
    %1982 = vmatprep.subr.bf16.mxu0 %v1477
    %1983 = vmatpush1.bf16.msra.mxu0 %v1476
    %1984 = vmatprep.subr.bf16.mxu0 %v1485
    %1985 = vmatpush1.bf16.msra.mxu0 %v1484
    %1986 = vmatprep.subr.bf16.mxu0 %v1493
    %1987 = vmatpush1.bf16.msra.mxu0 %v1492
    %1988 = vmatprep.subr.bf16.mxu0 %v1501
    %1989 = vmatpush1.bf16.msra.mxu0 %v1500
    %1990 = vmatprep.subr.bf16.mxu0 %v1509
    %1991 = vmatpush1.bf16.msra.mxu0 %v1508
    %1992 = vmatprep.subr.bf16.mxu0 %v1517
    %1993 = vmatpush1.bf16.msra.mxu0 %v1516
    %1994 = vmatprep.subr.bf16.mxu0 %v1525
    %1995 = vmatpush1.bf16.msra.mxu0 %v1524
    %1996 = vmatprep.subr.bf16.mxu0 %v1533
    %1997 = vmatpush1.bf16.msra.mxu0 %v1532
    %1998 = vmatprep.subr.bf16.mxu0 %v1541
    %1999 = vmatpush1.bf16.msra.mxu0 %v1540
    %2000 = vmatprep.subr.bf16.mxu0 %v1549
    %2001 = vmatpush1.bf16.msra.mxu0 %v1548
    %2002 = vmatprep.subr.bf16.mxu0 %v1557
    %2003 = vmatpush1.bf16.msra.mxu0 %v1556
    %2004 = vmatprep.subr.bf16.mxu0 %v1565
    %2005 = vmatpush1.bf16.msra.mxu0 %v1564
    %2006 = vmatprep.subr.bf16.mxu0 %v1573
    %2007 = vmatpush1.bf16.msra.mxu0 %v1572
    %2008 = vmatprep.subr.bf16.mxu0 %v1581
    %2009 = vmatpush1.bf16.msra.mxu0 %v1580
    %2010 = vmatprep.subr.bf16.mxu0 %v1589
    %2011 = vmatpush1.bf16.msra.mxu0 %v1588
    %2012 = vmatprep.mubr.bf16.mxu0 %v441
    %2013 = vmatmul.mubr.bf16.gmra.mrb[0].mxu0 %v440
    %v2014 = vpop.f32.mrb[0].mxu0
    %v2015 = vadd.f32 0.0, %v2014
    %v2016 = vpop.f32.mrb[0].mxu0
    %v2017 = vadd.f32 0.0, %v2016
    %v2018 = vpop.f32.mrb[0].mxu0
    %v2019 = vpop.f32.mrb[0].mxu0
    %2020 = vdwg.mxu0
    %2021 = vmatprep.subr.bf16.mxu0 %v1597
    %2022 = vmatpush1.bf16.msra.mxu0 %v1596
    %2023 = vmatprep.subr.bf16.mxu0 %v1605
    %2024 = vmatpush1.bf16.msra.mxu0 %v1604
    %2025 = vmatprep.subr.bf16.mxu0 %v1613
    %2026 = vmatpush1.bf16.msra.mxu0 %v1612
    %2027 = vmatprep.subr.bf16.mxu0 %v1621
    %2028 = vmatpush1.bf16.msra.mxu0 %v1620
    %2029 = vmatprep.subr.bf16.mxu0 %v1629
    %2030 = vmatpush1.bf16.msra.mxu0 %v1628
    %2031 = vmatprep.subr.bf16.mxu0 %v1637
    %2032 = vmatpush1.bf16.msra.mxu0 %v1636
    %2033 = vmatprep.subr.bf16.mxu0 %v1645
    %2034 = vmatpush1.bf16.msra.mxu0 %v1644
    %2035 = vmatprep.subr.bf16.mxu0 %v1653
    %2036 = vmatpush1.bf16.msra.mxu0 %v1652
    %2037 = vmatprep.subr.bf16.mxu0 %v1661
    %2038 = vmatpush1.bf16.msra.mxu0 %v1660
    %2039 = vmatprep.subr.bf16.mxu0 %v1669
    %2040 = vmatpush1.bf16.msra.mxu0 %v1668
    %2041 = vmatprep.subr.bf16.mxu0 %v1677
    %2042 = vmatpush1.bf16.msra.mxu0 %v1676
    %2043 = vmatprep.subr.bf16.mxu0 %v1685
    %2044 = vmatpush1.bf16.msra.mxu0 %v1684
    %2045 = vmatprep.subr.bf16.mxu0 %v1693
    %2046 = vmatpush1.bf16.msra.mxu0 %v1692
    %2047 = vmatprep.subr.bf16.mxu0 %v1701
    %2048 = vmatpush1.bf16.msra.mxu0 %v1700
    %2049 = vmatprep.subr.bf16.mxu0 %v1709
    %2050 = vmatpush1.bf16.msra.mxu0 %v1708
    %2051 = vmatprep.subr.bf16.mxu0 %v1717
    %2052 = vmatpush1.bf16.msra.mxu0 %v1716
    %2053 = vmatprep.mubr.bf16.mxu0 %v443
    %2054 = vmatmul.mubr.bf16.gmra.mrb[0].mxu0 %v442
    %v2055 = vpop.f32.mrb[0].mxu0
    %v2056 = vadd.f32 %v2015, %v2055
    %v2057 = vpop.f32.mrb[0].mxu0
    %v2058 = vadd.f32 %v2017, %v2057
    %v2059 = vpop.f32.mrb[0].mxu0
    %v2060 = vpop.f32.mrb[0].mxu0
    %2061 = vdwg.mxu0
    %2062 = vmatprep.subr.bf16.mxu0 %v1471
    %2063 = vmatpush1.bf16.msra.mxu0 %v1470
    %2064 = vmatprep.subr.bf16.mxu0 %v1479
    %2065 = vmatpush1.bf16.msra.mxu0 %v1478
    %2066 = vmatprep.subr.bf16.mxu0 %v1487
    %2067 = vmatpush1.bf16.msra.mxu0 %v1486
    %2068 = vmatprep.subr.bf16.mxu0 %v1495
    %2069 = vmatpush1.bf16.msra.mxu0 %v1494
    %2070 = vmatprep.subr.bf16.mxu0 %v1503
    %2071 = vmatpush1.bf16.msra.mxu0 %v1502
    %2072 = vmatprep.subr.bf16.mxu0 %v1511
    %2073 = vmatpush1.bf16.msra.mxu0 %v1510
    %2074 = vmatprep.subr.bf16.mxu0 %v1519
    %2075 = vmatpush1.bf16.msra.mxu0 %v1518
    %2076 = vmatprep.subr.bf16.mxu0 %v1527
    %2077 = vmatpush1.bf16.msra.mxu0 %v1526
    %2078 = vmatprep.subr.bf16.mxu0 %v1535
    %2079 = vmatpush1.bf16.msra.mxu0 %v1534
    %2080 = vmatprep.subr.bf16.mxu0 %v1543
    %2081 = vmatpush1.bf16.msra.mxu0 %v1542
    %2082 = vmatprep.subr.bf16.mxu0 %v1551
    %2083 = vmatpush1.bf16.msra.mxu0 %v1550
    %2084 = vmatprep.subr.bf16.mxu0 %v1559
    %2085 = vmatpush1.bf16.msra.mxu0 %v1558
    %2086 = vmatprep.subr.bf16.mxu0 %v1567
    %2087 = vmatpush1.bf16.msra.mxu0 %v1566
    %2088 = vmatprep.subr.bf16.mxu0 %v1575
    %2089 = vmatpush1.bf16.msra.mxu0 %v1574
    %2090 = vmatprep.subr.bf16.mxu0 %v1583
    %2091 = vmatpush1.bf16.msra.mxu0 %v1582
    %2092 = vmatprep.subr.bf16.mxu0 %v1591
    %2093 = vmatpush1.bf16.msra.mxu0 %v1590
    %2094 = vmatprep.mubr.bf16.mxu0 %v441
    %2095 = vmatmul.mubr.bf16.gmra.mrb[0].mxu0 %v440
    %v2096 = vpop.f32.mrb[0].mxu0
    %v2097 = vadd.f32 0.0, %v2096
    %v2098 = vpop.f32.mrb[0].mxu0
    %v2099 = vadd.f32 0.0, %v2098
    %v2100 = vpop.f32.mrb[0].mxu0
    %v2101 = vpop.f32.mrb[0].mxu0
    %2102 = vdwg.mxu0
    %2103 = vmatprep.subr.bf16.mxu0 %v1599
    %2104 = vmatpush1.bf16.msra.mxu0 %v1598
    %2105 = vmatprep.subr.bf16.mxu0 %v1607
    %2106 = vmatpush1.bf16.msra.mxu0 %v1606
    %2107 = vmatprep.subr.bf16.mxu0 %v1615
    %2108 = vmatpush1.bf16.msra.mxu0 %v1614
    %2109 = vmatprep.subr.bf16.mxu0 %v1623
    %2110 = vmatpush1.bf16.msra.mxu0 %v1622
    %2111 = vmatprep.subr.bf16.mxu0 %v1631
    %2112 = vmatpush1.bf16.msra.mxu0 %v1630
    %2113 = vmatprep.subr.bf16.mxu0 %v1639
    %2114 = vmatpush1.bf16.msra.mxu0 %v1638
    %2115 = vmatprep.subr.bf16.mxu0 %v1647
    %2116 = vmatpush1.bf16.msra.mxu0 %v1646
    %2117 = vmatprep.subr.bf16.mxu0 %v1655
    %2118 = vmatpush1.bf16.msra.mxu0 %v1654
    %2119 = vmatprep.subr.bf16.mxu0 %v1663
    %2120 = vmatpush1.bf16.msra.mxu0 %v1662
    %2121 = vmatprep.subr.bf16.mxu0 %v1671
    %2122 = vmatpush1.bf16.msra.mxu0 %v1670
    %2123 = vmatprep.subr.bf16.mxu0 %v1679
    %2124 = vmatpush1.bf16.msra.mxu0 %v1678
    %2125 = vmatprep.subr.bf16.mxu0 %v1687
    %2126 = vmatpush1.bf16.msra.mxu0 %v1686
    %2127 = vmatprep.subr.bf16.mxu0 %v1695
    %2128 = vmatpush1.bf16.msra.mxu0 %v1694
    %2129 = vmatprep.subr.bf16.mxu0 %v1703
    %2130 = vmatpush1.bf16.msra.mxu0 %v1702
    %2131 = vmatprep.subr.bf16.mxu0 %v1711
    %2132 = vmatpush1.bf16.msra.mxu0 %v1710
    %2133 = vmatprep.subr.bf16.mxu0 %v1719
    %2134 = vmatpush1.bf16.msra.mxu0 %v1718
    %2135 = vmatprep.mubr.bf16.mxu0 %v443
    %2136 = vmatmul.mubr.bf16.gmra.mrb[0].mxu0 %v442
    %v2137 = vpop.f32.mrb[0].mxu0
    %v2138 = vadd.f32 %v2097, %v2137
    %v2139 = vpop.f32.mrb[0].mxu0
    %v2140 = vadd.f32 %v2099, %v2139
    %v2141 = vpop.f32.mrb[0].mxu0
    %v2142 = vpop.f32.mrb[0].mxu0
    %2143 = vdwg.mxu0
    %2144 = vmatprep.subr.bf16.mxu0 %v1473
    %2145 = vmatpush1.bf16.msra.mxu0 %v1472
    %2146 = vmatprep.subr.bf16.mxu0 %v1481
    %2147 = vmatpush1.bf16.msra.mxu0 %v1480
    %2148 = vmatprep.subr.bf16.mxu0 %v1489
    %2149 = vmatpush1.bf16.msra.mxu0 %v1488
    %2150 = vmatprep.subr.bf16.mxu0 %v1497
    %2151 = vmatpush1.bf16.msra.mxu0 %v1496
    %2152 = vmatprep.subr.bf16.mxu0 %v1505
    %2153 = vmatpush1.bf16.msra.mxu0 %v1504
    %2154 = vmatprep.subr.bf16.mxu0 %v1513
    %2155 = vmatpush1.bf16.msra.mxu0 %v1512
    %2156 = vmatprep.subr.bf16.mxu0 %v1521
    %2157 = vmatpush1.bf16.msra.mxu0 %v1520
    %2158 = vmatprep.subr.bf16.mxu0 %v1529
    %2159 = vmatpush1.bf16.msra.mxu0 %v1528
    %2160 = vmatprep.subr.bf16.mxu0 %v1537
    %2161 = vmatpush1.bf16.msra.mxu0 %v1536
    %2162 = vmatprep.subr.bf16.mxu0 %v1545
    %2163 = vmatpush1.bf16.msra.mxu0 %v1544
    %2164 = vmatprep.subr.bf16.mxu0 %v1553
    %2165 = vmatpush1.bf16.msra.mxu0 %v1552
    %2166 = vmatprep.subr.bf16.mxu0 %v1561
    %2167 = vmatpush1.bf16.msra.mxu0 %v1560
    %2168 = vmatprep.subr.bf16.mxu0 %v1569
    %2169 = vmatpush1.bf16.msra.mxu0 %v1568
    %2170 = vmatprep.subr.bf16.mxu0 %v1577
    %2171 = vmatpush1.bf16.msra.mxu0 %v1576
    %2172 = vmatprep.subr.bf16.mxu0 %v1585
    %2173 = vmatpush1.bf16.msra.mxu0 %v1584
    %2174 = vmatprep.subr.bf16.mxu0 %v1593
    %2175 = vmatpush1.bf16.msra.mxu0 %v1592
    %2176 = vmatprep.mubr.bf16.mxu0 %v441
    %2177 = vmatmul.mubr.bf16.gmra.mrb[0].mxu0 %v440
    %v2178 = vpop.f32.mrb[0].mxu0
    %v2179 = vadd.f32 0.0, %v2178
    %v2180 = vpop.f32.mrb[0].mxu0
    %v2181 = vadd.f32 0.0, %v2180
    %v2182 = vpop.f32.mrb[0].mxu0
    %v2183 = vpop.f32.mrb[0].mxu0
    %2184 = vdwg.mxu0
    %2185 = vmatprep.subr.bf16.mxu0 %v1601
    %2186 = vmatpush1.bf16.msra.mxu0 %v1600
    %2187 = vmatprep.subr.bf16.mxu0 %v1609
    %2188 = vmatpush1.bf16.msra.mxu0 %v1608
    %2189 = vmatprep.subr.bf16.mxu0 %v1617
    %2190 = vmatpush1.bf16.msra.mxu0 %v1616
    %2191 = vmatprep.subr.bf16.mxu0 %v1625
    %2192 = vmatpush1.bf16.msra.mxu0 %v1624
    %2193 = vmatprep.subr.bf16.mxu0 %v1633
    %2194 = vmatpush1.bf16.msra.mxu0 %v1632
    %2195 = vmatprep.subr.bf16.mxu0 %v1641
    %2196 = vmatpush1.bf16.msra.mxu0 %v1640
    %2197 = vmatprep.subr.bf16.mxu0 %v1649
    %2198 = vmatpush1.bf16.msra.mxu0 %v1648
    %2199 = vmatprep.subr.bf16.mxu0 %v1657
    %2200 = vmatpush1.bf16.msra.mxu0 %v1656
    %2201 = vmatprep.subr.bf16.mxu0 %v1665
    %2202 = vmatpush1.bf16.msra.mxu0 %v1664
    %2203 = vmatprep.subr.bf16.mxu0 %v1673
    %2204 = vmatpush1.bf16.msra.mxu0 %v1672
    %2205 = vmatprep.subr.bf16.mxu0 %v1681
    %2206 = vmatpush1.bf16.msra.mxu0 %v1680
    %2207 = vmatprep.subr.bf16.mxu0 %v1689
    %2208 = vmatpush1.bf16.msra.mxu0 %v1688
    %2209 = vmatprep.subr.bf16.mxu0 %v1697
    %2210 = vmatpush1.bf16.msra.mxu0 %v1696
    %2211 = vmatprep.subr.bf16.mxu0 %v1705
    %2212 = vmatpush1.bf16.msra.mxu0 %v1704
    %2213 = vmatprep.subr.bf16.mxu0 %v1713
    %2214 = vmatpush1.bf16.msra.mxu0 %v1712
    %2215 = vmatprep.subr.bf16.mxu0 %v1721
    %2216 = vmatpush1.bf16.msra.mxu0 %v1720
    %2217 = vmatprep.mubr.bf16.mxu0 %v443
    %2218 = vmatmul.mubr.bf16.gmra.mrb[0].mxu0 %v442
    %v2219 = vpop.f32.mrb[0].mxu0
    %v2220 = vadd.f32 %v2179, %v2219
    %v2221 = vpop.f32.mrb[0].mxu0
    %v2222 = vadd.f32 %v2181, %v2221
    %v2223 = vpop.f32.mrb[0].mxu0
    %v2224 = vpop.f32.mrb[0].mxu0
    %2225 = vdwg.mxu0
    %2226 = vmatprep.subr.bf16.mxu0 %v1475
    %2227 = vmatpush1.bf16.msra.mxu0 %v1474
    %2228 = vmatprep.subr.bf16.mxu0 %v1483
    %2229 = vmatpush1.bf16.msra.mxu0 %v1482
    %2230 = vmatprep.subr.bf16.mxu0 %v1491
    %2231 = vmatpush1.bf16.msra.mxu0 %v1490
    %2232 = vmatprep.subr.bf16.mxu0 %v1499
    %2233 = vmatpush1.bf16.msra.mxu0 %v1498
    %2234 = vmatprep.subr.bf16.mxu0 %v1507
    %2235 = vmatpush1.bf16.msra.mxu0 %v1506
    %2236 = vmatprep.subr.bf16.mxu0 %v1515
    %2237 = vmatpush1.bf16.msra.mxu0 %v1514
    %2238 = vmatprep.subr.bf16.mxu0 %v1523
    %2239 = vmatpush1.bf16.msra.mxu0 %v1522
    %2240 = vmatprep.subr.bf16.mxu0 %v1531
    %2241 = vmatpush1.bf16.msra.mxu0 %v1530
    %2242 = vmatprep.subr.bf16.mxu0 %v1539
    %2243 = vmatpush1.bf16.msra.mxu0 %v1538
    %2244 = vmatprep.subr.bf16.mxu0 %v1547
    %2245 = vmatpush1.bf16.msra.mxu0 %v1546
    %2246 = vmatprep.subr.bf16.mxu0 %v1555
    %2247 = vmatpush1.bf16.msra.mxu0 %v1554
    %2248 = vmatprep.subr.bf16.mxu0 %v1563
    %2249 = vmatpush1.bf16.msra.mxu0 %v1562
    %2250 = vmatprep.subr.bf16.mxu0 %v1571
    %2251 = vmatpush1.bf16.msra.mxu0 %v1570
    %2252 = vmatprep.subr.bf16.mxu0 %v1579
    %2253 = vmatpush1.bf16.msra.mxu0 %v1578
    %2254 = vmatprep.subr.bf16.mxu0 %v1587
    %2255 = vmatpush1.bf16.msra.mxu0 %v1586
    %2256 = vmatprep.subr.bf16.mxu0 %v1595
    %2257 = vmatpush1.bf16.msra.mxu0 %v1594
    %2258 = vmatprep.mubr.bf16.mxu0 %v441
    %2259 = vmatmul.mubr.bf16.gmra.mrb[0].mxu0 %v440
    %v2260 = vpop.f32.mrb[0].mxu0
    %v2261 = vadd.f32 0.0, %v2260
    %v2262 = vpop.f32.mrb[0].mxu0
    %v2263 = vadd.f32 0.0, %v2262
    %v2264 = vpop.f32.mrb[0].mxu0
    %v2265 = vpop.f32.mrb[0].mxu0
    %2266 = vdwg.mxu0
    %2267 = vmatprep.subr.bf16.mxu0 %v1603
    %2268 = vmatpush1.bf16.msra.mxu0 %v1602
    %2269 = vmatprep.subr.bf16.mxu0 %v1611
    %2270 = vmatpush1.bf16.msra.mxu0 %v1610
    %2271 = vmatprep.subr.bf16.mxu0 %v1619
    %2272 = vmatpush1.bf16.msra.mxu0 %v1618
    %2273 = vmatprep.subr.bf16.mxu0 %v1627
    %2274 = vmatpush1.bf16.msra.mxu0 %v1626
    %2275 = vmatprep.subr.bf16.mxu0 %v1635
    %2276 = vmatpush1.bf16.msra.mxu0 %v1634
    %2277 = vmatprep.subr.bf16.mxu0 %v1643
    %2278 = vmatpush1.bf16.msra.mxu0 %v1642
    %2279 = vmatprep.subr.bf16.mxu0 %v1651
    %2280 = vmatpush1.bf16.msra.mxu0 %v1650
    %2281 = vmatprep.subr.bf16.mxu0 %v1659
    %2282 = vmatpush1.bf16.msra.mxu0 %v1658
    %2283 = vmatprep.subr.bf16.mxu0 %v1667
    %2284 = vmatpush1.bf16.msra.mxu0 %v1666
    %2285 = vmatprep.subr.bf16.mxu0 %v1675
    %2286 = vmatpush1.bf16.msra.mxu0 %v1674
    %2287 = vmatprep.subr.bf16.mxu0 %v1683
    %2288 = vmatpush1.bf16.msra.mxu0 %v1682
    %2289 = vmatprep.subr.bf16.mxu0 %v1691
    %2290 = vmatpush1.bf16.msra.mxu0 %v1690
    %2291 = vmatprep.subr.bf16.mxu0 %v1699
    %2292 = vmatpush1.bf16.msra.mxu0 %v1698
    %2293 = vmatprep.subr.bf16.mxu0 %v1707
    %2294 = vmatpush1.bf16.msra.mxu0 %v1706
    %2295 = vmatprep.subr.bf16.mxu0 %v1715
    %2296 = vmatpush1.bf16.msra.mxu0 %v1714
    %2297 = vmatprep.subr.bf16.mxu0 %v1723
    %2298 = vmatpush1.bf16.msra.mxu0 %v1722
    %2299 = vmatprep.mubr.bf16.mxu0 %v443
    %2300 = vmatmul.mubr.bf16.gmra.mrb[0].mxu0 %v442
    %v2301 = vpop.f32.mrb[0].mxu0
    %v2302 = vadd.f32 %v2261, %v2301
    %v2303 = vpop.f32.mrb[0].mxu0
    %v2304 = vadd.f32 %v2263, %v2303
    %v2305 = vpop.f32.mrb[0].mxu0
    %v2306 = vpop.f32.mrb[0].mxu0
    %2307 = vdwg.mxu0
    %v2308 = vld [vmem:[%s5] sm:$0xff]
    %v2309 = vld [vmem:[%s6] sm:$0xff]
    %v2310 = vrot.slane %v2056, 4
    %v2311 = vadd.f32 %v2056, %v2310
    %v2312 = vrot.slane %v2311, 2
    %v2313 = vadd.f32 %v2311, %v2312
    %v2314 = vrot.slane %v2313, 1
    %v2315 = vadd.f32 %v2313, %v2314
    %v2316 = vrot.slane %v2058, 4
    %v2317 = vadd.f32 %v2058, %v2316
    %v2318 = vrot.slane %v2317, 2
    %v2319 = vadd.f32 %v2317, %v2318
    %v2320 = vrot.slane %v2319, 1
    %v2321 = vadd.f32 %v2319, %v2320
    %v2322 = vrot.slane %v2138, 4
    %v2323 = vadd.f32 %v2138, %v2322
    %v2324 = vrot.slane %v2323, 2
    %v2325 = vadd.f32 %v2323, %v2324
    %v2326 = vrot.slane %v2325, 1
    %v2327 = vadd.f32 %v2325, %v2326
    %v2328 = vrot.slane %v2140, 4
    %v2329 = vadd.f32 %v2140, %v2328
    %v2330 = vrot.slane %v2329, 2
    %v2331 = vadd.f32 %v2329, %v2330
    %v2332 = vrot.slane %v2331, 1
    %v2333 = vadd.f32 %v2331, %v2332
    %v2334 = vrot.slane %v2220, 4
    %v2335 = vadd.f32 %v2220, %v2334
    %v2336 = vrot.slane %v2335, 2
    %v2337 = vadd.f32 %v2335, %v2336
    %v2338 = vrot.slane %v2337, 1
    %v2339 = vadd.f32 %v2337, %v2338
    %v2340 = vrot.slane %v2222, 4
    %v2341 = vadd.f32 %v2222, %v2340
    %v2342 = vrot.slane %v2341, 2
    %v2343 = vadd.f32 %v2341, %v2342
    %v2344 = vrot.slane %v2343, 1
    %v2345 = vadd.f32 %v2343, %v2344
    %v2346 = vrot.slane %v2302, 4
    %v2347 = vadd.f32 %v2302, %v2346
    %v2348 = vrot.slane %v2347, 2
    %v2349 = vadd.f32 %v2347, %v2348
    %v2350 = vrot.slane %v2349, 1
    %v2351 = vadd.f32 %v2349, %v2350
    %v2352 = vrot.slane %v2304, 4
    %v2353 = vadd.f32 %v2304, %v2352
    %v2354 = vrot.slane %v2353, 2
    %v2355 = vadd.f32 %v2353, %v2354
    %v2356 = vrot.slane %v2355, 1
    %v2357 = vadd.f32 %v2355, %v2356
    %v2358 = vmul.f32 %v2315, %v265
    %v2359 = vmul.f32 %v2321, %v265
    %v2360 = vmul.f32 %v2327, %v265
    %v2361 = vmul.f32 %v2333, %v265
    %v2362 = vmul.f32 %v2339, %v265
    %v2363 = vmul.f32 %v2345, %v265
    %v2364 = vmul.f32 %v2351, %v265
    %v2365 = vmul.f32 %v2357, %v265
    %v2366 = vsub.f32 %v2056, %v2358
    %v2367 = vsub.f32 %v2058, %v2359
    %v2368 = vsub.f32 %v2138, %v2360
    %v2369 = vsub.f32 %v2140, %v2361
    %v2370 = vsub.f32 %v2220, %v2362
    %v2371 = vsub.f32 %v2222, %v2363
    %v2372 = vsub.f32 %v2302, %v2364
    %v2373 = vsub.f32 %v2304, %v2365
    %v2374 = vmul.f32 %v2366, %v2366
    %v2375 = vmul.f32 %v2367, %v2367
    %v2376 = vmul.f32 %v2368, %v2368
    %v2377 = vmul.f32 %v2369, %v2369
    %v2378 = vmul.f32 %v2370, %v2370
    %v2379 = vmul.f32 %v2371, %v2371
    %v2380 = vmul.f32 %v2372, %v2372
    %v2381 = vmul.f32 %v2373, %v2373
    %v2382 = vrot.slane %v2374, 4
    %v2383 = vadd.f32 %v2374, %v2382
    %v2384 = vrot.slane %v2383, 2
    %v2385 = vadd.f32 %v2383, %v2384
    %v2386 = vrot.slane %v2385, 1
    %v2387 = vadd.f32 %v2385, %v2386
    %v2388 = vrot.slane %v2375, 4
    %v2389 = vadd.f32 %v2375, %v2388
    %v2390 = vrot.slane %v2389, 2
    %v2391 = vadd.f32 %v2389, %v2390
    %v2392 = vrot.slane %v2391, 1
    %v2393 = vadd.f32 %v2391, %v2392
    %v2394 = vrot.slane %v2376, 4
    %v2395 = vadd.f32 %v2376, %v2394
    %v2396 = vrot.slane %v2395, 2
    %v2397 = vadd.f32 %v2395, %v2396
    %v2398 = vrot.slane %v2397, 1
    %v2399 = vadd.f32 %v2397, %v2398
    %v2400 = vrot.slane %v2377, 4
    %v2401 = vadd.f32 %v2377, %v2400
    %v2402 = vrot.slane %v2401, 2
    %v2403 = vadd.f32 %v2401, %v2402
    %v2404 = vrot.slane %v2403, 1
    %v2405 = vadd.f32 %v2403, %v2404
    %v2406 = vrot.slane %v2378, 4
    %v2407 = vadd.f32 %v2378, %v2406
    %v2408 = vrot.slane %v2407, 2
    %v2409 = vadd.f32 %v2407, %v2408
    %v2410 = vrot.slane %v2409, 1
    %v2411 = vadd.f32 %v2409, %v2410
    %v2412 = vrot.slane %v2379, 4
    %v2413 = vadd.f32 %v2379, %v2412
    %v2414 = vrot.slane %v2413, 2
    %v2415 = vadd.f32 %v2413, %v2414
    %v2416 = vrot.slane %v2415, 1
    %v2417 = vadd.f32 %v2415, %v2416
    %v2418 = vrot.slane %v2380, 4
    %v2419 = vadd.f32 %v2380, %v2418
    %v2420 = vrot.slane %v2419, 2
    %v2421 = vadd.f32 %v2419, %v2420
    %v2422 = vrot.slane %v2421, 1
    %v2423 = vadd.f32 %v2421, %v2422
    %v2424 = vrot.slane %v2381, 4
    %v2425 = vadd.f32 %v2381, %v2424
    %v2426 = vrot.slane %v2425, 2
    %v2427 = vadd.f32 %v2425, %v2426
    %v2428 = vrot.slane %v2427, 1
    %v2429 = vadd.f32 %v2427, %v2428
    %v2430 = vmul.f32 %v2387, %v265
    %v2431 = vmul.f32 %v2393, %v265
    %v2432 = vmul.f32 %v2399, %v265
    %v2433 = vmul.f32 %v2405, %v265
    %v2434 = vmul.f32 %v2411, %v265
    %v2435 = vmul.f32 %v2417, %v265
    %v2436 = vmul.f32 %v2423, %v265
    %v2437 = vmul.f32 %v2429, %v265
    %v2438 = vadd.f32 %v2430, 1e-05
    %v2439 = vadd.f32 %v2431, 1e-05
    %v2440 = vadd.f32 %v2432, 1e-05
    %v2441 = vadd.f32 %v2433, 1e-05
    %v2442 = vadd.f32 %v2434, 1e-05
    %v2443 = vadd.f32 %v2435, 1e-05
    %v2444 = vadd.f32 %v2436, 1e-05
    %v2445 = vadd.f32 %v2437, 1e-05
    %v2446 = vrsqrt.pop %v2438
    %v2447 = vrsqrt.pop %v2439
    %v2448 = vrsqrt.pop %v2440
    %v2449 = vrsqrt.pop %v2441
    %v2450 = vrsqrt.pop %v2442
    %v2451 = vrsqrt.pop %v2443
    %v2452 = vrsqrt.pop %v2444
    %v2453 = vrsqrt.pop %v2445
    %v2462 = vcombine.low %v2446, %v2447
    %v2463 = vcombine.low %v2448, %v2449
    %v2464 = vcombine.low %v2450, %v2451
    %v2465 = vcombine.low %v2452, %v2453
    %v2467 = vunpack.c.l.s4 1966171168
    %v2468 = vunpack.c.0.s8 %v2467
    %v2469 = vlaneseq
    %v2470 = vshrl.u32 %v2469, 7
    %v2471 = vsub.s32 %v2468, %v2470
    %v2472 = vrot.slane %v2462, %v2471
    %v2474 = vunpack.c.l.s4 1966171168
    %v2475 = vunpack.c.0.s8 %v2474
    %v2476 = vlaneseq
    %v2477 = vshrl.u32 %v2476, 7
    %v2478 = vsub.s32 %v2475, %v2477
    %v2479 = vrot.slane %v2463, %v2478
    %v2481 = vunpack.c.l.s4 1966171168
    %v2482 = vunpack.c.0.s8 %v2481
    %v2483 = vlaneseq
    %v2484 = vshrl.u32 %v2483, 7
    %v2485 = vsub.s32 %v2482, %v2484
    %v2486 = vrot.slane %v2464, %v2485
    %v2488 = vunpack.c.l.s4 1966171168
    %v2489 = vunpack.c.0.s8 %v2488
    %v2490 = vlaneseq
    %v2491 = vshrl.u32 %v2490, 7
    %v2492 = vsub.s32 %v2489, %v2491
    %v2493 = vrot.slane %v2465, %v2492
    %v2494 = vcombine.low %v2472, %v2479
    %v2495 = vcombine.low %v2486, %v2493
    %v2497 = vunpack.c.l.s4 1966171168
    %v2498 = vunpack.c.0.s8 %v2497
    %v2499 = vlaneseq
    %v2500 = vshrl.u32 %v2499, 7
    %v2501 = vsub.s32 %v2498, %v2500
    %v2502 = vrot.slane %v2494, %v2501
    %v2504 = vunpack.c.l.s4 1966171168
    %v2505 = vunpack.c.0.s8 %v2504
    %v2506 = vlaneseq
    %v2507 = vshrl.u32 %v2506, 7
    %v2508 = vsub.s32 %v2505, %v2507
    %v2509 = vrot.slane %v2495, %v2508
    %v2510 = vcombine.low %v2502, %v2509
    %v2512 = vmul.f32 %v2308, %v2510
    %v2514 = vlaneseq
    %v2515 = vshrl.u32 %v2514, 7
    %v2516 = vsub.s32 0, %v2515
    %v2517 = vrot.slane %v2512, %v2516
    %v2518 = vlaneseq
    %v2519 = vshrl.u32 %v2518, 7
    %v2520 = vsub.s32 1, %v2519
    %v2521 = vrot.slane %v2512, %v2520
    %v2522 = vlaneseq
    %v2523 = vshrl.u32 %v2522, 7
    %v2524 = vsub.s32 2, %v2523
    %v2525 = vrot.slane %v2512, %v2524
    %v2526 = vlaneseq
    %v2527 = vshrl.u32 %v2526, 7
    %v2528 = vsub.s32 3, %v2527
    %v2529 = vrot.slane %v2512, %v2528
    %v2530 = vlaneseq
    %v2531 = vshrl.u32 %v2530, 7
    %v2532 = vsub.s32 4, %v2531
    %v2533 = vrot.slane %v2512, %v2532
    %v2534 = vlaneseq
    %v2535 = vshrl.u32 %v2534, 7
    %v2536 = vsub.s32 5, %v2535
    %v2537 = vrot.slane %v2512, %v2536
    %v2538 = vlaneseq
    %v2539 = vshrl.u32 %v2538, 7
    %v2540 = vsub.s32 6, %v2539
    %v2541 = vrot.slane %v2512, %v2540
    %v2542 = vlaneseq
    %v2543 = vshrl.u32 %v2542, 7
    %v2544 = vsub.s32 7, %v2543
    %v2545 = vrot.slane %v2512, %v2544
    %v2554 = vmul.f32 %v2358, %v2517
    %v2555 = vmul.f32 %v2359, %v2521
    %v2556 = vmul.f32 %v2360, %v2525
    %v2557 = vmul.f32 %v2361, %v2529
    %v2558 = vmul.f32 %v2362, %v2533
    %v2559 = vmul.f32 %v2363, %v2537
    %v2560 = vmul.f32 %v2364, %v2541
    %v2561 = vmul.f32 %v2365, %v2545
    %v2570 = vcombine.low %v2554, %v2555
    %v2571 = vcombine.low %v2556, %v2557
    %v2572 = vcombine.low %v2558, %v2559
    %v2573 = vcombine.low %v2560, %v2561
    %v2575 = vunpack.c.l.s4 1966171168
    %v2576 = vunpack.c.0.s8 %v2575
    %v2577 = vlaneseq
    %v2578 = vshrl.u32 %v2577, 7
    %v2579 = vsub.s32 %v2576, %v2578
    %v2580 = vrot.slane %v2570, %v2579
    %v2582 = vunpack.c.l.s4 1966171168
    %v2583 = vunpack.c.0.s8 %v2582
    %v2584 = vlaneseq
    %v2585 = vshrl.u32 %v2584, 7
    %v2586 = vsub.s32 %v2583, %v2585
    %v2587 = vrot.slane %v2571, %v2586
    %v2589 = vunpack.c.l.s4 1966171168
    %v2590 = vunpack.c.0.s8 %v2589
    %v2591 = vlaneseq
    %v2592 = vshrl.u32 %v2591, 7
    %v2593 = vsub.s32 %v2590, %v2592
    %v2594 = vrot.slane %v2572, %v2593
    %v2596 = vunpack.c.l.s4 1966171168
    %v2597 = vunpack.c.0.s8 %v2596
    %v2598 = vlaneseq
    %v2599 = vshrl.u32 %v2598, 7
    %v2600 = vsub.s32 %v2597, %v2599
    %v2601 = vrot.slane %v2573, %v2600
    %v2602 = vcombine.low %v2580, %v2587
    %v2603 = vcombine.low %v2594, %v2601
    %v2605 = vunpack.c.l.s4 1966171168
    %v2606 = vunpack.c.0.s8 %v2605
    %v2607 = vlaneseq
    %v2608 = vshrl.u32 %v2607, 7
    %v2609 = vsub.s32 %v2606, %v2608
    %v2610 = vrot.slane %v2602, %v2609
    %v2612 = vunpack.c.l.s4 1966171168
    %v2613 = vunpack.c.0.s8 %v2612
    %v2614 = vlaneseq
    %v2615 = vshrl.u32 %v2614, 7
    %v2616 = vsub.s32 %v2613, %v2615
    %v2617 = vrot.slane %v2603, %v2616
    %v2618 = vcombine.low %v2610, %v2617
    %v2620 = vsub.f32 %v2309, %v2618
    %v2621 = vmul.f32 %v2056, %v2517
    %v2622 = vmul.f32 %v2058, %v2521
    %v2623 = vmul.f32 %v2138, %v2525
    %v2624 = vmul.f32 %v2140, %v2529
    %v2625 = vmul.f32 %v2220, %v2533
    %v2626 = vmul.f32 %v2222, %v2537
    %v2627 = vmul.f32 %v2302, %v2541
    %v2628 = vmul.f32 %v2304, %v2545
    %v2630 = vlaneseq
    %v2631 = vshrl.u32 %v2630, 7
    %v2632 = vsub.s32 0, %v2631
    %v2633 = vrot.slane %v2620, %v2632
    %v2634 = vlaneseq
    %v2635 = vshrl.u32 %v2634, 7
    %v2636 = vsub.s32 1, %v2635
    %v2637 = vrot.slane %v2620, %v2636
    %v2638 = vlaneseq
    %v2639 = vshrl.u32 %v2638, 7
    %v2640 = vsub.s32 2, %v2639
    %v2641 = vrot.slane %v2620, %v2640
    %v2642 = vlaneseq
    %v2643 = vshrl.u32 %v2642, 7
    %v2644 = vsub.s32 3, %v2643
    %v2645 = vrot.slane %v2620, %v2644
    %v2646 = vlaneseq
    %v2647 = vshrl.u32 %v2646, 7
    %v2648 = vsub.s32 4, %v2647
    %v2649 = vrot.slane %v2620, %v2648
    %v2650 = vlaneseq
    %v2651 = vshrl.u32 %v2650, 7
    %v2652 = vsub.s32 5, %v2651
    %v2653 = vrot.slane %v2620, %v2652
    %v2654 = vlaneseq
    %v2655 = vshrl.u32 %v2654, 7
    %v2656 = vsub.s32 6, %v2655
    %v2657 = vrot.slane %v2620, %v2656
    %v2658 = vlaneseq
    %v2659 = vshrl.u32 %v2658, 7
    %v2660 = vsub.s32 7, %v2659
    %v2661 = vrot.slane %v2620, %v2660
    %v2670 = vadd.f32 %v2621, %v2633
    %v2671 = vadd.f32 %v2622, %v2637
    %v2672 = vadd.f32 %v2623, %v2641
    %v2673 = vadd.f32 %v2624, %v2645
    %v2674 = vadd.f32 %v2625, %v2649
    %v2675 = vadd.f32 %v2626, %v2653
    %v2676 = vadd.f32 %v2627, %v2657
    %v2677 = vadd.f32 %v2628, %v2661
    %vm2678 = vcmp.ge.f32.partialorder %v2670, 0.0
    %vm2679 = vcmp.ge.f32.partialorder %v2671, 0.0
    %vm2680 = vcmp.ge.f32.partialorder %v2672, 0.0
    %vm2681 = vcmp.ge.f32.partialorder %v2673, 0.0
    %vm2682 = vcmp.ge.f32.partialorder %v2674, 0.0
    %vm2683 = vcmp.ge.f32.partialorder %v2675, 0.0
    %vm2684 = vcmp.ge.f32.partialorder %v2676, 0.0
    %vm2685 = vcmp.ge.f32.partialorder %v2677, 0.0
    %v2686 = vmul.f32 %v2670, 0.01
    %v2687 = vmul.f32 %v2671, 0.01
    %v2688 = vmul.f32 %v2672, 0.01
    %v2689 = vmul.f32 %v2673, 0.01
    %v2690 = vmul.f32 %v2674, 0.01
    %v2691 = vmul.f32 %v2675, 0.01
    %v2692 = vmul.f32 %v2676, 0.01
    %v2693 = vmul.f32 %v2677, 0.01
    %v2694 = vsel %vm2678, %v2670, %v2686
    %v2695 = vsel %vm2679, %v2671, %v2687
    %v2696 = vsel %vm2680, %v2672, %v2688
    %v2697 = vsel %vm2681, %v2673, %v2689
    %v2698 = vsel %vm2682, %v2674, %v2690
    %v2699 = vsel %vm2683, %v2675, %v2691
    %v2700 = vsel %vm2684, %v2676, %v2692
    %v2701 = vsel %vm2685, %v2677, %v2693
    %v2702 = vld [vmem:[%s7] sm:$0xff]
    %v2703 = vld [vmem:[%s7 + $0x8] sm:$0xff]
    %v2704 = vld [vmem:[%s7 + $0x10] sm:$0xff]
    %v2705 = vld [vmem:[%s7 + $0x18] sm:$0xff]
    %v2706 = vld [vmem:[%s7 + $0x20] sm:$0xff]
    %v2707 = vld [vmem:[%s7 + $0x28] sm:$0xff]
    %v2708 = vld [vmem:[%s7 + $0x30] sm:$0xff]
    %v2709 = vld [vmem:[%s7 + $0x38] sm:$0xff]
    %v2710 = vld [vmem:[%s7 + $0x40] sm:$0xff]
    %v2711 = vld [vmem:[%s7 + $0x48] sm:$0xff]
    %v2712 = vld [vmem:[%s7 + $0x50] sm:$0xff]
    %v2713 = vld [vmem:[%s7 + $0x58] sm:$0xff]
    %v2714 = vld [vmem:[%s7 + $0x60] sm:$0xff]
    %v2715 = vld [vmem:[%s7 + $0x68] sm:$0xff]
    %v2716 = vld [vmem:[%s7 + $0x70] sm:$0xff]
    %v2717 = vld [vmem:[%s7 + $0x78] sm:$0xff]
    %v2718 = vld [vmem:[%s7 + $0x80] sm:$0xff]
    %v2719 = vld [vmem:[%s7 + $0x88] sm:$0xff]
    %v2720 = vld [vmem:[%s7 + $0x90] sm:$0xff]
    %v2721 = vld [vmem:[%s7 + $0x98] sm:$0xff]
    %v2722 = vld [vmem:[%s7 + $0xa0] sm:$0xff]
    %v2723 = vld [vmem:[%s7 + $0xa8] sm:$0xff]
    %v2724 = vld [vmem:[%s7 + $0xb0] sm:$0xff]
    %v2725 = vld [vmem:[%s7 + $0xb8] sm:$0xff]
    %v2726 = vld [vmem:[%s7 + $0xc0] sm:$0xff]
    %v2727 = vld [vmem:[%s7 + $0xc8] sm:$0xff]
    %v2728 = vld [vmem:[%s7 + $0xd0] sm:$0xff]
    %v2729 = vld [vmem:[%s7 + $0xd8] sm:$0xff]
    %v2730 = vld [vmem:[%s7 + $0xe0] sm:$0xff]
    %v2731 = vld [vmem:[%s7 + $0xe8] sm:$0xff]
    %v2732 = vld [vmem:[%s7 + $0xf0] sm:$0xff]
    %v2733 = vld [vmem:[%s7 + $0xf8] sm:$0xff]
    %v2734 = vld [vmem:[%s7 + $0x100] sm:$0xff]
    %v2735 = vld [vmem:[%s7 + $0x108] sm:$0xff]
    %v2736 = vld [vmem:[%s7 + $0x110] sm:$0xff]
    %v2737 = vld [vmem:[%s7 + $0x118] sm:$0xff]
    %v2738 = vld [vmem:[%s7 + $0x120] sm:$0xff]
    %v2739 = vld [vmem:[%s7 + $0x128] sm:$0xff]
    %v2740 = vld [vmem:[%s7 + $0x130] sm:$0xff]
    %v2741 = vld [vmem:[%s7 + $0x138] sm:$0xff]
    %v2742 = vld [vmem:[%s7 + $0x140] sm:$0xff]
    %v2743 = vld [vmem:[%s7 + $0x148] sm:$0xff]
    %v2744 = vld [vmem:[%s7 + $0x150] sm:$0xff]
    %v2745 = vld [vmem:[%s7 + $0x158] sm:$0xff]
    %v2746 = vld [vmem:[%s7 + $0x160] sm:$0xff]
    %v2747 = vld [vmem:[%s7 + $0x168] sm:$0xff]
    %v2748 = vld [vmem:[%s7 + $0x170] sm:$0xff]
    %v2749 = vld [vmem:[%s7 + $0x178] sm:$0xff]
    %v2750 = vld [vmem:[%s7 + $0x180] sm:$0xff]
    %v2751 = vld [vmem:[%s7 + $0x188] sm:$0xff]
    %v2752 = vld [vmem:[%s7 + $0x190] sm:$0xff]
    %v2753 = vld [vmem:[%s7 + $0x198] sm:$0xff]
    %v2754 = vld [vmem:[%s7 + $0x1a0] sm:$0xff]
    %v2755 = vld [vmem:[%s7 + $0x1a8] sm:$0xff]
    %v2756 = vld [vmem:[%s7 + $0x1b0] sm:$0xff]
    %v2757 = vld [vmem:[%s7 + $0x1b8] sm:$0xff]
    %v2758 = vld [vmem:[%s7 + $0x1c0] sm:$0xff]
    %v2759 = vld [vmem:[%s7 + $0x1c8] sm:$0xff]
    %v2760 = vld [vmem:[%s7 + $0x1d0] sm:$0xff]
    %v2761 = vld [vmem:[%s7 + $0x1d8] sm:$0xff]
    %v2762 = vld [vmem:[%s7 + $0x1e0] sm:$0xff]
    %v2763 = vld [vmem:[%s7 + $0x1e8] sm:$0xff]
    %v2764 = vld [vmem:[%s7 + $0x1f0] sm:$0xff]
    %v2765 = vld [vmem:[%s7 + $0x1f8] sm:$0xff]
    %v2766 = vld [vmem:[%s7 + $0x200] sm:$0xff]
    %v2767 = vld [vmem:[%s7 + $0x208] sm:$0xff]
    %v2768 = vld [vmem:[%s7 + $0x210] sm:$0xff]
    %v2769 = vld [vmem:[%s7 + $0x218] sm:$0xff]
    %v2770 = vld [vmem:[%s7 + $0x220] sm:$0xff]
    %v2771 = vld [vmem:[%s7 + $0x228] sm:$0xff]
    %v2772 = vld [vmem:[%s7 + $0x230] sm:$0xff]
    %v2773 = vld [vmem:[%s7 + $0x238] sm:$0xff]
    %v2774 = vld [vmem:[%s7 + $0x240] sm:$0xff]
    %v2775 = vld [vmem:[%s7 + $0x248] sm:$0xff]
    %v2776 = vld [vmem:[%s7 + $0x250] sm:$0xff]
    %v2777 = vld [vmem:[%s7 + $0x258] sm:$0xff]
    %v2778 = vld [vmem:[%s7 + $0x260] sm:$0xff]
    %v2779 = vld [vmem:[%s7 + $0x268] sm:$0xff]
    %v2780 = vld [vmem:[%s7 + $0x270] sm:$0xff]
    %v2781 = vld [vmem:[%s7 + $0x278] sm:$0xff]
    %v2782 = vld [vmem:[%s7 + $0x280] sm:$0xff]
    %v2783 = vld [vmem:[%s7 + $0x288] sm:$0xff]
    %v2784 = vld [vmem:[%s7 + $0x290] sm:$0xff]
    %v2785 = vld [vmem:[%s7 + $0x298] sm:$0xff]
    %v2786 = vld [vmem:[%s7 + $0x2a0] sm:$0xff]
    %v2787 = vld [vmem:[%s7 + $0x2a8] sm:$0xff]
    %v2788 = vld [vmem:[%s7 + $0x2b0] sm:$0xff]
    %v2789 = vld [vmem:[%s7 + $0x2b8] sm:$0xff]
    %v2790 = vld [vmem:[%s7 + $0x2c0] sm:$0xff]
    %v2791 = vld [vmem:[%s7 + $0x2c8] sm:$0xff]
    %v2792 = vld [vmem:[%s7 + $0x2d0] sm:$0xff]
    %v2793 = vld [vmem:[%s7 + $0x2d8] sm:$0xff]
    %v2794 = vld [vmem:[%s7 + $0x2e0] sm:$0xff]
    %v2795 = vld [vmem:[%s7 + $0x2e8] sm:$0xff]
    %v2796 = vld [vmem:[%s7 + $0x2f0] sm:$0xff]
    %v2797 = vld [vmem:[%s7 + $0x2f8] sm:$0xff]
    %v2798 = vld [vmem:[%s7 + $0x300] sm:$0xff]
    %v2799 = vld [vmem:[%s7 + $0x308] sm:$0xff]
    %v2800 = vld [vmem:[%s7 + $0x310] sm:$0xff]
    %v2801 = vld [vmem:[%s7 + $0x318] sm:$0xff]
    %v2802 = vld [vmem:[%s7 + $0x320] sm:$0xff]
    %v2803 = vld [vmem:[%s7 + $0x328] sm:$0xff]
    %v2804 = vld [vmem:[%s7 + $0x330] sm:$0xff]
    %v2805 = vld [vmem:[%s7 + $0x338] sm:$0xff]
    %v2806 = vld [vmem:[%s7 + $0x340] sm:$0xff]
    %v2807 = vld [vmem:[%s7 + $0x348] sm:$0xff]
    %v2808 = vld [vmem:[%s7 + $0x350] sm:$0xff]
    %v2809 = vld [vmem:[%s7 + $0x358] sm:$0xff]
    %v2810 = vld [vmem:[%s7 + $0x360] sm:$0xff]
    %v2811 = vld [vmem:[%s7 + $0x368] sm:$0xff]
    %v2812 = vld [vmem:[%s7 + $0x370] sm:$0xff]
    %v2813 = vld [vmem:[%s7 + $0x378] sm:$0xff]
    %v2814 = vld [vmem:[%s7 + $0x380] sm:$0xff]
    %v2815 = vld [vmem:[%s7 + $0x388] sm:$0xff]
    %v2816 = vld [vmem:[%s7 + $0x390] sm:$0xff]
    %v2817 = vld [vmem:[%s7 + $0x398] sm:$0xff]
    %v2818 = vld [vmem:[%s7 + $0x3a0] sm:$0xff]
    %v2819 = vld [vmem:[%s7 + $0x3a8] sm:$0xff]
    %v2820 = vld [vmem:[%s7 + $0x3b0] sm:$0xff]
    %v2821 = vld [vmem:[%s7 + $0x3b8] sm:$0xff]
    %v2822 = vld [vmem:[%s7 + $0x3c0] sm:$0xff]
    %v2823 = vld [vmem:[%s7 + $0x3c8] sm:$0xff]
    %v2824 = vld [vmem:[%s7 + $0x3d0] sm:$0xff]
    %v2825 = vld [vmem:[%s7 + $0x3d8] sm:$0xff]
    %v2826 = vld [vmem:[%s7 + $0x3e0] sm:$0xff]
    %v2827 = vld [vmem:[%s7 + $0x3e8] sm:$0xff]
    %v2828 = vld [vmem:[%s7 + $0x3f0] sm:$0xff]
    %v2829 = vld [vmem:[%s7 + $0x3f8] sm:$0xff]
    %v2830 = vld [vmem:[%s7 + $0x400] sm:$0xff]
    %v2831 = vld [vmem:[%s7 + $0x408] sm:$0xff]
    %v2832 = vld [vmem:[%s7 + $0x410] sm:$0xff]
    %v2833 = vld [vmem:[%s7 + $0x418] sm:$0xff]
    %v2834 = vld [vmem:[%s7 + $0x420] sm:$0xff]
    %v2835 = vld [vmem:[%s7 + $0x428] sm:$0xff]
    %v2836 = vld [vmem:[%s7 + $0x430] sm:$0xff]
    %v2837 = vld [vmem:[%s7 + $0x438] sm:$0xff]
    %v2838 = vld [vmem:[%s7 + $0x440] sm:$0xff]
    %v2839 = vld [vmem:[%s7 + $0x448] sm:$0xff]
    %v2840 = vld [vmem:[%s7 + $0x450] sm:$0xff]
    %v2841 = vld [vmem:[%s7 + $0x458] sm:$0xff]
    %v2842 = vld [vmem:[%s7 + $0x460] sm:$0xff]
    %v2843 = vld [vmem:[%s7 + $0x468] sm:$0xff]
    %v2844 = vld [vmem:[%s7 + $0x470] sm:$0xff]
    %v2845 = vld [vmem:[%s7 + $0x478] sm:$0xff]
    %v2846 = vld [vmem:[%s7 + $0x480] sm:$0xff]
    %v2847 = vld [vmem:[%s7 + $0x488] sm:$0xff]
    %v2848 = vld [vmem:[%s7 + $0x490] sm:$0xff]
    %v2849 = vld [vmem:[%s7 + $0x498] sm:$0xff]
    %v2850 = vld [vmem:[%s7 + $0x4a0] sm:$0xff]
    %v2851 = vld [vmem:[%s7 + $0x4a8] sm:$0xff]
    %v2852 = vld [vmem:[%s7 + $0x4b0] sm:$0xff]
    %v2853 = vld [vmem:[%s7 + $0x4b8] sm:$0xff]
    %v2854 = vld [vmem:[%s7 + $0x4c0] sm:$0xff]
    %v2855 = vld [vmem:[%s7 + $0x4c8] sm:$0xff]
    %v2856 = vld [vmem:[%s7 + $0x4d0] sm:$0xff]
    %v2857 = vld [vmem:[%s7 + $0x4d8] sm:$0xff]
    %v2858 = vld [vmem:[%s7 + $0x4e0] sm:$0xff]
    %v2859 = vld [vmem:[%s7 + $0x4e8] sm:$0xff]
    %v2860 = vld [vmem:[%s7 + $0x4f0] sm:$0xff]
    %v2861 = vld [vmem:[%s7 + $0x4f8] sm:$0xff]
    %v2862 = vld [vmem:[%s7 + $0x500] sm:$0xff]
    %v2863 = vld [vmem:[%s7 + $0x508] sm:$0xff]
    %v2864 = vld [vmem:[%s7 + $0x510] sm:$0xff]
    %v2865 = vld [vmem:[%s7 + $0x518] sm:$0xff]
    %v2866 = vld [vmem:[%s7 + $0x520] sm:$0xff]
    %v2867 = vld [vmem:[%s7 + $0x528] sm:$0xff]
    %v2868 = vld [vmem:[%s7 + $0x530] sm:$0xff]
    %v2869 = vld [vmem:[%s7 + $0x538] sm:$0xff]
    %v2870 = vld [vmem:[%s7 + $0x540] sm:$0xff]
    %v2871 = vld [vmem:[%s7 + $0x548] sm:$0xff]
    %v2872 = vld [vmem:[%s7 + $0x550] sm:$0xff]
    %v2873 = vld [vmem:[%s7 + $0x558] sm:$0xff]
    %v2874 = vld [vmem:[%s7 + $0x560] sm:$0xff]
    %v2875 = vld [vmem:[%s7 + $0x568] sm:$0xff]
    %v2876 = vld [vmem:[%s7 + $0x570] sm:$0xff]
    %v2877 = vld [vmem:[%s7 + $0x578] sm:$0xff]
    %v2878 = vld [vmem:[%s7 + $0x580] sm:$0xff]
    %v2879 = vld [vmem:[%s7 + $0x588] sm:$0xff]
    %v2880 = vld [vmem:[%s7 + $0x590] sm:$0xff]
    %v2881 = vld [vmem:[%s7 + $0x598] sm:$0xff]
    %v2882 = vld [vmem:[%s7 + $0x5a0] sm:$0xff]
    %v2883 = vld [vmem:[%s7 + $0x5a8] sm:$0xff]
    %v2884 = vld [vmem:[%s7 + $0x5b0] sm:$0xff]
    %v2885 = vld [vmem:[%s7 + $0x5b8] sm:$0xff]
    %v2886 = vld [vmem:[%s7 + $0x5c0] sm:$0xff]
    %v2887 = vld [vmem:[%s7 + $0x5c8] sm:$0xff]
    %v2888 = vld [vmem:[%s7 + $0x5d0] sm:$0xff]
    %v2889 = vld [vmem:[%s7 + $0x5d8] sm:$0xff]
    %v2890 = vld [vmem:[%s7 + $0x5e0] sm:$0xff]
    %v2891 = vld [vmem:[%s7 + $0x5e8] sm:$0xff]
    %v2892 = vld [vmem:[%s7 + $0x5f0] sm:$0xff]
    %v2893 = vld [vmem:[%s7 + $0x5f8] sm:$0xff]
    %v2894 = vld [vmem:[%s7 + $0x600] sm:$0xff]
    %v2895 = vld [vmem:[%s7 + $0x608] sm:$0xff]
    %v2896 = vld [vmem:[%s7 + $0x610] sm:$0xff]
    %v2897 = vld [vmem:[%s7 + $0x618] sm:$0xff]
    %v2898 = vld [vmem:[%s7 + $0x620] sm:$0xff]
    %v2899 = vld [vmem:[%s7 + $0x628] sm:$0xff]
    %v2900 = vld [vmem:[%s7 + $0x630] sm:$0xff]
    %v2901 = vld [vmem:[%s7 + $0x638] sm:$0xff]
    %v2902 = vld [vmem:[%s7 + $0x640] sm:$0xff]
    %v2903 = vld [vmem:[%s7 + $0x648] sm:$0xff]
    %v2904 = vld [vmem:[%s7 + $0x650] sm:$0xff]
    %v2905 = vld [vmem:[%s7 + $0x658] sm:$0xff]
    %v2906 = vld [vmem:[%s7 + $0x660] sm:$0xff]
    %v2907 = vld [vmem:[%s7 + $0x668] sm:$0xff]
    %v2908 = vld [vmem:[%s7 + $0x670] sm:$0xff]
    %v2909 = vld [vmem:[%s7 + $0x678] sm:$0xff]
    %v2910 = vld [vmem:[%s7 + $0x680] sm:$0xff]
    %v2911 = vld [vmem:[%s7 + $0x688] sm:$0xff]
    %v2912 = vld [vmem:[%s7 + $0x690] sm:$0xff]
    %v2913 = vld [vmem:[%s7 + $0x698] sm:$0xff]
    %v2914 = vld [vmem:[%s7 + $0x6a0] sm:$0xff]
    %v2915 = vld [vmem:[%s7 + $0x6a8] sm:$0xff]
    %v2916 = vld [vmem:[%s7 + $0x6b0] sm:$0xff]
    %v2917 = vld [vmem:[%s7 + $0x6b8] sm:$0xff]
    %v2918 = vld [vmem:[%s7 + $0x6c0] sm:$0xff]
    %v2919 = vld [vmem:[%s7 + $0x6c8] sm:$0xff]
    %v2920 = vld [vmem:[%s7 + $0x6d0] sm:$0xff]
    %v2921 = vld [vmem:[%s7 + $0x6d8] sm:$0xff]
    %v2922 = vld [vmem:[%s7 + $0x6e0] sm:$0xff]
    %v2923 = vld [vmem:[%s7 + $0x6e8] sm:$0xff]
    %v2924 = vld [vmem:[%s7 + $0x6f0] sm:$0xff]
    %v2925 = vld [vmem:[%s7 + $0x6f8] sm:$0xff]
    %v2926 = vld [vmem:[%s7 + $0x700] sm:$0xff]
    %v2927 = vld [vmem:[%s7 + $0x708] sm:$0xff]
    %v2928 = vld [vmem:[%s7 + $0x710] sm:$0xff]
    %v2929 = vld [vmem:[%s7 + $0x718] sm:$0xff]
    %v2930 = vld [vmem:[%s7 + $0x720] sm:$0xff]
    %v2931 = vld [vmem:[%s7 + $0x728] sm:$0xff]
    %v2932 = vld [vmem:[%s7 + $0x730] sm:$0xff]
    %v2933 = vld [vmem:[%s7 + $0x738] sm:$0xff]
    %v2934 = vld [vmem:[%s7 + $0x740] sm:$0xff]
    %v2935 = vld [vmem:[%s7 + $0x748] sm:$0xff]
    %v2936 = vld [vmem:[%s7 + $0x750] sm:$0xff]
    %v2937 = vld [vmem:[%s7 + $0x758] sm:$0xff]
    %v2938 = vld [vmem:[%s7 + $0x760] sm:$0xff]
    %v2939 = vld [vmem:[%s7 + $0x768] sm:$0xff]
    %v2940 = vld [vmem:[%s7 + $0x770] sm:$0xff]
    %v2941 = vld [vmem:[%s7 + $0x778] sm:$0xff]
    %v2942 = vld [vmem:[%s7 + $0x780] sm:$0xff]
    %v2943 = vld [vmem:[%s7 + $0x788] sm:$0xff]
    %v2944 = vld [vmem:[%s7 + $0x790] sm:$0xff]
    %v2945 = vld [vmem:[%s7 + $0x798] sm:$0xff]
    %v2946 = vld [vmem:[%s7 + $0x7a0] sm:$0xff]
    %v2947 = vld [vmem:[%s7 + $0x7a8] sm:$0xff]
    %v2948 = vld [vmem:[%s7 + $0x7b0] sm:$0xff]
    %v2949 = vld [vmem:[%s7 + $0x7b8] sm:$0xff]
    %v2950 = vld [vmem:[%s7 + $0x7c0] sm:$0xff]
    %v2951 = vld [vmem:[%s7 + $0x7c8] sm:$0xff]
    %v2952 = vld [vmem:[%s7 + $0x7d0] sm:$0xff]
    %v2953 = vld [vmem:[%s7 + $0x7d8] sm:$0xff]
    %v2954 = vld [vmem:[%s7 + $0x7e0] sm:$0xff]
    %v2955 = vld [vmem:[%s7 + $0x7e8] sm:$0xff]
    %v2956 = vld [vmem:[%s7 + $0x7f0] sm:$0xff]
    %v2957 = vld [vmem:[%s7 + $0x7f8] sm:$0xff]
    %v2958 = vld [vmem:[%s7 + $0x800] sm:$0xff]
    %v2959 = vld [vmem:[%s7 + $0x808] sm:$0xff]
    %v2960 = vld [vmem:[%s7 + $0x810] sm:$0xff]
    %v2961 = vld [vmem:[%s7 + $0x818] sm:$0xff]
    %v2962 = vld [vmem:[%s7 + $0x820] sm:$0xff]
    %v2963 = vld [vmem:[%s7 + $0x828] sm:$0xff]
    %v2964 = vld [vmem:[%s7 + $0x830] sm:$0xff]
    %v2965 = vld [vmem:[%s7 + $0x838] sm:$0xff]
    %v2966 = vld [vmem:[%s7 + $0x840] sm:$0xff]
    %v2967 = vld [vmem:[%s7 + $0x848] sm:$0xff]
    %v2968 = vld [vmem:[%s7 + $0x850] sm:$0xff]
    %v2969 = vld [vmem:[%s7 + $0x858] sm:$0xff]
    %v2970 = vld [vmem:[%s7 + $0x860] sm:$0xff]
    %v2971 = vld [vmem:[%s7 + $0x868] sm:$0xff]
    %v2972 = vld [vmem:[%s7 + $0x870] sm:$0xff]
    %v2973 = vld [vmem:[%s7 + $0x878] sm:$0xff]
    %v2974 = vld [vmem:[%s7 + $0x880] sm:$0xff]
    %v2975 = vld [vmem:[%s7 + $0x888] sm:$0xff]
    %v2976 = vld [vmem:[%s7 + $0x890] sm:$0xff]
    %v2977 = vld [vmem:[%s7 + $0x898] sm:$0xff]
    %v2978 = vld [vmem:[%s7 + $0x8a0] sm:$0xff]
    %v2979 = vld [vmem:[%s7 + $0x8a8] sm:$0xff]
    %v2980 = vld [vmem:[%s7 + $0x8b0] sm:$0xff]
    %v2981 = vld [vmem:[%s7 + $0x8b8] sm:$0xff]
    %v2982 = vld [vmem:[%s7 + $0x8c0] sm:$0xff]
    %v2983 = vld [vmem:[%s7 + $0x8c8] sm:$0xff]
    %v2984 = vld [vmem:[%s7 + $0x8d0] sm:$0xff]
    %v2985 = vld [vmem:[%s7 + $0x8d8] sm:$0xff]
    %v2986 = vld [vmem:[%s7 + $0x8e0] sm:$0xff]
    %v2987 = vld [vmem:[%s7 + $0x8e8] sm:$0xff]
    %v2988 = vld [vmem:[%s7 + $0x8f0] sm:$0xff]
    %v2989 = vld [vmem:[%s7 + $0x8f8] sm:$0xff]
    %v2990 = vld [vmem:[%s7 + $0x900] sm:$0xff]
    %v2991 = vld [vmem:[%s7 + $0x908] sm:$0xff]
    %v2992 = vld [vmem:[%s7 + $0x910] sm:$0xff]
    %v2993 = vld [vmem:[%s7 + $0x918] sm:$0xff]
    %v2994 = vld [vmem:[%s7 + $0x920] sm:$0xff]
    %v2995 = vld [vmem:[%s7 + $0x928] sm:$0xff]
    %v2996 = vld [vmem:[%s7 + $0x930] sm:$0xff]
    %v2997 = vld [vmem:[%s7 + $0x938] sm:$0xff]
    %v2998 = vld [vmem:[%s7 + $0x940] sm:$0xff]
    %v2999 = vld [vmem:[%s7 + $0x948] sm:$0xff]
    %v3000 = vld [vmem:[%s7 + $0x950] sm:$0xff]
    %v3001 = vld [vmem:[%s7 + $0x958] sm:$0xff]
    %v3002 = vld [vmem:[%s7 + $0x960] sm:$0xff]
    %v3003 = vld [vmem:[%s7 + $0x968] sm:$0xff]
    %v3004 = vld [vmem:[%s7 + $0x970] sm:$0xff]
    %v3005 = vld [vmem:[%s7 + $0x978] sm:$0xff]
    %v3006 = vld [vmem:[%s7 + $0x980] sm:$0xff]
    %v3007 = vld [vmem:[%s7 + $0x988] sm:$0xff]
    %v3008 = vld [vmem:[%s7 + $0x990] sm:$0xff]
    %v3009 = vld [vmem:[%s7 + $0x998] sm:$0xff]
    %v3010 = vld [vmem:[%s7 + $0x9a0] sm:$0xff]
    %v3011 = vld [vmem:[%s7 + $0x9a8] sm:$0xff]
    %v3012 = vld [vmem:[%s7 + $0x9b0] sm:$0xff]
    %v3013 = vld [vmem:[%s7 + $0x9b8] sm:$0xff]
    %v3014 = vld [vmem:[%s7 + $0x9c0] sm:$0xff]
    %v3015 = vld [vmem:[%s7 + $0x9c8] sm:$0xff]
    %v3016 = vld [vmem:[%s7 + $0x9d0] sm:$0xff]
    %v3017 = vld [vmem:[%s7 + $0x9d8] sm:$0xff]
    %v3018 = vld [vmem:[%s7 + $0x9e0] sm:$0xff]
    %v3019 = vld [vmem:[%s7 + $0x9e8] sm:$0xff]
    %v3020 = vld [vmem:[%s7 + $0x9f0] sm:$0xff]
    %v3021 = vld [vmem:[%s7 + $0x9f8] sm:$0xff]
    %v3022 = vld [vmem:[%s7 + $0xa00] sm:$0xff]
    %v3023 = vld [vmem:[%s7 + $0xa08] sm:$0xff]
    %v3024 = vld [vmem:[%s7 + $0xa10] sm:$0xff]
    %v3025 = vld [vmem:[%s7 + $0xa18] sm:$0xff]
    %v3026 = vld [vmem:[%s7 + $0xa20] sm:$0xff]
    %v3027 = vld [vmem:[%s7 + $0xa28] sm:$0xff]
    %v3028 = vld [vmem:[%s7 + $0xa30] sm:$0xff]
    %v3029 = vld [vmem:[%s7 + $0xa38] sm:$0xff]
    %v3030 = vld [vmem:[%s7 + $0xa40] sm:$0xff]
    %v3031 = vld [vmem:[%s7 + $0xa48] sm:$0xff]
    %v3032 = vld [vmem:[%s7 + $0xa50] sm:$0xff]
    %v3033 = vld [vmem:[%s7 + $0xa58] sm:$0xff]
    %v3034 = vld [vmem:[%s7 + $0xa60] sm:$0xff]
    %v3035 = vld [vmem:[%s7 + $0xa68] sm:$0xff]
    %v3036 = vld [vmem:[%s7 + $0xa70] sm:$0xff]
    %v3037 = vld [vmem:[%s7 + $0xa78] sm:$0xff]
    %v3038 = vld [vmem:[%s7 + $0xa80] sm:$0xff]
    %v3039 = vld [vmem:[%s7 + $0xa88] sm:$0xff]
    %v3040 = vld [vmem:[%s7 + $0xa90] sm:$0xff]
    %v3041 = vld [vmem:[%s7 + $0xa98] sm:$0xff]
    %v3042 = vld [vmem:[%s7 + $0xaa0] sm:$0xff]
    %v3043 = vld [vmem:[%s7 + $0xaa8] sm:$0xff]
    %v3044 = vld [vmem:[%s7 + $0xab0] sm:$0xff]
    %v3045 = vld [vmem:[%s7 + $0xab8] sm:$0xff]
    %v3046 = vld [vmem:[%s7 + $0xac0] sm:$0xff]
    %v3047 = vld [vmem:[%s7 + $0xac8] sm:$0xff]
    %v3048 = vld [vmem:[%s7 + $0xad0] sm:$0xff]
    %v3049 = vld [vmem:[%s7 + $0xad8] sm:$0xff]
    %v3050 = vld [vmem:[%s7 + $0xae0] sm:$0xff]
    %v3051 = vld [vmem:[%s7 + $0xae8] sm:$0xff]
    %v3052 = vld [vmem:[%s7 + $0xaf0] sm:$0xff]
    %v3053 = vld [vmem:[%s7 + $0xaf8] sm:$0xff]
    %v3054 = vld [vmem:[%s7 + $0xb00] sm:$0xff]
    %v3055 = vld [vmem:[%s7 + $0xb08] sm:$0xff]
    %v3056 = vld [vmem:[%s7 + $0xb10] sm:$0xff]
    %v3057 = vld [vmem:[%s7 + $0xb18] sm:$0xff]
    %v3058 = vld [vmem:[%s7 + $0xb20] sm:$0xff]
    %v3059 = vld [vmem:[%s7 + $0xb28] sm:$0xff]
    %v3060 = vld [vmem:[%s7 + $0xb30] sm:$0xff]
    %v3061 = vld [vmem:[%s7 + $0xb38] sm:$0xff]
    %v3062 = vld [vmem:[%s7 + $0xb40] sm:$0xff]
    %v3063 = vld [vmem:[%s7 + $0xb48] sm:$0xff]
    %v3064 = vld [vmem:[%s7 + $0xb50] sm:$0xff]
    %v3065 = vld [vmem:[%s7 + $0xb58] sm:$0xff]
    %v3066 = vld [vmem:[%s7 + $0xb60] sm:$0xff]
    %v3067 = vld [vmem:[%s7 + $0xb68] sm:$0xff]
    %v3068 = vld [vmem:[%s7 + $0xb70] sm:$0xff]
    %v3069 = vld [vmem:[%s7 + $0xb78] sm:$0xff]
    %v3070 = vld [vmem:[%s7 + $0xb80] sm:$0xff]
    %v3071 = vld [vmem:[%s7 + $0xb88] sm:$0xff]
    %v3072 = vld [vmem:[%s7 + $0xb90] sm:$0xff]
    %v3073 = vld [vmem:[%s7 + $0xb98] sm:$0xff]
    %v3074 = vld [vmem:[%s7 + $0xba0] sm:$0xff]
    %v3075 = vld [vmem:[%s7 + $0xba8] sm:$0xff]
    %v3076 = vld [vmem:[%s7 + $0xbb0] sm:$0xff]
    %v3077 = vld [vmem:[%s7 + $0xbb8] sm:$0xff]
    %v3078 = vld [vmem:[%s7 + $0xbc0] sm:$0xff]
    %v3079 = vld [vmem:[%s7 + $0xbc8] sm:$0xff]
    %v3080 = vld [vmem:[%s7 + $0xbd0] sm:$0xff]
    %v3081 = vld [vmem:[%s7 + $0xbd8] sm:$0xff]
    %v3082 = vld [vmem:[%s7 + $0xbe0] sm:$0xff]
    %v3083 = vld [vmem:[%s7 + $0xbe8] sm:$0xff]
    %v3084 = vld [vmem:[%s7 + $0xbf0] sm:$0xff]
    %v3085 = vld [vmem:[%s7 + $0xbf8] sm:$0xff]
    %v3086 = vld [vmem:[%s7 + $0xc00] sm:$0xff]
    %v3087 = vld [vmem:[%s7 + $0xc08] sm:$0xff]
    %v3088 = vld [vmem:[%s7 + $0xc10] sm:$0xff]
    %v3089 = vld [vmem:[%s7 + $0xc18] sm:$0xff]
    %v3090 = vld [vmem:[%s7 + $0xc20] sm:$0xff]
    %v3091 = vld [vmem:[%s7 + $0xc28] sm:$0xff]
    %v3092 = vld [vmem:[%s7 + $0xc30] sm:$0xff]
    %v3093 = vld [vmem:[%s7 + $0xc38] sm:$0xff]
    %v3094 = vld [vmem:[%s7 + $0xc40] sm:$0xff]
    %v3095 = vld [vmem:[%s7 + $0xc48] sm:$0xff]
    %v3096 = vld [vmem:[%s7 + $0xc50] sm:$0xff]
    %v3097 = vld [vmem:[%s7 + $0xc58] sm:$0xff]
    %v3098 = vld [vmem:[%s7 + $0xc60] sm:$0xff]
    %v3099 = vld [vmem:[%s7 + $0xc68] sm:$0xff]
    %v3100 = vld [vmem:[%s7 + $0xc70] sm:$0xff]
    %v3101 = vld [vmem:[%s7 + $0xc78] sm:$0xff]
    %v3102 = vld [vmem:[%s7 + $0xc80] sm:$0xff]
    %v3103 = vld [vmem:[%s7 + $0xc88] sm:$0xff]
    %v3104 = vld [vmem:[%s7 + $0xc90] sm:$0xff]
    %v3105 = vld [vmem:[%s7 + $0xc98] sm:$0xff]
    %v3106 = vld [vmem:[%s7 + $0xca0] sm:$0xff]
    %v3107 = vld [vmem:[%s7 + $0xca8] sm:$0xff]
    %v3108 = vld [vmem:[%s7 + $0xcb0] sm:$0xff]
    %v3109 = vld [vmem:[%s7 + $0xcb8] sm:$0xff]
    %v3110 = vld [vmem:[%s7 + $0xcc0] sm:$0xff]
    %v3111 = vld [vmem:[%s7 + $0xcc8] sm:$0xff]
    %v3112 = vld [vmem:[%s7 + $0xcd0] sm:$0xff]
    %v3113 = vld [vmem:[%s7 + $0xcd8] sm:$0xff]
    %v3114 = vld [vmem:[%s7 + $0xce0] sm:$0xff]
    %v3115 = vld [vmem:[%s7 + $0xce8] sm:$0xff]
    %v3116 = vld [vmem:[%s7 + $0xcf0] sm:$0xff]
    %v3117 = vld [vmem:[%s7 + $0xcf8] sm:$0xff]
    %v3118 = vld [vmem:[%s7 + $0xd00] sm:$0xff]
    %v3119 = vld [vmem:[%s7 + $0xd08] sm:$0xff]
    %v3120 = vld [vmem:[%s7 + $0xd10] sm:$0xff]
    %v3121 = vld [vmem:[%s7 + $0xd18] sm:$0xff]
    %v3122 = vld [vmem:[%s7 + $0xd20] sm:$0xff]
    %v3123 = vld [vmem:[%s7 + $0xd28] sm:$0xff]
    %v3124 = vld [vmem:[%s7 + $0xd30] sm:$0xff]
    %v3125 = vld [vmem:[%s7 + $0xd38] sm:$0xff]
    %v3126 = vld [vmem:[%s7 + $0xd40] sm:$0xff]
    %v3127 = vld [vmem:[%s7 + $0xd48] sm:$0xff]
    %v3128 = vld [vmem:[%s7 + $0xd50] sm:$0xff]
    %v3129 = vld [vmem:[%s7 + $0xd58] sm:$0xff]
    %v3130 = vld [vmem:[%s7 + $0xd60] sm:$0xff]
    %v3131 = vld [vmem:[%s7 + $0xd68] sm:$0xff]
    %v3132 = vld [vmem:[%s7 + $0xd70] sm:$0xff]
    %v3133 = vld [vmem:[%s7 + $0xd78] sm:$0xff]
    %v3134 = vld [vmem:[%s7 + $0xd80] sm:$0xff]
    %v3135 = vld [vmem:[%s7 + $0xd88] sm:$0xff]
    %v3136 = vld [vmem:[%s7 + $0xd90] sm:$0xff]
    %v3137 = vld [vmem:[%s7 + $0xd98] sm:$0xff]
    %v3138 = vld [vmem:[%s7 + $0xda0] sm:$0xff]
    %v3139 = vld [vmem:[%s7 + $0xda8] sm:$0xff]
    %v3140 = vld [vmem:[%s7 + $0xdb0] sm:$0xff]
    %v3141 = vld [vmem:[%s7 + $0xdb8] sm:$0xff]
    %v3142 = vld [vmem:[%s7 + $0xdc0] sm:$0xff]
    %v3143 = vld [vmem:[%s7 + $0xdc8] sm:$0xff]
    %v3144 = vld [vmem:[%s7 + $0xdd0] sm:$0xff]
    %v3145 = vld [vmem:[%s7 + $0xdd8] sm:$0xff]
    %v3146 = vld [vmem:[%s7 + $0xde0] sm:$0xff]
    %v3147 = vld [vmem:[%s7 + $0xde8] sm:$0xff]
    %v3148 = vld [vmem:[%s7 + $0xdf0] sm:$0xff]
    %v3149 = vld [vmem:[%s7 + $0xdf8] sm:$0xff]
    %v3150 = vld [vmem:[%s7 + $0xe00] sm:$0xff]
    %v3151 = vld [vmem:[%s7 + $0xe08] sm:$0xff]
    %v3152 = vld [vmem:[%s7 + $0xe10] sm:$0xff]
    %v3153 = vld [vmem:[%s7 + $0xe18] sm:$0xff]
    %v3154 = vld [vmem:[%s7 + $0xe20] sm:$0xff]
    %v3155 = vld [vmem:[%s7 + $0xe28] sm:$0xff]
    %v3156 = vld [vmem:[%s7 + $0xe30] sm:$0xff]
    %v3157 = vld [vmem:[%s7 + $0xe38] sm:$0xff]
    %v3158 = vld [vmem:[%s7 + $0xe40] sm:$0xff]
    %v3159 = vld [vmem:[%s7 + $0xe48] sm:$0xff]
    %v3160 = vld [vmem:[%s7 + $0xe50] sm:$0xff]
    %v3161 = vld [vmem:[%s7 + $0xe58] sm:$0xff]
    %v3162 = vld [vmem:[%s7 + $0xe60] sm:$0xff]
    %v3163 = vld [vmem:[%s7 + $0xe68] sm:$0xff]
    %v3164 = vld [vmem:[%s7 + $0xe70] sm:$0xff]
    %v3165 = vld [vmem:[%s7 + $0xe78] sm:$0xff]
    %v3166 = vld [vmem:[%s7 + $0xe80] sm:$0xff]
    %v3167 = vld [vmem:[%s7 + $0xe88] sm:$0xff]
    %v3168 = vld [vmem:[%s7 + $0xe90] sm:$0xff]
    %v3169 = vld [vmem:[%s7 + $0xe98] sm:$0xff]
    %v3170 = vld [vmem:[%s7 + $0xea0] sm:$0xff]
    %v3171 = vld [vmem:[%s7 + $0xea8] sm:$0xff]
    %v3172 = vld [vmem:[%s7 + $0xeb0] sm:$0xff]
    %v3173 = vld [vmem:[%s7 + $0xeb8] sm:$0xff]
    %v3174 = vld [vmem:[%s7 + $0xec0] sm:$0xff]
    %v3175 = vld [vmem:[%s7 + $0xec8] sm:$0xff]
    %v3176 = vld [vmem:[%s7 + $0xed0] sm:$0xff]
    %v3177 = vld [vmem:[%s7 + $0xed8] sm:$0xff]
    %v3178 = vld [vmem:[%s7 + $0xee0] sm:$0xff]
    %v3179 = vld [vmem:[%s7 + $0xee8] sm:$0xff]
    %v3180 = vld [vmem:[%s7 + $0xef0] sm:$0xff]
    %v3181 = vld [vmem:[%s7 + $0xef8] sm:$0xff]
    %v3182 = vld [vmem:[%s7 + $0xf00] sm:$0xff]
    %v3183 = vld [vmem:[%s7 + $0xf08] sm:$0xff]
    %v3184 = vld [vmem:[%s7 + $0xf10] sm:$0xff]
    %v3185 = vld [vmem:[%s7 + $0xf18] sm:$0xff]
    %v3186 = vld [vmem:[%s7 + $0xf20] sm:$0xff]
    %v3187 = vld [vmem:[%s7 + $0xf28] sm:$0xff]
    %v3188 = vld [vmem:[%s7 + $0xf30] sm:$0xff]
    %v3189 = vld [vmem:[%s7 + $0xf38] sm:$0xff]
    %v3190 = vld [vmem:[%s7 + $0xf40] sm:$0xff]
    %v3191 = vld [vmem:[%s7 + $0xf48] sm:$0xff]
    %v3192 = vld [vmem:[%s7 + $0xf50] sm:$0xff]
    %v3193 = vld [vmem:[%s7 + $0xf58] sm:$0xff]
    %v3194 = vld [vmem:[%s7 + $0xf60] sm:$0xff]
    %v3195 = vld [vmem:[%s7 + $0xf68] sm:$0xff]
    %v3196 = vld [vmem:[%s7 + $0xf70] sm:$0xff]
    %v3197 = vld [vmem:[%s7 + $0xf78] sm:$0xff]
    %v3198 = vld [vmem:[%s7 + $0xf80] sm:$0xff]
    %v3199 = vld [vmem:[%s7 + $0xf88] sm:$0xff]
    %v3200 = vld [vmem:[%s7 + $0xf90] sm:$0xff]
    %v3201 = vld [vmem:[%s7 + $0xf98] sm:$0xff]
    %v3202 = vld [vmem:[%s7 + $0xfa0] sm:$0xff]
    %v3203 = vld [vmem:[%s7 + $0xfa8] sm:$0xff]
    %v3204 = vld [vmem:[%s7 + $0xfb0] sm:$0xff]
    %v3205 = vld [vmem:[%s7 + $0xfb8] sm:$0xff]
    %v3206 = vld [vmem:[%s7 + $0xfc0] sm:$0xff]
    %v3207 = vld [vmem:[%s7 + $0xfc8] sm:$0xff]
    %v3208 = vld [vmem:[%s7 + $0xfd0] sm:$0xff]
    %v3209 = vld [vmem:[%s7 + $0xfd8] sm:$0xff]
    %v3210 = vld [vmem:[%s7 + $0xfe0] sm:$0xff]
    %v3211 = vld [vmem:[%s7 + $0xfe8] sm:$0xff]
    %v3212 = vld [vmem:[%s7 + $0xff0] sm:$0xff]
    %v3213 = vld [vmem:[%s7 + $0xff8] sm:$0xff]
    %v3214 = vunpack.c.l.s8.bf16 %v2702
    %v3215 = vunpack.c.l.s8.bf16 %v2703
    %v3216 = vunpack.c.l.s8.bf16 %v2704
    %v3217 = vunpack.c.l.s8.bf16 %v2705
    %v3218 = vunpack.c.l.s8.bf16 %v2706
    %v3219 = vunpack.c.l.s8.bf16 %v2707
    %v3220 = vunpack.c.l.s8.bf16 %v2708
    %v3221 = vunpack.c.l.s8.bf16 %v2709
    %v3222 = vunpack.c.l.s8.bf16 %v2710
    %v3223 = vunpack.c.l.s8.bf16 %v2711
    %v3224 = vunpack.c.l.s8.bf16 %v2712
    %v3225 = vunpack.c.l.s8.bf16 %v2713
    %v3226 = vunpack.c.l.s8.bf16 %v2714
    %v3227 = vunpack.c.l.s8.bf16 %v2715
    %v3228 = vunpack.c.l.s8.bf16 %v2716
    %v3229 = vunpack.c.l.s8.bf16 %v2717
    %v3230 = vunpack.c.h.s8.bf16 %v2702
    %v3231 = vunpack.c.h.s8.bf16 %v2703
    %v3232 = vunpack.c.h.s8.bf16 %v2704
    %v3233 = vunpack.c.h.s8.bf16 %v2705
    %v3234 = vunpack.c.h.s8.bf16 %v2706
    %v3235 = vunpack.c.h.s8.bf16 %v2707
    %v3236 = vunpack.c.h.s8.bf16 %v2708
    %v3237 = vunpack.c.h.s8.bf16 %v2709
    %v3238 = vunpack.c.h.s8.bf16 %v2710
    %v3239 = vunpack.c.h.s8.bf16 %v2711
    %v3240 = vunpack.c.h.s8.bf16 %v2712
    %v3241 = vunpack.c.h.s8.bf16 %v2713
    %v3242 = vunpack.c.h.s8.bf16 %v2714
    %v3243 = vunpack.c.h.s8.bf16 %v2715
    %v3244 = vunpack.c.h.s8.bf16 %v2716
    %v3245 = vunpack.c.h.s8.bf16 %v2717
    %v3246 = vunpack.c.l.s8.bf16 %v2718
    %v3247 = vunpack.c.l.s8.bf16 %v2719
    %v3248 = vunpack.c.l.s8.bf16 %v2720
    %v3249 = vunpack.c.l.s8.bf16 %v2721
    %v3250 = vunpack.c.l.s8.bf16 %v2722
    %v3251 = vunpack.c.l.s8.bf16 %v2723
    %v3252 = vunpack.c.l.s8.bf16 %v2724
    %v3253 = vunpack.c.l.s8.bf16 %v2725
    %v3254 = vunpack.c.l.s8.bf16 %v2726
    %v3255 = vunpack.c.l.s8.bf16 %v2727
    %v3256 = vunpack.c.l.s8.bf16 %v2728
    %v3257 = vunpack.c.l.s8.bf16 %v2729
    %v3258 = vunpack.c.l.s8.bf16 %v2730
    %v3259 = vunpack.c.l.s8.bf16 %v2731
    %v3260 = vunpack.c.l.s8.bf16 %v2732
    %v3261 = vunpack.c.l.s8.bf16 %v2733
    %v3262 = vunpack.c.h.s8.bf16 %v2718
    %v3263 = vunpack.c.h.s8.bf16 %v2719
    %v3264 = vunpack.c.h.s8.bf16 %v2720
    %v3265 = vunpack.c.h.s8.bf16 %v2721
    %v3266 = vunpack.c.h.s8.bf16 %v2722
    %v3267 = vunpack.c.h.s8.bf16 %v2723
    %v3268 = vunpack.c.h.s8.bf16 %v2724
    %v3269 = vunpack.c.h.s8.bf16 %v2725
    %v3270 = vunpack.c.h.s8.bf16 %v2726
    %v3271 = vunpack.c.h.s8.bf16 %v2727
    %v3272 = vunpack.c.h.s8.bf16 %v2728
    %v3273 = vunpack.c.h.s8.bf16 %v2729
    %v3274 = vunpack.c.h.s8.bf16 %v2730
    %v3275 = vunpack.c.h.s8.bf16 %v2731
    %v3276 = vunpack.c.h.s8.bf16 %v2732
    %v3277 = vunpack.c.h.s8.bf16 %v2733
    %v3278 = vunpack.c.l.s8.bf16 %v2734
    %v3279 = vunpack.c.l.s8.bf16 %v2735
    %v3280 = vunpack.c.l.s8.bf16 %v2736
    %v3281 = vunpack.c.l.s8.bf16 %v2737
    %v3282 = vunpack.c.l.s8.bf16 %v2738
    %v3283 = vunpack.c.l.s8.bf16 %v2739
    %v3284 = vunpack.c.l.s8.bf16 %v2740
    %v3285 = vunpack.c.l.s8.bf16 %v2741
    %v3286 = vunpack.c.l.s8.bf16 %v2742
    %v3287 = vunpack.c.l.s8.bf16 %v2743
    %v3288 = vunpack.c.l.s8.bf16 %v2744
    %v3289 = vunpack.c.l.s8.bf16 %v2745
    %v3290 = vunpack.c.l.s8.bf16 %v2746
    %v3291 = vunpack.c.l.s8.bf16 %v2747
    %v3292 = vunpack.c.l.s8.bf16 %v2748
    %v3293 = vunpack.c.l.s8.bf16 %v2749
    %v3294 = vunpack.c.h.s8.bf16 %v2734
    %v3295 = vunpack.c.h.s8.bf16 %v2735
    %v3296 = vunpack.c.h.s8.bf16 %v2736
    %v3297 = vunpack.c.h.s8.bf16 %v2737
    %v3298 = vunpack.c.h.s8.bf16 %v2738
    %v3299 = vunpack.c.h.s8.bf16 %v2739
    %v3300 = vunpack.c.h.s8.bf16 %v2740
    %v3301 = vunpack.c.h.s8.bf16 %v2741
    %v3302 = vunpack.c.h.s8.bf16 %v2742
    %v3303 = vunpack.c.h.s8.bf16 %v2743
    %v3304 = vunpack.c.h.s8.bf16 %v2744
    %v3305 = vunpack.c.h.s8.bf16 %v2745
    %v3306 = vunpack.c.h.s8.bf16 %v2746
    %v3307 = vunpack.c.h.s8.bf16 %v2747
    %v3308 = vunpack.c.h.s8.bf16 %v2748
    %v3309 = vunpack.c.h.s8.bf16 %v2749
    %v3310 = vunpack.c.l.s8.bf16 %v2750
    %v3311 = vunpack.c.l.s8.bf16 %v2751
    %v3312 = vunpack.c.l.s8.bf16 %v2752
    %v3313 = vunpack.c.l.s8.bf16 %v2753
    %v3314 = vunpack.c.l.s8.bf16 %v2754
    %v3315 = vunpack.c.l.s8.bf16 %v2755
    %v3316 = vunpack.c.l.s8.bf16 %v2756
    %v3317 = vunpack.c.l.s8.bf16 %v2757
    %v3318 = vunpack.c.l.s8.bf16 %v2758
    %v3319 = vunpack.c.l.s8.bf16 %v2759
    %v3320 = vunpack.c.l.s8.bf16 %v2760
    %v3321 = vunpack.c.l.s8.bf16 %v2761
    %v3322 = vunpack.c.l.s8.bf16 %v2762
    %v3323 = vunpack.c.l.s8.bf16 %v2763
    %v3324 = vunpack.c.l.s8.bf16 %v2764
    %v3325 = vunpack.c.l.s8.bf16 %v2765
    %v3326 = vunpack.c.h.s8.bf16 %v2750
    %v3327 = vunpack.c.h.s8.bf16 %v2751
    %v3328 = vunpack.c.h.s8.bf16 %v2752
    %v3329 = vunpack.c.h.s8.bf16 %v2753
    %v3330 = vunpack.c.h.s8.bf16 %v2754
    %v3331 = vunpack.c.h.s8.bf16 %v2755
    %v3332 = vunpack.c.h.s8.bf16 %v2756
    %v3333 = vunpack.c.h.s8.bf16 %v2757
    %v3334 = vunpack.c.h.s8.bf16 %v2758
    %v3335 = vunpack.c.h.s8.bf16 %v2759
    %v3336 = vunpack.c.h.s8.bf16 %v2760
    %v3337 = vunpack.c.h.s8.bf16 %v2761
    %v3338 = vunpack.c.h.s8.bf16 %v2762
    %v3339 = vunpack.c.h.s8.bf16 %v2763
    %v3340 = vunpack.c.h.s8.bf16 %v2764
    %v3341 = vunpack.c.h.s8.bf16 %v2765
    %v3342 = vunpack.c.l.s8.bf16 %v2766
    %v3343 = vunpack.c.l.s8.bf16 %v2767
    %v3344 = vunpack.c.l.s8.bf16 %v2768
    %v3345 = vunpack.c.l.s8.bf16 %v2769
    %v3346 = vunpack.c.l.s8.bf16 %v2770
    %v3347 = vunpack.c.l.s8.bf16 %v2771
    %v3348 = vunpack.c.l.s8.bf16 %v2772
    %v3349 = vunpack.c.l.s8.bf16 %v2773
    %v3350 = vunpack.c.l.s8.bf16 %v2774
    %v3351 = vunpack.c.l.s8.bf16 %v2775
    %v3352 = vunpack.c.l.s8.bf16 %v2776
    %v3353 = vunpack.c.l.s8.bf16 %v2777
    %v3354 = vunpack.c.l.s8.bf16 %v2778
    %v3355 = vunpack.c.l.s8.bf16 %v2779
    %v3356 = vunpack.c.l.s8.bf16 %v2780
    %v3357 = vunpack.c.l.s8.bf16 %v2781
    %v3358 = vunpack.c.h.s8.bf16 %v2766
    %v3359 = vunpack.c.h.s8.bf16 %v2767
    %v3360 = vunpack.c.h.s8.bf16 %v2768
    %v3361 = vunpack.c.h.s8.bf16 %v2769
    %v3362 = vunpack.c.h.s8.bf16 %v2770
    %v3363 = vunpack.c.h.s8.bf16 %v2771
    %v3364 = vunpack.c.h.s8.bf16 %v2772
    %v3365 = vunpack.c.h.s8.bf16 %v2773
    %v3366 = vunpack.c.h.s8.bf16 %v2774
    %v3367 = vunpack.c.h.s8.bf16 %v2775
    %v3368 = vunpack.c.h.s8.bf16 %v2776
    %v3369 = vunpack.c.h.s8.bf16 %v2777
    %v3370 = vunpack.c.h.s8.bf16 %v2778
    %v3371 = vunpack.c.h.s8.bf16 %v2779
    %v3372 = vunpack.c.h.s8.bf16 %v2780
    %v3373 = vunpack.c.h.s8.bf16 %v2781
    %v3374 = vunpack.c.l.s8.bf16 %v2782
    %v3375 = vunpack.c.l.s8.bf16 %v2783
    %v3376 = vunpack.c.l.s8.bf16 %v2784
    %v3377 = vunpack.c.l.s8.bf16 %v2785
    %v3378 = vunpack.c.l.s8.bf16 %v2786
    %v3379 = vunpack.c.l.s8.bf16 %v2787
    %v3380 = vunpack.c.l.s8.bf16 %v2788
    %v3381 = vunpack.c.l.s8.bf16 %v2789
    %v3382 = vunpack.c.l.s8.bf16 %v2790
    %v3383 = vunpack.c.l.s8.bf16 %v2791
    %v3384 = vunpack.c.l.s8.bf16 %v2792
    %v3385 = vunpack.c.l.s8.bf16 %v2793
    %v3386 = vunpack.c.l.s8.bf16 %v2794
    %v3387 = vunpack.c.l.s8.bf16 %v2795
    %v3388 = vunpack.c.l.s8.bf16 %v2796
    %v3389 = vunpack.c.l.s8.bf16 %v2797
    %v3390 = vunpack.c.h.s8.bf16 %v2782
    %v3391 = vunpack.c.h.s8.bf16 %v2783
    %v3392 = vunpack.c.h.s8.bf16 %v2784
    %v3393 = vunpack.c.h.s8.bf16 %v2785
    %v3394 = vunpack.c.h.s8.bf16 %v2786
    %v3395 = vunpack.c.h.s8.bf16 %v2787
    %v3396 = vunpack.c.h.s8.bf16 %v2788
    %v3397 = vunpack.c.h.s8.bf16 %v2789
    %v3398 = vunpack.c.h.s8.bf16 %v2790
    %v3399 = vunpack.c.h.s8.bf16 %v2791
    %v3400 = vunpack.c.h.s8.bf16 %v2792
    %v3401 = vunpack.c.h.s8.bf16 %v2793
    %v3402 = vunpack.c.h.s8.bf16 %v2794
    %v3403 = vunpack.c.h.s8.bf16 %v2795
    %v3404 = vunpack.c.h.s8.bf16 %v2796
    %v3405 = vunpack.c.h.s8.bf16 %v2797
    %v3406 = vunpack.c.l.s8.bf16 %v2798
    %v3407 = vunpack.c.l.s8.bf16 %v2799
    %v3408 = vunpack.c.l.s8.bf16 %v2800
    %v3409 = vunpack.c.l.s8.bf16 %v2801
    %v3410 = vunpack.c.l.s8.bf16 %v2802
    %v3411 = vunpack.c.l.s8.bf16 %v2803
    %v3412 = vunpack.c.l.s8.bf16 %v2804
    %v3413 = vunpack.c.l.s8.bf16 %v2805
    %v3414 = vunpack.c.l.s8.bf16 %v2806
    %v3415 = vunpack.c.l.s8.bf16 %v2807
    %v3416 = vunpack.c.l.s8.bf16 %v2808
    %v3417 = vunpack.c.l.s8.bf16 %v2809
    %v3418 = vunpack.c.l.s8.bf16 %v2810
    %v3419 = vunpack.c.l.s8.bf16 %v2811
    %v3420 = vunpack.c.l.s8.bf16 %v2812
    %v3421 = vunpack.c.l.s8.bf16 %v2813
    %v3422 = vunpack.c.h.s8.bf16 %v2798
    %v3423 = vunpack.c.h.s8.bf16 %v2799
    %v3424 = vunpack.c.h.s8.bf16 %v2800
    %v3425 = vunpack.c.h.s8.bf16 %v2801
    %v3426 = vunpack.c.h.s8.bf16 %v2802
    %v3427 = vunpack.c.h.s8.bf16 %v2803
    %v3428 = vunpack.c.h.s8.bf16 %v2804
    %v3429 = vunpack.c.h.s8.bf16 %v2805
    %v3430 = vunpack.c.h.s8.bf16 %v2806
    %v3431 = vunpack.c.h.s8.bf16 %v2807
    %v3432 = vunpack.c.h.s8.bf16 %v2808
    %v3433 = vunpack.c.h.s8.bf16 %v2809
    %v3434 = vunpack.c.h.s8.bf16 %v2810
    %v3435 = vunpack.c.h.s8.bf16 %v2811
    %v3436 = vunpack.c.h.s8.bf16 %v2812
    %v3437 = vunpack.c.h.s8.bf16 %v2813
    %v3438 = vunpack.c.l.s8.bf16 %v2814
    %v3439 = vunpack.c.l.s8.bf16 %v2815
    %v3440 = vunpack.c.l.s8.bf16 %v2816
    %v3441 = vunpack.c.l.s8.bf16 %v2817
    %v3442 = vunpack.c.l.s8.bf16 %v2818
    %v3443 = vunpack.c.l.s8.bf16 %v2819
    %v3444 = vunpack.c.l.s8.bf16 %v2820
    %v3445 = vunpack.c.l.s8.bf16 %v2821
    %v3446 = vunpack.c.l.s8.bf16 %v2822
    %v3447 = vunpack.c.l.s8.bf16 %v2823
    %v3448 = vunpack.c.l.s8.bf16 %v2824
    %v3449 = vunpack.c.l.s8.bf16 %v2825
    %v3450 = vunpack.c.l.s8.bf16 %v2826
    %v3451 = vunpack.c.l.s8.bf16 %v2827
    %v3452 = vunpack.c.l.s8.bf16 %v2828
    %v3453 = vunpack.c.l.s8.bf16 %v2829
    %v3454 = vunpack.c.h.s8.bf16 %v2814
    %v3455 = vunpack.c.h.s8.bf16 %v2815
    %v3456 = vunpack.c.h.s8.bf16 %v2816
    %v3457 = vunpack.c.h.s8.bf16 %v2817
    %v3458 = vunpack.c.h.s8.bf16 %v2818
    %v3459 = vunpack.c.h.s8.bf16 %v2819
    %v3460 = vunpack.c.h.s8.bf16 %v2820
    %v3461 = vunpack.c.h.s8.bf16 %v2821
    %v3462 = vunpack.c.h.s8.bf16 %v2822
    %v3463 = vunpack.c.h.s8.bf16 %v2823
    %v3464 = vunpack.c.h.s8.bf16 %v2824
    %v3465 = vunpack.c.h.s8.bf16 %v2825
    %v3466 = vunpack.c.h.s8.bf16 %v2826
    %v3467 = vunpack.c.h.s8.bf16 %v2827
    %v3468 = vunpack.c.h.s8.bf16 %v2828
    %v3469 = vunpack.c.h.s8.bf16 %v2829
    %v3470 = vunpack.c.l.s8.bf16 %v2830
    %v3471 = vunpack.c.l.s8.bf16 %v2831
    %v3472 = vunpack.c.l.s8.bf16 %v2832
    %v3473 = vunpack.c.l.s8.bf16 %v2833
    %v3474 = vunpack.c.l.s8.bf16 %v2834
    %v3475 = vunpack.c.l.s8.bf16 %v2835
    %v3476 = vunpack.c.l.s8.bf16 %v2836
    %v3477 = vunpack.c.l.s8.bf16 %v2837
    %v3478 = vunpack.c.l.s8.bf16 %v2838
    %v3479 = vunpack.c.l.s8.bf16 %v2839
    %v3480 = vunpack.c.l.s8.bf16 %v2840
    %v3481 = vunpack.c.l.s8.bf16 %v2841
    %v3482 = vunpack.c.l.s8.bf16 %v2842
    %v3483 = vunpack.c.l.s8.bf16 %v2843
    %v3484 = vunpack.c.l.s8.bf16 %v2844
    %v3485 = vunpack.c.l.s8.bf16 %v2845
    %v3486 = vunpack.c.h.s8.bf16 %v2830
    %v3487 = vunpack.c.h.s8.bf16 %v2831
    %v3488 = vunpack.c.h.s8.bf16 %v2832
    %v3489 = vunpack.c.h.s8.bf16 %v2833
    %v3490 = vunpack.c.h.s8.bf16 %v2834
    %v3491 = vunpack.c.h.s8.bf16 %v2835
    %v3492 = vunpack.c.h.s8.bf16 %v2836
    %v3493 = vunpack.c.h.s8.bf16 %v2837
    %v3494 = vunpack.c.h.s8.bf16 %v2838
    %v3495 = vunpack.c.h.s8.bf16 %v2839
    %v3496 = vunpack.c.h.s8.bf16 %v2840
    %v3497 = vunpack.c.h.s8.bf16 %v2841
    %v3498 = vunpack.c.h.s8.bf16 %v2842
    %v3499 = vunpack.c.h.s8.bf16 %v2843
    %v3500 = vunpack.c.h.s8.bf16 %v2844
    %v3501 = vunpack.c.h.s8.bf16 %v2845
    %v3502 = vunpack.c.l.s8.bf16 %v2846
    %v3503 = vunpack.c.l.s8.bf16 %v2847
    %v3504 = vunpack.c.l.s8.bf16 %v2848
    %v3505 = vunpack.c.l.s8.bf16 %v2849
    %v3506 = vunpack.c.l.s8.bf16 %v2850
    %v3507 = vunpack.c.l.s8.bf16 %v2851
    %v3508 = vunpack.c.l.s8.bf16 %v2852
    %v3509 = vunpack.c.l.s8.bf16 %v2853
    %v3510 = vunpack.c.l.s8.bf16 %v2854
    %v3511 = vunpack.c.l.s8.bf16 %v2855
    %v3512 = vunpack.c.l.s8.bf16 %v2856
    %v3513 = vunpack.c.l.s8.bf16 %v2857
    %v3514 = vunpack.c.l.s8.bf16 %v2858
    %v3515 = vunpack.c.l.s8.bf16 %v2859
    %v3516 = vunpack.c.l.s8.bf16 %v2860
    %v3517 = vunpack.c.l.s8.bf16 %v2861
    %v3518 = vunpack.c.h.s8.bf16 %v2846
    %v3519 = vunpack.c.h.s8.bf16 %v2847
    %v3520 = vunpack.c.h.s8.bf16 %v2848
    %v3521 = vunpack.c.h.s8.bf16 %v2849
    %v3522 = vunpack.c.h.s8.bf16 %v2850
    %v3523 = vunpack.c.h.s8.bf16 %v2851
    %v3524 = vunpack.c.h.s8.bf16 %v2852
    %v3525 = vunpack.c.h.s8.bf16 %v2853
    %v3526 = vunpack.c.h.s8.bf16 %v2854
    %v3527 = vunpack.c.h.s8.bf16 %v2855
    %v3528 = vunpack.c.h.s8.bf16 %v2856
    %v3529 = vunpack.c.h.s8.bf16 %v2857
    %v3530 = vunpack.c.h.s8.bf16 %v2858
    %v3531 = vunpack.c.h.s8.bf16 %v2859
    %v3532 = vunpack.c.h.s8.bf16 %v2860
    %v3533 = vunpack.c.h.s8.bf16 %v2861
    %v3534 = vunpack.c.l.s8.bf16 %v2862
    %v3535 = vunpack.c.l.s8.bf16 %v2863
    %v3536 = vunpack.c.l.s8.bf16 %v2864
    %v3537 = vunpack.c.l.s8.bf16 %v2865
    %v3538 = vunpack.c.l.s8.bf16 %v2866
    %v3539 = vunpack.c.l.s8.bf16 %v2867
    %v3540 = vunpack.c.l.s8.bf16 %v2868
    %v3541 = vunpack.c.l.s8.bf16 %v2869
    %v3542 = vunpack.c.l.s8.bf16 %v2870
    %v3543 = vunpack.c.l.s8.bf16 %v2871
    %v3544 = vunpack.c.l.s8.bf16 %v2872
    %v3545 = vunpack.c.l.s8.bf16 %v2873
    %v3546 = vunpack.c.l.s8.bf16 %v2874
    %v3547 = vunpack.c.l.s8.bf16 %v2875
    %v3548 = vunpack.c.l.s8.bf16 %v2876
    %v3549 = vunpack.c.l.s8.bf16 %v2877
    %v3550 = vunpack.c.h.s8.bf16 %v2862
    %v3551 = vunpack.c.h.s8.bf16 %v2863
    %v3552 = vunpack.c.h.s8.bf16 %v2864
    %v3553 = vunpack.c.h.s8.bf16 %v2865
    %v3554 = vunpack.c.h.s8.bf16 %v2866
    %v3555 = vunpack.c.h.s8.bf16 %v2867
    %v3556 = vunpack.c.h.s8.bf16 %v2868
    %v3557 = vunpack.c.h.s8.bf16 %v2869
    %v3558 = vunpack.c.h.s8.bf16 %v2870
    %v3559 = vunpack.c.h.s8.bf16 %v2871
    %v3560 = vunpack.c.h.s8.bf16 %v2872
    %v3561 = vunpack.c.h.s8.bf16 %v2873
    %v3562 = vunpack.c.h.s8.bf16 %v2874
    %v3563 = vunpack.c.h.s8.bf16 %v2875
    %v3564 = vunpack.c.h.s8.bf16 %v2876
    %v3565 = vunpack.c.h.s8.bf16 %v2877
    %v3566 = vunpack.c.l.s8.bf16 %v2878
    %v3567 = vunpack.c.l.s8.bf16 %v2879
    %v3568 = vunpack.c.l.s8.bf16 %v2880
    %v3569 = vunpack.c.l.s8.bf16 %v2881
    %v3570 = vunpack.c.l.s8.bf16 %v2882
    %v3571 = vunpack.c.l.s8.bf16 %v2883
    %v3572 = vunpack.c.l.s8.bf16 %v2884
    %v3573 = vunpack.c.l.s8.bf16 %v2885
    %v3574 = vunpack.c.l.s8.bf16 %v2886
    %v3575 = vunpack.c.l.s8.bf16 %v2887
    %v3576 = vunpack.c.l.s8.bf16 %v2888
    %v3577 = vunpack.c.l.s8.bf16 %v2889
    %v3578 = vunpack.c.l.s8.bf16 %v2890
    %v3579 = vunpack.c.l.s8.bf16 %v2891
    %v3580 = vunpack.c.l.s8.bf16 %v2892
    %v3581 = vunpack.c.l.s8.bf16 %v2893
    %v3582 = vunpack.c.h.s8.bf16 %v2878
    %v3583 = vunpack.c.h.s8.bf16 %v2879
    %v3584 = vunpack.c.h.s8.bf16 %v2880
    %v3585 = vunpack.c.h.s8.bf16 %v2881
    %v3586 = vunpack.c.h.s8.bf16 %v2882
    %v3587 = vunpack.c.h.s8.bf16 %v2883
    %v3588 = vunpack.c.h.s8.bf16 %v2884
    %v3589 = vunpack.c.h.s8.bf16 %v2885
    %v3590 = vunpack.c.h.s8.bf16 %v2886
    %v3591 = vunpack.c.h.s8.bf16 %v2887
    %v3592 = vunpack.c.h.s8.bf16 %v2888
    %v3593 = vunpack.c.h.s8.bf16 %v2889
    %v3594 = vunpack.c.h.s8.bf16 %v2890
    %v3595 = vunpack.c.h.s8.bf16 %v2891
    %v3596 = vunpack.c.h.s8.bf16 %v2892
    %v3597 = vunpack.c.h.s8.bf16 %v2893
    %v3598 = vunpack.c.l.s8.bf16 %v2894
    %v3599 = vunpack.c.l.s8.bf16 %v2895
    %v3600 = vunpack.c.l.s8.bf16 %v2896
    %v3601 = vunpack.c.l.s8.bf16 %v2897
    %v3602 = vunpack.c.l.s8.bf16 %v2898
    %v3603 = vunpack.c.l.s8.bf16 %v2899
    %v3604 = vunpack.c.l.s8.bf16 %v2900
    %v3605 = vunpack.c.l.s8.bf16 %v2901
    %v3606 = vunpack.c.l.s8.bf16 %v2902
    %v3607 = vunpack.c.l.s8.bf16 %v2903
    %v3608 = vunpack.c.l.s8.bf16 %v2904
    %v3609 = vunpack.c.l.s8.bf16 %v2905
    %v3610 = vunpack.c.l.s8.bf16 %v2906
    %v3611 = vunpack.c.l.s8.bf16 %v2907
    %v3612 = vunpack.c.l.s8.bf16 %v2908
    %v3613 = vunpack.c.l.s8.bf16 %v2909
    %v3614 = vunpack.c.h.s8.bf16 %v2894
    %v3615 = vunpack.c.h.s8.bf16 %v2895
    %v3616 = vunpack.c.h.s8.bf16 %v2896
    %v3617 = vunpack.c.h.s8.bf16 %v2897
    %v3618 = vunpack.c.h.s8.bf16 %v2898
    %v3619 = vunpack.c.h.s8.bf16 %v2899
    %v3620 = vunpack.c.h.s8.bf16 %v2900
    %v3621 = vunpack.c.h.s8.bf16 %v2901
    %v3622 = vunpack.c.h.s8.bf16 %v2902
    %v3623 = vunpack.c.h.s8.bf16 %v2903
    %v3624 = vunpack.c.h.s8.bf16 %v2904
    %v3625 = vunpack.c.h.s8.bf16 %v2905
    %v3626 = vunpack.c.h.s8.bf16 %v2906
    %v3627 = vunpack.c.h.s8.bf16 %v2907
    %v3628 = vunpack.c.h.s8.bf16 %v2908
    %v3629 = vunpack.c.h.s8.bf16 %v2909
    %v3630 = vunpack.c.l.s8.bf16 %v2910
    %v3631 = vunpack.c.l.s8.bf16 %v2911
    %v3632 = vunpack.c.l.s8.bf16 %v2912
    %v3633 = vunpack.c.l.s8.bf16 %v2913
    %v3634 = vunpack.c.l.s8.bf16 %v2914
    %v3635 = vunpack.c.l.s8.bf16 %v2915
    %v3636 = vunpack.c.l.s8.bf16 %v2916
    %v3637 = vunpack.c.l.s8.bf16 %v2917
    %v3638 = vunpack.c.l.s8.bf16 %v2918
    %v3639 = vunpack.c.l.s8.bf16 %v2919
    %v3640 = vunpack.c.l.s8.bf16 %v2920
    %v3641 = vunpack.c.l.s8.bf16 %v2921
    %v3642 = vunpack.c.l.s8.bf16 %v2922
    %v3643 = vunpack.c.l.s8.bf16 %v2923
    %v3644 = vunpack.c.l.s8.bf16 %v2924
    %v3645 = vunpack.c.l.s8.bf16 %v2925
    %v3646 = vunpack.c.h.s8.bf16 %v2910
    %v3647 = vunpack.c.h.s8.bf16 %v2911
    %v3648 = vunpack.c.h.s8.bf16 %v2912
    %v3649 = vunpack.c.h.s8.bf16 %v2913
    %v3650 = vunpack.c.h.s8.bf16 %v2914
    %v3651 = vunpack.c.h.s8.bf16 %v2915
    %v3652 = vunpack.c.h.s8.bf16 %v2916
    %v3653 = vunpack.c.h.s8.bf16 %v2917
    %v3654 = vunpack.c.h.s8.bf16 %v2918
    %v3655 = vunpack.c.h.s8.bf16 %v2919
    %v3656 = vunpack.c.h.s8.bf16 %v2920
    %v3657 = vunpack.c.h.s8.bf16 %v2921
    %v3658 = vunpack.c.h.s8.bf16 %v2922
    %v3659 = vunpack.c.h.s8.bf16 %v2923
    %v3660 = vunpack.c.h.s8.bf16 %v2924
    %v3661 = vunpack.c.h.s8.bf16 %v2925
    %v3662 = vunpack.c.l.s8.bf16 %v2926
    %v3663 = vunpack.c.l.s8.bf16 %v2927
    %v3664 = vunpack.c.l.s8.bf16 %v2928
    %v3665 = vunpack.c.l.s8.bf16 %v2929
    %v3666 = vunpack.c.l.s8.bf16 %v2930
    %v3667 = vunpack.c.l.s8.bf16 %v2931
    %v3668 = vunpack.c.l.s8.bf16 %v2932
    %v3669 = vunpack.c.l.s8.bf16 %v2933
    %v3670 = vunpack.c.l.s8.bf16 %v2934
    %v3671 = vunpack.c.l.s8.bf16 %v2935
    %v3672 = vunpack.c.l.s8.bf16 %v2936
    %v3673 = vunpack.c.l.s8.bf16 %v2937
    %v3674 = vunpack.c.l.s8.bf16 %v2938
    %v3675 = vunpack.c.l.s8.bf16 %v2939
    %v3676 = vunpack.c.l.s8.bf16 %v2940
    %v3677 = vunpack.c.l.s8.bf16 %v2941
    %v3678 = vunpack.c.h.s8.bf16 %v2926
    %v3679 = vunpack.c.h.s8.bf16 %v2927
    %v3680 = vunpack.c.h.s8.bf16 %v2928
    %v3681 = vunpack.c.h.s8.bf16 %v2929
    %v3682 = vunpack.c.h.s8.bf16 %v2930
    %v3683 = vunpack.c.h.s8.bf16 %v2931
    %v3684 = vunpack.c.h.s8.bf16 %v2932
    %v3685 = vunpack.c.h.s8.bf16 %v2933
    %v3686 = vunpack.c.h.s8.bf16 %v2934
    %v3687 = vunpack.c.h.s8.bf16 %v2935
    %v3688 = vunpack.c.h.s8.bf16 %v2936
    %v3689 = vunpack.c.h.s8.bf16 %v2937
    %v3690 = vunpack.c.h.s8.bf16 %v2938
    %v3691 = vunpack.c.h.s8.bf16 %v2939
    %v3692 = vunpack.c.h.s8.bf16 %v2940
    %v3693 = vunpack.c.h.s8.bf16 %v2941
    %v3694 = vunpack.c.l.s8.bf16 %v2942
    %v3695 = vunpack.c.l.s8.bf16 %v2943
    %v3696 = vunpack.c.l.s8.bf16 %v2944
    %v3697 = vunpack.c.l.s8.bf16 %v2945
    %v3698 = vunpack.c.l.s8.bf16 %v2946
    %v3699 = vunpack.c.l.s8.bf16 %v2947
    %v3700 = vunpack.c.l.s8.bf16 %v2948
    %v3701 = vunpack.c.l.s8.bf16 %v2949
    %v3702 = vunpack.c.l.s8.bf16 %v2950
    %v3703 = vunpack.c.l.s8.bf16 %v2951
    %v3704 = vunpack.c.l.s8.bf16 %v2952
    %v3705 = vunpack.c.l.s8.bf16 %v2953
    %v3706 = vunpack.c.l.s8.bf16 %v2954
    %v3707 = vunpack.c.l.s8.bf16 %v2955
    %v3708 = vunpack.c.l.s8.bf16 %v2956
    %v3709 = vunpack.c.l.s8.bf16 %v2957
    %v3710 = vunpack.c.h.s8.bf16 %v2942
    %v3711 = vunpack.c.h.s8.bf16 %v2943
    %v3712 = vunpack.c.h.s8.bf16 %v2944
    %v3713 = vunpack.c.h.s8.bf16 %v2945
    %v3714 = vunpack.c.h.s8.bf16 %v2946
    %v3715 = vunpack.c.h.s8.bf16 %v2947
    %v3716 = vunpack.c.h.s8.bf16 %v2948
    %v3717 = vunpack.c.h.s8.bf16 %v2949
    %v3718 = vunpack.c.h.s8.bf16 %v2950
    %v3719 = vunpack.c.h.s8.bf16 %v2951
    %v3720 = vunpack.c.h.s8.bf16 %v2952
    %v3721 = vunpack.c.h.s8.bf16 %v2953
    %v3722 = vunpack.c.h.s8.bf16 %v2954
    %v3723 = vunpack.c.h.s8.bf16 %v2955
    %v3724 = vunpack.c.h.s8.bf16 %v2956
    %v3725 = vunpack.c.h.s8.bf16 %v2957
    %v3726 = vunpack.c.l.s8.bf16 %v2958
    %v3727 = vunpack.c.l.s8.bf16 %v2959
    %v3728 = vunpack.c.l.s8.bf16 %v2960
    %v3729 = vunpack.c.l.s8.bf16 %v2961
    %v3730 = vunpack.c.l.s8.bf16 %v2962
    %v3731 = vunpack.c.l.s8.bf16 %v2963
    %v3732 = vunpack.c.l.s8.bf16 %v2964
    %v3733 = vunpack.c.l.s8.bf16 %v2965
    %v3734 = vunpack.c.l.s8.bf16 %v2966
    %v3735 = vunpack.c.l.s8.bf16 %v2967
    %v3736 = vunpack.c.l.s8.bf16 %v2968
    %v3737 = vunpack.c.l.s8.bf16 %v2969
    %v3738 = vunpack.c.l.s8.bf16 %v2970
    %v3739 = vunpack.c.l.s8.bf16 %v2971
    %v3740 = vunpack.c.l.s8.bf16 %v2972
    %v3741 = vunpack.c.l.s8.bf16 %v2973
    %v3742 = vunpack.c.h.s8.bf16 %v2958
    %v3743 = vunpack.c.h.s8.bf16 %v2959
    %v3744 = vunpack.c.h.s8.bf16 %v2960
    %v3745 = vunpack.c.h.s8.bf16 %v2961
    %v3746 = vunpack.c.h.s8.bf16 %v2962
    %v3747 = vunpack.c.h.s8.bf16 %v2963
    %v3748 = vunpack.c.h.s8.bf16 %v2964
    %v3749 = vunpack.c.h.s8.bf16 %v2965
    %v3750 = vunpack.c.h.s8.bf16 %v2966
    %v3751 = vunpack.c.h.s8.bf16 %v2967
    %v3752 = vunpack.c.h.s8.bf16 %v2968
    %v3753 = vunpack.c.h.s8.bf16 %v2969
    %v3754 = vunpack.c.h.s8.bf16 %v2970
    %v3755 = vunpack.c.h.s8.bf16 %v2971
    %v3756 = vunpack.c.h.s8.bf16 %v2972
    %v3757 = vunpack.c.h.s8.bf16 %v2973
    %v3758 = vunpack.c.l.s8.bf16 %v2974
    %v3759 = vunpack.c.l.s8.bf16 %v2975
    %v3760 = vunpack.c.l.s8.bf16 %v2976
    %v3761 = vunpack.c.l.s8.bf16 %v2977
    %v3762 = vunpack.c.l.s8.bf16 %v2978
    %v3763 = vunpack.c.l.s8.bf16 %v2979
    %v3764 = vunpack.c.l.s8.bf16 %v2980
    %v3765 = vunpack.c.l.s8.bf16 %v2981
    %v3766 = vunpack.c.l.s8.bf16 %v2982
    %v3767 = vunpack.c.l.s8.bf16 %v2983
    %v3768 = vunpack.c.l.s8.bf16 %v2984
    %v3769 = vunpack.c.l.s8.bf16 %v2985
    %v3770 = vunpack.c.l.s8.bf16 %v2986
    %v3771 = vunpack.c.l.s8.bf16 %v2987
    %v3772 = vunpack.c.l.s8.bf16 %v2988
    %v3773 = vunpack.c.l.s8.bf16 %v2989
    %v3774 = vunpack.c.h.s8.bf16 %v2974
    %v3775 = vunpack.c.h.s8.bf16 %v2975
    %v3776 = vunpack.c.h.s8.bf16 %v2976
    %v3777 = vunpack.c.h.s8.bf16 %v2977
    %v3778 = vunpack.c.h.s8.bf16 %v2978
    %v3779 = vunpack.c.h.s8.bf16 %v2979
    %v3780 = vunpack.c.h.s8.bf16 %v2980
    %v3781 = vunpack.c.h.s8.bf16 %v2981
    %v3782 = vunpack.c.h.s8.bf16 %v2982
    %v3783 = vunpack.c.h.s8.bf16 %v2983
    %v3784 = vunpack.c.h.s8.bf16 %v2984
    %v3785 = vunpack.c.h.s8.bf16 %v2985
    %v3786 = vunpack.c.h.s8.bf16 %v2986
    %v3787 = vunpack.c.h.s8.bf16 %v2987
    %v3788 = vunpack.c.h.s8.bf16 %v2988
    %v3789 = vunpack.c.h.s8.bf16 %v2989
    %v3790 = vunpack.c.l.s8.bf16 %v2990
    %v3791 = vunpack.c.l.s8.bf16 %v2991
    %v3792 = vunpack.c.l.s8.bf16 %v2992
    %v3793 = vunpack.c.l.s8.bf16 %v2993
    %v3794 = vunpack.c.l.s8.bf16 %v2994
    %v3795 = vunpack.c.l.s8.bf16 %v2995
    %v3796 = vunpack.c.l.s8.bf16 %v2996
    %v3797 = vunpack.c.l.s8.bf16 %v2997
    %v3798 = vunpack.c.l.s8.bf16 %v2998
    %v3799 = vunpack.c.l.s8.bf16 %v2999
    %v3800 = vunpack.c.l.s8.bf16 %v3000
    %v3801 = vunpack.c.l.s8.bf16 %v3001
    %v3802 = vunpack.c.l.s8.bf16 %v3002
    %v3803 = vunpack.c.l.s8.bf16 %v3003
    %v3804 = vunpack.c.l.s8.bf16 %v3004
    %v3805 = vunpack.c.l.s8.bf16 %v3005
    %v3806 = vunpack.c.h.s8.bf16 %v2990
    %v3807 = vunpack.c.h.s8.bf16 %v2991
    %v3808 = vunpack.c.h.s8.bf16 %v2992
    %v3809 = vunpack.c.h.s8.bf16 %v2993
    %v3810 = vunpack.c.h.s8.bf16 %v2994
    %v3811 = vunpack.c.h.s8.bf16 %v2995
    %v3812 = vunpack.c.h.s8.bf16 %v2996
    %v3813 = vunpack.c.h.s8.bf16 %v2997
    %v3814 = vunpack.c.h.s8.bf16 %v2998
    %v3815 = vunpack.c.h.s8.bf16 %v2999
    %v3816 = vunpack.c.h.s8.bf16 %v3000
    %v3817 = vunpack.c.h.s8.bf16 %v3001
    %v3818 = vunpack.c.h.s8.bf16 %v3002
    %v3819 = vunpack.c.h.s8.bf16 %v3003
    %v3820 = vunpack.c.h.s8.bf16 %v3004
    %v3821 = vunpack.c.h.s8.bf16 %v3005
    %v3822 = vunpack.c.l.s8.bf16 %v3006
    %v3823 = vunpack.c.l.s8.bf16 %v3007
    %v3824 = vunpack.c.l.s8.bf16 %v3008
    %v3825 = vunpack.c.l.s8.bf16 %v3009
    %v3826 = vunpack.c.l.s8.bf16 %v3010
    %v3827 = vunpack.c.l.s8.bf16 %v3011
    %v3828 = vunpack.c.l.s8.bf16 %v3012
    %v3829 = vunpack.c.l.s8.bf16 %v3013
    %v3830 = vunpack.c.l.s8.bf16 %v3014
    %v3831 = vunpack.c.l.s8.bf16 %v3015
    %v3832 = vunpack.c.l.s8.bf16 %v3016
    %v3833 = vunpack.c.l.s8.bf16 %v3017
    %v3834 = vunpack.c.l.s8.bf16 %v3018
    %v3835 = vunpack.c.l.s8.bf16 %v3019
    %v3836 = vunpack.c.l.s8.bf16 %v3020
    %v3837 = vunpack.c.l.s8.bf16 %v3021
    %v3838 = vunpack.c.h.s8.bf16 %v3006
    %v3839 = vunpack.c.h.s8.bf16 %v3007
    %v3840 = vunpack.c.h.s8.bf16 %v3008
    %v3841 = vunpack.c.h.s8.bf16 %v3009
    %v3842 = vunpack.c.h.s8.bf16 %v3010
    %v3843 = vunpack.c.h.s8.bf16 %v3011
    %v3844 = vunpack.c.h.s8.bf16 %v3012
    %v3845 = vunpack.c.h.s8.bf16 %v3013
    %v3846 = vunpack.c.h.s8.bf16 %v3014
    %v3847 = vunpack.c.h.s8.bf16 %v3015
    %v3848 = vunpack.c.h.s8.bf16 %v3016
    %v3849 = vunpack.c.h.s8.bf16 %v3017
    %v3850 = vunpack.c.h.s8.bf16 %v3018
    %v3851 = vunpack.c.h.s8.bf16 %v3019
    %v3852 = vunpack.c.h.s8.bf16 %v3020
    %v3853 = vunpack.c.h.s8.bf16 %v3021
    %v3854 = vunpack.c.l.s8.bf16 %v3022
    %v3855 = vunpack.c.l.s8.bf16 %v3023
    %v3856 = vunpack.c.l.s8.bf16 %v3024
    %v3857 = vunpack.c.l.s8.bf16 %v3025
    %v3858 = vunpack.c.l.s8.bf16 %v3026
    %v3859 = vunpack.c.l.s8.bf16 %v3027
    %v3860 = vunpack.c.l.s8.bf16 %v3028
    %v3861 = vunpack.c.l.s8.bf16 %v3029
    %v3862 = vunpack.c.l.s8.bf16 %v3030
    %v3863 = vunpack.c.l.s8.bf16 %v3031
    %v3864 = vunpack.c.l.s8.bf16 %v3032
    %v3865 = vunpack.c.l.s8.bf16 %v3033
    %v3866 = vunpack.c.l.s8.bf16 %v3034
    %v3867 = vunpack.c.l.s8.bf16 %v3035
    %v3868 = vunpack.c.l.s8.bf16 %v3036
    %v3869 = vunpack.c.l.s8.bf16 %v3037
    %v3870 = vunpack.c.h.s8.bf16 %v3022
    %v3871 = vunpack.c.h.s8.bf16 %v3023
    %v3872 = vunpack.c.h.s8.bf16 %v3024
    %v3873 = vunpack.c.h.s8.bf16 %v3025
    %v3874 = vunpack.c.h.s8.bf16 %v3026
    %v3875 = vunpack.c.h.s8.bf16 %v3027
    %v3876 = vunpack.c.h.s8.bf16 %v3028
    %v3877 = vunpack.c.h.s8.bf16 %v3029
    %v3878 = vunpack.c.h.s8.bf16 %v3030
    %v3879 = vunpack.c.h.s8.bf16 %v3031
    %v3880 = vunpack.c.h.s8.bf16 %v3032
    %v3881 = vunpack.c.h.s8.bf16 %v3033
    %v3882 = vunpack.c.h.s8.bf16 %v3034
    %v3883 = vunpack.c.h.s8.bf16 %v3035
    %v3884 = vunpack.c.h.s8.bf16 %v3036
    %v3885 = vunpack.c.h.s8.bf16 %v3037
    %v3886 = vunpack.c.l.s8.bf16 %v3038
    %v3887 = vunpack.c.l.s8.bf16 %v3039
    %v3888 = vunpack.c.l.s8.bf16 %v3040
    %v3889 = vunpack.c.l.s8.bf16 %v3041
    %v3890 = vunpack.c.l.s8.bf16 %v3042
    %v3891 = vunpack.c.l.s8.bf16 %v3043
    %v3892 = vunpack.c.l.s8.bf16 %v3044
    %v3893 = vunpack.c.l.s8.bf16 %v3045
    %v3894 = vunpack.c.l.s8.bf16 %v3046
    %v3895 = vunpack.c.l.s8.bf16 %v3047
    %v3896 = vunpack.c.l.s8.bf16 %v3048
    %v3897 = vunpack.c.l.s8.bf16 %v3049
    %v3898 = vunpack.c.l.s8.bf16 %v3050
    %v3899 = vunpack.c.l.s8.bf16 %v3051
    %v3900 = vunpack.c.l.s8.bf16 %v3052
    %v3901 = vunpack.c.l.s8.bf16 %v3053
    %v3902 = vunpack.c.h.s8.bf16 %v3038
    %v3903 = vunpack.c.h.s8.bf16 %v3039
    %v3904 = vunpack.c.h.s8.bf16 %v3040
    %v3905 = vunpack.c.h.s8.bf16 %v3041
    %v3906 = vunpack.c.h.s8.bf16 %v3042
    %v3907 = vunpack.c.h.s8.bf16 %v3043
    %v3908 = vunpack.c.h.s8.bf16 %v3044
    %v3909 = vunpack.c.h.s8.bf16 %v3045
    %v3910 = vunpack.c.h.s8.bf16 %v3046
    %v3911 = vunpack.c.h.s8.bf16 %v3047
    %v3912 = vunpack.c.h.s8.bf16 %v3048
    %v3913 = vunpack.c.h.s8.bf16 %v3049
    %v3914 = vunpack.c.h.s8.bf16 %v3050
    %v3915 = vunpack.c.h.s8.bf16 %v3051
    %v3916 = vunpack.c.h.s8.bf16 %v3052
    %v3917 = vunpack.c.h.s8.bf16 %v3053
    %v3918 = vunpack.c.l.s8.bf16 %v3054
    %v3919 = vunpack.c.l.s8.bf16 %v3055
    %v3920 = vunpack.c.l.s8.bf16 %v3056
    %v3921 = vunpack.c.l.s8.bf16 %v3057
    %v3922 = vunpack.c.l.s8.bf16 %v3058
    %v3923 = vunpack.c.l.s8.bf16 %v3059
    %v3924 = vunpack.c.l.s8.bf16 %v3060
    %v3925 = vunpack.c.l.s8.bf16 %v3061
    %v3926 = vunpack.c.l.s8.bf16 %v3062
    %v3927 = vunpack.c.l.s8.bf16 %v3063
    %v3928 = vunpack.c.l.s8.bf16 %v3064
    %v3929 = vunpack.c.l.s8.bf16 %v3065
    %v3930 = vunpack.c.l.s8.bf16 %v3066
    %v3931 = vunpack.c.l.s8.bf16 %v3067
    %v3932 = vunpack.c.l.s8.bf16 %v3068
    %v3933 = vunpack.c.l.s8.bf16 %v3069
    %v3934 = vunpack.c.h.s8.bf16 %v3054
    %v3935 = vunpack.c.h.s8.bf16 %v3055
    %v3936 = vunpack.c.h.s8.bf16 %v3056
    %v3937 = vunpack.c.h.s8.bf16 %v3057
    %v3938 = vunpack.c.h.s8.bf16 %v3058
    %v3939 = vunpack.c.h.s8.bf16 %v3059
    %v3940 = vunpack.c.h.s8.bf16 %v3060
    %v3941 = vunpack.c.h.s8.bf16 %v3061
    %v3942 = vunpack.c.h.s8.bf16 %v3062
    %v3943 = vunpack.c.h.s8.bf16 %v3063
    %v3944 = vunpack.c.h.s8.bf16 %v3064
    %v3945 = vunpack.c.h.s8.bf16 %v3065
    %v3946 = vunpack.c.h.s8.bf16 %v3066
    %v3947 = vunpack.c.h.s8.bf16 %v3067
    %v3948 = vunpack.c.h.s8.bf16 %v3068
    %v3949 = vunpack.c.h.s8.bf16 %v3069
    %v3950 = vunpack.c.l.s8.bf16 %v3070
    %v3951 = vunpack.c.l.s8.bf16 %v3071
    %v3952 = vunpack.c.l.s8.bf16 %v3072
    %v3953 = vunpack.c.l.s8.bf16 %v3073
    %v3954 = vunpack.c.l.s8.bf16 %v3074
    %v3955 = vunpack.c.l.s8.bf16 %v3075
    %v3956 = vunpack.c.l.s8.bf16 %v3076
    %v3957 = vunpack.c.l.s8.bf16 %v3077
    %v3958 = vunpack.c.l.s8.bf16 %v3078
    %v3959 = vunpack.c.l.s8.bf16 %v3079
    %v3960 = vunpack.c.l.s8.bf16 %v3080
    %v3961 = vunpack.c.l.s8.bf16 %v3081
    %v3962 = vunpack.c.l.s8.bf16 %v3082
    %v3963 = vunpack.c.l.s8.bf16 %v3083
    %v3964 = vunpack.c.l.s8.bf16 %v3084
    %v3965 = vunpack.c.l.s8.bf16 %v3085
    %v3966 = vunpack.c.h.s8.bf16 %v3070
    %v3967 = vunpack.c.h.s8.bf16 %v3071
    %v3968 = vunpack.c.h.s8.bf16 %v3072
    %v3969 = vunpack.c.h.s8.bf16 %v3073
    %v3970 = vunpack.c.h.s8.bf16 %v3074
    %v3971 = vunpack.c.h.s8.bf16 %v3075
    %v3972 = vunpack.c.h.s8.bf16 %v3076
    %v3973 = vunpack.c.h.s8.bf16 %v3077
    %v3974 = vunpack.c.h.s8.bf16 %v3078
    %v3975 = vunpack.c.h.s8.bf16 %v3079
    %v3976 = vunpack.c.h.s8.bf16 %v3080
    %v3977 = vunpack.c.h.s8.bf16 %v3081
    %v3978 = vunpack.c.h.s8.bf16 %v3082
    %v3979 = vunpack.c.h.s8.bf16 %v3083
    %v3980 = vunpack.c.h.s8.bf16 %v3084
    %v3981 = vunpack.c.h.s8.bf16 %v3085
    %v3982 = vunpack.c.l.s8.bf16 %v3086
    %v3983 = vunpack.c.l.s8.bf16 %v3087
    %v3984 = vunpack.c.l.s8.bf16 %v3088
    %v3985 = vunpack.c.l.s8.bf16 %v3089
    %v3986 = vunpack.c.l.s8.bf16 %v3090
    %v3987 = vunpack.c.l.s8.bf16 %v3091
    %v3988 = vunpack.c.l.s8.bf16 %v3092
    %v3989 = vunpack.c.l.s8.bf16 %v3093
    %v3990 = vunpack.c.l.s8.bf16 %v3094
    %v3991 = vunpack.c.l.s8.bf16 %v3095
    %v3992 = vunpack.c.l.s8.bf16 %v3096
    %v3993 = vunpack.c.l.s8.bf16 %v3097
    %v3994 = vunpack.c.l.s8.bf16 %v3098
    %v3995 = vunpack.c.l.s8.bf16 %v3099
    %v3996 = vunpack.c.l.s8.bf16 %v3100
    %v3997 = vunpack.c.l.s8.bf16 %v3101
    %v3998 = vunpack.c.h.s8.bf16 %v3086
    %v3999 = vunpack.c.h.s8.bf16 %v3087
    %v4000 = vunpack.c.h.s8.bf16 %v3088
    %v4001 = vunpack.c.h.s8.bf16 %v3089
    %v4002 = vunpack.c.h.s8.bf16 %v3090
    %v4003 = vunpack.c.h.s8.bf16 %v3091
    %v4004 = vunpack.c.h.s8.bf16 %v3092
    %v4005 = vunpack.c.h.s8.bf16 %v3093
    %v4006 = vunpack.c.h.s8.bf16 %v3094
    %v4007 = vunpack.c.h.s8.bf16 %v3095
    %v4008 = vunpack.c.h.s8.bf16 %v3096
    %v4009 = vunpack.c.h.s8.bf16 %v3097
    %v4010 = vunpack.c.h.s8.bf16 %v3098
    %v4011 = vunpack.c.h.s8.bf16 %v3099
    %v4012 = vunpack.c.h.s8.bf16 %v3100
    %v4013 = vunpack.c.h.s8.bf16 %v3101
    %v4014 = vunpack.c.l.s8.bf16 %v3102
    %v4015 = vunpack.c.l.s8.bf16 %v3103
    %v4016 = vunpack.c.l.s8.bf16 %v3104
    %v4017 = vunpack.c.l.s8.bf16 %v3105
    %v4018 = vunpack.c.l.s8.bf16 %v3106
    %v4019 = vunpack.c.l.s8.bf16 %v3107
    %v4020 = vunpack.c.l.s8.bf16 %v3108
    %v4021 = vunpack.c.l.s8.bf16 %v3109
    %v4022 = vunpack.c.l.s8.bf16 %v3110
    %v4023 = vunpack.c.l.s8.bf16 %v3111
    %v4024 = vunpack.c.l.s8.bf16 %v3112
    %v4025 = vunpack.c.l.s8.bf16 %v3113
    %v4026 = vunpack.c.l.s8.bf16 %v3114
    %v4027 = vunpack.c.l.s8.bf16 %v3115
    %v4028 = vunpack.c.l.s8.bf16 %v3116
    %v4029 = vunpack.c.l.s8.bf16 %v3117
    %v4030 = vunpack.c.h.s8.bf16 %v3102
    %v4031 = vunpack.c.h.s8.bf16 %v3103
    %v4032 = vunpack.c.h.s8.bf16 %v3104
    %v4033 = vunpack.c.h.s8.bf16 %v3105
    %v4034 = vunpack.c.h.s8.bf16 %v3106
    %v4035 = vunpack.c.h.s8.bf16 %v3107
    %v4036 = vunpack.c.h.s8.bf16 %v3108
    %v4037 = vunpack.c.h.s8.bf16 %v3109
    %v4038 = vunpack.c.h.s8.bf16 %v3110
    %v4039 = vunpack.c.h.s8.bf16 %v3111
    %v4040 = vunpack.c.h.s8.bf16 %v3112
    %v4041 = vunpack.c.h.s8.bf16 %v3113
    %v4042 = vunpack.c.h.s8.bf16 %v3114
    %v4043 = vunpack.c.h.s8.bf16 %v3115
    %v4044 = vunpack.c.h.s8.bf16 %v3116
    %v4045 = vunpack.c.h.s8.bf16 %v3117
    %v4046 = vunpack.c.l.s8.bf16 %v3118
    %v4047 = vunpack.c.l.s8.bf16 %v3119
    %v4048 = vunpack.c.l.s8.bf16 %v3120
    %v4049 = vunpack.c.l.s8.bf16 %v3121
    %v4050 = vunpack.c.l.s8.bf16 %v3122
    %v4051 = vunpack.c.l.s8.bf16 %v3123
    %v4052 = vunpack.c.l.s8.bf16 %v3124
    %v4053 = vunpack.c.l.s8.bf16 %v3125
    %v4054 = vunpack.c.l.s8.bf16 %v3126
    %v4055 = vunpack.c.l.s8.bf16 %v3127
    %v4056 = vunpack.c.l.s8.bf16 %v3128
    %v4057 = vunpack.c.l.s8.bf16 %v3129
    %v4058 = vunpack.c.l.s8.bf16 %v3130
    %v4059 = vunpack.c.l.s8.bf16 %v3131
    %v4060 = vunpack.c.l.s8.bf16 %v3132
    %v4061 = vunpack.c.l.s8.bf16 %v3133
    %v4062 = vunpack.c.h.s8.bf16 %v3118
    %v4063 = vunpack.c.h.s8.bf16 %v3119
    %v4064 = vunpack.c.h.s8.bf16 %v3120
    %v4065 = vunpack.c.h.s8.bf16 %v3121
    %v4066 = vunpack.c.h.s8.bf16 %v3122
    %v4067 = vunpack.c.h.s8.bf16 %v3123
    %v4068 = vunpack.c.h.s8.bf16 %v3124
    %v4069 = vunpack.c.h.s8.bf16 %v3125
    %v4070 = vunpack.c.h.s8.bf16 %v3126
    %v4071 = vunpack.c.h.s8.bf16 %v3127
    %v4072 = vunpack.c.h.s8.bf16 %v3128
    %v4073 = vunpack.c.h.s8.bf16 %v3129
    %v4074 = vunpack.c.h.s8.bf16 %v3130
    %v4075 = vunpack.c.h.s8.bf16 %v3131
    %v4076 = vunpack.c.h.s8.bf16 %v3132
    %v4077 = vunpack.c.h.s8.bf16 %v3133
    %v4078 = vunpack.c.l.s8.bf16 %v3134
    %v4079 = vunpack.c.l.s8.bf16 %v3135
    %v4080 = vunpack.c.l.s8.bf16 %v3136
    %v4081 = vunpack.c.l.s8.bf16 %v3137
    %v4082 = vunpack.c.l.s8.bf16 %v3138
    %v4083 = vunpack.c.l.s8.bf16 %v3139
    %v4084 = vunpack.c.l.s8.bf16 %v3140
    %v4085 = vunpack.c.l.s8.bf16 %v3141
    %v4086 = vunpack.c.l.s8.bf16 %v3142
    %v4087 = vunpack.c.l.s8.bf16 %v3143
    %v4088 = vunpack.c.l.s8.bf16 %v3144
    %v4089 = vunpack.c.l.s8.bf16 %v3145
    %v4090 = vunpack.c.l.s8.bf16 %v3146
    %v4091 = vunpack.c.l.s8.bf16 %v3147
    %v4092 = vunpack.c.l.s8.bf16 %v3148
    %v4093 = vunpack.c.l.s8.bf16 %v3149
    %v4094 = vunpack.c.h.s8.bf16 %v3134
    %v4095 = vunpack.c.h.s8.bf16 %v3135
    %v4096 = vunpack.c.h.s8.bf16 %v3136
    %v4097 = vunpack.c.h.s8.bf16 %v3137
    %v4098 = vunpack.c.h.s8.bf16 %v3138
    %v4099 = vunpack.c.h.s8.bf16 %v3139
    %v4100 = vunpack.c.h.s8.bf16 %v3140
    %v4101 = vunpack.c.h.s8.bf16 %v3141
    %v4102 = vunpack.c.h.s8.bf16 %v3142
    %v4103 = vunpack.c.h.s8.bf16 %v3143
    %v4104 = vunpack.c.h.s8.bf16 %v3144
    %v4105 = vunpack.c.h.s8.bf16 %v3145
    %v4106 = vunpack.c.h.s8.bf16 %v3146
    %v4107 = vunpack.c.h.s8.bf16 %v3147
    %v4108 = vunpack.c.h.s8.bf16 %v3148
    %v4109 = vunpack.c.h.s8.bf16 %v3149
    %v4110 = vunpack.c.l.s8.bf16 %v3150
    %v4111 = vunpack.c.l.s8.bf16 %v3151
    %v4112 = vunpack.c.l.s8.bf16 %v3152
    %v4113 = vunpack.c.l.s8.bf16 %v3153
    %v4114 = vunpack.c.l.s8.bf16 %v3154
    %v4115 = vunpack.c.l.s8.bf16 %v3155
    %v4116 = vunpack.c.l.s8.bf16 %v3156
    %v4117 = vunpack.c.l.s8.bf16 %v3157
    %v4118 = vunpack.c.l.s8.bf16 %v3158
    %v4119 = vunpack.c.l.s8.bf16 %v3159
    %v4120 = vunpack.c.l.s8.bf16 %v3160
    %v4121 = vunpack.c.l.s8.bf16 %v3161
    %v4122 = vunpack.c.l.s8.bf16 %v3162
    %v4123 = vunpack.c.l.s8.bf16 %v3163
    %v4124 = vunpack.c.l.s8.bf16 %v3164
    %v4125 = vunpack.c.l.s8.bf16 %v3165
    %v4126 = vunpack.c.h.s8.bf16 %v3150
    %v4127 = vunpack.c.h.s8.bf16 %v3151
    %v4128 = vunpack.c.h.s8.bf16 %v3152
    %v4129 = vunpack.c.h.s8.bf16 %v3153
    %v4130 = vunpack.c.h.s8.bf16 %v3154
    %v4131 = vunpack.c.h.s8.bf16 %v3155
    %v4132 = vunpack.c.h.s8.bf16 %v3156
    %v4133 = vunpack.c.h.s8.bf16 %v3157
    %v4134 = vunpack.c.h.s8.bf16 %v3158
    %v4135 = vunpack.c.h.s8.bf16 %v3159
    %v4136 = vunpack.c.h.s8.bf16 %v3160
    %v4137 = vunpack.c.h.s8.bf16 %v3161
    %v4138 = vunpack.c.h.s8.bf16 %v3162
    %v4139 = vunpack.c.h.s8.bf16 %v3163
    %v4140 = vunpack.c.h.s8.bf16 %v3164
    %v4141 = vunpack.c.h.s8.bf16 %v3165
    %v4142 = vunpack.c.l.s8.bf16 %v3166
    %v4143 = vunpack.c.l.s8.bf16 %v3167
    %v4144 = vunpack.c.l.s8.bf16 %v3168
    %v4145 = vunpack.c.l.s8.bf16 %v3169
    %v4146 = vunpack.c.l.s8.bf16 %v3170
    %v4147 = vunpack.c.l.s8.bf16 %v3171
    %v4148 = vunpack.c.l.s8.bf16 %v3172
    %v4149 = vunpack.c.l.s8.bf16 %v3173
    %v4150 = vunpack.c.l.s8.bf16 %v3174
    %v4151 = vunpack.c.l.s8.bf16 %v3175
    %v4152 = vunpack.c.l.s8.bf16 %v3176
    %v4153 = vunpack.c.l.s8.bf16 %v3177
    %v4154 = vunpack.c.l.s8.bf16 %v3178
    %v4155 = vunpack.c.l.s8.bf16 %v3179
    %v4156 = vunpack.c.l.s8.bf16 %v3180
    %v4157 = vunpack.c.l.s8.bf16 %v3181
    %v4158 = vunpack.c.h.s8.bf16 %v3166
    %v4159 = vunpack.c.h.s8.bf16 %v3167
    %v4160 = vunpack.c.h.s8.bf16 %v3168
    %v4161 = vunpack.c.h.s8.bf16 %v3169
    %v4162 = vunpack.c.h.s8.bf16 %v3170
    %v4163 = vunpack.c.h.s8.bf16 %v3171
    %v4164 = vunpack.c.h.s8.bf16 %v3172
    %v4165 = vunpack.c.h.s8.bf16 %v3173
    %v4166 = vunpack.c.h.s8.bf16 %v3174
    %v4167 = vunpack.c.h.s8.bf16 %v3175
    %v4168 = vunpack.c.h.s8.bf16 %v3176
    %v4169 = vunpack.c.h.s8.bf16 %v3177
    %v4170 = vunpack.c.h.s8.bf16 %v3178
    %v4171 = vunpack.c.h.s8.bf16 %v3179
    %v4172 = vunpack.c.h.s8.bf16 %v3180
    %v4173 = vunpack.c.h.s8.bf16 %v3181
    %v4174 = vunpack.c.l.s8.bf16 %v3182
    %v4175 = vunpack.c.l.s8.bf16 %v3183
    %v4176 = vunpack.c.l.s8.bf16 %v3184
    %v4177 = vunpack.c.l.s8.bf16 %v3185
    %v4178 = vunpack.c.l.s8.bf16 %v3186
    %v4179 = vunpack.c.l.s8.bf16 %v3187
    %v4180 = vunpack.c.l.s8.bf16 %v3188
    %v4181 = vunpack.c.l.s8.bf16 %v3189
    %v4182 = vunpack.c.l.s8.bf16 %v3190
    %v4183 = vunpack.c.l.s8.bf16 %v3191
    %v4184 = vunpack.c.l.s8.bf16 %v3192
    %v4185 = vunpack.c.l.s8.bf16 %v3193
    %v4186 = vunpack.c.l.s8.bf16 %v3194
    %v4187 = vunpack.c.l.s8.bf16 %v3195
    %v4188 = vunpack.c.l.s8.bf16 %v3196
    %v4189 = vunpack.c.l.s8.bf16 %v3197
    %v4190 = vunpack.c.h.s8.bf16 %v3182
    %v4191 = vunpack.c.h.s8.bf16 %v3183
    %v4192 = vunpack.c.h.s8.bf16 %v3184
    %v4193 = vunpack.c.h.s8.bf16 %v3185
    %v4194 = vunpack.c.h.s8.bf16 %v3186
    %v4195 = vunpack.c.h.s8.bf16 %v3187
    %v4196 = vunpack.c.h.s8.bf16 %v3188
    %v4197 = vunpack.c.h.s8.bf16 %v3189
    %v4198 = vunpack.c.h.s8.bf16 %v3190
    %v4199 = vunpack.c.h.s8.bf16 %v3191
    %v4200 = vunpack.c.h.s8.bf16 %v3192
    %v4201 = vunpack.c.h.s8.bf16 %v3193
    %v4202 = vunpack.c.h.s8.bf16 %v3194
    %v4203 = vunpack.c.h.s8.bf16 %v3195
    %v4204 = vunpack.c.h.s8.bf16 %v3196
    %v4205 = vunpack.c.h.s8.bf16 %v3197
    %v4206 = vunpack.c.l.s8.bf16 %v3198
    %v4207 = vunpack.c.l.s8.bf16 %v3199
    %v4208 = vunpack.c.l.s8.bf16 %v3200
    %v4209 = vunpack.c.l.s8.bf16 %v3201
    %v4210 = vunpack.c.l.s8.bf16 %v3202
    %v4211 = vunpack.c.l.s8.bf16 %v3203
    %v4212 = vunpack.c.l.s8.bf16 %v3204
    %v4213 = vunpack.c.l.s8.bf16 %v3205
    %v4214 = vunpack.c.l.s8.bf16 %v3206
    %v4215 = vunpack.c.l.s8.bf16 %v3207
    %v4216 = vunpack.c.l.s8.bf16 %v3208
    %v4217 = vunpack.c.l.s8.bf16 %v3209
    %v4218 = vunpack.c.l.s8.bf16 %v3210
    %v4219 = vunpack.c.l.s8.bf16 %v3211
    %v4220 = vunpack.c.l.s8.bf16 %v3212
    %v4221 = vunpack.c.l.s8.bf16 %v3213
    %v4222 = vunpack.c.h.s8.bf16 %v3198
    %v4223 = vunpack.c.h.s8.bf16 %v3199
    %v4224 = vunpack.c.h.s8.bf16 %v3200
    %v4225 = vunpack.c.h.s8.bf16 %v3201
    %v4226 = vunpack.c.h.s8.bf16 %v3202
    %v4227 = vunpack.c.h.s8.bf16 %v3203
    %v4228 = vunpack.c.h.s8.bf16 %v3204
    %v4229 = vunpack.c.h.s8.bf16 %v3205
    %v4230 = vunpack.c.h.s8.bf16 %v3206
    %v4231 = vunpack.c.h.s8.bf16 %v3207
    %v4232 = vunpack.c.h.s8.bf16 %v3208
    %v4233 = vunpack.c.h.s8.bf16 %v3209
    %v4234 = vunpack.c.h.s8.bf16 %v3210
    %v4235 = vunpack.c.h.s8.bf16 %v3211
    %v4236 = vunpack.c.h.s8.bf16 %v3212
    %v4237 = vunpack.c.h.s8.bf16 %v3213
    %v4238 = vpack.c.bf16 %v2694, %v2694
    %v4239 = vpack.c.bf16 %v2695, %v2695
    %v4240 = vpack.c.bf16 %v2696, %v2696
    %v4241 = vpack.c.bf16 %v2697, %v2697
    %v4242 = vpack.c.bf16 %v2698, %v2698
    %v4243 = vpack.c.bf16 %v2699, %v2699
    %v4244 = vpack.c.bf16 %v2700, %v2700
    %v4245 = vpack.c.bf16 %v2701, %v2701
    %4246 = vmatprep.subr.bf16.mxu0 %v3215
    %4247 = vmatpush1.bf16.msra.mxu0 %v3214
    %4248 = vmatprep.subr.bf16.mxu0 %v3231
    %4249 = vmatpush1.bf16.msra.mxu0 %v3230
    %4250 = vmatprep.subr.bf16.mxu0 %v3247
    %4251 = vmatpush1.bf16.msra.mxu0 %v3246
    %4252 = vmatprep.subr.bf16.mxu0 %v3263
    %4253 = vmatpush1.bf16.msra.mxu0 %v3262
    %4254 = vmatprep.subr.bf16.mxu0 %v3279
    %4255 = vmatpush1.bf16.msra.mxu0 %v3278
    %4256 = vmatprep.subr.bf16.mxu0 %v3295
    %4257 = vmatpush1.bf16.msra.mxu0 %v3294
    %4258 = vmatprep.subr.bf16.mxu0 %v3311
    %4259 = vmatpush1.bf16.msra.mxu0 %v3310
    %4260 = vmatprep.subr.bf16.mxu0 %v3327
    %4261 = vmatpush1.bf16.msra.mxu0 %v3326
    %4262 = vmatprep.subr.bf16.mxu0 %v3343
    %4263 = vmatpush1.bf16.msra.mxu0 %v3342
    %4264 = vmatprep.subr.bf16.mxu0 %v3359
    %4265 = vmatpush1.bf16.msra.mxu0 %v3358
    %4266 = vmatprep.subr.bf16.mxu0 %v3375
    %4267 = vmatpush1.bf16.msra.mxu0 %v3374
    %4268 = vmatprep.subr.bf16.mxu0 %v3391
    %4269 = vmatpush1.bf16.msra.mxu0 %v3390
    %4270 = vmatprep.subr.bf16.mxu0 %v3407
    %4271 = vmatpush1.bf16.msra.mxu0 %v3406
    %4272 = vmatprep.subr.bf16.mxu0 %v3423
    %4273 = vmatpush1.bf16.msra.mxu0 %v3422
    %4274 = vmatprep.subr.bf16.mxu0 %v3439
    %4275 = vmatpush1.bf16.msra.mxu0 %v3438
    %4276 = vmatprep.subr.bf16.mxu0 %v3455
    %4277 = vmatpush1.bf16.msra.mxu0 %v3454
    %4278 = vmatprep.mubr.bf16.mxu0 %v4239
    %4279 = vmatmul.mubr.bf16.gmra.mrb[0].mxu0 %v4238
    %v4280 = vpop.f32.mrb[0].mxu0
    %v4281 = vadd.f32 0.0, %v4280
    %v4282 = vpop.f32.mrb[0].mxu0
    %v4283 = vadd.f32 0.0, %v4282
    %v4284 = vpop.f32.mrb[0].mxu0
    %v4285 = vpop.f32.mrb[0].mxu0
    %4286 = vdwg.mxu0
    %4287 = vmatprep.subr.bf16.mxu0 %v3471
    %4288 = vmatpush1.bf16.msra.mxu0 %v3470
    %4289 = vmatprep.subr.bf16.mxu0 %v3487
    %4290 = vmatpush1.bf16.msra.mxu0 %v3486
    %4291 = vmatprep.subr.bf16.mxu0 %v3503
    %4292 = vmatpush1.bf16.msra.mxu0 %v3502
    %4293 = vmatprep.subr.bf16.mxu0 %v3519
    %4294 = vmatpush1.bf16.msra.mxu0 %v3518
    %4295 = vmatprep.subr.bf16.mxu0 %v3535
    %4296 = vmatpush1.bf16.msra.mxu0 %v3534
    %4297 = vmatprep.subr.bf16.mxu0 %v3551
    %4298 = vmatpush1.bf16.msra.mxu0 %v3550
    %4299 = vmatprep.subr.bf16.mxu0 %v3567
    %4300 = vmatpush1.bf16.msra.mxu0 %v3566
    %4301 = vmatprep.subr.bf16.mxu0 %v3583
    %4302 = vmatpush1.bf16.msra.mxu0 %v3582
    %4303 = vmatprep.subr.bf16.mxu0 %v3599
    %4304 = vmatpush1.bf16.msra.mxu0 %v3598
    %4305 = vmatprep.subr.bf16.mxu0 %v3615
    %4306 = vmatpush1.bf16.msra.mxu0 %v3614
    %4307 = vmatprep.subr.bf16.mxu0 %v3631
    %4308 = vmatpush1.bf16.msra.mxu0 %v3630
    %4309 = vmatprep.subr.bf16.mxu0 %v3647
    %4310 = vmatpush1.bf16.msra.mxu0 %v3646
    %4311 = vmatprep.subr.bf16.mxu0 %v3663
    %4312 = vmatpush1.bf16.msra.mxu0 %v3662
    %4313 = vmatprep.subr.bf16.mxu0 %v3679
    %4314 = vmatpush1.bf16.msra.mxu0 %v3678
    %4315 = vmatprep.subr.bf16.mxu0 %v3695
    %4316 = vmatpush1.bf16.msra.mxu0 %v3694
    %4317 = vmatprep.subr.bf16.mxu0 %v3711
    %4318 = vmatpush1.bf16.msra.mxu0 %v3710
    %4319 = vmatprep.mubr.bf16.mxu0 %v4241
    %4320 = vmatmul.mubr.bf16.gmra.mrb[0].mxu0 %v4240
    %v4321 = vpop.f32.mrb[0].mxu0
    %v4322 = vadd.f32 %v4281, %v4321
    %v4323 = vpop.f32.mrb[0].mxu0
    %v4324 = vadd.f32 %v4283, %v4323
    %v4325 = vpop.f32.mrb[0].mxu0
    %v4326 = vpop.f32.mrb[0].mxu0
    %4327 = vdwg.mxu0
    %4328 = vmatprep.subr.bf16.mxu0 %v3727
    %4329 = vmatpush1.bf16.msra.mxu0 %v3726
    %4330 = vmatprep.subr.bf16.mxu0 %v3743
    %4331 = vmatpush1.bf16.msra.mxu0 %v3742
    %4332 = vmatprep.subr.bf16.mxu0 %v3759
    %4333 = vmatpush1.bf16.msra.mxu0 %v3758
    %4334 = vmatprep.subr.bf16.mxu0 %v3775
    %4335 = vmatpush1.bf16.msra.mxu0 %v3774
    %4336 = vmatprep.subr.bf16.mxu0 %v3791
    %4337 = vmatpush1.bf16.msra.mxu0 %v3790
    %4338 = vmatprep.subr.bf16.mxu0 %v3807
    %4339 = vmatpush1.bf16.msra.mxu0 %v3806
    %4340 = vmatprep.subr.bf16.mxu0 %v3823
    %4341 = vmatpush1.bf16.msra.mxu0 %v3822
    %4342 = vmatprep.subr.bf16.mxu0 %v3839
    %4343 = vmatpush1.bf16.msra.mxu0 %v3838
    %4344 = vmatprep.subr.bf16.mxu0 %v3855
    %4345 = vmatpush1.bf16.msra.mxu0 %v3854
    %4346 = vmatprep.subr.bf16.mxu0 %v3871
    %4347 = vmatpush1.bf16.msra.mxu0 %v3870
    %4348 = vmatprep.subr.bf16.mxu0 %v3887
    %4349 = vmatpush1.bf16.msra.mxu0 %v3886
    %4350 = vmatprep.subr.bf16.mxu0 %v3903
    %4351 = vmatpush1.bf16.msra.mxu0 %v3902
    %4352 = vmatprep.subr.bf16.mxu0 %v3919
    %4353 = vmatpush1.bf16.msra.mxu0 %v3918
    %4354 = vmatprep.subr.bf16.mxu0 %v3935
    %4355 = vmatpush1.bf16.msra.mxu0 %v3934
    %4356 = vmatprep.subr.bf16.mxu0 %v3951
    %4357 = vmatpush1.bf16.msra.mxu0 %v3950
    %4358 = vmatprep.subr.bf16.mxu0 %v3967
    %4359 = vmatpush1.bf16.msra.mxu0 %v3966
    %4360 = vmatprep.mubr.bf16.mxu0 %v4243
    %4361 = vmatmul.mubr.bf16.gmra.mrb[0].mxu0 %v4242
    %v4362 = vpop.f32.mrb[0].mxu0
    %v4363 = vadd.f32 %v4322, %v4362
    %v4364 = vpop.f32.mrb[0].mxu0
    %v4365 = vadd.f32 %v4324, %v4364
    %v4366 = vpop.f32.mrb[0].mxu0
    %v4367 = vpop.f32.mrb[0].mxu0
    %4368 = vdwg.mxu0
    %4369 = vmatprep.subr.bf16.mxu0 %v3983
    %4370 = vmatpush1.bf16.msra.mxu0 %v3982
    %4371 = vmatprep.subr.bf16.mxu0 %v3999
    %4372 = vmatpush1.bf16.msra.mxu0 %v3998
    %4373 = vmatprep.subr.bf16.mxu0 %v4015
    %4374 = vmatpush1.bf16.msra.mxu0 %v4014
    %4375 = vmatprep.subr.bf16.mxu0 %v4031
    %4376 = vmatpush1.bf16.msra.mxu0 %v4030
    %4377 = vmatprep.subr.bf16.mxu0 %v4047
    %4378 = vmatpush1.bf16.msra.mxu0 %v4046
    %4379 = vmatprep.subr.bf16.mxu0 %v4063
    %4380 = vmatpush1.bf16.msra.mxu0 %v4062
    %4381 = vmatprep.subr.bf16.mxu0 %v4079
    %4382 = vmatpush1.bf16.msra.mxu0 %v4078
    %4383 = vmatprep.subr.bf16.mxu0 %v4095
    %4384 = vmatpush1.bf16.msra.mxu0 %v4094
    %4385 = vmatprep.subr.bf16.mxu0 %v4111
    %4386 = vmatpush1.bf16.msra.mxu0 %v4110
    %4387 = vmatprep.subr.bf16.mxu0 %v4127
    %4388 = vmatpush1.bf16.msra.mxu0 %v4126
    %4389 = vmatprep.subr.bf16.mxu0 %v4143
    %4390 = vmatpush1.bf16.msra.mxu0 %v4142
    %4391 = vmatprep.subr.bf16.mxu0 %v4159
    %4392 = vmatpush1.bf16.msra.mxu0 %v4158
    %4393 = vmatprep.subr.bf16.mxu0 %v4175
    %4394 = vmatpush1.bf16.msra.mxu0 %v4174
    %4395 = vmatprep.subr.bf16.mxu0 %v4191
    %4396 = vmatpush1.bf16.msra.mxu0 %v4190
    %4397 = vmatprep.subr.bf16.mxu0 %v4207
    %4398 = vmatpush1.bf16.msra.mxu0 %v4206
    %4399 = vmatprep.subr.bf16.mxu0 %v4223
    %4400 = vmatpush1.bf16.msra.mxu0 %v4222
    %4401 = vmatprep.mubr.bf16.mxu0 %v4245
    %4402 = vmatmul.mubr.bf16.gmra.mrb[0].mxu0 %v4244
    %v4403 = vpop.f32.mrb[0].mxu0
    %v4404 = vadd.f32 %v4363, %v4403
    %v4405 = vpop.f32.mrb[0].mxu0
    %v4406 = vadd.f32 %v4365, %v4405
    %v4407 = vpop.f32.mrb[0].mxu0
    %v4408 = vpop.f32.mrb[0].mxu0
    %4409 = vdwg.mxu0
    %4410 = vmatprep.subr.bf16.mxu0 %v3217
    %4411 = vmatpush1.bf16.msra.mxu0 %v3216
    %4412 = vmatprep.subr.bf16.mxu0 %v3233
    %4413 = vmatpush1.bf16.msra.mxu0 %v3232
    %4414 = vmatprep.subr.bf16.mxu0 %v3249
    %4415 = vmatpush1.bf16.msra.mxu0 %v3248
    %4416 = vmatprep.subr.bf16.mxu0 %v3265
    %4417 = vmatpush1.bf16.msra.mxu0 %v3264
    %4418 = vmatprep.subr.bf16.mxu0 %v3281
    %4419 = vmatpush1.bf16.msra.mxu0 %v3280
    %4420 = vmatprep.subr.bf16.mxu0 %v3297
    %4421 = vmatpush1.bf16.msra.mxu0 %v3296
    %4422 = vmatprep.subr.bf16.mxu0 %v3313
    %4423 = vmatpush1.bf16.msra.mxu0 %v3312
    %4424 = vmatprep.subr.bf16.mxu0 %v3329
    %4425 = vmatpush1.bf16.msra.mxu0 %v3328
    %4426 = vmatprep.subr.bf16.mxu0 %v3345
    %4427 = vmatpush1.bf16.msra.mxu0 %v3344
    %4428 = vmatprep.subr.bf16.mxu0 %v3361
    %4429 = vmatpush1.bf16.msra.mxu0 %v3360
    %4430 = vmatprep.subr.bf16.mxu0 %v3377
    %4431 = vmatpush1.bf16.msra.mxu0 %v3376
    %4432 = vmatprep.subr.bf16.mxu0 %v3393
    %4433 = vmatpush1.bf16.msra.mxu0 %v3392
    %4434 = vmatprep.subr.bf16.mxu0 %v3409
    %4435 = vmatpush1.bf16.msra.mxu0 %v3408
    %4436 = vmatprep.subr.bf16.mxu0 %v3425
    %4437 = vmatpush1.bf16.msra.mxu0 %v3424
    %4438 = vmatprep.subr.bf16.mxu0 %v3441
    %4439 = vmatpush1.bf16.msra.mxu0 %v3440
    %4440 = vmatprep.subr.bf16.mxu0 %v3457
    %4441 = vmatpush1.bf16.msra.mxu0 %v3456
    %4442 = vmatprep.mubr.bf16.mxu0 %v4239
    %4443 = vmatmul.mubr.bf16.gmra.mrb[0].mxu0 %v4238
    %v4444 = vpop.f32.mrb[0].mxu0
    %v4445 = vadd.f32 0.0, %v4444
    %v4446 = vpop.f32.mrb[0].mxu0
    %v4447 = vadd.f32 0.0, %v4446
    %v4448 = vpop.f32.mrb[0].mxu0
    %v4449 = vpop.f32.mrb[0].mxu0
    %4450 = vdwg.mxu0
    %4451 = vmatprep.subr.bf16.mxu0 %v3473
    %4452 = vmatpush1.bf16.msra.mxu0 %v3472
    %4453 = vmatprep.subr.bf16.mxu0 %v3489
    %4454 = vmatpush1.bf16.msra.mxu0 %v3488
    %4455 = vmatprep.subr.bf16.mxu0 %v3505
    %4456 = vmatpush1.bf16.msra.mxu0 %v3504
    %4457 = vmatprep.subr.bf16.mxu0 %v3521
    %4458 = vmatpush1.bf16.msra.mxu0 %v3520
    %4459 = vmatprep.subr.bf16.mxu0 %v3537
    %4460 = vmatpush1.bf16.msra.mxu0 %v3536
    %4461 = vmatprep.subr.bf16.mxu0 %v3553
    %4462 = vmatpush1.bf16.msra.mxu0 %v3552
    %4463 = vmatprep.subr.bf16.mxu0 %v3569
    %4464 = vmatpush1.bf16.msra.mxu0 %v3568
    %4465 = vmatprep.subr.bf16.mxu0 %v3585
    %4466 = vmatpush1.bf16.msra.mxu0 %v3584
    %4467 = vmatprep.subr.bf16.mxu0 %v3601
    %4468 = vmatpush1.bf16.msra.mxu0 %v3600
    %4469 = vmatprep.subr.bf16.mxu0 %v3617
    %4470 = vmatpush1.bf16.msra.mxu0 %v3616
    %4471 = vmatprep.subr.bf16.mxu0 %v3633
    %4472 = vmatpush1.bf16.msra.mxu0 %v3632
    %4473 = vmatprep.subr.bf16.mxu0 %v3649
    %4474 = vmatpush1.bf16.msra.mxu0 %v3648
    %4475 = vmatprep.subr.bf16.mxu0 %v3665
    %4476 = vmatpush1.bf16.msra.mxu0 %v3664
    %4477 = vmatprep.subr.bf16.mxu0 %v3681
    %4478 = vmatpush1.bf16.msra.mxu0 %v3680
    %4479 = vmatprep.subr.bf16.mxu0 %v3697
    %4480 = vmatpush1.bf16.msra.mxu0 %v3696
    %4481 = vmatprep.subr.bf16.mxu0 %v3713
    %4482 = vmatpush1.bf16.msra.mxu0 %v3712
    %4483 = vmatprep.mubr.bf16.mxu0 %v4241
    %4484 = vmatmul.mubr.bf16.gmra.mrb[0].mxu0 %v4240
    %v4485 = vpop.f32.mrb[0].mxu0
    %v4486 = vadd.f32 %v4445, %v4485
    %v4487 = vpop.f32.mrb[0].mxu0
    %v4488 = vadd.f32 %v4447, %v4487
    %v4489 = vpop.f32.mrb[0].mxu0
    %v4490 = vpop.f32.mrb[0].mxu0
    %4491 = vdwg.mxu0
    %4492 = vmatprep.subr.bf16.mxu0 %v3729
    %4493 = vmatpush1.bf16.msra.mxu0 %v3728
    %4494 = vmatprep.subr.bf16.mxu0 %v3745
    %4495 = vmatpush1.bf16.msra.mxu0 %v3744
    %4496 = vmatprep.subr.bf16.mxu0 %v3761
    %4497 = vmatpush1.bf16.msra.mxu0 %v3760
    %4498 = vmatprep.subr.bf16.mxu0 %v3777
    %4499 = vmatpush1.bf16.msra.mxu0 %v3776
    %4500 = vmatprep.subr.bf16.mxu0 %v3793
    %4501 = vmatpush1.bf16.msra.mxu0 %v3792
    %4502 = vmatprep.subr.bf16.mxu0 %v3809
    %4503 = vmatpush1.bf16.msra.mxu0 %v3808
    %4504 = vmatprep.subr.bf16.mxu0 %v3825
    %4505 = vmatpush1.bf16.msra.mxu0 %v3824
    %4506 = vmatprep.subr.bf16.mxu0 %v3841
    %4507 = vmatpush1.bf16.msra.mxu0 %v3840
    %4508 = vmatprep.subr.bf16.mxu0 %v3857
    %4509 = vmatpush1.bf16.msra.mxu0 %v3856
    %4510 = vmatprep.subr.bf16.mxu0 %v3873
    %4511 = vmatpush1.bf16.msra.mxu0 %v3872
    %4512 = vmatprep.subr.bf16.mxu0 %v3889
    %4513 = vmatpush1.bf16.msra.mxu0 %v3888
    %4514 = vmatprep.subr.bf16.mxu0 %v3905
    %4515 = vmatpush1.bf16.msra.mxu0 %v3904
    %4516 = vmatprep.subr.bf16.mxu0 %v3921
    %4517 = vmatpush1.bf16.msra.mxu0 %v3920
    %4518 = vmatprep.subr.bf16.mxu0 %v3937
    %4519 = vmatpush1.bf16.msra.mxu0 %v3936
    %4520 = vmatprep.subr.bf16.mxu0 %v3953
    %4521 = vmatpush1.bf16.msra.mxu0 %v3952
    %4522 = vmatprep.subr.bf16.mxu0 %v3969
    %4523 = vmatpush1.bf16.msra.mxu0 %v3968
    %4524 = vmatprep.mubr.bf16.mxu0 %v4243
    %4525 = vmatmul.mubr.bf16.gmra.mrb[0].mxu0 %v4242
    %v4526 = vpop.f32.mrb[0].mxu0
    %v4527 = vadd.f32 %v4486, %v4526
    %v4528 = vpop.f32.mrb[0].mxu0
    %v4529 = vadd.f32 %v4488, %v4528
    %v4530 = vpop.f32.mrb[0].mxu0
    %v4531 = vpop.f32.mrb[0].mxu0
    %4532 = vdwg.mxu0
    %4533 = vmatprep.subr.bf16.mxu0 %v3985
    %4534 = vmatpush1.bf16.msra.mxu0 %v3984
    %4535 = vmatprep.subr.bf16.mxu0 %v4001
    %4536 = vmatpush1.bf16.msra.mxu0 %v4000
    %4537 = vmatprep.subr.bf16.mxu0 %v4017
    %4538 = vmatpush1.bf16.msra.mxu0 %v4016
    %4539 = vmatprep.subr.bf16.mxu0 %v4033
    %4540 = vmatpush1.bf16.msra.mxu0 %v4032
    %4541 = vmatprep.subr.bf16.mxu0 %v4049
    %4542 = vmatpush1.bf16.msra.mxu0 %v4048
    %4543 = vmatprep.subr.bf16.mxu0 %v4065
    %4544 = vmatpush1.bf16.msra.mxu0 %v4064
    %4545 = vmatprep.subr.bf16.mxu0 %v4081
    %4546 = vmatpush1.bf16.msra.mxu0 %v4080
    %4547 = vmatprep.subr.bf16.mxu0 %v4097
    %4548 = vmatpush1.bf16.msra.mxu0 %v4096
    %4549 = vmatprep.subr.bf16.mxu0 %v4113
    %4550 = vmatpush1.bf16.msra.mxu0 %v4112
    %4551 = vmatprep.subr.bf16.mxu0 %v4129
    %4552 = vmatpush1.bf16.msra.mxu0 %v4128
    %4553 = vmatprep.subr.bf16.mxu0 %v4145
    %4554 = vmatpush1.bf16.msra.mxu0 %v4144
    %4555 = vmatprep.subr.bf16.mxu0 %v4161
    %4556 = vmatpush1.bf16.msra.mxu0 %v4160
    %4557 = vmatprep.subr.bf16.mxu0 %v4177
    %4558 = vmatpush1.bf16.msra.mxu0 %v4176
    %4559 = vmatprep.subr.bf16.mxu0 %v4193
    %4560 = vmatpush1.bf16.msra.mxu0 %v4192
    %4561 = vmatprep.subr.bf16.mxu0 %v4209
    %4562 = vmatpush1.bf16.msra.mxu0 %v4208
    %4563 = vmatprep.subr.bf16.mxu0 %v4225
    %4564 = vmatpush1.bf16.msra.mxu0 %v4224
    %4565 = vmatprep.mubr.bf16.mxu0 %v4245
    %4566 = vmatmul.mubr.bf16.gmra.mrb[0].mxu0 %v4244
    %v4567 = vpop.f32.mrb[0].mxu0
    %v4568 = vadd.f32 %v4527, %v4567
    %v4569 = vpop.f32.mrb[0].mxu0
    %v4570 = vadd.f32 %v4529, %v4569
    %v4571 = vpop.f32.mrb[0].mxu0
    %v4572 = vpop.f32.mrb[0].mxu0
    %4573 = vdwg.mxu0
    %4574 = vmatprep.subr.bf16.mxu0 %v3219
    %4575 = vmatpush1.bf16.msra.mxu0 %v3218
    %4576 = vmatprep.subr.bf16.mxu0 %v3235
    %4577 = vmatpush1.bf16.msra.mxu0 %v3234
    %4578 = vmatprep.subr.bf16.mxu0 %v3251
    %4579 = vmatpush1.bf16.msra.mxu0 %v3250
    %4580 = vmatprep.subr.bf16.mxu0 %v3267
    %4581 = vmatpush1.bf16.msra.mxu0 %v3266
    %4582 = vmatprep.subr.bf16.mxu0 %v3283
    %4583 = vmatpush1.bf16.msra.mxu0 %v3282
    %4584 = vmatprep.subr.bf16.mxu0 %v3299
    %4585 = vmatpush1.bf16.msra.mxu0 %v3298
    %4586 = vmatprep.subr.bf16.mxu0 %v3315
    %4587 = vmatpush1.bf16.msra.mxu0 %v3314
    %4588 = vmatprep.subr.bf16.mxu0 %v3331
    %4589 = vmatpush1.bf16.msra.mxu0 %v3330
    %4590 = vmatprep.subr.bf16.mxu0 %v3347
    %4591 = vmatpush1.bf16.msra.mxu0 %v3346
    %4592 = vmatprep.subr.bf16.mxu0 %v3363
    %4593 = vmatpush1.bf16.msra.mxu0 %v3362
    %4594 = vmatprep.subr.bf16.mxu0 %v3379
    %4595 = vmatpush1.bf16.msra.mxu0 %v3378
    %4596 = vmatprep.subr.bf16.mxu0 %v3395
    %4597 = vmatpush1.bf16.msra.mxu0 %v3394
    %4598 = vmatprep.subr.bf16.mxu0 %v3411
    %4599 = vmatpush1.bf16.msra.mxu0 %v3410
    %4600 = vmatprep.subr.bf16.mxu0 %v3427
    %4601 = vmatpush1.bf16.msra.mxu0 %v3426
    %4602 = vmatprep.subr.bf16.mxu0 %v3443
    %4603 = vmatpush1.bf16.msra.mxu0 %v3442
    %4604 = vmatprep.subr.bf16.mxu0 %v3459
    %4605 = vmatpush1.bf16.msra.mxu0 %v3458
    %4606 = vmatprep.mubr.bf16.mxu0 %v4239
    %4607 = vmatmul.mubr.bf16.gmra.mrb[0].mxu0 %v4238
    %v4608 = vpop.f32.mrb[0].mxu0
    %v4609 = vadd.f32 0.0, %v4608
    %v4610 = vpop.f32.mrb[0].mxu0
    %v4611 = vadd.f32 0.0, %v4610
    %v4612 = vpop.f32.mrb[0].mxu0
    %v4613 = vpop.f32.mrb[0].mxu0
    %4614 = vdwg.mxu0
    %4615 = vmatprep.subr.bf16.mxu0 %v3475
    %4616 = vmatpush1.bf16.msra.mxu0 %v3474
    %4617 = vmatprep.subr.bf16.mxu0 %v3491
    %4618 = vmatpush1.bf16.msra.mxu0 %v3490
    %4619 = vmatprep.subr.bf16.mxu0 %v3507
    %4620 = vmatpush1.bf16.msra.mxu0 %v3506
    %4621 = vmatprep.subr.bf16.mxu0 %v3523
    %4622 = vmatpush1.bf16.msra.mxu0 %v3522
    %4623 = vmatprep.subr.bf16.mxu0 %v3539
    %4624 = vmatpush1.bf16.msra.mxu0 %v3538
    %4625 = vmatprep.subr.bf16.mxu0 %v3555
    %4626 = vmatpush1.bf16.msra.mxu0 %v3554
    %4627 = vmatprep.subr.bf16.mxu0 %v3571
    %4628 = vmatpush1.bf16.msra.mxu0 %v3570
    %4629 = vmatprep.subr.bf16.mxu0 %v3587
    %4630 = vmatpush1.bf16.msra.mxu0 %v3586
    %4631 = vmatprep.subr.bf16.mxu0 %v3603
    %4632 = vmatpush1.bf16.msra.mxu0 %v3602
    %4633 = vmatprep.subr.bf16.mxu0 %v3619
    %4634 = vmatpush1.bf16.msra.mxu0 %v3618
    %4635 = vmatprep.subr.bf16.mxu0 %v3635
    %4636 = vmatpush1.bf16.msra.mxu0 %v3634
    %4637 = vmatprep.subr.bf16.mxu0 %v3651
    %4638 = vmatpush1.bf16.msra.mxu0 %v3650
    %4639 = vmatprep.subr.bf16.mxu0 %v3667
    %4640 = vmatpush1.bf16.msra.mxu0 %v3666
    %4641 = vmatprep.subr.bf16.mxu0 %v3683
    %4642 = vmatpush1.bf16.msra.mxu0 %v3682
    %4643 = vmatprep.subr.bf16.mxu0 %v3699
    %4644 = vmatpush1.bf16.msra.mxu0 %v3698
    %4645 = vmatprep.subr.bf16.mxu0 %v3715
    %4646 = vmatpush1.bf16.msra.mxu0 %v3714
    %4647 = vmatprep.mubr.bf16.mxu0 %v4241
    %4648 = vmatmul.mubr.bf16.gmra.mrb[0].mxu0 %v4240
    %v4649 = vpop.f32.mrb[0].mxu0
    %v4650 = vadd.f32 %v4609, %v4649
    %v4651 = vpop.f32.mrb[0].mxu0
    %v4652 = vadd.f32 %v4611, %v4651
    %v4653 = vpop.f32.mrb[0].mxu0
    %v4654 = vpop.f32.mrb[0].mxu0
    %4655 = vdwg.mxu0
    %4656 = vmatprep.subr.bf16.mxu0 %v3731
    %4657 = vmatpush1.bf16.msra.mxu0 %v3730
    %4658 = vmatprep.subr.bf16.mxu0 %v3747
    %4659 = vmatpush1.bf16.msra.mxu0 %v3746
    %4660 = vmatprep.subr.bf16.mxu0 %v3763
    %4661 = vmatpush1.bf16.msra.mxu0 %v3762
    %4662 = vmatprep.subr.bf16.mxu0 %v3779
    %4663 = vmatpush1.bf16.msra.mxu0 %v3778
    %4664 = vmatprep.subr.bf16.mxu0 %v3795
    %4665 = vmatpush1.bf16.msra.mxu0 %v3794
    %4666 = vmatprep.subr.bf16.mxu0 %v3811
    %4667 = vmatpush1.bf16.msra.mxu0 %v3810
    %4668 = vmatprep.subr.bf16.mxu0 %v3827
    %4669 = vmatpush1.bf16.msra.mxu0 %v3826
    %4670 = vmatprep.subr.bf16.mxu0 %v3843
    %4671 = vmatpush1.bf16.msra.mxu0 %v3842
    %4672 = vmatprep.subr.bf16.mxu0 %v3859
    %4673 = vmatpush1.bf16.msra.mxu0 %v3858
    %4674 = vmatprep.subr.bf16.mxu0 %v3875
    %4675 = vmatpush1.bf16.msra.mxu0 %v3874
    %4676 = vmatprep.subr.bf16.mxu0 %v3891
    %4677 = vmatpush1.bf16.msra.mxu0 %v3890
    %4678 = vmatprep.subr.bf16.mxu0 %v3907
    %4679 = vmatpush1.bf16.msra.mxu0 %v3906
    %4680 = vmatprep.subr.bf16.mxu0 %v3923
    %4681 = vmatpush1.bf16.msra.mxu0 %v3922
    %4682 = vmatprep.subr.bf16.mxu0 %v3939
    %4683 = vmatpush1.bf16.msra.mxu0 %v3938
    %4684 = vmatprep.subr.bf16.mxu0 %v3955
    %4685 = vmatpush1.bf16.msra.mxu0 %v3954
    %4686 = vmatprep.subr.bf16.mxu0 %v3971
    %4687 = vmatpush1.bf16.msra.mxu0 %v3970
    %4688 = vmatprep.mubr.bf16.mxu0 %v4243
    %4689 = vmatmul.mubr.bf16.gmra.mrb[0].mxu0 %v4242
    %v4690 = vpop.f32.mrb[0].mxu0
    %v4691 = vadd.f32 %v4650, %v4690
    %v4692 = vpop.f32.mrb[0].mxu0
    %v4693 = vadd.f32 %v4652, %v4692
    %v4694 = vpop.f32.mrb[0].mxu0
    %v4695 = vpop.f32.mrb[0].mxu0
    %4696 = vdwg.mxu0
    %4697 = vmatprep.subr.bf16.mxu0 %v3987
    %4698 = vmatpush1.bf16.msra.mxu0 %v3986
    %4699 = vmatprep.subr.bf16.mxu0 %v4003
    %4700 = vmatpush1.bf16.msra.mxu0 %v4002
    %4701 = vmatprep.subr.bf16.mxu0 %v4019
    %4702 = vmatpush1.bf16.msra.mxu0 %v4018
    %4703 = vmatprep.subr.bf16.mxu0 %v4035
    %4704 = vmatpush1.bf16.msra.mxu0 %v4034
    %4705 = vmatprep.subr.bf16.mxu0 %v4051
    %4706 = vmatpush1.bf16.msra.mxu0 %v4050
    %4707 = vmatprep.subr.bf16.mxu0 %v4067
    %4708 = vmatpush1.bf16.msra.mxu0 %v4066
    %4709 = vmatprep.subr.bf16.mxu0 %v4083
    %4710 = vmatpush1.bf16.msra.mxu0 %v4082
    %4711 = vmatprep.subr.bf16.mxu0 %v4099
    %4712 = vmatpush1.bf16.msra.mxu0 %v4098
    %4713 = vmatprep.subr.bf16.mxu0 %v4115
    %4714 = vmatpush1.bf16.msra.mxu0 %v4114
    %4715 = vmatprep.subr.bf16.mxu0 %v4131
    %4716 = vmatpush1.bf16.msra.mxu0 %v4130
    %4717 = vmatprep.subr.bf16.mxu0 %v4147
    %4718 = vmatpush1.bf16.msra.mxu0 %v4146
    %4719 = vmatprep.subr.bf16.mxu0 %v4163
    %4720 = vmatpush1.bf16.msra.mxu0 %v4162
    %4721 = vmatprep.subr.bf16.mxu0 %v4179
    %4722 = vmatpush1.bf16.msra.mxu0 %v4178
    %4723 = vmatprep.subr.bf16.mxu0 %v4195
    %4724 = vmatpush1.bf16.msra.mxu0 %v4194
    %4725 = vmatprep.subr.bf16.mxu0 %v4211
    %4726 = vmatpush1.bf16.msra.mxu0 %v4210
    %4727 = vmatprep.subr.bf16.mxu0 %v4227
    %4728 = vmatpush1.bf16.msra.mxu0 %v4226
    %4729 = vmatprep.mubr.bf16.mxu0 %v4245
    %4730 = vmatmul.mubr.bf16.gmra.mrb[0].mxu0 %v4244
    %v4731 = vpop.f32.mrb[0].mxu0
    %v4732 = vadd.f32 %v4691, %v4731
    %v4733 = vpop.f32.mrb[0].mxu0
    %v4734 = vadd.f32 %v4693, %v4733
    %v4735 = vpop.f32.mrb[0].mxu0
    %v4736 = vpop.f32.mrb[0].mxu0
    %4737 = vdwg.mxu0
    %4738 = vmatprep.subr.bf16.mxu0 %v3221
    %4739 = vmatpush1.bf16.msra.mxu0 %v3220
    %4740 = vmatprep.subr.bf16.mxu0 %v3237
    %4741 = vmatpush1.bf16.msra.mxu0 %v3236
    %4742 = vmatprep.subr.bf16.mxu0 %v3253
    %4743 = vmatpush1.bf16.msra.mxu0 %v3252
    %4744 = vmatprep.subr.bf16.mxu0 %v3269
    %4745 = vmatpush1.bf16.msra.mxu0 %v3268
    %4746 = vmatprep.subr.bf16.mxu0 %v3285
    %4747 = vmatpush1.bf16.msra.mxu0 %v3284
    %4748 = vmatprep.subr.bf16.mxu0 %v3301
    %4749 = vmatpush1.bf16.msra.mxu0 %v3300
    %4750 = vmatprep.subr.bf16.mxu0 %v3317
    %4751 = vmatpush1.bf16.msra.mxu0 %v3316
    %4752 = vmatprep.subr.bf16.mxu0 %v3333
    %4753 = vmatpush1.bf16.msra.mxu0 %v3332
    %4754 = vmatprep.subr.bf16.mxu0 %v3349
    %4755 = vmatpush1.bf16.msra.mxu0 %v3348
    %4756 = vmatprep.subr.bf16.mxu0 %v3365
    %4757 = vmatpush1.bf16.msra.mxu0 %v3364
    %4758 = vmatprep.subr.bf16.mxu0 %v3381
    %4759 = vmatpush1.bf16.msra.mxu0 %v3380
    %4760 = vmatprep.subr.bf16.mxu0 %v3397
    %4761 = vmatpush1.bf16.msra.mxu0 %v3396
    %4762 = vmatprep.subr.bf16.mxu0 %v3413
    %4763 = vmatpush1.bf16.msra.mxu0 %v3412
    %4764 = vmatprep.subr.bf16.mxu0 %v3429
    %4765 = vmatpush1.bf16.msra.mxu0 %v3428
    %4766 = vmatprep.subr.bf16.mxu0 %v3445
    %4767 = vmatpush1.bf16.msra.mxu0 %v3444
    %4768 = vmatprep.subr.bf16.mxu0 %v3461
    %4769 = vmatpush1.bf16.msra.mxu0 %v3460
    %4770 = vmatprep.mubr.bf16.mxu0 %v4239
    %4771 = vmatmul.mubr.bf16.gmra.mrb[0].mxu0 %v4238
    %v4772 = vpop.f32.mrb[0].mxu0
    %v4773 = vadd.f32 0.0, %v4772
    %v4774 = vpop.f32.mrb[0].mxu0
    %v4775 = vadd.f32 0.0, %v4774
    %v4776 = vpop.f32.mrb[0].mxu0
    %v4777 = vpop.f32.mrb[0].mxu0
    %4778 = vdwg.mxu0
    %4779 = vmatprep.subr.bf16.mxu0 %v3477
    %4780 = vmatpush1.bf16.msra.mxu0 %v3476
    %4781 = vmatprep.subr.bf16.mxu0 %v3493
    %4782 = vmatpush1.bf16.msra.mxu0 %v3492
    %4783 = vmatprep.subr.bf16.mxu0 %v3509
    %4784 = vmatpush1.bf16.msra.mxu0 %v3508
    %4785 = vmatprep.subr.bf16.mxu0 %v3525
    %4786 = vmatpush1.bf16.msra.mxu0 %v3524
    %4787 = vmatprep.subr.bf16.mxu0 %v3541
    %4788 = vmatpush1.bf16.msra.mxu0 %v3540
    %4789 = vmatprep.subr.bf16.mxu0 %v3557
    %4790 = vmatpush1.bf16.msra.mxu0 %v3556
    %4791 = vmatprep.subr.bf16.mxu0 %v3573
    %4792 = vmatpush1.bf16.msra.mxu0 %v3572
    %4793 = vmatprep.subr.bf16.mxu0 %v3589
    %4794 = vmatpush1.bf16.msra.mxu0 %v3588
    %4795 = vmatprep.subr.bf16.mxu0 %v3605
    %4796 = vmatpush1.bf16.msra.mxu0 %v3604
    %4797 = vmatprep.subr.bf16.mxu0 %v3621
    %4798 = vmatpush1.bf16.msra.mxu0 %v3620
    %4799 = vmatprep.subr.bf16.mxu0 %v3637
    %4800 = vmatpush1.bf16.msra.mxu0 %v3636
    %4801 = vmatprep.subr.bf16.mxu0 %v3653
    %4802 = vmatpush1.bf16.msra.mxu0 %v3652
    %4803 = vmatprep.subr.bf16.mxu0 %v3669
    %4804 = vmatpush1.bf16.msra.mxu0 %v3668
    %4805 = vmatprep.subr.bf16.mxu0 %v3685
    %4806 = vmatpush1.bf16.msra.mxu0 %v3684
    %4807 = vmatprep.subr.bf16.mxu0 %v3701
    %4808 = vmatpush1.bf16.msra.mxu0 %v3700
    %4809 = vmatprep.subr.bf16.mxu0 %v3717
    %4810 = vmatpush1.bf16.msra.mxu0 %v3716
    %4811 = vmatprep.mubr.bf16.mxu0 %v4241
    %4812 = vmatmul.mubr.bf16.gmra.mrb[0].mxu0 %v4240
    %v4813 = vpop.f32.mrb[0].mxu0
    %v4814 = vadd.f32 %v4773, %v4813
    %v4815 = vpop.f32.mrb[0].mxu0
    %v4816 = vadd.f32 %v4775, %v4815
    %v4817 = vpop.f32.mrb[0].mxu0
    %v4818 = vpop.f32.mrb[0].mxu0
    %4819 = vdwg.mxu0
    %4820 = vmatprep.subr.bf16.mxu0 %v3733
    %4821 = vmatpush1.bf16.msra.mxu0 %v3732
    %4822 = vmatprep.subr.bf16.mxu0 %v3749
    %4823 = vmatpush1.bf16.msra.mxu0 %v3748
    %4824 = vmatprep.subr.bf16.mxu0 %v3765
    %4825 = vmatpush1.bf16.msra.mxu0 %v3764
    %4826 = vmatprep.subr.bf16.mxu0 %v3781
    %4827 = vmatpush1.bf16.msra.mxu0 %v3780
    %4828 = vmatprep.subr.bf16.mxu0 %v3797
    %4829 = vmatpush1.bf16.msra.mxu0 %v3796
    %4830 = vmatprep.subr.bf16.mxu0 %v3813
    %4831 = vmatpush1.bf16.msra.mxu0 %v3812
    %4832 = vmatprep.subr.bf16.mxu0 %v3829
    %4833 = vmatpush1.bf16.msra.mxu0 %v3828
    %4834 = vmatprep.subr.bf16.mxu0 %v3845
    %4835 = vmatpush1.bf16.msra.mxu0 %v3844
    %4836 = vmatprep.subr.bf16.mxu0 %v3861
    %4837 = vmatpush1.bf16.msra.mxu0 %v3860
    %4838 = vmatprep.subr.bf16.mxu0 %v3877
    %4839 = vmatpush1.bf16.msra.mxu0 %v3876
    %4840 = vmatprep.subr.bf16.mxu0 %v3893
    %4841 = vmatpush1.bf16.msra.mxu0 %v3892
    %4842 = vmatprep.subr.bf16.mxu0 %v3909
    %4843 = vmatpush1.bf16.msra.mxu0 %v3908
    %4844 = vmatprep.subr.bf16.mxu0 %v3925
    %4845 = vmatpush1.bf16.msra.mxu0 %v3924
    %4846 = vmatprep.subr.bf16.mxu0 %v3941
    %4847 = vmatpush1.bf16.msra.mxu0 %v3940
    %4848 = vmatprep.subr.bf16.mxu0 %v3957
    %4849 = vmatpush1.bf16.msra.mxu0 %v3956
    %4850 = vmatprep.subr.bf16.mxu0 %v3973
    %4851 = vmatpush1.bf16.msra.mxu0 %v3972
    %4852 = vmatprep.mubr.bf16.mxu0 %v4243
    %4853 = vmatmul.mubr.bf16.gmra.mrb[0].mxu0 %v4242
    %v4854 = vpop.f32.mrb[0].mxu0
    %v4855 = vadd.f32 %v4814, %v4854
    %v4856 = vpop.f32.mrb[0].mxu0
    %v4857 = vadd.f32 %v4816, %v4856
    %v4858 = vpop.f32.mrb[0].mxu0
    %v4859 = vpop.f32.mrb[0].mxu0
    %4860 = vdwg.mxu0
    %4861 = vmatprep.subr.bf16.mxu0 %v3989
    %4862 = vmatpush1.bf16.msra.mxu0 %v3988
    %4863 = vmatprep.subr.bf16.mxu0 %v4005
    %4864 = vmatpush1.bf16.msra.mxu0 %v4004
    %4865 = vmatprep.subr.bf16.mxu0 %v4021
    %4866 = vmatpush1.bf16.msra.mxu0 %v4020
    %4867 = vmatprep.subr.bf16.mxu0 %v4037
    %4868 = vmatpush1.bf16.msra.mxu0 %v4036
    %4869 = vmatprep.subr.bf16.mxu0 %v4053
    %4870 = vmatpush1.bf16.msra.mxu0 %v4052
    %4871 = vmatprep.subr.bf16.mxu0 %v4069
    %4872 = vmatpush1.bf16.msra.mxu0 %v4068
    %4873 = vmatprep.subr.bf16.mxu0 %v4085
    %4874 = vmatpush1.bf16.msra.mxu0 %v4084
    %4875 = vmatprep.subr.bf16.mxu0 %v4101
    %4876 = vmatpush1.bf16.msra.mxu0 %v4100
    %4877 = vmatprep.subr.bf16.mxu0 %v4117
    %4878 = vmatpush1.bf16.msra.mxu0 %v4116
    %4879 = vmatprep.subr.bf16.mxu0 %v4133
    %4880 = vmatpush1.bf16.msra.mxu0 %v4132
    %4881 = vmatprep.subr.bf16.mxu0 %v4149
    %4882 = vmatpush1.bf16.msra.mxu0 %v4148
    %4883 = vmatprep.subr.bf16.mxu0 %v4165
    %4884 = vmatpush1.bf16.msra.mxu0 %v4164
    %4885 = vmatprep.subr.bf16.mxu0 %v4181
    %4886 = vmatpush1.bf16.msra.mxu0 %v4180
    %4887 = vmatprep.subr.bf16.mxu0 %v4197
    %4888 = vmatpush1.bf16.msra.mxu0 %v4196
    %4889 = vmatprep.subr.bf16.mxu0 %v4213
    %4890 = vmatpush1.bf16.msra.mxu0 %v4212
    %4891 = vmatprep.subr.bf16.mxu0 %v4229
    %4892 = vmatpush1.bf16.msra.mxu0 %v4228
    %4893 = vmatprep.mubr.bf16.mxu0 %v4245
    %4894 = vmatmul.mubr.bf16.gmra.mrb[0].mxu0 %v4244
    %v4895 = vpop.f32.mrb[0].mxu0
    %v4896 = vadd.f32 %v4855, %v4895
    %v4897 = vpop.f32.mrb[0].mxu0
    %v4898 = vadd.f32 %v4857, %v4897
    %v4899 = vpop.f32.mrb[0].mxu0
    %v4900 = vpop.f32.mrb[0].mxu0
    %4901 = vdwg.mxu0
    %4902 = vmatprep.subr.bf16.mxu0 %v3223
    %4903 = vmatpush1.bf16.msra.mxu0 %v3222
    %4904 = vmatprep.subr.bf16.mxu0 %v3239
    %4905 = vmatpush1.bf16.msra.mxu0 %v3238
    %4906 = vmatprep.subr.bf16.mxu0 %v3255
    %4907 = vmatpush1.bf16.msra.mxu0 %v3254
    %4908 = vmatprep.subr.bf16.mxu0 %v3271
    %4909 = vmatpush1.bf16.msra.mxu0 %v3270
    %4910 = vmatprep.subr.bf16.mxu0 %v3287
    %4911 = vmatpush1.bf16.msra.mxu0 %v3286
    %4912 = vmatprep.subr.bf16.mxu0 %v3303
    %4913 = vmatpush1.bf16.msra.mxu0 %v3302
    %4914 = vmatprep.subr.bf16.mxu0 %v3319
    %4915 = vmatpush1.bf16.msra.mxu0 %v3318
    %4916 = vmatprep.subr.bf16.mxu0 %v3335
    %4917 = vmatpush1.bf16.msra.mxu0 %v3334
    %4918 = vmatprep.subr.bf16.mxu0 %v3351
    %4919 = vmatpush1.bf16.msra.mxu0 %v3350
    %4920 = vmatprep.subr.bf16.mxu0 %v3367
    %4921 = vmatpush1.bf16.msra.mxu0 %v3366
    %4922 = vmatprep.subr.bf16.mxu0 %v3383
    %4923 = vmatpush1.bf16.msra.mxu0 %v3382
    %4924 = vmatprep.subr.bf16.mxu0 %v3399
    %4925 = vmatpush1.bf16.msra.mxu0 %v3398
    %4926 = vmatprep.subr.bf16.mxu0 %v3415
    %4927 = vmatpush1.bf16.msra.mxu0 %v3414
    %4928 = vmatprep.subr.bf16.mxu0 %v3431
    %4929 = vmatpush1.bf16.msra.mxu0 %v3430
    %4930 = vmatprep.subr.bf16.mxu0 %v3447
    %4931 = vmatpush1.bf16.msra.mxu0 %v3446
    %4932 = vmatprep.subr.bf16.mxu0 %v3463
    %4933 = vmatpush1.bf16.msra.mxu0 %v3462
    %4934 = vmatprep.mubr.bf16.mxu0 %v4239
    %4935 = vmatmul.mubr.bf16.gmra.mrb[0].mxu0 %v4238
    %v4936 = vpop.f32.mrb[0].mxu0
    %v4937 = vadd.f32 0.0, %v4936
    %v4938 = vpop.f32.mrb[0].mxu0
    %v4939 = vadd.f32 0.0, %v4938
    %v4940 = vpop.f32.mrb[0].mxu0
    %v4941 = vpop.f32.mrb[0].mxu0
    %4942 = vdwg.mxu0
    %4943 = vmatprep.subr.bf16.mxu0 %v3479
    %4944 = vmatpush1.bf16.msra.mxu0 %v3478
    %4945 = vmatprep.subr.bf16.mxu0 %v3495
    %4946 = vmatpush1.bf16.msra.mxu0 %v3494
    %4947 = vmatprep.subr.bf16.mxu0 %v3511
    %4948 = vmatpush1.bf16.msra.mxu0 %v3510
    %4949 = vmatprep.subr.bf16.mxu0 %v3527
    %4950 = vmatpush1.bf16.msra.mxu0 %v3526
    %4951 = vmatprep.subr.bf16.mxu0 %v3543
    %4952 = vmatpush1.bf16.msra.mxu0 %v3542
    %4953 = vmatprep.subr.bf16.mxu0 %v3559
    %4954 = vmatpush1.bf16.msra.mxu0 %v3558
    %4955 = vmatprep.subr.bf16.mxu0 %v3575
    %4956 = vmatpush1.bf16.msra.mxu0 %v3574
    %4957 = vmatprep.subr.bf16.mxu0 %v3591
    %4958 = vmatpush1.bf16.msra.mxu0 %v3590
    %4959 = vmatprep.subr.bf16.mxu0 %v3607
    %4960 = vmatpush1.bf16.msra.mxu0 %v3606
    %4961 = vmatprep.subr.bf16.mxu0 %v3623
    %4962 = vmatpush1.bf16.msra.mxu0 %v3622
    %4963 = vmatprep.subr.bf16.mxu0 %v3639
    %4964 = vmatpush1.bf16.msra.mxu0 %v3638
    %4965 = vmatprep.subr.bf16.mxu0 %v3655
    %4966 = vmatpush1.bf16.msra.mxu0 %v3654
    %4967 = vmatprep.subr.bf16.mxu0 %v3671
    %4968 = vmatpush1.bf16.msra.mxu0 %v3670
    %4969 = vmatprep.subr.bf16.mxu0 %v3687
    %4970 = vmatpush1.bf16.msra.mxu0 %v3686
    %4971 = vmatprep.subr.bf16.mxu0 %v3703
    %4972 = vmatpush1.bf16.msra.mxu0 %v3702
    %4973 = vmatprep.subr.bf16.mxu0 %v3719
    %4974 = vmatpush1.bf16.msra.mxu0 %v3718
    %4975 = vmatprep.mubr.bf16.mxu0 %v4241
    %4976 = vmatmul.mubr.bf16.gmra.mrb[0].mxu0 %v4240
    %v4977 = vpop.f32.mrb[0].mxu0
    %v4978 = vadd.f32 %v4937, %v4977
    %v4979 = vpop.f32.mrb[0].mxu0
    %v4980 = vadd.f32 %v4939, %v4979
    %v4981 = vpop.f32.mrb[0].mxu0
    %v4982 = vpop.f32.mrb[0].mxu0
    %4983 = vdwg.mxu0
    %4984 = vmatprep.subr.bf16.mxu0 %v3735
    %4985 = vmatpush1.bf16.msra.mxu0 %v3734
    %4986 = vmatprep.subr.bf16.mxu0 %v3751
    %4987 = vmatpush1.bf16.msra.mxu0 %v3750
    %4988 = vmatprep.subr.bf16.mxu0 %v3767
    %4989 = vmatpush1.bf16.msra.mxu0 %v3766
    %4990 = vmatprep.subr.bf16.mxu0 %v3783
    %4991 = vmatpush1.bf16.msra.mxu0 %v3782
    %4992 = vmatprep.subr.bf16.mxu0 %v3799
    %4993 = vmatpush1.bf16.msra.mxu0 %v3798
    %4994 = vmatprep.subr.bf16.mxu0 %v3815
    %4995 = vmatpush1.bf16.msra.mxu0 %v3814
    %4996 = vmatprep.subr.bf16.mxu0 %v3831
    %4997 = vmatpush1.bf16.msra.mxu0 %v3830
    %4998 = vmatprep.subr.bf16.mxu0 %v3847
    %4999 = vmatpush1.bf16.msra.mxu0 %v3846
    %5000 = vmatprep.subr.bf16.mxu0 %v3863
    %5001 = vmatpush1.bf16.msra.mxu0 %v3862
    %5002 = vmatprep.subr.bf16.mxu0 %v3879
    %5003 = vmatpush1.bf16.msra.mxu0 %v3878
    %5004 = vmatprep.subr.bf16.mxu0 %v3895
    %5005 = vmatpush1.bf16.msra.mxu0 %v3894
    %5006 = vmatprep.subr.bf16.mxu0 %v3911
    %5007 = vmatpush1.bf16.msra.mxu0 %v3910
    %5008 = vmatprep.subr.bf16.mxu0 %v3927
    %5009 = vmatpush1.bf16.msra.mxu0 %v3926
    %5010 = vmatprep.subr.bf16.mxu0 %v3943
    %5011 = vmatpush1.bf16.msra.mxu0 %v3942
    %5012 = vmatprep.subr.bf16.mxu0 %v3959
    %5013 = vmatpush1.bf16.msra.mxu0 %v3958
    %5014 = vmatprep.subr.bf16.mxu0 %v3975
    %5015 = vmatpush1.bf16.msra.mxu0 %v3974
    %5016 = vmatprep.mubr.bf16.mxu0 %v4243
    %5017 = vmatmul.mubr.bf16.gmra.mrb[0].mxu0 %v4242
    %v5018 = vpop.f32.mrb[0].mxu0
    %v5019 = vadd.f32 %v4978, %v5018
    %v5020 = vpop.f32.mrb[0].mxu0
    %v5021 = vadd.f32 %v4980, %v5020
    %v5022 = vpop.f32.mrb[0].mxu0
    %v5023 = vpop.f32.mrb[0].mxu0
    %5024 = vdwg.mxu0
    %5025 = vmatprep.subr.bf16.mxu0 %v3991
    %5026 = vmatpush1.bf16.msra.mxu0 %v3990
    %5027 = vmatprep.subr.bf16.mxu0 %v4007
    %5028 = vmatpush1.bf16.msra.mxu0 %v4006
    %5029 = vmatprep.subr.bf16.mxu0 %v4023
    %5030 = vmatpush1.bf16.msra.mxu0 %v4022
    %5031 = vmatprep.subr.bf16.mxu0 %v4039
    %5032 = vmatpush1.bf16.msra.mxu0 %v4038
    %5033 = vmatprep.subr.bf16.mxu0 %v4055
    %5034 = vmatpush1.bf16.msra.mxu0 %v4054
    %5035 = vmatprep.subr.bf16.mxu0 %v4071
    %5036 = vmatpush1.bf16.msra.mxu0 %v4070
    %5037 = vmatprep.subr.bf16.mxu0 %v4087
    %5038 = vmatpush1.bf16.msra.mxu0 %v4086
    %5039 = vmatprep.subr.bf16.mxu0 %v4103
    %5040 = vmatpush1.bf16.msra.mxu0 %v4102
    %5041 = vmatprep.subr.bf16.mxu0 %v4119
    %5042 = vmatpush1.bf16.msra.mxu0 %v4118
    %5043 = vmatprep.subr.bf16.mxu0 %v4135
    %5044 = vmatpush1.bf16.msra.mxu0 %v4134
    %5045 = vmatprep.subr.bf16.mxu0 %v4151
    %5046 = vmatpush1.bf16.msra.mxu0 %v4150
    %5047 = vmatprep.subr.bf16.mxu0 %v4167
    %5048 = vmatpush1.bf16.msra.mxu0 %v4166
    %5049 = vmatprep.subr.bf16.mxu0 %v4183
    %5050 = vmatpush1.bf16.msra.mxu0 %v4182
    %5051 = vmatprep.subr.bf16.mxu0 %v4199
    %5052 = vmatpush1.bf16.msra.mxu0 %v4198
    %5053 = vmatprep.subr.bf16.mxu0 %v4215
    %5054 = vmatpush1.bf16.msra.mxu0 %v4214
    %5055 = vmatprep.subr.bf16.mxu0 %v4231
    %5056 = vmatpush1.bf16.msra.mxu0 %v4230
    %5057 = vmatprep.mubr.bf16.mxu0 %v4245
    %5058 = vmatmul.mubr.bf16.gmra.mrb[0].mxu0 %v4244
    %v5059 = vpop.f32.mrb[0].mxu0
    %v5060 = vadd.f32 %v5019, %v5059
    %v5061 = vpop.f32.mrb[0].mxu0
    %v5062 = vadd.f32 %v5021, %v5061
    %v5063 = vpop.f32.mrb[0].mxu0
    %v5064 = vpop.f32.mrb[0].mxu0
    %5065 = vdwg.mxu0
    %5066 = vmatprep.subr.bf16.mxu0 %v3225
    %5067 = vmatpush1.bf16.msra.mxu0 %v3224
    %5068 = vmatprep.subr.bf16.mxu0 %v3241
    %5069 = vmatpush1.bf16.msra.mxu0 %v3240
    %5070 = vmatprep.subr.bf16.mxu0 %v3257
    %5071 = vmatpush1.bf16.msra.mxu0 %v3256
    %5072 = vmatprep.subr.bf16.mxu0 %v3273
    %5073 = vmatpush1.bf16.msra.mxu0 %v3272
    %5074 = vmatprep.subr.bf16.mxu0 %v3289
    %5075 = vmatpush1.bf16.msra.mxu0 %v3288
    %5076 = vmatprep.subr.bf16.mxu0 %v3305
    %5077 = vmatpush1.bf16.msra.mxu0 %v3304
    %5078 = vmatprep.subr.bf16.mxu0 %v3321
    %5079 = vmatpush1.bf16.msra.mxu0 %v3320
    %5080 = vmatprep.subr.bf16.mxu0 %v3337
    %5081 = vmatpush1.bf16.msra.mxu0 %v3336
    %5082 = vmatprep.subr.bf16.mxu0 %v3353
    %5083 = vmatpush1.bf16.msra.mxu0 %v3352
    %5084 = vmatprep.subr.bf16.mxu0 %v3369
    %5085 = vmatpush1.bf16.msra.mxu0 %v3368
    %5086 = vmatprep.subr.bf16.mxu0 %v3385
    %5087 = vmatpush1.bf16.msra.mxu0 %v3384
    %5088 = vmatprep.subr.bf16.mxu0 %v3401
    %5089 = vmatpush1.bf16.msra.mxu0 %v3400
    %5090 = vmatprep.subr.bf16.mxu0 %v3417
    %5091 = vmatpush1.bf16.msra.mxu0 %v3416
    %5092 = vmatprep.subr.bf16.mxu0 %v3433
    %5093 = vmatpush1.bf16.msra.mxu0 %v3432
    %5094 = vmatprep.subr.bf16.mxu0 %v3449
    %5095 = vmatpush1.bf16.msra.mxu0 %v3448
    %5096 = vmatprep.subr.bf16.mxu0 %v3465
    %5097 = vmatpush1.bf16.msra.mxu0 %v3464
    %5098 = vmatprep.mubr.bf16.mxu0 %v4239
    %5099 = vmatmul.mubr.bf16.gmra.mrb[0].mxu0 %v4238
    %v5100 = vpop.f32.mrb[0].mxu0
    %v5101 = vadd.f32 0.0, %v5100
    %v5102 = vpop.f32.mrb[0].mxu0
    %v5103 = vadd.f32 0.0, %v5102
    %v5104 = vpop.f32.mrb[0].mxu0
    %v5105 = vpop.f32.mrb[0].mxu0
    %5106 = vdwg.mxu0
    %5107 = vmatprep.subr.bf16.mxu0 %v3481
    %5108 = vmatpush1.bf16.msra.mxu0 %v3480
    %5109 = vmatprep.subr.bf16.mxu0 %v3497
    %5110 = vmatpush1.bf16.msra.mxu0 %v3496
    %5111 = vmatprep.subr.bf16.mxu0 %v3513
    %5112 = vmatpush1.bf16.msra.mxu0 %v3512
    %5113 = vmatprep.subr.bf16.mxu0 %v3529
    %5114 = vmatpush1.bf16.msra.mxu0 %v3528
    %5115 = vmatprep.subr.bf16.mxu0 %v3545
    %5116 = vmatpush1.bf16.msra.mxu0 %v3544
    %5117 = vmatprep.subr.bf16.mxu0 %v3561
    %5118 = vmatpush1.bf16.msra.mxu0 %v3560
    %5119 = vmatprep.subr.bf16.mxu0 %v3577
    %5120 = vmatpush1.bf16.msra.mxu0 %v3576
    %5121 = vmatprep.subr.bf16.mxu0 %v3593
    %5122 = vmatpush1.bf16.msra.mxu0 %v3592
    %5123 = vmatprep.subr.bf16.mxu0 %v3609
    %5124 = vmatpush1.bf16.msra.mxu0 %v3608
    %5125 = vmatprep.subr.bf16.mxu0 %v3625
    %5126 = vmatpush1.bf16.msra.mxu0 %v3624
    %5127 = vmatprep.subr.bf16.mxu0 %v3641
    %5128 = vmatpush1.bf16.msra.mxu0 %v3640
    %5129 = vmatprep.subr.bf16.mxu0 %v3657
    %5130 = vmatpush1.bf16.msra.mxu0 %v3656
    %5131 = vmatprep.subr.bf16.mxu0 %v3673
    %5132 = vmatpush1.bf16.msra.mxu0 %v3672
    %5133 = vmatprep.subr.bf16.mxu0 %v3689
    %5134 = vmatpush1.bf16.msra.mxu0 %v3688
    %5135 = vmatprep.subr.bf16.mxu0 %v3705
    %5136 = vmatpush1.bf16.msra.mxu0 %v3704
    %5137 = vmatprep.subr.bf16.mxu0 %v3721
    %5138 = vmatpush1.bf16.msra.mxu0 %v3720
    %5139 = vmatprep.mubr.bf16.mxu0 %v4241
    %5140 = vmatmul.mubr.bf16.gmra.mrb[0].mxu0 %v4240
    %v5141 = vpop.f32.mrb[0].mxu0
    %v5142 = vadd.f32 %v5101, %v5141
    %v5143 = vpop.f32.mrb[0].mxu0
    %v5144 = vadd.f32 %v5103, %v5143
    %v5145 = vpop.f32.mrb[0].mxu0
    %v5146 = vpop.f32.mrb[0].mxu0
    %5147 = vdwg.mxu0
    %5148 = vmatprep.subr.bf16.mxu0 %v3737
    %5149 = vmatpush1.bf16.msra.mxu0 %v3736
    %5150 = vmatprep.subr.bf16.mxu0 %v3753
    %5151 = vmatpush1.bf16.msra.mxu0 %v3752
    %5152 = vmatprep.subr.bf16.mxu0 %v3769
    %5153 = vmatpush1.bf16.msra.mxu0 %v3768
    %5154 = vmatprep.subr.bf16.mxu0 %v3785
    %5155 = vmatpush1.bf16.msra.mxu0 %v3784
    %5156 = vmatprep.subr.bf16.mxu0 %v3801
    %5157 = vmatpush1.bf16.msra.mxu0 %v3800
    %5158 = vmatprep.subr.bf16.mxu0 %v3817
    %5159 = vmatpush1.bf16.msra.mxu0 %v3816
    %5160 = vmatprep.subr.bf16.mxu0 %v3833
    %5161 = vmatpush1.bf16.msra.mxu0 %v3832
    %5162 = vmatprep.subr.bf16.mxu0 %v3849
    %5163 = vmatpush1.bf16.msra.mxu0 %v3848
    %5164 = vmatprep.subr.bf16.mxu0 %v3865
    %5165 = vmatpush1.bf16.msra.mxu0 %v3864
    %5166 = vmatprep.subr.bf16.mxu0 %v3881
    %5167 = vmatpush1.bf16.msra.mxu0 %v3880
    %5168 = vmatprep.subr.bf16.mxu0 %v3897
    %5169 = vmatpush1.bf16.msra.mxu0 %v3896
    %5170 = vmatprep.subr.bf16.mxu0 %v3913
    %5171 = vmatpush1.bf16.msra.mxu0 %v3912
    %5172 = vmatprep.subr.bf16.mxu0 %v3929
    %5173 = vmatpush1.bf16.msra.mxu0 %v3928
    %5174 = vmatprep.subr.bf16.mxu0 %v3945
    %5175 = vmatpush1.bf16.msra.mxu0 %v3944
    %5176 = vmatprep.subr.bf16.mxu0 %v3961
    %5177 = vmatpush1.bf16.msra.mxu0 %v3960
    %5178 = vmatprep.subr.bf16.mxu0 %v3977
    %5179 = vmatpush1.bf16.msra.mxu0 %v3976
    %5180 = vmatprep.mubr.bf16.mxu0 %v4243
    %5181 = vmatmul.mubr.bf16.gmra.mrb[0].mxu0 %v4242
    %v5182 = vpop.f32.mrb[0].mxu0
    %v5183 = vadd.f32 %v5142, %v5182
    %v5184 = vpop.f32.mrb[0].mxu0
    %v5185 = vadd.f32 %v5144, %v5184
    %v5186 = vpop.f32.mrb[0].mxu0
    %v5187 = vpop.f32.mrb[0].mxu0
    %5188 = vdwg.mxu0
    %5189 = vmatprep.subr.bf16.mxu0 %v3993
    %5190 = vmatpush1.bf16.msra.mxu0 %v3992
    %5191 = vmatprep.subr.bf16.mxu0 %v4009
    %5192 = vmatpush1.bf16.msra.mxu0 %v4008
    %5193 = vmatprep.subr.bf16.mxu0 %v4025
    %5194 = vmatpush1.bf16.msra.mxu0 %v4024
    %5195 = vmatprep.subr.bf16.mxu0 %v4041
    %5196 = vmatpush1.bf16.msra.mxu0 %v4040
    %5197 = vmatprep.subr.bf16.mxu0 %v4057
    %5198 = vmatpush1.bf16.msra.mxu0 %v4056
    %5199 = vmatprep.subr.bf16.mxu0 %v4073
    %5200 = vmatpush1.bf16.msra.mxu0 %v4072
    %5201 = vmatprep.subr.bf16.mxu0 %v4089
    %5202 = vmatpush1.bf16.msra.mxu0 %v4088
    %5203 = vmatprep.subr.bf16.mxu0 %v4105
    %5204 = vmatpush1.bf16.msra.mxu0 %v4104
    %5205 = vmatprep.subr.bf16.mxu0 %v4121
    %5206 = vmatpush1.bf16.msra.mxu0 %v4120
    %5207 = vmatprep.subr.bf16.mxu0 %v4137
    %5208 = vmatpush1.bf16.msra.mxu0 %v4136
    %5209 = vmatprep.subr.bf16.mxu0 %v4153
    %5210 = vmatpush1.bf16.msra.mxu0 %v4152
    %5211 = vmatprep.subr.bf16.mxu0 %v4169
    %5212 = vmatpush1.bf16.msra.mxu0 %v4168
    %5213 = vmatprep.subr.bf16.mxu0 %v4185
    %5214 = vmatpush1.bf16.msra.mxu0 %v4184
    %5215 = vmatprep.subr.bf16.mxu0 %v4201
    %5216 = vmatpush1.bf16.msra.mxu0 %v4200
    %5217 = vmatprep.subr.bf16.mxu0 %v4217
    %5218 = vmatpush1.bf16.msra.mxu0 %v4216
    %5219 = vmatprep.subr.bf16.mxu0 %v4233
    %5220 = vmatpush1.bf16.msra.mxu0 %v4232
    %5221 = vmatprep.mubr.bf16.mxu0 %v4245
    %5222 = vmatmul.mubr.bf16.gmra.mrb[0].mxu0 %v4244
    %v5223 = vpop.f32.mrb[0].mxu0
    %v5224 = vadd.f32 %v5183, %v5223
    %v5225 = vpop.f32.mrb[0].mxu0
    %v5226 = vadd.f32 %v5185, %v5225
    %v5227 = vpop.f32.mrb[0].mxu0
    %v5228 = vpop.f32.mrb[0].mxu0
    %5229 = vdwg.mxu0
    %5230 = vmatprep.subr.bf16.mxu0 %v3227
    %5231 = vmatpush1.bf16.msra.mxu0 %v3226
    %5232 = vmatprep.subr.bf16.mxu0 %v3243
    %5233 = vmatpush1.bf16.msra.mxu0 %v3242
    %5234 = vmatprep.subr.bf16.mxu0 %v3259
    %5235 = vmatpush1.bf16.msra.mxu0 %v3258
    %5236 = vmatprep.subr.bf16.mxu0 %v3275
    %5237 = vmatpush1.bf16.msra.mxu0 %v3274
    %5238 = vmatprep.subr.bf16.mxu0 %v3291
    %5239 = vmatpush1.bf16.msra.mxu0 %v3290
    %5240 = vmatprep.subr.bf16.mxu0 %v3307
    %5241 = vmatpush1.bf16.msra.mxu0 %v3306
    %5242 = vmatprep.subr.bf16.mxu0 %v3323
    %5243 = vmatpush1.bf16.msra.mxu0 %v3322
    %5244 = vmatprep.subr.bf16.mxu0 %v3339
    %5245 = vmatpush1.bf16.msra.mxu0 %v3338
    %5246 = vmatprep.subr.bf16.mxu0 %v3355
    %5247 = vmatpush1.bf16.msra.mxu0 %v3354
    %5248 = vmatprep.subr.bf16.mxu0 %v3371
    %5249 = vmatpush1.bf16.msra.mxu0 %v3370
    %5250 = vmatprep.subr.bf16.mxu0 %v3387
    %5251 = vmatpush1.bf16.msra.mxu0 %v3386
    %5252 = vmatprep.subr.bf16.mxu0 %v3403
    %5253 = vmatpush1.bf16.msra.mxu0 %v3402
    %5254 = vmatprep.subr.bf16.mxu0 %v3419
    %5255 = vmatpush1.bf16.msra.mxu0 %v3418
    %5256 = vmatprep.subr.bf16.mxu0 %v3435
    %5257 = vmatpush1.bf16.msra.mxu0 %v3434
    %5258 = vmatprep.subr.bf16.mxu0 %v3451
    %5259 = vmatpush1.bf16.msra.mxu0 %v3450
    %5260 = vmatprep.subr.bf16.mxu0 %v3467
    %5261 = vmatpush1.bf16.msra.mxu0 %v3466
    %5262 = vmatprep.mubr.bf16.mxu0 %v4239
    %5263 = vmatmul.mubr.bf16.gmra.mrb[0].mxu0 %v4238
    %v5264 = vpop.f32.mrb[0].mxu0
    %v5265 = vadd.f32 0.0, %v5264
    %v5266 = vpop.f32.mrb[0].mxu0
    %v5267 = vadd.f32 0.0, %v5266
    %v5268 = vpop.f32.mrb[0].mxu0
    %v5269 = vpop.f32.mrb[0].mxu0
    %5270 = vdwg.mxu0
    %5271 = vmatprep.subr.bf16.mxu0 %v3483
    %5272 = vmatpush1.bf16.msra.mxu0 %v3482
    %5273 = vmatprep.subr.bf16.mxu0 %v3499
    %5274 = vmatpush1.bf16.msra.mxu0 %v3498
    %5275 = vmatprep.subr.bf16.mxu0 %v3515
    %5276 = vmatpush1.bf16.msra.mxu0 %v3514
    %5277 = vmatprep.subr.bf16.mxu0 %v3531
    %5278 = vmatpush1.bf16.msra.mxu0 %v3530
    %5279 = vmatprep.subr.bf16.mxu0 %v3547
    %5280 = vmatpush1.bf16.msra.mxu0 %v3546
    %5281 = vmatprep.subr.bf16.mxu0 %v3563
    %5282 = vmatpush1.bf16.msra.mxu0 %v3562
    %5283 = vmatprep.subr.bf16.mxu0 %v3579
    %5284 = vmatpush1.bf16.msra.mxu0 %v3578
    %5285 = vmatprep.subr.bf16.mxu0 %v3595
    %5286 = vmatpush1.bf16.msra.mxu0 %v3594
    %5287 = vmatprep.subr.bf16.mxu0 %v3611
    %5288 = vmatpush1.bf16.msra.mxu0 %v3610
    %5289 = vmatprep.subr.bf16.mxu0 %v3627
    %5290 = vmatpush1.bf16.msra.mxu0 %v3626
    %5291 = vmatprep.subr.bf16.mxu0 %v3643
    %5292 = vmatpush1.bf16.msra.mxu0 %v3642
    %5293 = vmatprep.subr.bf16.mxu0 %v3659
    %5294 = vmatpush1.bf16.msra.mxu0 %v3658
    %5295 = vmatprep.subr.bf16.mxu0 %v3675
    %5296 = vmatpush1.bf16.msra.mxu0 %v3674
    %5297 = vmatprep.subr.bf16.mxu0 %v3691
    %5298 = vmatpush1.bf16.msra.mxu0 %v3690
    %5299 = vmatprep.subr.bf16.mxu0 %v3707
    %5300 = vmatpush1.bf16.msra.mxu0 %v3706
    %5301 = vmatprep.subr.bf16.mxu0 %v3723
    %5302 = vmatpush1.bf16.msra.mxu0 %v3722
    %5303 = vmatprep.mubr.bf16.mxu0 %v4241
    %5304 = vmatmul.mubr.bf16.gmra.mrb[0].mxu0 %v4240
    %v5305 = vpop.f32.mrb[0].mxu0
    %v5306 = vadd.f32 %v5265, %v5305
    %v5307 = vpop.f32.mrb[0].mxu0
    %v5308 = vadd.f32 %v5267, %v5307
    %v5309 = vpop.f32.mrb[0].mxu0
    %v5310 = vpop.f32.mrb[0].mxu0
    %5311 = vdwg.mxu0
    %5312 = vmatprep.subr.bf16.mxu0 %v3739
    %5313 = vmatpush1.bf16.msra.mxu0 %v3738
    %5314 = vmatprep.subr.bf16.mxu0 %v3755
    %5315 = vmatpush1.bf16.msra.mxu0 %v3754
    %5316 = vmatprep.subr.bf16.mxu0 %v3771
    %5317 = vmatpush1.bf16.msra.mxu0 %v3770
    %5318 = vmatprep.subr.bf16.mxu0 %v3787
    %5319 = vmatpush1.bf16.msra.mxu0 %v3786
    %5320 = vmatprep.subr.bf16.mxu0 %v3803
    %5321 = vmatpush1.bf16.msra.mxu0 %v3802
    %5322 = vmatprep.subr.bf16.mxu0 %v3819
    %5323 = vmatpush1.bf16.msra.mxu0 %v3818
    %5324 = vmatprep.subr.bf16.mxu0 %v3835
    %5325 = vmatpush1.bf16.msra.mxu0 %v3834
    %5326 = vmatprep.subr.bf16.mxu0 %v3851
    %5327 = vmatpush1.bf16.msra.mxu0 %v3850
    %5328 = vmatprep.subr.bf16.mxu0 %v3867
    %5329 = vmatpush1.bf16.msra.mxu0 %v3866
    %5330 = vmatprep.subr.bf16.mxu0 %v3883
    %5331 = vmatpush1.bf16.msra.mxu0 %v3882
    %5332 = vmatprep.subr.bf16.mxu0 %v3899
    %5333 = vmatpush1.bf16.msra.mxu0 %v3898
    %5334 = vmatprep.subr.bf16.mxu0 %v3915
    %5335 = vmatpush1.bf16.msra.mxu0 %v3914
    %5336 = vmatprep.subr.bf16.mxu0 %v3931
    %5337 = vmatpush1.bf16.msra.mxu0 %v3930
    %5338 = vmatprep.subr.bf16.mxu0 %v3947
    %5339 = vmatpush1.bf16.msra.mxu0 %v3946
    %5340 = vmatprep.subr.bf16.mxu0 %v3963
    %5341 = vmatpush1.bf16.msra.mxu0 %v3962
    %5342 = vmatprep.subr.bf16.mxu0 %v3979
    %5343 = vmatpush1.bf16.msra.mxu0 %v3978
    %5344 = vmatprep.mubr.bf16.mxu0 %v4243
    %5345 = vmatmul.mubr.bf16.gmra.mrb[0].mxu0 %v4242
    %v5346 = vpop.f32.mrb[0].mxu0
    %v5347 = vadd.f32 %v5306, %v5346
    %v5348 = vpop.f32.mrb[0].mxu0
    %v5349 = vadd.f32 %v5308, %v5348
    %v5350 = vpop.f32.mrb[0].mxu0
    %v5351 = vpop.f32.mrb[0].mxu0
    %5352 = vdwg.mxu0
    %5353 = vmatprep.subr.bf16.mxu0 %v3995
    %5354 = vmatpush1.bf16.msra.mxu0 %v3994
    %5355 = vmatprep.subr.bf16.mxu0 %v4011
    %5356 = vmatpush1.bf16.msra.mxu0 %v4010
    %5357 = vmatprep.subr.bf16.mxu0 %v4027
    %5358 = vmatpush1.bf16.msra.mxu0 %v4026
    %5359 = vmatprep.subr.bf16.mxu0 %v4043
    %5360 = vmatpush1.bf16.msra.mxu0 %v4042
    %5361 = vmatprep.subr.bf16.mxu0 %v4059
    %5362 = vmatpush1.bf16.msra.mxu0 %v4058
    %5363 = vmatprep.subr.bf16.mxu0 %v4075
    %5364 = vmatpush1.bf16.msra.mxu0 %v4074
    %5365 = vmatprep.subr.bf16.mxu0 %v4091
    %5366 = vmatpush1.bf16.msra.mxu0 %v4090
    %5367 = vmatprep.subr.bf16.mxu0 %v4107
    %5368 = vmatpush1.bf16.msra.mxu0 %v4106
    %5369 = vmatprep.subr.bf16.mxu0 %v4123
    %5370 = vmatpush1.bf16.msra.mxu0 %v4122
    %5371 = vmatprep.subr.bf16.mxu0 %v4139
    %5372 = vmatpush1.bf16.msra.mxu0 %v4138
    %5373 = vmatprep.subr.bf16.mxu0 %v4155
    %5374 = vmatpush1.bf16.msra.mxu0 %v4154
    %5375 = vmatprep.subr.bf16.mxu0 %v4171
    %5376 = vmatpush1.bf16.msra.mxu0 %v4170
    %5377 = vmatprep.subr.bf16.mxu0 %v4187
    %5378 = vmatpush1.bf16.msra.mxu0 %v4186
    %5379 = vmatprep.subr.bf16.mxu0 %v4203
    %5380 = vmatpush1.bf16.msra.mxu0 %v4202
    %5381 = vmatprep.subr.bf16.mxu0 %v4219
    %5382 = vmatpush1.bf16.msra.mxu0 %v4218
    %5383 = vmatprep.subr.bf16.mxu0 %v4235
    %5384 = vmatpush1.bf16.msra.mxu0 %v4234
    %5385 = vmatprep.mubr.bf16.mxu0 %v4245
    %5386 = vmatmul.mubr.bf16.gmra.mrb[0].mxu0 %v4244
    %v5387 = vpop.f32.mrb[0].mxu0
    %v5388 = vadd.f32 %v5347, %v5387
    %v5389 = vpop.f32.mrb[0].mxu0
    %v5390 = vadd.f32 %v5349, %v5389
    %v5391 = vpop.f32.mrb[0].mxu0
    %v5392 = vpop.f32.mrb[0].mxu0
    %5393 = vdwg.mxu0
    %5394 = vmatprep.subr.bf16.mxu0 %v3229
    %5395 = vmatpush1.bf16.msra.mxu0 %v3228
    %5396 = vmatprep.subr.bf16.mxu0 %v3245
    %5397 = vmatpush1.bf16.msra.mxu0 %v3244
    %5398 = vmatprep.subr.bf16.mxu0 %v3261
    %5399 = vmatpush1.bf16.msra.mxu0 %v3260
    %5400 = vmatprep.subr.bf16.mxu0 %v3277
    %5401 = vmatpush1.bf16.msra.mxu0 %v3276
    %5402 = vmatprep.subr.bf16.mxu0 %v3293
    %5403 = vmatpush1.bf16.msra.mxu0 %v3292
    %5404 = vmatprep.subr.bf16.mxu0 %v3309
    %5405 = vmatpush1.bf16.msra.mxu0 %v3308
    %5406 = vmatprep.subr.bf16.mxu0 %v3325
    %5407 = vmatpush1.bf16.msra.mxu0 %v3324
    %5408 = vmatprep.subr.bf16.mxu0 %v3341
    %5409 = vmatpush1.bf16.msra.mxu0 %v3340
    %5410 = vmatprep.subr.bf16.mxu0 %v3357
    %5411 = vmatpush1.bf16.msra.mxu0 %v3356
    %5412 = vmatprep.subr.bf16.mxu0 %v3373
    %5413 = vmatpush1.bf16.msra.mxu0 %v3372
    %5414 = vmatprep.subr.bf16.mxu0 %v3389
    %5415 = vmatpush1.bf16.msra.mxu0 %v3388
    %5416 = vmatprep.subr.bf16.mxu0 %v3405
    %5417 = vmatpush1.bf16.msra.mxu0 %v3404
    %5418 = vmatprep.subr.bf16.mxu0 %v3421
    %5419 = vmatpush1.bf16.msra.mxu0 %v3420
    %5420 = vmatprep.subr.bf16.mxu0 %v3437
    %5421 = vmatpush1.bf16.msra.mxu0 %v3436
    %5422 = vmatprep.subr.bf16.mxu0 %v3453
    %5423 = vmatpush1.bf16.msra.mxu0 %v3452
    %5424 = vmatprep.subr.bf16.mxu0 %v3469
    %5425 = vmatpush1.bf16.msra.mxu0 %v3468
    %5426 = vmatprep.mubr.bf16.mxu0 %v4239
    %5427 = vmatmul.mubr.bf16.gmra.mrb[0].mxu0 %v4238
    %v5428 = vpop.f32.mrb[0].mxu0
    %v5429 = vadd.f32 0.0, %v5428
    %v5430 = vpop.f32.mrb[0].mxu0
    %v5431 = vadd.f32 0.0, %v5430
    %v5432 = vpop.f32.mrb[0].mxu0
    %v5433 = vpop.f32.mrb[0].mxu0
    %5434 = vdwg.mxu0
    %5435 = vmatprep.subr.bf16.mxu0 %v3485
    %5436 = vmatpush1.bf16.msra.mxu0 %v3484
    %5437 = vmatprep.subr.bf16.mxu0 %v3501
    %5438 = vmatpush1.bf16.msra.mxu0 %v3500
    %5439 = vmatprep.subr.bf16.mxu0 %v3517
    %5440 = vmatpush1.bf16.msra.mxu0 %v3516
    %5441 = vmatprep.subr.bf16.mxu0 %v3533
    %5442 = vmatpush1.bf16.msra.mxu0 %v3532
    %5443 = vmatprep.subr.bf16.mxu0 %v3549
    %5444 = vmatpush1.bf16.msra.mxu0 %v3548
    %5445 = vmatprep.subr.bf16.mxu0 %v3565
    %5446 = vmatpush1.bf16.msra.mxu0 %v3564
    %5447 = vmatprep.subr.bf16.mxu0 %v3581
    %5448 = vmatpush1.bf16.msra.mxu0 %v3580
    %5449 = vmatprep.subr.bf16.mxu0 %v3597
    %5450 = vmatpush1.bf16.msra.mxu0 %v3596
    %5451 = vmatprep.subr.bf16.mxu0 %v3613
    %5452 = vmatpush1.bf16.msra.mxu0 %v3612
    %5453 = vmatprep.subr.bf16.mxu0 %v3629
    %5454 = vmatpush1.bf16.msra.mxu0 %v3628
    %5455 = vmatprep.subr.bf16.mxu0 %v3645
    %5456 = vmatpush1.bf16.msra.mxu0 %v3644
    %5457 = vmatprep.subr.bf16.mxu0 %v3661
    %5458 = vmatpush1.bf16.msra.mxu0 %v3660
    %5459 = vmatprep.subr.bf16.mxu0 %v3677
    %5460 = vmatpush1.bf16.msra.mxu0 %v3676
    %5461 = vmatprep.subr.bf16.mxu0 %v3693
    %5462 = vmatpush1.bf16.msra.mxu0 %v3692
    %5463 = vmatprep.subr.bf16.mxu0 %v3709
    %5464 = vmatpush1.bf16.msra.mxu0 %v3708
    %5465 = vmatprep.subr.bf16.mxu0 %v3725
    %5466 = vmatpush1.bf16.msra.mxu0 %v3724
    %5467 = vmatprep.mubr.bf16.mxu0 %v4241
    %5468 = vmatmul.mubr.bf16.gmra.mrb[0].mxu0 %v4240
    %v5469 = vpop.f32.mrb[0].mxu0
    %v5470 = vadd.f32 %v5429, %v5469
    %v5471 = vpop.f32.mrb[0].mxu0
    %v5472 = vadd.f32 %v5431, %v5471
    %v5473 = vpop.f32.mrb[0].mxu0
    %v5474 = vpop.f32.mrb[0].mxu0
    %5475 = vdwg.mxu0
    %5476 = vmatprep.subr.bf16.mxu0 %v3741
    %5477 = vmatpush1.bf16.msra.mxu0 %v3740
    %5478 = vmatprep.subr.bf16.mxu0 %v3757
    %5479 = vmatpush1.bf16.msra.mxu0 %v3756
    %5480 = vmatprep.subr.bf16.mxu0 %v3773
    %5481 = vmatpush1.bf16.msra.mxu0 %v3772
    %5482 = vmatprep.subr.bf16.mxu0 %v3789
    %5483 = vmatpush1.bf16.msra.mxu0 %v3788
    %5484 = vmatprep.subr.bf16.mxu0 %v3805
    %5485 = vmatpush1.bf16.msra.mxu0 %v3804
    %5486 = vmatprep.subr.bf16.mxu0 %v3821
    %5487 = vmatpush1.bf16.msra.mxu0 %v3820
    %5488 = vmatprep.subr.bf16.mxu0 %v3837
    %5489 = vmatpush1.bf16.msra.mxu0 %v3836
    %5490 = vmatprep.subr.bf16.mxu0 %v3853
    %5491 = vmatpush1.bf16.msra.mxu0 %v3852
    %5492 = vmatprep.subr.bf16.mxu0 %v3869
    %5493 = vmatpush1.bf16.msra.mxu0 %v3868
    %5494 = vmatprep.subr.bf16.mxu0 %v3885
    %5495 = vmatpush1.bf16.msra.mxu0 %v3884
    %5496 = vmatprep.subr.bf16.mxu0 %v3901
    %5497 = vmatpush1.bf16.msra.mxu0 %v3900
    %5498 = vmatprep.subr.bf16.mxu0 %v3917
    %5499 = vmatpush1.bf16.msra.mxu0 %v3916
    %5500 = vmatprep.subr.bf16.mxu0 %v3933
    %5501 = vmatpush1.bf16.msra.mxu0 %v3932
    %5502 = vmatprep.subr.bf16.mxu0 %v3949
    %5503 = vmatpush1.bf16.msra.mxu0 %v3948
    %5504 = vmatprep.subr.bf16.mxu0 %v3965
    %5505 = vmatpush1.bf16.msra.mxu0 %v3964
    %5506 = vmatprep.subr.bf16.mxu0 %v3981
    %5507 = vmatpush1.bf16.msra.mxu0 %v3980
    %5508 = vmatprep.mubr.bf16.mxu0 %v4243
    %5509 = vmatmul.mubr.bf16.gmra.mrb[0].mxu0 %v4242
    %v5510 = vpop.f32.mrb[0].mxu0
    %v5511 = vadd.f32 %v5470, %v5510
    %v5512 = vpop.f32.mrb[0].mxu0
    %v5513 = vadd.f32 %v5472, %v5512
    %v5514 = vpop.f32.mrb[0].mxu0
    %v5515 = vpop.f32.mrb[0].mxu0
    %5516 = vdwg.mxu0
    %5517 = vmatprep.subr.bf16.mxu0 %v3997
    %5518 = vmatpush1.bf16.msra.mxu0 %v3996
    %5519 = vmatprep.subr.bf16.mxu0 %v4013
    %5520 = vmatpush1.bf16.msra.mxu0 %v4012
    %5521 = vmatprep.subr.bf16.mxu0 %v4029
    %5522 = vmatpush1.bf16.msra.mxu0 %v4028
    %5523 = vmatprep.subr.bf16.mxu0 %v4045
    %5524 = vmatpush1.bf16.msra.mxu0 %v4044
    %5525 = vmatprep.subr.bf16.mxu0 %v4061
    %5526 = vmatpush1.bf16.msra.mxu0 %v4060
    %5527 = vmatprep.subr.bf16.mxu0 %v4077
    %5528 = vmatpush1.bf16.msra.mxu0 %v4076
    %5529 = vmatprep.subr.bf16.mxu0 %v4093
    %5530 = vmatpush1.bf16.msra.mxu0 %v4092
    %5531 = vmatprep.subr.bf16.mxu0 %v4109
    %5532 = vmatpush1.bf16.msra.mxu0 %v4108
    %5533 = vmatprep.subr.bf16.mxu0 %v4125
    %5534 = vmatpush1.bf16.msra.mxu0 %v4124
    %5535 = vmatprep.subr.bf16.mxu0 %v4141
    %5536 = vmatpush1.bf16.msra.mxu0 %v4140
    %5537 = vmatprep.subr.bf16.mxu0 %v4157
    %5538 = vmatpush1.bf16.msra.mxu0 %v4156
    %5539 = vmatprep.subr.bf16.mxu0 %v4173
    %5540 = vmatpush1.bf16.msra.mxu0 %v4172
    %5541 = vmatprep.subr.bf16.mxu0 %v4189
    %5542 = vmatpush1.bf16.msra.mxu0 %v4188
    %5543 = vmatprep.subr.bf16.mxu0 %v4205
    %5544 = vmatpush1.bf16.msra.mxu0 %v4204
    %5545 = vmatprep.subr.bf16.mxu0 %v4221
    %5546 = vmatpush1.bf16.msra.mxu0 %v4220
    %5547 = vmatprep.subr.bf16.mxu0 %v4237
    %5548 = vmatpush1.bf16.msra.mxu0 %v4236
    %5549 = vmatprep.mubr.bf16.mxu0 %v4245
    %5550 = vmatmul.mubr.bf16.gmra.mrb[0].mxu0 %v4244
    %v5551 = vpop.f32.mrb[0].mxu0
    %v5552 = vadd.f32 %v5511, %v5551
    %v5553 = vpop.f32.mrb[0].mxu0
    %v5554 = vadd.f32 %v5513, %v5553
    %v5555 = vpop.f32.mrb[0].mxu0
    %v5556 = vpop.f32.mrb[0].mxu0
    %5557 = vdwg.mxu0
    %v5558 = vld [vmem:[%s8] sm:$0xff]
    %v5559 = vld [vmem:[%s8 + $0x8] sm:$0xff]
    %v5562 = vlaneseq
    %v5563 = vshrl.u32 %v5562, 7
    %v5564 = vsub.s32 0, %v5563
    %v5565 = vrot.slane %v5558, %v5564
    %v5566 = vlaneseq
    %v5567 = vshrl.u32 %v5566, 7
    %v5568 = vsub.s32 1, %v5567
    %v5569 = vrot.slane %v5558, %v5568
    %v5570 = vlaneseq
    %v5571 = vshrl.u32 %v5570, 7
    %v5572 = vsub.s32 2, %v5571
    %v5573 = vrot.slane %v5558, %v5572
    %v5574 = vlaneseq
    %v5575 = vshrl.u32 %v5574, 7
    %v5576 = vsub.s32 3, %v5575
    %v5577 = vrot.slane %v5558, %v5576
    %v5578 = vlaneseq
    %v5579 = vshrl.u32 %v5578, 7
    %v5580 = vsub.s32 4, %v5579
    %v5581 = vrot.slane %v5558, %v5580
    %v5582 = vlaneseq
    %v5583 = vshrl.u32 %v5582, 7
    %v5584 = vsub.s32 5, %v5583
    %v5585 = vrot.slane %v5558, %v5584
    %v5586 = vlaneseq
    %v5587 = vshrl.u32 %v5586, 7
    %v5588 = vsub.s32 6, %v5587
    %v5589 = vrot.slane %v5558, %v5588
    %v5590 = vlaneseq
    %v5591 = vshrl.u32 %v5590, 7
    %v5592 = vsub.s32 7, %v5591
    %v5593 = vrot.slane %v5558, %v5592
    %v5594 = vlaneseq
    %v5595 = vshrl.u32 %v5594, 7
    %v5596 = vsub.s32 0, %v5595
    %v5597 = vrot.slane %v5559, %v5596
    %v5598 = vlaneseq
    %v5599 = vshrl.u32 %v5598, 7
    %v5600 = vsub.s32 1, %v5599
    %v5601 = vrot.slane %v5559, %v5600
    %v5602 = vlaneseq
    %v5603 = vshrl.u32 %v5602, 7
    %v5604 = vsub.s32 2, %v5603
    %v5605 = vrot.slane %v5559, %v5604
    %v5606 = vlaneseq
    %v5607 = vshrl.u32 %v5606, 7
    %v5608 = vsub.s32 3, %v5607
    %v5609 = vrot.slane %v5559, %v5608
    %v5610 = vlaneseq
    %v5611 = vshrl.u32 %v5610, 7
    %v5612 = vsub.s32 4, %v5611
    %v5613 = vrot.slane %v5559, %v5612
    %v5614 = vlaneseq
    %v5615 = vshrl.u32 %v5614, 7
    %v5616 = vsub.s32 5, %v5615
    %v5617 = vrot.slane %v5559, %v5616
    %v5618 = vlaneseq
    %v5619 = vshrl.u32 %v5618, 7
    %v5620 = vsub.s32 6, %v5619
    %v5621 = vrot.slane %v5559, %v5620
    %v5622 = vlaneseq
    %v5623 = vshrl.u32 %v5622, 7
    %v5624 = vsub.s32 7, %v5623
    %v5625 = vrot.slane %v5559, %v5624
    %v5642 = vmul.f32 %v4404, %v5565
    %v5643 = vmul.f32 %v4406, %v5569
    %v5644 = vmul.f32 %v4568, %v5573
    %v5645 = vmul.f32 %v4570, %v5577
    %v5646 = vmul.f32 %v4732, %v5581
    %v5647 = vmul.f32 %v4734, %v5585
    %v5648 = vmul.f32 %v4896, %v5589
    %v5649 = vmul.f32 %v4898, %v5593
    %v5650 = vmul.f32 %v5060, %v5597
    %v5651 = vmul.f32 %v5062, %v5601
    %v5652 = vmul.f32 %v5224, %v5605
    %v5653 = vmul.f32 %v5226, %v5609
    %v5654 = vmul.f32 %v5388, %v5613
    %v5655 = vmul.f32 %v5390, %v5617
    %v5656 = vmul.f32 %v5552, %v5621
    %v5657 = vmul.f32 %v5554, %v5625
    %v5658 = vld [vmem:[%s9] sm:$0xff]
    %v5659 = vld [vmem:[%s9 + $0x8] sm:$0xff]
    %v5660 = vld [vmem:[%s10] sm:$0xff]
    %v5661 = vld [vmem:[%s10 + $0x8] sm:$0xff]
    %v5662 = vrot.slane %v5642, 4
    %v5663 = vadd.f32 %v5642, %v5662
    %v5664 = vrot.slane %v5663, 2
    %v5665 = vadd.f32 %v5663, %v5664
    %v5666 = vrot.slane %v5665, 1
    %v5667 = vadd.f32 %v5665, %v5666
    %v5668 = vrot.slane %v5643, 4
    %v5669 = vadd.f32 %v5643, %v5668
    %v5670 = vrot.slane %v5669, 2
    %v5671 = vadd.f32 %v5669, %v5670
    %v5672 = vrot.slane %v5671, 1
    %v5673 = vadd.f32 %v5671, %v5672
    %v5674 = vrot.slane %v5644, 4
    %v5675 = vadd.f32 %v5644, %v5674
    %v5676 = vrot.slane %v5675, 2
    %v5677 = vadd.f32 %v5675, %v5676
    %v5678 = vrot.slane %v5677, 1
    %v5679 = vadd.f32 %v5677, %v5678
    %v5680 = vrot.slane %v5645, 4
    %v5681 = vadd.f32 %v5645, %v5680
    %v5682 = vrot.slane %v5681, 2
    %v5683 = vadd.f32 %v5681, %v5682
    %v5684 = vrot.slane %v5683, 1
    %v5685 = vadd.f32 %v5683, %v5684
    %v5686 = vrot.slane %v5646, 4
    %v5687 = vadd.f32 %v5646, %v5686
    %v5688 = vrot.slane %v5687, 2
    %v5689 = vadd.f32 %v5687, %v5688
    %v5690 = vrot.slane %v5689, 1
    %v5691 = vadd.f32 %v5689, %v5690
    %v5692 = vrot.slane %v5647, 4
    %v5693 = vadd.f32 %v5647, %v5692
    %v5694 = vrot.slane %v5693, 2
    %v5695 = vadd.f32 %v5693, %v5694
    %v5696 = vrot.slane %v5695, 1
    %v5697 = vadd.f32 %v5695, %v5696
    %v5698 = vrot.slane %v5648, 4
    %v5699 = vadd.f32 %v5648, %v5698
    %v5700 = vrot.slane %v5699, 2
    %v5701 = vadd.f32 %v5699, %v5700
    %v5702 = vrot.slane %v5701, 1
    %v5703 = vadd.f32 %v5701, %v5702
    %v5704 = vrot.slane %v5649, 4
    %v5705 = vadd.f32 %v5649, %v5704
    %v5706 = vrot.slane %v5705, 2
    %v5707 = vadd.f32 %v5705, %v5706
    %v5708 = vrot.slane %v5707, 1
    %v5709 = vadd.f32 %v5707, %v5708
    %v5710 = vrot.slane %v5650, 4
    %v5711 = vadd.f32 %v5650, %v5710
    %v5712 = vrot.slane %v5711, 2
    %v5713 = vadd.f32 %v5711, %v5712
    %v5714 = vrot.slane %v5713, 1
    %v5715 = vadd.f32 %v5713, %v5714
    %v5716 = vrot.slane %v5651, 4
    %v5717 = vadd.f32 %v5651, %v5716
    %v5718 = vrot.slane %v5717, 2
    %v5719 = vadd.f32 %v5717, %v5718
    %v5720 = vrot.slane %v5719, 1
    %v5721 = vadd.f32 %v5719, %v5720
    %v5722 = vrot.slane %v5652, 4
    %v5723 = vadd.f32 %v5652, %v5722
    %v5724 = vrot.slane %v5723, 2
    %v5725 = vadd.f32 %v5723, %v5724
    %v5726 = vrot.slane %v5725, 1
    %v5727 = vadd.f32 %v5725, %v5726
    %v5728 = vrot.slane %v5653, 4
    %v5729 = vadd.f32 %v5653, %v5728
    %v5730 = vrot.slane %v5729, 2
    %v5731 = vadd.f32 %v5729, %v5730
    %v5732 = vrot.slane %v5731, 1
    %v5733 = vadd.f32 %v5731, %v5732
    %v5734 = vrot.slane %v5654, 4
    %v5735 = vadd.f32 %v5654, %v5734
    %v5736 = vrot.slane %v5735, 2
    %v5737 = vadd.f32 %v5735, %v5736
    %v5738 = vrot.slane %v5737, 1
    %v5739 = vadd.f32 %v5737, %v5738
    %v5740 = vrot.slane %v5655, 4
    %v5741 = vadd.f32 %v5655, %v5740
    %v5742 = vrot.slane %v5741, 2
    %v5743 = vadd.f32 %v5741, %v5742
    %v5744 = vrot.slane %v5743, 1
    %v5745 = vadd.f32 %v5743, %v5744
    %v5746 = vrot.slane %v5656, 4
    %v5747 = vadd.f32 %v5656, %v5746
    %v5748 = vrot.slane %v5747, 2
    %v5749 = vadd.f32 %v5747, %v5748
    %v5750 = vrot.slane %v5749, 1
    %v5751 = vadd.f32 %v5749, %v5750
    %v5752 = vrot.slane %v5657, 4
    %v5753 = vadd.f32 %v5657, %v5752
    %v5754 = vrot.slane %v5753, 2
    %v5755 = vadd.f32 %v5753, %v5754
    %v5756 = vrot.slane %v5755, 1
    %v5757 = vadd.f32 %v5755, %v5756
    %v5758 = vmul.f32 %v5667, %v265
    %v5759 = vmul.f32 %v5673, %v265
    %v5760 = vmul.f32 %v5679, %v265
    %v5761 = vmul.f32 %v5685, %v265
    %v5762 = vmul.f32 %v5691, %v265
    %v5763 = vmul.f32 %v5697, %v265
    %v5764 = vmul.f32 %v5703, %v265
    %v5765 = vmul.f32 %v5709, %v265
    %v5766 = vmul.f32 %v5715, %v265
    %v5767 = vmul.f32 %v5721, %v265
    %v5768 = vmul.f32 %v5727, %v265
    %v5769 = vmul.f32 %v5733, %v265
    %v5770 = vmul.f32 %v5739, %v265
    %v5771 = vmul.f32 %v5745, %v265
    %v5772 = vmul.f32 %v5751, %v265
    %v5773 = vmul.f32 %v5757, %v265
    %v5774 = vsub.f32 %v5642, %v5758
    %v5775 = vsub.f32 %v5643, %v5759
    %v5776 = vsub.f32 %v5644, %v5760
    %v5777 = vsub.f32 %v5645, %v5761
    %v5778 = vsub.f32 %v5646, %v5762
    %v5779 = vsub.f32 %v5647, %v5763
    %v5780 = vsub.f32 %v5648, %v5764
    %v5781 = vsub.f32 %v5649, %v5765
    %v5782 = vsub.f32 %v5650, %v5766
    %v5783 = vsub.f32 %v5651, %v5767
    %v5784 = vsub.f32 %v5652, %v5768
    %v5785 = vsub.f32 %v5653, %v5769
    %v5786 = vsub.f32 %v5654, %v5770
    %v5787 = vsub.f32 %v5655, %v5771
    %v5788 = vsub.f32 %v5656, %v5772
    %v5789 = vsub.f32 %v5657, %v5773
    %v5790 = vmul.f32 %v5774, %v5774
    %v5791 = vmul.f32 %v5775, %v5775
    %v5792 = vmul.f32 %v5776, %v5776
    %v5793 = vmul.f32 %v5777, %v5777
    %v5794 = vmul.f32 %v5778, %v5778
    %v5795 = vmul.f32 %v5779, %v5779
    %v5796 = vmul.f32 %v5780, %v5780
    %v5797 = vmul.f32 %v5781, %v5781
    %v5798 = vmul.f32 %v5782, %v5782
    %v5799 = vmul.f32 %v5783, %v5783
    %v5800 = vmul.f32 %v5784, %v5784
    %v5801 = vmul.f32 %v5785, %v5785
    %v5802 = vmul.f32 %v5786, %v5786
    %v5803 = vmul.f32 %v5787, %v5787
    %v5804 = vmul.f32 %v5788, %v5788
    %v5805 = vmul.f32 %v5789, %v5789
    %v5806 = vrot.slane %v5790, 4
    %v5807 = vadd.f32 %v5790, %v5806
    %v5808 = vrot.slane %v5807, 2
    %v5809 = vadd.f32 %v5807, %v5808
    %v5810 = vrot.slane %v5809, 1
    %v5811 = vadd.f32 %v5809, %v5810
    %v5812 = vrot.slane %v5791, 4
    %v5813 = vadd.f32 %v5791, %v5812
    %v5814 = vrot.slane %v5813, 2
    %v5815 = vadd.f32 %v5813, %v5814
    %v5816 = vrot.slane %v5815, 1
    %v5817 = vadd.f32 %v5815, %v5816
    %v5818 = vrot.slane %v5792, 4
    %v5819 = vadd.f32 %v5792, %v5818
    %v5820 = vrot.slane %v5819, 2
    %v5821 = vadd.f32 %v5819, %v5820
    %v5822 = vrot.slane %v5821, 1
    %v5823 = vadd.f32 %v5821, %v5822
    %v5824 = vrot.slane %v5793, 4
    %v5825 = vadd.f32 %v5793, %v5824
    %v5826 = vrot.slane %v5825, 2
    %v5827 = vadd.f32 %v5825, %v5826
    %v5828 = vrot.slane %v5827, 1
    %v5829 = vadd.f32 %v5827, %v5828
    %v5830 = vrot.slane %v5794, 4
    %v5831 = vadd.f32 %v5794, %v5830
    %v5832 = vrot.slane %v5831, 2
    %v5833 = vadd.f32 %v5831, %v5832
    %v5834 = vrot.slane %v5833, 1
    %v5835 = vadd.f32 %v5833, %v5834
    %v5836 = vrot.slane %v5795, 4
    %v5837 = vadd.f32 %v5795, %v5836
    %v5838 = vrot.slane %v5837, 2
    %v5839 = vadd.f32 %v5837, %v5838
    %v5840 = vrot.slane %v5839, 1
    %v5841 = vadd.f32 %v5839, %v5840
    %v5842 = vrot.slane %v5796, 4
    %v5843 = vadd.f32 %v5796, %v5842
    %v5844 = vrot.slane %v5843, 2
    %v5845 = vadd.f32 %v5843, %v5844
    %v5846 = vrot.slane %v5845, 1
    %v5847 = vadd.f32 %v5845, %v5846
    %v5848 = vrot.slane %v5797, 4
    %v5849 = vadd.f32 %v5797, %v5848
    %v5850 = vrot.slane %v5849, 2
    %v5851 = vadd.f32 %v5849, %v5850
    %v5852 = vrot.slane %v5851, 1
    %v5853 = vadd.f32 %v5851, %v5852
    %v5854 = vrot.slane %v5798, 4
    %v5855 = vadd.f32 %v5798, %v5854
    %v5856 = vrot.slane %v5855, 2
    %v5857 = vadd.f32 %v5855, %v5856
    %v5858 = vrot.slane %v5857, 1
    %v5859 = vadd.f32 %v5857, %v5858
    %v5860 = vrot.slane %v5799, 4
    %v5861 = vadd.f32 %v5799, %v5860
    %v5862 = vrot.slane %v5861, 2
    %v5863 = vadd.f32 %v5861, %v5862
    %v5864 = vrot.slane %v5863, 1
    %v5865 = vadd.f32 %v5863, %v5864
    %v5866 = vrot.slane %v5800, 4
    %v5867 = vadd.f32 %v5800, %v5866
    %v5868 = vrot.slane %v5867, 2
    %v5869 = vadd.f32 %v5867, %v5868
    %v5870 = vrot.slane %v5869, 1
    %v5871 = vadd.f32 %v5869, %v5870
    %v5872 = vrot.slane %v5801, 4
    %v5873 = vadd.f32 %v5801, %v5872
    %v5874 = vrot.slane %v5873, 2
    %v5875 = vadd.f32 %v5873, %v5874
    %v5876 = vrot.slane %v5875, 1
    %v5877 = vadd.f32 %v5875, %v5876
    %v5878 = vrot.slane %v5802, 4
    %v5879 = vadd.f32 %v5802, %v5878
    %v5880 = vrot.slane %v5879, 2
    %v5881 = vadd.f32 %v5879, %v5880
    %v5882 = vrot.slane %v5881, 1
    %v5883 = vadd.f32 %v5881, %v5882
    %v5884 = vrot.slane %v5803, 4
    %v5885 = vadd.f32 %v5803, %v5884
    %v5886 = vrot.slane %v5885, 2
    %v5887 = vadd.f32 %v5885, %v5886
    %v5888 = vrot.slane %v5887, 1
    %v5889 = vadd.f32 %v5887, %v5888
    %v5890 = vrot.slane %v5804, 4
    %v5891 = vadd.f32 %v5804, %v5890
    %v5892 = vrot.slane %v5891, 2
    %v5893 = vadd.f32 %v5891, %v5892
    %v5894 = vrot.slane %v5893, 1
    %v5895 = vadd.f32 %v5893, %v5894
    %v5896 = vrot.slane %v5805, 4
    %v5897 = vadd.f32 %v5805, %v5896
    %v5898 = vrot.slane %v5897, 2
    %v5899 = vadd.f32 %v5897, %v5898
    %v5900 = vrot.slane %v5899, 1
    %v5901 = vadd.f32 %v5899, %v5900
    %v5902 = vmul.f32 %v5811, %v265
    %v5903 = vmul.f32 %v5817, %v265
    %v5904 = vmul.f32 %v5823, %v265
    %v5905 = vmul.f32 %v5829, %v265
    %v5906 = vmul.f32 %v5835, %v265
    %v5907 = vmul.f32 %v5841, %v265
    %v5908 = vmul.f32 %v5847, %v265
    %v5909 = vmul.f32 %v5853, %v265
    %v5910 = vmul.f32 %v5859, %v265
    %v5911 = vmul.f32 %v5865, %v265
    %v5912 = vmul.f32 %v5871, %v265
    %v5913 = vmul.f32 %v5877, %v265
    %v5914 = vmul.f32 %v5883, %v265
    %v5915 = vmul.f32 %v5889, %v265
    %v5916 = vmul.f32 %v5895, %v265
    %v5917 = vmul.f32 %v5901, %v265
    %v5918 = vadd.f32 %v5902, 1e-05
    %v5919 = vadd.f32 %v5903, 1e-05
    %v5920 = vadd.f32 %v5904, 1e-05
    %v5921 = vadd.f32 %v5905, 1e-05
    %v5922 = vadd.f32 %v5906, 1e-05
    %v5923 = vadd.f32 %v5907, 1e-05
    %v5924 = vadd.f32 %v5908, 1e-05
    %v5925 = vadd.f32 %v5909, 1e-05
    %v5926 = vadd.f32 %v5910, 1e-05
    %v5927 = vadd.f32 %v5911, 1e-05
    %v5928 = vadd.f32 %v5912, 1e-05
    %v5929 = vadd.f32 %v5913, 1e-05
    %v5930 = vadd.f32 %v5914, 1e-05
    %v5931 = vadd.f32 %v5915, 1e-05
    %v5932 = vadd.f32 %v5916, 1e-05
    %v5933 = vadd.f32 %v5917, 1e-05
    %v5934 = vrsqrt.pop %v5918
    %v5935 = vrsqrt.pop %v5919
    %v5936 = vrsqrt.pop %v5920
    %v5937 = vrsqrt.pop %v5921
    %v5938 = vrsqrt.pop %v5922
    %v5939 = vrsqrt.pop %v5923
    %v5940 = vrsqrt.pop %v5924
    %v5941 = vrsqrt.pop %v5925
    %v5942 = vrsqrt.pop %v5926
    %v5943 = vrsqrt.pop %v5927
    %v5944 = vrsqrt.pop %v5928
    %v5945 = vrsqrt.pop %v5929
    %v5946 = vrsqrt.pop %v5930
    %v5947 = vrsqrt.pop %v5931
    %v5948 = vrsqrt.pop %v5932
    %v5949 = vrsqrt.pop %v5933
    %v5966 = vcombine.low %v5934, %v5935
    %v5967 = vcombine.low %v5936, %v5937
    %v5968 = vcombine.low %v5938, %v5939
    %v5969 = vcombine.low %v5940, %v5941
    %v5971 = vunpack.c.l.s4 1966171168
    %v5972 = vunpack.c.0.s8 %v5971
    %v5973 = vlaneseq
    %v5974 = vshrl.u32 %v5973, 7
    %v5975 = vsub.s32 %v5972, %v5974
    %v5976 = vrot.slane %v5966, %v5975
    %v5978 = vunpack.c.l.s4 1966171168
    %v5979 = vunpack.c.0.s8 %v5978
    %v5980 = vlaneseq
    %v5981 = vshrl.u32 %v5980, 7
    %v5982 = vsub.s32 %v5979, %v5981
    %v5983 = vrot.slane %v5967, %v5982
    %v5985 = vunpack.c.l.s4 1966171168
    %v5986 = vunpack.c.0.s8 %v5985
    %v5987 = vlaneseq
    %v5988 = vshrl.u32 %v5987, 7
    %v5989 = vsub.s32 %v5986, %v5988
    %v5990 = vrot.slane %v5968, %v5989
    %v5992 = vunpack.c.l.s4 1966171168
    %v5993 = vunpack.c.0.s8 %v5992
    %v5994 = vlaneseq
    %v5995 = vshrl.u32 %v5994, 7
    %v5996 = vsub.s32 %v5993, %v5995
    %v5997 = vrot.slane %v5969, %v5996
    %v5998 = vcombine.low %v5976, %v5983
    %v5999 = vcombine.low %v5990, %v5997
    %v6001 = vunpack.c.l.s4 1966171168
    %v6002 = vunpack.c.0.s8 %v6001
    %v6003 = vlaneseq
    %v6004 = vshrl.u32 %v6003, 7
    %v6005 = vsub.s32 %v6002, %v6004
    %v6006 = vrot.slane %v5998, %v6005
    %v6008 = vunpack.c.l.s4 1966171168
    %v6009 = vunpack.c.0.s8 %v6008
    %v6010 = vlaneseq
    %v6011 = vshrl.u32 %v6010, 7
    %v6012 = vsub.s32 %v6009, %v6011
    %v6013 = vrot.slane %v5999, %v6012
    %v6014 = vcombine.low %v6006, %v6013
    %v6015 = vcombine.low %v5942, %v5943
    %v6016 = vcombine.low %v5944, %v5945
    %v6017 = vcombine.low %v5946, %v5947
    %v6018 = vcombine.low %v5948, %v5949
    %v6020 = vunpack.c.l.s4 1966171168
    %v6021 = vunpack.c.0.s8 %v6020
    %v6022 = vlaneseq
    %v6023 = vshrl.u32 %v6022, 7
    %v6024 = vsub.s32 %v6021, %v6023
    %v6025 = vrot.slane %v6015, %v6024
    %v6027 = vunpack.c.l.s4 1966171168
    %v6028 = vunpack.c.0.s8 %v6027
    %v6029 = vlaneseq
    %v6030 = vshrl.u32 %v6029, 7
    %v6031 = vsub.s32 %v6028, %v6030
    %v6032 = vrot.slane %v6016, %v6031
    %v6034 = vunpack.c.l.s4 1966171168
    %v6035 = vunpack.c.0.s8 %v6034
    %v6036 = vlaneseq
    %v6037 = vshrl.u32 %v6036, 7
    %v6038 = vsub.s32 %v6035, %v6037
    %v6039 = vrot.slane %v6017, %v6038
    %v6041 = vunpack.c.l.s4 1966171168
    %v6042 = vunpack.c.0.s8 %v6041
    %v6043 = vlaneseq
    %v6044 = vshrl.u32 %v6043, 7
    %v6045 = vsub.s32 %v6042, %v6044
    %v6046 = vrot.slane %v6018, %v6045
    %v6047 = vcombine.low %v6025, %v6032
    %v6048 = vcombine.low %v6039, %v6046
    %v6050 = vunpack.c.l.s4 1966171168
    %v6051 = vunpack.c.0.s8 %v6050
    %v6052 = vlaneseq
    %v6053 = vshrl.u32 %v6052, 7
    %v6054 = vsub.s32 %v6051, %v6053
    %v6055 = vrot.slane %v6047, %v6054
    %v6057 = vunpack.c.l.s4 1966171168
    %v6058 = vunpack.c.0.s8 %v6057
    %v6059 = vlaneseq
    %v6060 = vshrl.u32 %v6059, 7
    %v6061 = vsub.s32 %v6058, %v6060
    %v6062 = vrot.slane %v6048, %v6061
    %v6063 = vcombine.low %v6055, %v6062
    %v6066 = vmul.f32 %v5658, %v6014
    %v6067 = vmul.f32 %v5659, %v6063
    %v6070 = vlaneseq
    %v6071 = vshrl.u32 %v6070, 7
    %v6072 = vsub.s32 0, %v6071
    %v6073 = vrot.slane %v6066, %v6072
    %v6074 = vlaneseq
    %v6075 = vshrl.u32 %v6074, 7
    %v6076 = vsub.s32 1, %v6075
    %v6077 = vrot.slane %v6066, %v6076
    %v6078 = vlaneseq
    %v6079 = vshrl.u32 %v6078, 7
    %v6080 = vsub.s32 2, %v6079
    %v6081 = vrot.slane %v6066, %v6080
    %v6082 = vlaneseq
    %v6083 = vshrl.u32 %v6082, 7
    %v6084 = vsub.s32 3, %v6083
    %v6085 = vrot.slane %v6066, %v6084
    %v6086 = vlaneseq
    %v6087 = vshrl.u32 %v6086, 7
    %v6088 = vsub.s32 4, %v6087
    %v6089 = vrot.slane %v6066, %v6088
    %v6090 = vlaneseq
    %v6091 = vshrl.u32 %v6090, 7
    %v6092 = vsub.s32 5, %v6091
    %v6093 = vrot.slane %v6066, %v6092
    %v6094 = vlaneseq
    %v6095 = vshrl.u32 %v6094, 7
    %v6096 = vsub.s32 6, %v6095
    %v6097 = vrot.slane %v6066, %v6096
    %v6098 = vlaneseq
    %v6099 = vshrl.u32 %v6098, 7
    %v6100 = vsub.s32 7, %v6099
    %v6101 = vrot.slane %v6066, %v6100
    %v6102 = vlaneseq
    %v6103 = vshrl.u32 %v6102, 7
    %v6104 = vsub.s32 0, %v6103
    %v6105 = vrot.slane %v6067, %v6104
    %v6106 = vlaneseq
    %v6107 = vshrl.u32 %v6106, 7
    %v6108 = vsub.s32 1, %v6107
    %v6109 = vrot.slane %v6067, %v6108
    %v6110 = vlaneseq
    %v6111 = vshrl.u32 %v6110, 7
    %v6112 = vsub.s32 2, %v6111
    %v6113 = vrot.slane %v6067, %v6112
    %v6114 = vlaneseq
    %v6115 = vshrl.u32 %v6114, 7
    %v6116 = vsub.s32 3, %v6115
    %v6117 = vrot.slane %v6067, %v6116
    %v6118 = vlaneseq
    %v6119 = vshrl.u32 %v6118, 7
    %v6120 = vsub.s32 4, %v6119
    %v6121 = vrot.slane %v6067, %v6120
    %v6122 = vlaneseq
    %v6123 = vshrl.u32 %v6122, 7
    %v6124 = vsub.s32 5, %v6123
    %v6125 = vrot.slane %v6067, %v6124
    %v6126 = vlaneseq
    %v6127 = vshrl.u32 %v6126, 7
    %v6128 = vsub.s32 6, %v6127
    %v6129 = vrot.slane %v6067, %v6128
    %v6130 = vlaneseq
    %v6131 = vshrl.u32 %v6130, 7
    %v6132 = vsub.s32 7, %v6131
    %v6133 = vrot.slane %v6067, %v6132
    %v6150 = vmul.f32 %v5758, %v6073
    %v6151 = vmul.f32 %v5759, %v6077
    %v6152 = vmul.f32 %v5760, %v6081
    %v6153 = vmul.f32 %v5761, %v6085
    %v6154 = vmul.f32 %v5762, %v6089
    %v6155 = vmul.f32 %v5763, %v6093
    %v6156 = vmul.f32 %v5764, %v6097
    %v6157 = vmul.f32 %v5765, %v6101
    %v6158 = vmul.f32 %v5766, %v6105
    %v6159 = vmul.f32 %v5767, %v6109
    %v6160 = vmul.f32 %v5768, %v6113
    %v6161 = vmul.f32 %v5769, %v6117
    %v6162 = vmul.f32 %v5770, %v6121
    %v6163 = vmul.f32 %v5771, %v6125
    %v6164 = vmul.f32 %v5772, %v6129
    %v6165 = vmul.f32 %v5773, %v6133
    %v6182 = vcombine.low %v6150, %v6151
    %v6183 = vcombine.low %v6152, %v6153
    %v6184 = vcombine.low %v6154, %v6155
    %v6185 = vcombine.low %v6156, %v6157
    %v6187 = vunpack.c.l.s4 1966171168
    %v6188 = vunpack.c.0.s8 %v6187
    %v6189 = vlaneseq
    %v6190 = vshrl.u32 %v6189, 7
    %v6191 = vsub.s32 %v6188, %v6190
    %v6192 = vrot.slane %v6182, %v6191
    %v6194 = vunpack.c.l.s4 1966171168
    %v6195 = vunpack.c.0.s8 %v6194
    %v6196 = vlaneseq
    %v6197 = vshrl.u32 %v6196, 7
    %v6198 = vsub.s32 %v6195, %v6197
    %v6199 = vrot.slane %v6183, %v6198
    %v6201 = vunpack.c.l.s4 1966171168
    %v6202 = vunpack.c.0.s8 %v6201
    %v6203 = vlaneseq
    %v6204 = vshrl.u32 %v6203, 7
    %v6205 = vsub.s32 %v6202, %v6204
    %v6206 = vrot.slane %v6184, %v6205
    %v6208 = vunpack.c.l.s4 1966171168
    %v6209 = vunpack.c.0.s8 %v6208
    %v6210 = vlaneseq
    %v6211 = vshrl.u32 %v6210, 7
    %v6212 = vsub.s32 %v6209, %v6211
    %v6213 = vrot.slane %v6185, %v6212
    %v6214 = vcombine.low %v6192, %v6199
    %v6215 = vcombine.low %v6206, %v6213
    %v6217 = vunpack.c.l.s4 1966171168
    %v6218 = vunpack.c.0.s8 %v6217
    %v6219 = vlaneseq
    %v6220 = vshrl.u32 %v6219, 7
    %v6221 = vsub.s32 %v6218, %v6220
    %v6222 = vrot.slane %v6214, %v6221
    %v6224 = vunpack.c.l.s4 1966171168
    %v6225 = vunpack.c.0.s8 %v6224
    %v6226 = vlaneseq
    %v6227 = vshrl.u32 %v6226, 7
    %v6228 = vsub.s32 %v6225, %v6227
    %v6229 = vrot.slane %v6215, %v6228
    %v6230 = vcombine.low %v6222, %v6229
    %v6231 = vcombine.low %v6158, %v6159
    %v6232 = vcombine.low %v6160, %v6161
    %v6233 = vcombine.low %v6162, %v6163
    %v6234 = vcombine.low %v6164, %v6165
    %v6236 = vunpack.c.l.s4 1966171168
    %v6237 = vunpack.c.0.s8 %v6236
    %v6238 = vlaneseq
    %v6239 = vshrl.u32 %v6238, 7
    %v6240 = vsub.s32 %v6237, %v6239
    %v6241 = vrot.slane %v6231, %v6240
    %v6243 = vunpack.c.l.s4 1966171168
    %v6244 = vunpack.c.0.s8 %v6243
    %v6245 = vlaneseq
    %v6246 = vshrl.u32 %v6245, 7
    %v6247 = vsub.s32 %v6244, %v6246
    %v6248 = vrot.slane %v6232, %v6247
    %v6250 = vunpack.c.l.s4 1966171168
    %v6251 = vunpack.c.0.s8 %v6250
    %v6252 = vlaneseq
    %v6253 = vshrl.u32 %v6252, 7
    %v6254 = vsub.s32 %v6251, %v6253
    %v6255 = vrot.slane %v6233, %v6254
    %v6257 = vunpack.c.l.s4 1966171168
    %v6258 = vunpack.c.0.s8 %v6257
    %v6259 = vlaneseq
    %v6260 = vshrl.u32 %v6259, 7
    %v6261 = vsub.s32 %v6258, %v6260
    %v6262 = vrot.slane %v6234, %v6261
    %v6263 = vcombine.low %v6241, %v6248
    %v6264 = vcombine.low %v6255, %v6262
    %v6266 = vunpack.c.l.s4 1966171168
    %v6267 = vunpack.c.0.s8 %v6266
    %v6268 = vlaneseq
    %v6269 = vshrl.u32 %v6268, 7
    %v6270 = vsub.s32 %v6267, %v6269
    %v6271 = vrot.slane %v6263, %v6270
    %v6273 = vunpack.c.l.s4 1966171168
    %v6274 = vunpack.c.0.s8 %v6273
    %v6275 = vlaneseq
    %v6276 = vshrl.u32 %v6275, 7
    %v6277 = vsub.s32 %v6274, %v6276
    %v6278 = vrot.slane %v6264, %v6277
    %v6279 = vcombine.low %v6271, %v6278
    %v6282 = vsub.f32 %v5660, %v6230
    %v6283 = vsub.f32 %v5661, %v6279
    %v6284 = vmul.f32 %v5642, %v6073
    %v6285 = vmul.f32 %v5643, %v6077
    %v6286 = vmul.f32 %v5644, %v6081
    %v6287 = vmul.f32 %v5645, %v6085
    %v6288 = vmul.f32 %v5646, %v6089
    %v6289 = vmul.f32 %v5647, %v6093
    %v6290 = vmul.f32 %v5648, %v6097
    %v6291 = vmul.f32 %v5649, %v6101
    %v6292 = vmul.f32 %v5650, %v6105
    %v6293 = vmul.f32 %v5651, %v6109
    %v6294 = vmul.f32 %v5652, %v6113
    %v6295 = vmul.f32 %v5653, %v6117
    %v6296 = vmul.f32 %v5654, %v6121
    %v6297 = vmul.f32 %v5655, %v6125
    %v6298 = vmul.f32 %v5656, %v6129
    %v6299 = vmul.f32 %v5657, %v6133
    %v6302 = vlaneseq
    %v6303 = vshrl.u32 %v6302, 7
    %v6304 = vsub.s32 0, %v6303
    %v6305 = vrot.slane %v6282, %v6304
    %v6306 = vlaneseq
    %v6307 = vshrl.u32 %v6306, 7
    %v6308 = vsub.s32 1, %v6307
    %v6309 = vrot.slane %v6282, %v6308
    %v6310 = vlaneseq
    %v6311 = vshrl.u32 %v6310, 7
    %v6312 = vsub.s32 2, %v6311
    %v6313 = vrot.slane %v6282, %v6312
    %v6314 = vlaneseq
    %v6315 = vshrl.u32 %v6314, 7
    %v6316 = vsub.s32 3, %v6315
    %v6317 = vrot.slane %v6282, %v6316
    %v6318 = vlaneseq
    %v6319 = vshrl.u32 %v6318, 7
    %v6320 = vsub.s32 4, %v6319
    %v6321 = vrot.slane %v6282, %v6320
    %v6322 = vlaneseq
    %v6323 = vshrl.u32 %v6322, 7
    %v6324 = vsub.s32 5, %v6323
    %v6325 = vrot.slane %v6282, %v6324
    %v6326 = vlaneseq
    %v6327 = vshrl.u32 %v6326, 7
    %v6328 = vsub.s32 6, %v6327
    %v6329 = vrot.slane %v6282, %v6328
    %v6330 = vlaneseq
    %v6331 = vshrl.u32 %v6330, 7
    %v6332 = vsub.s32 7, %v6331
    %v6333 = vrot.slane %v6282, %v6332
    %v6334 = vlaneseq
    %v6335 = vshrl.u32 %v6334, 7
    %v6336 = vsub.s32 0, %v6335
    %v6337 = vrot.slane %v6283, %v6336
    %v6338 = vlaneseq
    %v6339 = vshrl.u32 %v6338, 7
    %v6340 = vsub.s32 1, %v6339
    %v6341 = vrot.slane %v6283, %v6340
    %v6342 = vlaneseq
    %v6343 = vshrl.u32 %v6342, 7
    %v6344 = vsub.s32 2, %v6343
    %v6345 = vrot.slane %v6283, %v6344
    %v6346 = vlaneseq
    %v6347 = vshrl.u32 %v6346, 7
    %v6348 = vsub.s32 3, %v6347
    %v6349 = vrot.slane %v6283, %v6348
    %v6350 = vlaneseq
    %v6351 = vshrl.u32 %v6350, 7
    %v6352 = vsub.s32 4, %v6351
    %v6353 = vrot.slane %v6283, %v6352
    %v6354 = vlaneseq
    %v6355 = vshrl.u32 %v6354, 7
    %v6356 = vsub.s32 5, %v6355
    %v6357 = vrot.slane %v6283, %v6356
    %v6358 = vlaneseq
    %v6359 = vshrl.u32 %v6358, 7
    %v6360 = vsub.s32 6, %v6359
    %v6361 = vrot.slane %v6283, %v6360
    %v6362 = vlaneseq
    %v6363 = vshrl.u32 %v6362, 7
    %v6364 = vsub.s32 7, %v6363
    %v6365 = vrot.slane %v6283, %v6364
    %v6382 = vadd.f32 %v6284, %v6305
    %v6383 = vadd.f32 %v6285, %v6309
    %v6384 = vadd.f32 %v6286, %v6313
    %v6385 = vadd.f32 %v6287, %v6317
    %v6386 = vadd.f32 %v6288, %v6321
    %v6387 = vadd.f32 %v6289, %v6325
    %v6388 = vadd.f32 %v6290, %v6329
    %v6389 = vadd.f32 %v6291, %v6333
    %v6390 = vadd.f32 %v6292, %v6337
    %v6391 = vadd.f32 %v6293, %v6341
    %v6392 = vadd.f32 %v6294, %v6345
    %v6393 = vadd.f32 %v6295, %v6349
    %v6394 = vadd.f32 %v6296, %v6353
    %v6395 = vadd.f32 %v6297, %v6357
    %v6396 = vadd.f32 %v6298, %v6361
    %v6397 = vadd.f32 %v6299, %v6365
    %vm6398 = vcmp.ge.f32.partialorder %v6382, 0.0
    %vm6399 = vcmp.ge.f32.partialorder %v6383, 0.0
    %vm6400 = vcmp.ge.f32.partialorder %v6384, 0.0
    %vm6401 = vcmp.ge.f32.partialorder %v6385, 0.0
    %vm6402 = vcmp.ge.f32.partialorder %v6386, 0.0
    %vm6403 = vcmp.ge.f32.partialorder %v6387, 0.0
    %vm6404 = vcmp.ge.f32.partialorder %v6388, 0.0
    %vm6405 = vcmp.ge.f32.partialorder %v6389, 0.0
    %vm6406 = vcmp.ge.f32.partialorder %v6390, 0.0
    %vm6407 = vcmp.ge.f32.partialorder %v6391, 0.0
    %vm6408 = vcmp.ge.f32.partialorder %v6392, 0.0
    %vm6409 = vcmp.ge.f32.partialorder %v6393, 0.0
    %vm6410 = vcmp.ge.f32.partialorder %v6394, 0.0
    %vm6411 = vcmp.ge.f32.partialorder %v6395, 0.0
    %vm6412 = vcmp.ge.f32.partialorder %v6396, 0.0
    %vm6413 = vcmp.ge.f32.partialorder %v6397, 0.0
    %v6414 = vmul.f32 %v6382, 0.01
    %v6415 = vmul.f32 %v6383, 0.01
    %v6416 = vmul.f32 %v6384, 0.01
    %v6417 = vmul.f32 %v6385, 0.01
    %v6418 = vmul.f32 %v6386, 0.01
    %v6419 = vmul.f32 %v6387, 0.01
    %v6420 = vmul.f32 %v6388, 0.01
    %v6421 = vmul.f32 %v6389, 0.01
    %v6422 = vmul.f32 %v6390, 0.01
    %v6423 = vmul.f32 %v6391, 0.01
    %v6424 = vmul.f32 %v6392, 0.01
    %v6425 = vmul.f32 %v6393, 0.01
    %v6426 = vmul.f32 %v6394, 0.01
    %v6427 = vmul.f32 %v6395, 0.01
    %v6428 = vmul.f32 %v6396, 0.01
    %v6429 = vmul.f32 %v6397, 0.01
    %v6430 = vsel %vm6398, %v6382, %v6414
    %v6431 = vsel %vm6399, %v6383, %v6415
    %v6432 = vsel %vm6400, %v6384, %v6416
    %v6433 = vsel %vm6401, %v6385, %v6417
    %v6434 = vsel %vm6402, %v6386, %v6418
    %v6435 = vsel %vm6403, %v6387, %v6419
    %v6436 = vsel %vm6404, %v6388, %v6420
    %v6437 = vsel %vm6405, %v6389, %v6421
    %v6438 = vsel %vm6406, %v6390, %v6422
    %v6439 = vsel %vm6407, %v6391, %v6423
    %v6440 = vsel %vm6408, %v6392, %v6424
    %v6441 = vsel %vm6409, %v6393, %v6425
    %v6442 = vsel %vm6410, %v6394, %v6426
    %v6443 = vsel %vm6411, %v6395, %v6427
    %v6444 = vsel %vm6412, %v6396, %v6428
    %v6445 = vsel %vm6413, %v6397, %v6429
    %v6446 = vld [vmem:[#allocation4] sm:$0xff]
    %v6447 = vld [vmem:[#allocation4 + $0x8] sm:$0xff]
    %v6448 = vld [vmem:[#allocation4 + $0x10] sm:$0xff]
    %v6449 = vld [vmem:[#allocation4 + $0x18] sm:$0xff]
    %v6450 = vld [vmem:[#allocation4 + $0x20] sm:$0xff]
    %v6451 = vld [vmem:[#allocation4 + $0x28] sm:$0xff]
    %v6452 = vld [vmem:[#allocation4 + $0x30] sm:$0xff]
    %v6453 = vld [vmem:[#allocation4 + $0x38] sm:$0xff]
    %v6454 = vld [vmem:[#allocation4 + $0x40] sm:$0xff]
    %v6455 = vld [vmem:[#allocation4 + $0x48] sm:$0xff]
    %v6456 = vld [vmem:[#allocation4 + $0x50] sm:$0xff]
    %v6457 = vld [vmem:[#allocation4 + $0x58] sm:$0xff]
    %v6458 = vld [vmem:[#allocation4 + $0x60] sm:$0xff]
    %v6459 = vld [vmem:[#allocation4 + $0x68] sm:$0xff]
    %v6460 = vld [vmem:[#allocation4 + $0x70] sm:$0xff]
    %v6461 = vld [vmem:[#allocation4 + $0x78] sm:$0xff]
    %v6462 = vld [vmem:[#allocation4 + $0x80] sm:$0xff]
    %v6463 = vld [vmem:[#allocation4 + $0x88] sm:$0xff]
    %v6464 = vld [vmem:[#allocation4 + $0x90] sm:$0xff]
    %v6465 = vld [vmem:[#allocation4 + $0x98] sm:$0xff]
    %v6466 = vld [vmem:[#allocation4 + $0xa0] sm:$0xff]
    %v6467 = vld [vmem:[#allocation4 + $0xa8] sm:$0xff]
    %v6468 = vld [vmem:[#allocation4 + $0xb0] sm:$0xff]
    %v6469 = vld [vmem:[#allocation4 + $0xb8] sm:$0xff]
    %v6470 = vld [vmem:[#allocation4 + $0xc0] sm:$0xff]
    %v6471 = vld [vmem:[#allocation4 + $0xc8] sm:$0xff]
    %v6472 = vld [vmem:[#allocation4 + $0xd0] sm:$0xff]
    %v6473 = vld [vmem:[#allocation4 + $0xd8] sm:$0xff]
    %v6474 = vld [vmem:[#allocation4 + $0xe0] sm:$0xff]
    %v6475 = vld [vmem:[#allocation4 + $0xe8] sm:$0xff]
    %v6476 = vld [vmem:[#allocation4 + $0xf0] sm:$0xff]
    %v6477 = vld [vmem:[#allocation4 + $0xf8] sm:$0xff]
    %v6478 = vld [vmem:[#allocation4 + $0x100] sm:$0xff]
    %v6479 = vld [vmem:[#allocation4 + $0x108] sm:$0xff]
    %v6480 = vld [vmem:[#allocation4 + $0x110] sm:$0xff]
    %v6481 = vld [vmem:[#allocation4 + $0x118] sm:$0xff]
    %v6482 = vld [vmem:[#allocation4 + $0x120] sm:$0xff]
    %v6483 = vld [vmem:[#allocation4 + $0x128] sm:$0xff]
    %v6484 = vld [vmem:[#allocation4 + $0x130] sm:$0xff]
    %v6485 = vld [vmem:[#allocation4 + $0x138] sm:$0xff]
    %v6486 = vld [vmem:[#allocation4 + $0x140] sm:$0xff]
    %v6487 = vld [vmem:[#allocation4 + $0x148] sm:$0xff]
    %v6488 = vld [vmem:[#allocation4 + $0x150] sm:$0xff]
    %v6489 = vld [vmem:[#allocation4 + $0x158] sm:$0xff]
    %v6490 = vld [vmem:[#allocation4 + $0x160] sm:$0xff]
    %v6491 = vld [vmem:[#allocation4 + $0x168] sm:$0xff]
    %v6492 = vld [vmem:[#allocation4 + $0x170] sm:$0xff]
    %v6493 = vld [vmem:[#allocation4 + $0x178] sm:$0xff]
    %v6494 = vld [vmem:[#allocation4 + $0x180] sm:$0xff]
    %v6495 = vld [vmem:[#allocation4 + $0x188] sm:$0xff]
    %v6496 = vld [vmem:[#allocation4 + $0x190] sm:$0xff]
    %v6497 = vld [vmem:[#allocation4 + $0x198] sm:$0xff]
    %v6498 = vld [vmem:[#allocation4 + $0x1a0] sm:$0xff]
    %v6499 = vld [vmem:[#allocation4 + $0x1a8] sm:$0xff]
    %v6500 = vld [vmem:[#allocation4 + $0x1b0] sm:$0xff]
    %v6501 = vld [vmem:[#allocation4 + $0x1b8] sm:$0xff]
    %v6502 = vld [vmem:[#allocation4 + $0x1c0] sm:$0xff]
    %v6503 = vld [vmem:[#allocation4 + $0x1c8] sm:$0xff]
    %v6504 = vld [vmem:[#allocation4 + $0x1d0] sm:$0xff]
    %v6505 = vld [vmem:[#allocation4 + $0x1d8] sm:$0xff]
    %v6506 = vld [vmem:[#allocation4 + $0x1e0] sm:$0xff]
    %v6507 = vld [vmem:[#allocation4 + $0x1e8] sm:$0xff]
    %v6508 = vld [vmem:[#allocation4 + $0x1f0] sm:$0xff]
    %v6509 = vld [vmem:[#allocation4 + $0x1f8] sm:$0xff]
    %v6510 = vld [vmem:[#allocation4 + $0x200] sm:$0xff]
    %v6511 = vld [vmem:[#allocation4 + $0x208] sm:$0xff]
    %v6512 = vld [vmem:[#allocation4 + $0x210] sm:$0xff]
    %v6513 = vld [vmem:[#allocation4 + $0x218] sm:$0xff]
    %v6514 = vld [vmem:[#allocation4 + $0x220] sm:$0xff]
    %v6515 = vld [vmem:[#allocation4 + $0x228] sm:$0xff]
    %v6516 = vld [vmem:[#allocation4 + $0x230] sm:$0xff]
    %v6517 = vld [vmem:[#allocation4 + $0x238] sm:$0xff]
    %v6518 = vld [vmem:[#allocation4 + $0x240] sm:$0xff]
    %v6519 = vld [vmem:[#allocation4 + $0x248] sm:$0xff]
    %v6520 = vld [vmem:[#allocation4 + $0x250] sm:$0xff]
    %v6521 = vld [vmem:[#allocation4 + $0x258] sm:$0xff]
    %v6522 = vld [vmem:[#allocation4 + $0x260] sm:$0xff]
    %v6523 = vld [vmem:[#allocation4 + $0x268] sm:$0xff]
    %v6524 = vld [vmem:[#allocation4 + $0x270] sm:$0xff]
    %v6525 = vld [vmem:[#allocation4 + $0x278] sm:$0xff]
    %v6526 = vld [vmem:[#allocation4 + $0x280] sm:$0xff]
    %v6527 = vld [vmem:[#allocation4 + $0x288] sm:$0xff]
    %v6528 = vld [vmem:[#allocation4 + $0x290] sm:$0xff]
    %v6529 = vld [vmem:[#allocation4 + $0x298] sm:$0xff]
    %v6530 = vld [vmem:[#allocation4 + $0x2a0] sm:$0xff]
    %v6531 = vld [vmem:[#allocation4 + $0x2a8] sm:$0xff]
    %v6532 = vld [vmem:[#allocation4 + $0x2b0] sm:$0xff]
    %v6533 = vld [vmem:[#allocation4 + $0x2b8] sm:$0xff]
    %v6534 = vld [vmem:[#allocation4 + $0x2c0] sm:$0xff]
    %v6535 = vld [vmem:[#allocation4 + $0x2c8] sm:$0xff]
    %v6536 = vld [vmem:[#allocation4 + $0x2d0] sm:$0xff]
    %v6537 = vld [vmem:[#allocation4 + $0x2d8] sm:$0xff]
    %v6538 = vld [vmem:[#allocation4 + $0x2e0] sm:$0xff]
    %v6539 = vld [vmem:[#allocation4 + $0x2e8] sm:$0xff]
    %v6540 = vld [vmem:[#allocation4 + $0x2f0] sm:$0xff]
    %v6541 = vld [vmem:[#allocation4 + $0x2f8] sm:$0xff]
    %v6542 = vld [vmem:[#allocation4 + $0x300] sm:$0xff]
    %v6543 = vld [vmem:[#allocation4 + $0x308] sm:$0xff]
    %v6544 = vld [vmem:[#allocation4 + $0x310] sm:$0xff]
    %v6545 = vld [vmem:[#allocation4 + $0x318] sm:$0xff]
    %v6546 = vld [vmem:[#allocation4 + $0x320] sm:$0xff]
    %v6547 = vld [vmem:[#allocation4 + $0x328] sm:$0xff]
    %v6548 = vld [vmem:[#allocation4 + $0x330] sm:$0xff]
    %v6549 = vld [vmem:[#allocation4 + $0x338] sm:$0xff]
    %v6550 = vld [vmem:[#allocation4 + $0x340] sm:$0xff]
    %v6551 = vld [vmem:[#allocation4 + $0x348] sm:$0xff]
    %v6552 = vld [vmem:[#allocation4 + $0x350] sm:$0xff]
    %v6553 = vld [vmem:[#allocation4 + $0x358] sm:$0xff]
    %v6554 = vld [vmem:[#allocation4 + $0x360] sm:$0xff]
    %v6555 = vld [vmem:[#allocation4 + $0x368] sm:$0xff]
    %v6556 = vld [vmem:[#allocation4 + $0x370] sm:$0xff]
    %v6557 = vld [vmem:[#allocation4 + $0x378] sm:$0xff]
    %v6558 = vld [vmem:[#allocation4 + $0x380] sm:$0xff]
    %v6559 = vld [vmem:[#allocation4 + $0x388] sm:$0xff]
    %v6560 = vld [vmem:[#allocation4 + $0x390] sm:$0xff]
    %v6561 = vld [vmem:[#allocation4 + $0x398] sm:$0xff]
    %v6562 = vld [vmem:[#allocation4 + $0x3a0] sm:$0xff]
    %v6563 = vld [vmem:[#allocation4 + $0x3a8] sm:$0xff]
    %v6564 = vld [vmem:[#allocation4 + $0x3b0] sm:$0xff]
    %v6565 = vld [vmem:[#allocation4 + $0x3b8] sm:$0xff]
    %v6566 = vld [vmem:[#allocation4 + $0x3c0] sm:$0xff]
    %v6567 = vld [vmem:[#allocation4 + $0x3c8] sm:$0xff]
    %v6568 = vld [vmem:[#allocation4 + $0x3d0] sm:$0xff]
    %v6569 = vld [vmem:[#allocation4 + $0x3d8] sm:$0xff]
    %v6570 = vld [vmem:[#allocation4 + $0x3e0] sm:$0xff]
    %v6571 = vld [vmem:[#allocation4 + $0x3e8] sm:$0xff]
    %v6572 = vld [vmem:[#allocation4 + $0x3f0] sm:$0xff]
    %v6573 = vld [vmem:[#allocation4 + $0x3f8] sm:$0xff]
    %v6574 = vld [vmem:[#allocation4 + $0x400] sm:$0xff]
    %v6575 = vld [vmem:[#allocation4 + $0x408] sm:$0xff]
    %v6576 = vld [vmem:[#allocation4 + $0x410] sm:$0xff]
    %v6577 = vld [vmem:[#allocation4 + $0x418] sm:$0xff]
    %v6578 = vld [vmem:[#allocation4 + $0x420] sm:$0xff]
    %v6579 = vld [vmem:[#allocation4 + $0x428] sm:$0xff]
    %v6580 = vld [vmem:[#allocation4 + $0x430] sm:$0xff]
    %v6581 = vld [vmem:[#allocation4 + $0x438] sm:$0xff]
    %v6582 = vld [vmem:[#allocation4 + $0x440] sm:$0xff]
    %v6583 = vld [vmem:[#allocation4 + $0x448] sm:$0xff]
    %v6584 = vld [vmem:[#allocation4 + $0x450] sm:$0xff]
    %v6585 = vld [vmem:[#allocation4 + $0x458] sm:$0xff]
    %v6586 = vld [vmem:[#allocation4 + $0x460] sm:$0xff]
    %v6587 = vld [vmem:[#allocation4 + $0x468] sm:$0xff]
    %v6588 = vld [vmem:[#allocation4 + $0x470] sm:$0xff]
    %v6589 = vld [vmem:[#allocation4 + $0x478] sm:$0xff]
    %v6590 = vld [vmem:[#allocation4 + $0x480] sm:$0xff]
    %v6591 = vld [vmem:[#allocation4 + $0x488] sm:$0xff]
    %v6592 = vld [vmem:[#allocation4 + $0x490] sm:$0xff]
    %v6593 = vld [vmem:[#allocation4 + $0x498] sm:$0xff]
    %v6594 = vld [vmem:[#allocation4 + $0x4a0] sm:$0xff]
    %v6595 = vld [vmem:[#allocation4 + $0x4a8] sm:$0xff]
    %v6596 = vld [vmem:[#allocation4 + $0x4b0] sm:$0xff]
    %v6597 = vld [vmem:[#allocation4 + $0x4b8] sm:$0xff]
    %v6598 = vld [vmem:[#allocation4 + $0x4c0] sm:$0xff]
    %v6599 = vld [vmem:[#allocation4 + $0x4c8] sm:$0xff]
    %v6600 = vld [vmem:[#allocation4 + $0x4d0] sm:$0xff]
    %v6601 = vld [vmem:[#allocation4 + $0x4d8] sm:$0xff]
    %v6602 = vld [vmem:[#allocation4 + $0x4e0] sm:$0xff]
    %v6603 = vld [vmem:[#allocation4 + $0x4e8] sm:$0xff]
    %v6604 = vld [vmem:[#allocation4 + $0x4f0] sm:$0xff]
    %v6605 = vld [vmem:[#allocation4 + $0x4f8] sm:$0xff]
    %v6606 = vld [vmem:[#allocation4 + $0x500] sm:$0xff]
    %v6607 = vld [vmem:[#allocation4 + $0x508] sm:$0xff]
    %v6608 = vld [vmem:[#allocation4 + $0x510] sm:$0xff]
    %v6609 = vld [vmem:[#allocation4 + $0x518] sm:$0xff]
    %v6610 = vld [vmem:[#allocation4 + $0x520] sm:$0xff]
    %v6611 = vld [vmem:[#allocation4 + $0x528] sm:$0xff]
    %v6612 = vld [vmem:[#allocation4 + $0x530] sm:$0xff]
    %v6613 = vld [vmem:[#allocation4 + $0x538] sm:$0xff]
    %v6614 = vld [vmem:[#allocation4 + $0x540] sm:$0xff]
    %v6615 = vld [vmem:[#allocation4 + $0x548] sm:$0xff]
    %v6616 = vld [vmem:[#allocation4 + $0x550] sm:$0xff]
    %v6617 = vld [vmem:[#allocation4 + $0x558] sm:$0xff]
    %v6618 = vld [vmem:[#allocation4 + $0x560] sm:$0xff]
    %v6619 = vld [vmem:[#allocation4 + $0x568] sm:$0xff]
    %v6620 = vld [vmem:[#allocation4 + $0x570] sm:$0xff]
    %v6621 = vld [vmem:[#allocation4 + $0x578] sm:$0xff]
    %v6622 = vld [vmem:[#allocation4 + $0x580] sm:$0xff]
    %v6623 = vld [vmem:[#allocation4 + $0x588] sm:$0xff]
    %v6624 = vld [vmem:[#allocation4 + $0x590] sm:$0xff]
    %v6625 = vld [vmem:[#allocation4 + $0x598] sm:$0xff]
    %v6626 = vld [vmem:[#allocation4 + $0x5a0] sm:$0xff]
    %v6627 = vld [vmem:[#allocation4 + $0x5a8] sm:$0xff]
    %v6628 = vld [vmem:[#allocation4 + $0x5b0] sm:$0xff]
    %v6629 = vld [vmem:[#allocation4 + $0x5b8] sm:$0xff]
    %v6630 = vld [vmem:[#allocation4 + $0x5c0] sm:$0xff]
    %v6631 = vld [vmem:[#allocation4 + $0x5c8] sm:$0xff]
    %v6632 = vld [vmem:[#allocation4 + $0x5d0] sm:$0xff]
    %v6633 = vld [vmem:[#allocation4 + $0x5d8] sm:$0xff]
    %v6634 = vld [vmem:[#allocation4 + $0x5e0] sm:$0xff]
    %v6635 = vld [vmem:[#allocation4 + $0x5e8] sm:$0xff]
    %v6636 = vld [vmem:[#allocation4 + $0x5f0] sm:$0xff]
    %v6637 = vld [vmem:[#allocation4 + $0x5f8] sm:$0xff]
    %v6638 = vld [vmem:[#allocation4 + $0x600] sm:$0xff]
    %v6639 = vld [vmem:[#allocation4 + $0x608] sm:$0xff]
    %v6640 = vld [vmem:[#allocation4 + $0x610] sm:$0xff]
    %v6641 = vld [vmem:[#allocation4 + $0x618] sm:$0xff]
    %v6642 = vld [vmem:[#allocation4 + $0x620] sm:$0xff]
    %v6643 = vld [vmem:[#allocation4 + $0x628] sm:$0xff]
    %v6644 = vld [vmem:[#allocation4 + $0x630] sm:$0xff]
    %v6645 = vld [vmem:[#allocation4 + $0x638] sm:$0xff]
    %v6646 = vld [vmem:[#allocation4 + $0x640] sm:$0xff]
    %v6647 = vld [vmem:[#allocation4 + $0x648] sm:$0xff]
    %v6648 = vld [vmem:[#allocation4 + $0x650] sm:$0xff]
    %v6649 = vld [vmem:[#allocation4 + $0x658] sm:$0xff]
    %v6650 = vld [vmem:[#allocation4 + $0x660] sm:$0xff]
    %v6651 = vld [vmem:[#allocation4 + $0x668] sm:$0xff]
    %v6652 = vld [vmem:[#allocation4 + $0x670] sm:$0xff]
    %v6653 = vld [vmem:[#allocation4 + $0x678] sm:$0xff]
    %v6654 = vld [vmem:[#allocation4 + $0x680] sm:$0xff]
    %v6655 = vld [vmem:[#allocation4 + $0x688] sm:$0xff]
    %v6656 = vld [vmem:[#allocation4 + $0x690] sm:$0xff]
    %v6657 = vld [vmem:[#allocation4 + $0x698] sm:$0xff]
    %v6658 = vld [vmem:[#allocation4 + $0x6a0] sm:$0xff]
    %v6659 = vld [vmem:[#allocation4 + $0x6a8] sm:$0xff]
    %v6660 = vld [vmem:[#allocation4 + $0x6b0] sm:$0xff]
    %v6661 = vld [vmem:[#allocation4 + $0x6b8] sm:$0xff]
    %v6662 = vld [vmem:[#allocation4 + $0x6c0] sm:$0xff]
    %v6663 = vld [vmem:[#allocation4 + $0x6c8] sm:$0xff]
    %v6664 = vld [vmem:[#allocation4 + $0x6d0] sm:$0xff]
    %v6665 = vld [vmem:[#allocation4 + $0x6d8] sm:$0xff]
    %v6666 = vld [vmem:[#allocation4 + $0x6e0] sm:$0xff]
    %v6667 = vld [vmem:[#allocation4 + $0x6e8] sm:$0xff]
    %v6668 = vld [vmem:[#allocation4 + $0x6f0] sm:$0xff]
    %v6669 = vld [vmem:[#allocation4 + $0x6f8] sm:$0xff]
    %v6670 = vld [vmem:[#allocation4 + $0x700] sm:$0xff]
    %v6671 = vld [vmem:[#allocation4 + $0x708] sm:$0xff]
    %v6672 = vld [vmem:[#allocation4 + $0x710] sm:$0xff]
    %v6673 = vld [vmem:[#allocation4 + $0x718] sm:$0xff]
    %v6674 = vld [vmem:[#allocation4 + $0x720] sm:$0xff]
    %v6675 = vld [vmem:[#allocation4 + $0x728] sm:$0xff]
    %v6676 = vld [vmem:[#allocation4 + $0x730] sm:$0xff]
    %v6677 = vld [vmem:[#allocation4 + $0x738] sm:$0xff]
    %v6678 = vld [vmem:[#allocation4 + $0x740] sm:$0xff]
    %v6679 = vld [vmem:[#allocation4 + $0x748] sm:$0xff]
    %v6680 = vld [vmem:[#allocation4 + $0x750] sm:$0xff]
    %v6681 = vld [vmem:[#allocation4 + $0x758] sm:$0xff]
    %v6682 = vld [vmem:[#allocation4 + $0x760] sm:$0xff]
    %v6683 = vld [vmem:[#allocation4 + $0x768] sm:$0xff]
    %v6684 = vld [vmem:[#allocation4 + $0x770] sm:$0xff]
    %v6685 = vld [vmem:[#allocation4 + $0x778] sm:$0xff]
    %v6686 = vld [vmem:[#allocation4 + $0x780] sm:$0xff]
    %v6687 = vld [vmem:[#allocation4 + $0x788] sm:$0xff]
    %v6688 = vld [vmem:[#allocation4 + $0x790] sm:$0xff]
    %v6689 = vld [vmem:[#allocation4 + $0x798] sm:$0xff]
    %v6690 = vld [vmem:[#allocation4 + $0x7a0] sm:$0xff]
    %v6691 = vld [vmem:[#allocation4 + $0x7a8] sm:$0xff]
    %v6692 = vld [vmem:[#allocation4 + $0x7b0] sm:$0xff]
    %v6693 = vld [vmem:[#allocation4 + $0x7b8] sm:$0xff]
    %v6694 = vld [vmem:[#allocation4 + $0x7c0] sm:$0xff]
    %v6695 = vld [vmem:[#allocation4 + $0x7c8] sm:$0xff]
    %v6696 = vld [vmem:[#allocation4 + $0x7d0] sm:$0xff]
    %v6697 = vld [vmem:[#allocation4 + $0x7d8] sm:$0xff]
    %v6698 = vld [vmem:[#allocation4 + $0x7e0] sm:$0xff]
    %v6699 = vld [vmem:[#allocation4 + $0x7e8] sm:$0xff]
    %v6700 = vld [vmem:[#allocation4 + $0x7f0] sm:$0xff]
    %v6701 = vld [vmem:[#allocation4 + $0x7f8] sm:$0xff]
    %v6702 = vld [vmem:[#allocation4 + $0x800] sm:$0xff]
    %v6703 = vld [vmem:[#allocation4 + $0x808] sm:$0xff]
    %v6704 = vld [vmem:[#allocation4 + $0x810] sm:$0xff]
    %v6705 = vld [vmem:[#allocation4 + $0x818] sm:$0xff]
    %v6706 = vld [vmem:[#allocation4 + $0x820] sm:$0xff]
    %v6707 = vld [vmem:[#allocation4 + $0x828] sm:$0xff]
    %v6708 = vld [vmem:[#allocation4 + $0x830] sm:$0xff]
    %v6709 = vld [vmem:[#allocation4 + $0x838] sm:$0xff]
    %v6710 = vld [vmem:[#allocation4 + $0x840] sm:$0xff]
    %v6711 = vld [vmem:[#allocation4 + $0x848] sm:$0xff]
    %v6712 = vld [vmem:[#allocation4 + $0x850] sm:$0xff]
    %v6713 = vld [vmem:[#allocation4 + $0x858] sm:$0xff]
    %v6714 = vld [vmem:[#allocation4 + $0x860] sm:$0xff]
    %v6715 = vld [vmem:[#allocation4 + $0x868] sm:$0xff]
    %v6716 = vld [vmem:[#allocation4 + $0x870] sm:$0xff]
    %v6717 = vld [vmem:[#allocation4 + $0x878] sm:$0xff]
    %v6718 = vld [vmem:[#allocation4 + $0x880] sm:$0xff]
    %v6719 = vld [vmem:[#allocation4 + $0x888] sm:$0xff]
    %v6720 = vld [vmem:[#allocation4 + $0x890] sm:$0xff]
    %v6721 = vld [vmem:[#allocation4 + $0x898] sm:$0xff]
    %v6722 = vld [vmem:[#allocation4 + $0x8a0] sm:$0xff]
    %v6723 = vld [vmem:[#allocation4 + $0x8a8] sm:$0xff]
    %v6724 = vld [vmem:[#allocation4 + $0x8b0] sm:$0xff]
    %v6725 = vld [vmem:[#allocation4 + $0x8b8] sm:$0xff]
    %v6726 = vld [vmem:[#allocation4 + $0x8c0] sm:$0xff]
    %v6727 = vld [vmem:[#allocation4 + $0x8c8] sm:$0xff]
    %v6728 = vld [vmem:[#allocation4 + $0x8d0] sm:$0xff]
    %v6729 = vld [vmem:[#allocation4 + $0x8d8] sm:$0xff]
    %v6730 = vld [vmem:[#allocation4 + $0x8e0] sm:$0xff]
    %v6731 = vld [vmem:[#allocation4 + $0x8e8] sm:$0xff]
    %v6732 = vld [vmem:[#allocation4 + $0x8f0] sm:$0xff]
    %v6733 = vld [vmem:[#allocation4 + $0x8f8] sm:$0xff]
    %v6734 = vld [vmem:[#allocation4 + $0x900] sm:$0xff]
    %v6735 = vld [vmem:[#allocation4 + $0x908] sm:$0xff]
    %v6736 = vld [vmem:[#allocation4 + $0x910] sm:$0xff]
    %v6737 = vld [vmem:[#allocation4 + $0x918] sm:$0xff]
    %v6738 = vld [vmem:[#allocation4 + $0x920] sm:$0xff]
    %v6739 = vld [vmem:[#allocation4 + $0x928] sm:$0xff]
    %v6740 = vld [vmem:[#allocation4 + $0x930] sm:$0xff]
    %v6741 = vld [vmem:[#allocation4 + $0x938] sm:$0xff]
    %v6742 = vld [vmem:[#allocation4 + $0x940] sm:$0xff]
    %v6743 = vld [vmem:[#allocation4 + $0x948] sm:$0xff]
    %v6744 = vld [vmem:[#allocation4 + $0x950] sm:$0xff]
    %v6745 = vld [vmem:[#allocation4 + $0x958] sm:$0xff]
    %v6746 = vld [vmem:[#allocation4 + $0x960] sm:$0xff]
    %v6747 = vld [vmem:[#allocation4 + $0x968] sm:$0xff]
    %v6748 = vld [vmem:[#allocation4 + $0x970] sm:$0xff]
    %v6749 = vld [vmem:[#allocation4 + $0x978] sm:$0xff]
    %v6750 = vld [vmem:[#allocation4 + $0x980] sm:$0xff]
    %v6751 = vld [vmem:[#allocation4 + $0x988] sm:$0xff]
    %v6752 = vld [vmem:[#allocation4 + $0x990] sm:$0xff]
    %v6753 = vld [vmem:[#allocation4 + $0x998] sm:$0xff]
    %v6754 = vld [vmem:[#allocation4 + $0x9a0] sm:$0xff]
    %v6755 = vld [vmem:[#allocation4 + $0x9a8] sm:$0xff]
    %v6756 = vld [vmem:[#allocation4 + $0x9b0] sm:$0xff]
    %v6757 = vld [vmem:[#allocation4 + $0x9b8] sm:$0xff]
    %v6758 = vld [vmem:[#allocation4 + $0x9c0] sm:$0xff]
    %v6759 = vld [vmem:[#allocation4 + $0x9c8] sm:$0xff]
    %v6760 = vld [vmem:[#allocation4 + $0x9d0] sm:$0xff]
    %v6761 = vld [vmem:[#allocation4 + $0x9d8] sm:$0xff]
    %v6762 = vld [vmem:[#allocation4 + $0x9e0] sm:$0xff]
    %v6763 = vld [vmem:[#allocation4 + $0x9e8] sm:$0xff]
    %v6764 = vld [vmem:[#allocation4 + $0x9f0] sm:$0xff]
    %v6765 = vld [vmem:[#allocation4 + $0x9f8] sm:$0xff]
    %v6766 = vld [vmem:[#allocation4 + $0xa00] sm:$0xff]
    %v6767 = vld [vmem:[#allocation4 + $0xa08] sm:$0xff]
    %v6768 = vld [vmem:[#allocation4 + $0xa10] sm:$0xff]
    %v6769 = vld [vmem:[#allocation4 + $0xa18] sm:$0xff]
    %v6770 = vld [vmem:[#allocation4 + $0xa20] sm:$0xff]
    %v6771 = vld [vmem:[#allocation4 + $0xa28] sm:$0xff]
    %v6772 = vld [vmem:[#allocation4 + $0xa30] sm:$0xff]
    %v6773 = vld [vmem:[#allocation4 + $0xa38] sm:$0xff]
    %v6774 = vld [vmem:[#allocation4 + $0xa40] sm:$0xff]
    %v6775 = vld [vmem:[#allocation4 + $0xa48] sm:$0xff]
    %v6776 = vld [vmem:[#allocation4 + $0xa50] sm:$0xff]
    %v6777 = vld [vmem:[#allocation4 + $0xa58] sm:$0xff]
    %v6778 = vld [vmem:[#allocation4 + $0xa60] sm:$0xff]
    %v6779 = vld [vmem:[#allocation4 + $0xa68] sm:$0xff]
    %v6780 = vld [vmem:[#allocation4 + $0xa70] sm:$0xff]
    %v6781 = vld [vmem:[#allocation4 + $0xa78] sm:$0xff]
    %v6782 = vld [vmem:[#allocation4 + $0xa80] sm:$0xff]
    %v6783 = vld [vmem:[#allocation4 + $0xa88] sm:$0xff]
    %v6784 = vld [vmem:[#allocation4 + $0xa90] sm:$0xff]
    %v6785 = vld [vmem:[#allocation4 + $0xa98] sm:$0xff]
    %v6786 = vld [vmem:[#allocation4 + $0xaa0] sm:$0xff]
    %v6787 = vld [vmem:[#allocation4 + $0xaa8] sm:$0xff]
    %v6788 = vld [vmem:[#allocation4 + $0xab0] sm:$0xff]
    %v6789 = vld [vmem:[#allocation4 + $0xab8] sm:$0xff]
    %v6790 = vld [vmem:[#allocation4 + $0xac0] sm:$0xff]
    %v6791 = vld [vmem:[#allocation4 + $0xac8] sm:$0xff]
    %v6792 = vld [vmem:[#allocation4 + $0xad0] sm:$0xff]
    %v6793 = vld [vmem:[#allocation4 + $0xad8] sm:$0xff]
    %v6794 = vld [vmem:[#allocation4 + $0xae0] sm:$0xff]
    %v6795 = vld [vmem:[#allocation4 + $0xae8] sm:$0xff]
    %v6796 = vld [vmem:[#allocation4 + $0xaf0] sm:$0xff]
    %v6797 = vld [vmem:[#allocation4 + $0xaf8] sm:$0xff]
    %v6798 = vld [vmem:[#allocation4 + $0xb00] sm:$0xff]
    %v6799 = vld [vmem:[#allocation4 + $0xb08] sm:$0xff]
    %v6800 = vld [vmem:[#allocation4 + $0xb10] sm:$0xff]
    %v6801 = vld [vmem:[#allocation4 + $0xb18] sm:$0xff]
    %v6802 = vld [vmem:[#allocation4 + $0xb20] sm:$0xff]
    %v6803 = vld [vmem:[#allocation4 + $0xb28] sm:$0xff]
    %v6804 = vld [vmem:[#allocation4 + $0xb30] sm:$0xff]
    %v6805 = vld [vmem:[#allocation4 + $0xb38] sm:$0xff]
    %v6806 = vld [vmem:[#allocation4 + $0xb40] sm:$0xff]
    %v6807 = vld [vmem:[#allocation4 + $0xb48] sm:$0xff]
    %v6808 = vld [vmem:[#allocation4 + $0xb50] sm:$0xff]
    %v6809 = vld [vmem:[#allocation4 + $0xb58] sm:$0xff]
    %v6810 = vld [vmem:[#allocation4 + $0xb60] sm:$0xff]
    %v6811 = vld [vmem:[#allocation4 + $0xb68] sm:$0xff]
    %v6812 = vld [vmem:[#allocation4 + $0xb70] sm:$0xff]
    %v6813 = vld [vmem:[#allocation4 + $0xb78] sm:$0xff]
    %v6814 = vld [vmem:[#allocation4 + $0xb80] sm:$0xff]
    %v6815 = vld [vmem:[#allocation4 + $0xb88] sm:$0xff]
    %v6816 = vld [vmem:[#allocation4 + $0xb90] sm:$0xff]
    %v6817 = vld [vmem:[#allocation4 + $0xb98] sm:$0xff]
    %v6818 = vld [vmem:[#allocation4 + $0xba0] sm:$0xff]
    %v6819 = vld [vmem:[#allocation4 + $0xba8] sm:$0xff]
    %v6820 = vld [vmem:[#allocation4 + $0xbb0] sm:$0xff]
    %v6821 = vld [vmem:[#allocation4 + $0xbb8] sm:$0xff]
    %v6822 = vld [vmem:[#allocation4 + $0xbc0] sm:$0xff]
    %v6823 = vld [vmem:[#allocation4 + $0xbc8] sm:$0xff]
    %v6824 = vld [vmem:[#allocation4 + $0xbd0] sm:$0xff]
    %v6825 = vld [vmem:[#allocation4 + $0xbd8] sm:$0xff]
    %v6826 = vld [vmem:[#allocation4 + $0xbe0] sm:$0xff]
    %v6827 = vld [vmem:[#allocation4 + $0xbe8] sm:$0xff]
    %v6828 = vld [vmem:[#allocation4 + $0xbf0] sm:$0xff]
    %v6829 = vld [vmem:[#allocation4 + $0xbf8] sm:$0xff]
    %v6830 = vld [vmem:[#allocation4 + $0xc00] sm:$0xff]
    %v6831 = vld [vmem:[#allocation4 + $0xc08] sm:$0xff]
    %v6832 = vld [vmem:[#allocation4 + $0xc10] sm:$0xff]
    %v6833 = vld [vmem:[#allocation4 + $0xc18] sm:$0xff]
    %v6834 = vld [vmem:[#allocation4 + $0xc20] sm:$0xff]
    %v6835 = vld [vmem:[#allocation4 + $0xc28] sm:$0xff]
    %v6836 = vld [vmem:[#allocation4 + $0xc30] sm:$0xff]
    %v6837 = vld [vmem:[#allocation4 + $0xc38] sm:$0xff]
    %v6838 = vld [vmem:[#allocation4 + $0xc40] sm:$0xff]
    %v6839 = vld [vmem:[#allocation4 + $0xc48] sm:$0xff]
    %v6840 = vld [vmem:[#allocation4 + $0xc50] sm:$0xff]
    %v6841 = vld [vmem:[#allocation4 + $0xc58] sm:$0xff]
    %v6842 = vld [vmem:[#allocation4 + $0xc60] sm:$0xff]
    %v6843 = vld [vmem:[#allocation4 + $0xc68] sm:$0xff]
    %v6844 = vld [vmem:[#allocation4 + $0xc70] sm:$0xff]
    %v6845 = vld [vmem:[#allocation4 + $0xc78] sm:$0xff]
    %v6846 = vld [vmem:[#allocation4 + $0xc80] sm:$0xff]
    %v6847 = vld [vmem:[#allocation4 + $0xc88] sm:$0xff]
    %v6848 = vld [vmem:[#allocation4 + $0xc90] sm:$0xff]
    %v6849 = vld [vmem:[#allocation4 + $0xc98] sm:$0xff]
    %v6850 = vld [vmem:[#allocation4 + $0xca0] sm:$0xff]
    %v6851 = vld [vmem:[#allocation4 + $0xca8] sm:$0xff]
    %v6852 = vld [vmem:[#allocation4 + $0xcb0] sm:$0xff]
    %v6853 = vld [vmem:[#allocation4 + $0xcb8] sm:$0xff]
    %v6854 = vld [vmem:[#allocation4 + $0xcc0] sm:$0xff]
    %v6855 = vld [vmem:[#allocation4 + $0xcc8] sm:$0xff]
    %v6856 = vld [vmem:[#allocation4 + $0xcd0] sm:$0xff]
    %v6857 = vld [vmem:[#allocation4 + $0xcd8] sm:$0xff]
    %v6858 = vld [vmem:[#allocation4 + $0xce0] sm:$0xff]
    %v6859 = vld [vmem:[#allocation4 + $0xce8] sm:$0xff]
    %v6860 = vld [vmem:[#allocation4 + $0xcf0] sm:$0xff]
    %v6861 = vld [vmem:[#allocation4 + $0xcf8] sm:$0xff]
    %v6862 = vld [vmem:[#allocation4 + $0xd00] sm:$0xff]
    %v6863 = vld [vmem:[#allocation4 + $0xd08] sm:$0xff]
    %v6864 = vld [vmem:[#allocation4 + $0xd10] sm:$0xff]
    %v6865 = vld [vmem:[#allocation4 + $0xd18] sm:$0xff]
    %v6866 = vld [vmem:[#allocation4 + $0xd20] sm:$0xff]
    %v6867 = vld [vmem:[#allocation4 + $0xd28] sm:$0xff]
    %v6868 = vld [vmem:[#allocation4 + $0xd30] sm:$0xff]
    %v6869 = vld [vmem:[#allocation4 + $0xd38] sm:$0xff]
    %v6870 = vld [vmem:[#allocation4 + $0xd40] sm:$0xff]
    %v6871 = vld [vmem:[#allocation4 + $0xd48] sm:$0xff]
    %v6872 = vld [vmem:[#allocation4 + $0xd50] sm:$0xff]
    %v6873 = vld [vmem:[#allocation4 + $0xd58] sm:$0xff]
    %v6874 = vld [vmem:[#allocation4 + $0xd60] sm:$0xff]
    %v6875 = vld [vmem:[#allocation4 + $0xd68] sm:$0xff]
    %v6876 = vld [vmem:[#allocation4 + $0xd70] sm:$0xff]
    %v6877 = vld [vmem:[#allocation4 + $0xd78] sm:$0xff]
    %v6878 = vld [vmem:[#allocation4 + $0xd80] sm:$0xff]
    %v6879 = vld [vmem:[#allocation4 + $0xd88] sm:$0xff]
    %v6880 = vld [vmem:[#allocation4 + $0xd90] sm:$0xff]
    %v6881 = vld [vmem:[#allocation4 + $0xd98] sm:$0xff]
    %v6882 = vld [vmem:[#allocation4 + $0xda0] sm:$0xff]
    %v6883 = vld [vmem:[#allocation4 + $0xda8] sm:$0xff]
    %v6884 = vld [vmem:[#allocation4 + $0xdb0] sm:$0xff]
    %v6885 = vld [vmem:[#allocation4 + $0xdb8] sm:$0xff]
    %v6886 = vld [vmem:[#allocation4 + $0xdc0] sm:$0xff]
    %v6887 = vld [vmem:[#allocation4 + $0xdc8] sm:$0xff]
    %v6888 = vld [vmem:[#allocation4 + $0xdd0] sm:$0xff]
    %v6889 = vld [vmem:[#allocation4 + $0xdd8] sm:$0xff]
    %v6890 = vld [vmem:[#allocation4 + $0xde0] sm:$0xff]
    %v6891 = vld [vmem:[#allocation4 + $0xde8] sm:$0xff]
    %v6892 = vld [vmem:[#allocation4 + $0xdf0] sm:$0xff]
    %v6893 = vld [vmem:[#allocation4 + $0xdf8] sm:$0xff]
    %v6894 = vunpack.c.l.s8.bf16 %v6446
    %v6895 = vunpack.c.l.s8.bf16 %v6447
    %v6896 = vunpack.c.l.s8.bf16 %v6448
    %v6897 = vunpack.c.l.s8.bf16 %v6449
    %v6898 = vunpack.c.l.s8.bf16 %v6450
    %v6899 = vunpack.c.l.s8.bf16 %v6451
    %v6900 = vunpack.c.l.s8.bf16 %v6452
    %v6901 = vunpack.c.h.s8.bf16 %v6446
    %v6902 = vunpack.c.h.s8.bf16 %v6447
    %v6903 = vunpack.c.h.s8.bf16 %v6448
    %v6904 = vunpack.c.h.s8.bf16 %v6449
    %v6905 = vunpack.c.h.s8.bf16 %v6450
    %v6906 = vunpack.c.h.s8.bf16 %v6451
    %v6907 = vunpack.c.h.s8.bf16 %v6452
    %v6908 = vunpack.c.l.s8.bf16 %v6453
    %v6909 = vunpack.c.l.s8.bf16 %v6454
    %v6910 = vunpack.c.l.s8.bf16 %v6455
    %v6911 = vunpack.c.l.s8.bf16 %v6456
    %v6912 = vunpack.c.l.s8.bf16 %v6457
    %v6913 = vunpack.c.l.s8.bf16 %v6458
    %v6914 = vunpack.c.l.s8.bf16 %v6459
    %v6915 = vunpack.c.h.s8.bf16 %v6453
    %v6916 = vunpack.c.h.s8.bf16 %v6454
    %v6917 = vunpack.c.h.s8.bf16 %v6455
    %v6918 = vunpack.c.h.s8.bf16 %v6456
    %v6919 = vunpack.c.h.s8.bf16 %v6457
    %v6920 = vunpack.c.h.s8.bf16 %v6458
    %v6921 = vunpack.c.h.s8.bf16 %v6459
    %v6922 = vunpack.c.l.s8.bf16 %v6460
    %v6923 = vunpack.c.l.s8.bf16 %v6461
    %v6924 = vunpack.c.l.s8.bf16 %v6462
    %v6925 = vunpack.c.l.s8.bf16 %v6463
    %v6926 = vunpack.c.l.s8.bf16 %v6464
    %v6927 = vunpack.c.l.s8.bf16 %v6465
    %v6928 = vunpack.c.l.s8.bf16 %v6466
    %v6929 = vunpack.c.h.s8.bf16 %v6460
    %v6930 = vunpack.c.h.s8.bf16 %v6461
    %v6931 = vunpack.c.h.s8.bf16 %v6462
    %v6932 = vunpack.c.h.s8.bf16 %v6463
    %v6933 = vunpack.c.h.s8.bf16 %v6464
    %v6934 = vunpack.c.h.s8.bf16 %v6465
    %v6935 = vunpack.c.h.s8.bf16 %v6466
    %v6936 = vunpack.c.l.s8.bf16 %v6467
    %v6937 = vunpack.c.l.s8.bf16 %v6468
    %v6938 = vunpack.c.l.s8.bf16 %v6469
    %v6939 = vunpack.c.l.s8.bf16 %v6470
    %v6940 = vunpack.c.l.s8.bf16 %v6471
    %v6941 = vunpack.c.l.s8.bf16 %v6472
    %v6942 = vunpack.c.l.s8.bf16 %v6473
    %v6943 = vunpack.c.h.s8.bf16 %v6467
    %v6944 = vunpack.c.h.s8.bf16 %v6468
    %v6945 = vunpack.c.h.s8.bf16 %v6469
    %v6946 = vunpack.c.h.s8.bf16 %v6470
    %v6947 = vunpack.c.h.s8.bf16 %v6471
    %v6948 = vunpack.c.h.s8.bf16 %v6472
    %v6949 = vunpack.c.h.s8.bf16 %v6473
    %v6950 = vunpack.c.l.s8.bf16 %v6474
    %v6951 = vunpack.c.l.s8.bf16 %v6475
    %v6952 = vunpack.c.l.s8.bf16 %v6476
    %v6953 = vunpack.c.l.s8.bf16 %v6477
    %v6954 = vunpack.c.l.s8.bf16 %v6478
    %v6955 = vunpack.c.l.s8.bf16 %v6479
    %v6956 = vunpack.c.l.s8.bf16 %v6480
    %v6957 = vunpack.c.h.s8.bf16 %v6474
    %v6958 = vunpack.c.h.s8.bf16 %v6475
    %v6959 = vunpack.c.h.s8.bf16 %v6476
    %v6960 = vunpack.c.h.s8.bf16 %v6477
    %v6961 = vunpack.c.h.s8.bf16 %v6478
    %v6962 = vunpack.c.h.s8.bf16 %v6479
    %v6963 = vunpack.c.h.s8.bf16 %v6480
    %v6964 = vunpack.c.l.s8.bf16 %v6481
    %v6965 = vunpack.c.l.s8.bf16 %v6482
    %v6966 = vunpack.c.l.s8.bf16 %v6483
    %v6967 = vunpack.c.l.s8.bf16 %v6484
    %v6968 = vunpack.c.l.s8.bf16 %v6485
    %v6969 = vunpack.c.l.s8.bf16 %v6486
    %v6970 = vunpack.c.l.s8.bf16 %v6487
    %v6971 = vunpack.c.h.s8.bf16 %v6481
    %v6972 = vunpack.c.h.s8.bf16 %v6482
    %v6973 = vunpack.c.h.s8.bf16 %v6483
    %v6974 = vunpack.c.h.s8.bf16 %v6484
    %v6975 = vunpack.c.h.s8.bf16 %v6485
    %v6976 = vunpack.c.h.s8.bf16 %v6486
    %v6977 = vunpack.c.h.s8.bf16 %v6487
    %v6978 = vunpack.c.l.s8.bf16 %v6488
    %v6979 = vunpack.c.l.s8.bf16 %v6489
    %v6980 = vunpack.c.l.s8.bf16 %v6490
    %v6981 = vunpack.c.l.s8.bf16 %v6491
    %v6982 = vunpack.c.l.s8.bf16 %v6492
    %v6983 = vunpack.c.l.s8.bf16 %v6493
    %v6984 = vunpack.c.l.s8.bf16 %v6494
    %v6985 = vunpack.c.h.s8.bf16 %v6488
    %v6986 = vunpack.c.h.s8.bf16 %v6489
    %v6987 = vunpack.c.h.s8.bf16 %v6490
    %v6988 = vunpack.c.h.s8.bf16 %v6491
    %v6989 = vunpack.c.h.s8.bf16 %v6492
    %v6990 = vunpack.c.h.s8.bf16 %v6493
    %v6991 = vunpack.c.h.s8.bf16 %v6494
    %v6992 = vunpack.c.l.s8.bf16 %v6495
    %v6993 = vunpack.c.l.s8.bf16 %v6496
    %v6994 = vunpack.c.l.s8.bf16 %v6497
    %v6995 = vunpack.c.l.s8.bf16 %v6498
    %v6996 = vunpack.c.l.s8.bf16 %v6499
    %v6997 = vunpack.c.l.s8.bf16 %v6500
    %v6998 = vunpack.c.l.s8.bf16 %v6501
    %v6999 = vunpack.c.h.s8.bf16 %v6495
    %v7000 = vunpack.c.h.s8.bf16 %v6496
    %v7001 = vunpack.c.h.s8.bf16 %v6497
    %v7002 = vunpack.c.h.s8.bf16 %v6498
    %v7003 = vunpack.c.h.s8.bf16 %v6499
    %v7004 = vunpack.c.h.s8.bf16 %v6500
    %v7005 = vunpack.c.h.s8.bf16 %v6501
    %v7006 = vunpack.c.l.s8.bf16 %v6502
    %v7007 = vunpack.c.l.s8.bf16 %v6503
    %v7008 = vunpack.c.l.s8.bf16 %v6504
    %v7009 = vunpack.c.l.s8.bf16 %v6505
    %v7010 = vunpack.c.l.s8.bf16 %v6506
    %v7011 = vunpack.c.l.s8.bf16 %v6507
    %v7012 = vunpack.c.l.s8.bf16 %v6508
    %v7013 = vunpack.c.h.s8.bf16 %v6502
    %v7014 = vunpack.c.h.s8.bf16 %v6503
    %v7015 = vunpack.c.h.s8.bf16 %v6504
    %v7016 = vunpack.c.h.s8.bf16 %v6505
    %v7017 = vunpack.c.h.s8.bf16 %v6506
    %v7018 = vunpack.c.h.s8.bf16 %v6507
    %v7019 = vunpack.c.h.s8.bf16 %v6508
    %v7020 = vunpack.c.l.s8.bf16 %v6509
    %v7021 = vunpack.c.l.s8.bf16 %v6510
    %v7022 = vunpack.c.l.s8.bf16 %v6511
    %v7023 = vunpack.c.l.s8.bf16 %v6512
    %v7024 = vunpack.c.l.s8.bf16 %v6513
    %v7025 = vunpack.c.l.s8.bf16 %v6514
    %v7026 = vunpack.c.l.s8.bf16 %v6515
    %v7027 = vunpack.c.h.s8.bf16 %v6509
    %v7028 = vunpack.c.h.s8.bf16 %v6510
    %v7029 = vunpack.c.h.s8.bf16 %v6511
    %v7030 = vunpack.c.h.s8.bf16 %v6512
    %v7031 = vunpack.c.h.s8.bf16 %v6513
    %v7032 = vunpack.c.h.s8.bf16 %v6514
    %v7033 = vunpack.c.h.s8.bf16 %v6515
    %v7034 = vunpack.c.l.s8.bf16 %v6516
    %v7035 = vunpack.c.l.s8.bf16 %v6517
    %v7036 = vunpack.c.l.s8.bf16 %v6518
    %v7037 = vunpack.c.l.s8.bf16 %v6519
    %v7038 = vunpack.c.l.s8.bf16 %v6520
    %v7039 = vunpack.c.l.s8.bf16 %v6521
    %v7040 = vunpack.c.l.s8.bf16 %v6522
    %v7041 = vunpack.c.h.s8.bf16 %v6516
    %v7042 = vunpack.c.h.s8.bf16 %v6517
    %v7043 = vunpack.c.h.s8.bf16 %v6518
    %v7044 = vunpack.c.h.s8.bf16 %v6519
    %v7045 = vunpack.c.h.s8.bf16 %v6520
    %v7046 = vunpack.c.h.s8.bf16 %v6521
    %v7047 = vunpack.c.h.s8.bf16 %v6522
    %v7048 = vunpack.c.l.s8.bf16 %v6523
    %v7049 = vunpack.c.l.s8.bf16 %v6524
    %v7050 = vunpack.c.l.s8.bf16 %v6525
    %v7051 = vunpack.c.l.s8.bf16 %v6526
    %v7052 = vunpack.c.l.s8.bf16 %v6527
    %v7053 = vunpack.c.l.s8.bf16 %v6528
    %v7054 = vunpack.c.l.s8.bf16 %v6529
    %v7055 = vunpack.c.h.s8.bf16 %v6523
    %v7056 = vunpack.c.h.s8.bf16 %v6524
    %v7057 = vunpack.c.h.s8.bf16 %v6525
    %v7058 = vunpack.c.h.s8.bf16 %v6526
    %v7059 = vunpack.c.h.s8.bf16 %v6527
    %v7060 = vunpack.c.h.s8.bf16 %v6528
    %v7061 = vunpack.c.h.s8.bf16 %v6529
    %v7062 = vunpack.c.l.s8.bf16 %v6530
    %v7063 = vunpack.c.l.s8.bf16 %v6531
    %v7064 = vunpack.c.l.s8.bf16 %v6532
    %v7065 = vunpack.c.l.s8.bf16 %v6533
    %v7066 = vunpack.c.l.s8.bf16 %v6534
    %v7067 = vunpack.c.l.s8.bf16 %v6535
    %v7068 = vunpack.c.l.s8.bf16 %v6536
    %v7069 = vunpack.c.h.s8.bf16 %v6530
    %v7070 = vunpack.c.h.s8.bf16 %v6531
    %v7071 = vunpack.c.h.s8.bf16 %v6532
    %v7072 = vunpack.c.h.s8.bf16 %v6533
    %v7073 = vunpack.c.h.s8.bf16 %v6534
    %v7074 = vunpack.c.h.s8.bf16 %v6535
    %v7075 = vunpack.c.h.s8.bf16 %v6536
    %v7076 = vunpack.c.l.s8.bf16 %v6537
    %v7077 = vunpack.c.l.s8.bf16 %v6538
    %v7078 = vunpack.c.l.s8.bf16 %v6539
    %v7079 = vunpack.c.l.s8.bf16 %v6540
    %v7080 = vunpack.c.l.s8.bf16 %v6541
    %v7081 = vunpack.c.l.s8.bf16 %v6542
    %v7082 = vunpack.c.l.s8.bf16 %v6543
    %v7083 = vunpack.c.h.s8.bf16 %v6537
    %v7084 = vunpack.c.h.s8.bf16 %v6538
    %v7085 = vunpack.c.h.s8.bf16 %v6539
    %v7086 = vunpack.c.h.s8.bf16 %v6540
    %v7087 = vunpack.c.h.s8.bf16 %v6541
    %v7088 = vunpack.c.h.s8.bf16 %v6542
    %v7089 = vunpack.c.h.s8.bf16 %v6543
    %v7090 = vunpack.c.l.s8.bf16 %v6544
    %v7091 = vunpack.c.l.s8.bf16 %v6545
    %v7092 = vunpack.c.l.s8.bf16 %v6546
    %v7093 = vunpack.c.l.s8.bf16 %v6547
    %v7094 = vunpack.c.l.s8.bf16 %v6548
    %v7095 = vunpack.c.l.s8.bf16 %v6549
    %v7096 = vunpack.c.l.s8.bf16 %v6550
    %v7097 = vunpack.c.h.s8.bf16 %v6544
    %v7098 = vunpack.c.h.s8.bf16 %v6545
    %v7099 = vunpack.c.h.s8.bf16 %v6546
    %v7100 = vunpack.c.h.s8.bf16 %v6547
    %v7101 = vunpack.c.h.s8.bf16 %v6548
    %v7102 = vunpack.c.h.s8.bf16 %v6549
    %v7103 = vunpack.c.h.s8.bf16 %v6550
    %v7104 = vunpack.c.l.s8.bf16 %v6551
    %v7105 = vunpack.c.l.s8.bf16 %v6552
    %v7106 = vunpack.c.l.s8.bf16 %v6553
    %v7107 = vunpack.c.l.s8.bf16 %v6554
    %v7108 = vunpack.c.l.s8.bf16 %v6555
    %v7109 = vunpack.c.l.s8.bf16 %v6556
    %v7110 = vunpack.c.l.s8.bf16 %v6557
    %v7111 = vunpack.c.h.s8.bf16 %v6551
    %v7112 = vunpack.c.h.s8.bf16 %v6552
    %v7113 = vunpack.c.h.s8.bf16 %v6553
    %v7114 = vunpack.c.h.s8.bf16 %v6554
    %v7115 = vunpack.c.h.s8.bf16 %v6555
    %v7116 = vunpack.c.h.s8.bf16 %v6556
    %v7117 = vunpack.c.h.s8.bf16 %v6557
    %v7118 = vunpack.c.l.s8.bf16 %v6558
    %v7119 = vunpack.c.l.s8.bf16 %v6559
    %v7120 = vunpack.c.l.s8.bf16 %v6560
    %v7121 = vunpack.c.l.s8.bf16 %v6561
    %v7122 = vunpack.c.l.s8.bf16 %v6562
    %v7123 = vunpack.c.l.s8.bf16 %v6563
    %v7124 = vunpack.c.l.s8.bf16 %v6564
    %v7125 = vunpack.c.h.s8.bf16 %v6558
    %v7126 = vunpack.c.h.s8.bf16 %v6559
    %v7127 = vunpack.c.h.s8.bf16 %v6560
    %v7128 = vunpack.c.h.s8.bf16 %v6561
    %v7129 = vunpack.c.h.s8.bf16 %v6562
    %v7130 = vunpack.c.h.s8.bf16 %v6563
    %v7131 = vunpack.c.h.s8.bf16 %v6564
    %v7132 = vunpack.c.l.s8.bf16 %v6565
    %v7133 = vunpack.c.l.s8.bf16 %v6566
    %v7134 = vunpack.c.l.s8.bf16 %v6567
    %v7135 = vunpack.c.l.s8.bf16 %v6568
    %v7136 = vunpack.c.l.s8.bf16 %v6569
    %v7137 = vunpack.c.l.s8.bf16 %v6570
    %v7138 = vunpack.c.l.s8.bf16 %v6571
    %v7139 = vunpack.c.h.s8.bf16 %v6565
    %v7140 = vunpack.c.h.s8.bf16 %v6566
    %v7141 = vunpack.c.h.s8.bf16 %v6567
    %v7142 = vunpack.c.h.s8.bf16 %v6568
    %v7143 = vunpack.c.h.s8.bf16 %v6569
    %v7144 = vunpack.c.h.s8.bf16 %v6570
    %v7145 = vunpack.c.h.s8.bf16 %v6571
    %v7146 = vunpack.c.l.s8.bf16 %v6572
    %v7147 = vunpack.c.l.s8.bf16 %v6573
    %v7148 = vunpack.c.l.s8.bf16 %v6574
    %v7149 = vunpack.c.l.s8.bf16 %v6575
    %v7150 = vunpack.c.l.s8.bf16 %v6576
    %v7151 = vunpack.c.l.s8.bf16 %v6577
    %v7152 = vunpack.c.l.s8.bf16 %v6578
    %v7153 = vunpack.c.h.s8.bf16 %v6572
    %v7154 = vunpack.c.h.s8.bf16 %v6573
    %v7155 = vunpack.c.h.s8.bf16 %v6574
    %v7156 = vunpack.c.h.s8.bf16 %v6575
    %v7157 = vunpack.c.h.s8.bf16 %v6576
    %v7158 = vunpack.c.h.s8.bf16 %v6577
    %v7159 = vunpack.c.h.s8.bf16 %v6578
    %v7160 = vunpack.c.l.s8.bf16 %v6579
    %v7161 = vunpack.c.l.s8.bf16 %v6580
    %v7162 = vunpack.c.l.s8.bf16 %v6581
    %v7163 = vunpack.c.l.s8.bf16 %v6582
    %v7164 = vunpack.c.l.s8.bf16 %v6583
    %v7165 = vunpack.c.l.s8.bf16 %v6584
    %v7166 = vunpack.c.l.s8.bf16 %v6585
    %v7167 = vunpack.c.h.s8.bf16 %v6579
    %v7168 = vunpack.c.h.s8.bf16 %v6580
    %v7169 = vunpack.c.h.s8.bf16 %v6581
    %v7170 = vunpack.c.h.s8.bf16 %v6582
    %v7171 = vunpack.c.h.s8.bf16 %v6583
    %v7172 = vunpack.c.h.s8.bf16 %v6584
    %v7173 = vunpack.c.h.s8.bf16 %v6585
    %v7174 = vunpack.c.l.s8.bf16 %v6586
    %v7175 = vunpack.c.l.s8.bf16 %v6587
    %v7176 = vunpack.c.l.s8.bf16 %v6588
    %v7177 = vunpack.c.l.s8.bf16 %v6589
    %v7178 = vunpack.c.l.s8.bf16 %v6590
    %v7179 = vunpack.c.l.s8.bf16 %v6591
    %v7180 = vunpack.c.l.s8.bf16 %v6592
    %v7181 = vunpack.c.h.s8.bf16 %v6586
    %v7182 = vunpack.c.h.s8.bf16 %v6587
    %v7183 = vunpack.c.h.s8.bf16 %v6588
    %v7184 = vunpack.c.h.s8.bf16 %v6589
    %v7185 = vunpack.c.h.s8.bf16 %v6590
    %v7186 = vunpack.c.h.s8.bf16 %v6591
    %v7187 = vunpack.c.h.s8.bf16 %v6592
    %v7188 = vunpack.c.l.s8.bf16 %v6593
    %v7189 = vunpack.c.l.s8.bf16 %v6594
    %v7190 = vunpack.c.l.s8.bf16 %v6595
    %v7191 = vunpack.c.l.s8.bf16 %v6596
    %v7192 = vunpack.c.l.s8.bf16 %v6597
    %v7193 = vunpack.c.l.s8.bf16 %v6598
    %v7194 = vunpack.c.l.s8.bf16 %v6599
    %v7195 = vunpack.c.h.s8.bf16 %v6593
    %v7196 = vunpack.c.h.s8.bf16 %v6594
    %v7197 = vunpack.c.h.s8.bf16 %v6595
    %v7198 = vunpack.c.h.s8.bf16 %v6596
    %v7199 = vunpack.c.h.s8.bf16 %v6597
    %v7200 = vunpack.c.h.s8.bf16 %v6598
    %v7201 = vunpack.c.h.s8.bf16 %v6599
    %v7202 = vunpack.c.l.s8.bf16 %v6600
    %v7203 = vunpack.c.l.s8.bf16 %v6601
    %v7204 = vunpack.c.l.s8.bf16 %v6602
    %v7205 = vunpack.c.l.s8.bf16 %v6603
    %v7206 = vunpack.c.l.s8.bf16 %v6604
    %v7207 = vunpack.c.l.s8.bf16 %v6605
    %v7208 = vunpack.c.l.s8.bf16 %v6606
    %v7209 = vunpack.c.h.s8.bf16 %v6600
    %v7210 = vunpack.c.h.s8.bf16 %v6601
    %v7211 = vunpack.c.h.s8.bf16 %v6602
    %v7212 = vunpack.c.h.s8.bf16 %v6603
    %v7213 = vunpack.c.h.s8.bf16 %v6604
    %v7214 = vunpack.c.h.s8.bf16 %v6605
    %v7215 = vunpack.c.h.s8.bf16 %v6606
    %v7216 = vunpack.c.l.s8.bf16 %v6607
    %v7217 = vunpack.c.l.s8.bf16 %v6608
    %v7218 = vunpack.c.l.s8.bf16 %v6609
    %v7219 = vunpack.c.l.s8.bf16 %v6610
    %v7220 = vunpack.c.l.s8.bf16 %v6611
    %v7221 = vunpack.c.l.s8.bf16 %v6612
    %v7222 = vunpack.c.l.s8.bf16 %v6613
    %v7223 = vunpack.c.h.s8.bf16 %v6607
    %v7224 = vunpack.c.h.s8.bf16 %v6608
    %v7225 = vunpack.c.h.s8.bf16 %v6609
    %v7226 = vunpack.c.h.s8.bf16 %v6610
    %v7227 = vunpack.c.h.s8.bf16 %v6611
    %v7228 = vunpack.c.h.s8.bf16 %v6612
    %v7229 = vunpack.c.h.s8.bf16 %v6613
    %v7230 = vunpack.c.l.s8.bf16 %v6614
    %v7231 = vunpack.c.l.s8.bf16 %v6615
    %v7232 = vunpack.c.l.s8.bf16 %v6616
    %v7233 = vunpack.c.l.s8.bf16 %v6617
    %v7234 = vunpack.c.l.s8.bf16 %v6618
    %v7235 = vunpack.c.l.s8.bf16 %v6619
    %v7236 = vunpack.c.l.s8.bf16 %v6620
    %v7237 = vunpack.c.h.s8.bf16 %v6614
    %v7238 = vunpack.c.h.s8.bf16 %v6615
    %v7239 = vunpack.c.h.s8.bf16 %v6616
    %v7240 = vunpack.c.h.s8.bf16 %v6617
    %v7241 = vunpack.c.h.s8.bf16 %v6618
    %v7242 = vunpack.c.h.s8.bf16 %v6619
    %v7243 = vunpack.c.h.s8.bf16 %v6620
    %v7244 = vunpack.c.l.s8.bf16 %v6621
    %v7245 = vunpack.c.l.s8.bf16 %v6622
    %v7246 = vunpack.c.l.s8.bf16 %v6623
    %v7247 = vunpack.c.l.s8.bf16 %v6624
    %v7248 = vunpack.c.l.s8.bf16 %v6625
    %v7249 = vunpack.c.l.s8.bf16 %v6626
    %v7250 = vunpack.c.l.s8.bf16 %v6627
    %v7251 = vunpack.c.h.s8.bf16 %v6621
    %v7252 = vunpack.c.h.s8.bf16 %v6622
    %v7253 = vunpack.c.h.s8.bf16 %v6623
    %v7254 = vunpack.c.h.s8.bf16 %v6624
    %v7255 = vunpack.c.h.s8.bf16 %v6625
    %v7256 = vunpack.c.h.s8.bf16 %v6626
    %v7257 = vunpack.c.h.s8.bf16 %v6627
    %v7258 = vunpack.c.l.s8.bf16 %v6628
    %v7259 = vunpack.c.l.s8.bf16 %v6629
    %v7260 = vunpack.c.l.s8.bf16 %v6630
    %v7261 = vunpack.c.l.s8.bf16 %v6631
    %v7262 = vunpack.c.l.s8.bf16 %v6632
    %v7263 = vunpack.c.l.s8.bf16 %v6633
    %v7264 = vunpack.c.l.s8.bf16 %v6634
    %v7265 = vunpack.c.h.s8.bf16 %v6628
    %v7266 = vunpack.c.h.s8.bf16 %v6629
    %v7267 = vunpack.c.h.s8.bf16 %v6630
    %v7268 = vunpack.c.h.s8.bf16 %v6631
    %v7269 = vunpack.c.h.s8.bf16 %v6632
    %v7270 = vunpack.c.h.s8.bf16 %v6633
    %v7271 = vunpack.c.h.s8.bf16 %v6634
    %v7272 = vunpack.c.l.s8.bf16 %v6635
    %v7273 = vunpack.c.l.s8.bf16 %v6636
    %v7274 = vunpack.c.l.s8.bf16 %v6637
    %v7275 = vunpack.c.l.s8.bf16 %v6638
    %v7276 = vunpack.c.l.s8.bf16 %v6639
    %v7277 = vunpack.c.l.s8.bf16 %v6640
    %v7278 = vunpack.c.l.s8.bf16 %v6641
    %v7279 = vunpack.c.h.s8.bf16 %v6635
    %v7280 = vunpack.c.h.s8.bf16 %v6636
    %v7281 = vunpack.c.h.s8.bf16 %v6637
    %v7282 = vunpack.c.h.s8.bf16 %v6638
    %v7283 = vunpack.c.h.s8.bf16 %v6639
    %v7284 = vunpack.c.h.s8.bf16 %v6640
    %v7285 = vunpack.c.h.s8.bf16 %v6641
    %v7286 = vunpack.c.l.s8.bf16 %v6642
    %v7287 = vunpack.c.l.s8.bf16 %v6643
    %v7288 = vunpack.c.l.s8.bf16 %v6644
    %v7289 = vunpack.c.l.s8.bf16 %v6645
    %v7290 = vunpack.c.l.s8.bf16 %v6646
    %v7291 = vunpack.c.l.s8.bf16 %v6647
    %v7292 = vunpack.c.l.s8.bf16 %v6648
    %v7293 = vunpack.c.h.s8.bf16 %v6642
    %v7294 = vunpack.c.h.s8.bf16 %v6643
    %v7295 = vunpack.c.h.s8.bf16 %v6644
    %v7296 = vunpack.c.h.s8.bf16 %v6645
    %v7297 = vunpack.c.h.s8.bf16 %v6646
    %v7298 = vunpack.c.h.s8.bf16 %v6647
    %v7299 = vunpack.c.h.s8.bf16 %v6648
    %v7300 = vunpack.c.l.s8.bf16 %v6649
    %v7301 = vunpack.c.l.s8.bf16 %v6650
    %v7302 = vunpack.c.l.s8.bf16 %v6651
    %v7303 = vunpack.c.l.s8.bf16 %v6652
    %v7304 = vunpack.c.l.s8.bf16 %v6653
    %v7305 = vunpack.c.l.s8.bf16 %v6654
    %v7306 = vunpack.c.l.s8.bf16 %v6655
    %v7307 = vunpack.c.h.s8.bf16 %v6649
    %v7308 = vunpack.c.h.s8.bf16 %v6650
    %v7309 = vunpack.c.h.s8.bf16 %v6651
    %v7310 = vunpack.c.h.s8.bf16 %v6652
    %v7311 = vunpack.c.h.s8.bf16 %v6653
    %v7312 = vunpack.c.h.s8.bf16 %v6654
    %v7313 = vunpack.c.h.s8.bf16 %v6655
    %v7314 = vunpack.c.l.s8.bf16 %v6656
    %v7315 = vunpack.c.l.s8.bf16 %v6657
    %v7316 = vunpack.c.l.s8.bf16 %v6658
    %v7317 = vunpack.c.l.s8.bf16 %v6659
    %v7318 = vunpack.c.l.s8.bf16 %v6660
    %v7319 = vunpack.c.l.s8.bf16 %v6661
    %v7320 = vunpack.c.l.s8.bf16 %v6662
    %v7321 = vunpack.c.h.s8.bf16 %v6656
    %v7322 = vunpack.c.h.s8.bf16 %v6657
    %v7323 = vunpack.c.h.s8.bf16 %v6658
    %v7324 = vunpack.c.h.s8.bf16 %v6659
    %v7325 = vunpack.c.h.s8.bf16 %v6660
    %v7326 = vunpack.c.h.s8.bf16 %v6661
    %v7327 = vunpack.c.h.s8.bf16 %v6662
    %v7328 = vunpack.c.l.s8.bf16 %v6663
    %v7329 = vunpack.c.l.s8.bf16 %v6664
    %v7330 = vunpack.c.l.s8.bf16 %v6665
    %v7331 = vunpack.c.l.s8.bf16 %v6666
    %v7332 = vunpack.c.l.s8.bf16 %v6667
    %v7333 = vunpack.c.l.s8.bf16 %v6668
    %v7334 = vunpack.c.l.s8.bf16 %v6669
    %v7335 = vunpack.c.h.s8.bf16 %v6663
    %v7336 = vunpack.c.h.s8.bf16 %v6664
    %v7337 = vunpack.c.h.s8.bf16 %v6665
    %v7338 = vunpack.c.h.s8.bf16 %v6666
    %v7339 = vunpack.c.h.s8.bf16 %v6667
    %v7340 = vunpack.c.h.s8.bf16 %v6668
    %v7341 = vunpack.c.h.s8.bf16 %v6669
    %v7342 = vunpack.c.l.s8.bf16 %v6670
    %v7343 = vunpack.c.l.s8.bf16 %v6671
    %v7344 = vunpack.c.l.s8.bf16 %v6672
    %v7345 = vunpack.c.l.s8.bf16 %v6673
    %v7346 = vunpack.c.l.s8.bf16 %v6674
    %v7347 = vunpack.c.l.s8.bf16 %v6675
    %v7348 = vunpack.c.l.s8.bf16 %v6676
    %v7349 = vunpack.c.h.s8.bf16 %v6670
    %v7350 = vunpack.c.h.s8.bf16 %v6671
    %v7351 = vunpack.c.h.s8.bf16 %v6672
    %v7352 = vunpack.c.h.s8.bf16 %v6673
    %v7353 = vunpack.c.h.s8.bf16 %v6674
    %v7354 = vunpack.c.h.s8.bf16 %v6675
    %v7355 = vunpack.c.h.s8.bf16 %v6676
    %v7356 = vunpack.c.l.s8.bf16 %v6677
    %v7357 = vunpack.c.l.s8.bf16 %v6678
    %v7358 = vunpack.c.l.s8.bf16 %v6679
    %v7359 = vunpack.c.l.s8.bf16 %v6680
    %v7360 = vunpack.c.l.s8.bf16 %v6681
    %v7361 = vunpack.c.l.s8.bf16 %v6682
    %v7362 = vunpack.c.l.s8.bf16 %v6683
    %v7363 = vunpack.c.h.s8.bf16 %v6677
    %v7364 = vunpack.c.h.s8.bf16 %v6678
    %v7365 = vunpack.c.h.s8.bf16 %v6679
    %v7366 = vunpack.c.h.s8.bf16 %v6680
    %v7367 = vunpack.c.h.s8.bf16 %v6681
    %v7368 = vunpack.c.h.s8.bf16 %v6682
    %v7369 = vunpack.c.h.s8.bf16 %v6683
    %v7370 = vunpack.c.l.s8.bf16 %v6684
    %v7371 = vunpack.c.l.s8.bf16 %v6685
    %v7372 = vunpack.c.l.s8.bf16 %v6686
    %v7373 = vunpack.c.l.s8.bf16 %v6687
    %v7374 = vunpack.c.l.s8.bf16 %v6688
    %v7375 = vunpack.c.l.s8.bf16 %v6689
    %v7376 = vunpack.c.l.s8.bf16 %v6690
    %v7377 = vunpack.c.h.s8.bf16 %v6684
    %v7378 = vunpack.c.h.s8.bf16 %v6685
    %v7379 = vunpack.c.h.s8.bf16 %v6686
    %v7380 = vunpack.c.h.s8.bf16 %v6687
    %v7381 = vunpack.c.h.s8.bf16 %v6688
    %v7382 = vunpack.c.h.s8.bf16 %v6689
    %v7383 = vunpack.c.h.s8.bf16 %v6690
    %v7384 = vunpack.c.l.s8.bf16 %v6691
    %v7385 = vunpack.c.l.s8.bf16 %v6692
    %v7386 = vunpack.c.l.s8.bf16 %v6693
    %v7387 = vunpack.c.l.s8.bf16 %v6694
    %v7388 = vunpack.c.l.s8.bf16 %v6695
    %v7389 = vunpack.c.l.s8.bf16 %v6696
    %v7390 = vunpack.c.l.s8.bf16 %v6697
    %v7391 = vunpack.c.h.s8.bf16 %v6691
    %v7392 = vunpack.c.h.s8.bf16 %v6692
    %v7393 = vunpack.c.h.s8.bf16 %v6693
    %v7394 = vunpack.c.h.s8.bf16 %v6694
    %v7395 = vunpack.c.h.s8.bf16 %v6695
    %v7396 = vunpack.c.h.s8.bf16 %v6696
    %v7397 = vunpack.c.h.s8.bf16 %v6697
    %v7398 = vunpack.c.l.s8.bf16 %v6698
    %v7399 = vunpack.c.l.s8.bf16 %v6699
    %v7400 = vunpack.c.l.s8.bf16 %v6700
    %v7401 = vunpack.c.l.s8.bf16 %v6701
    %v7402 = vunpack.c.l.s8.bf16 %v6702
    %v7403 = vunpack.c.l.s8.bf16 %v6703
    %v7404 = vunpack.c.l.s8.bf16 %v6704
    %v7405 = vunpack.c.h.s8.bf16 %v6698
    %v7406 = vunpack.c.h.s8.bf16 %v6699
    %v7407 = vunpack.c.h.s8.bf16 %v6700
    %v7408 = vunpack.c.h.s8.bf16 %v6701
    %v7409 = vunpack.c.h.s8.bf16 %v6702
    %v7410 = vunpack.c.h.s8.bf16 %v6703
    %v7411 = vunpack.c.h.s8.bf16 %v6704
    %v7412 = vunpack.c.l.s8.bf16 %v6705
    %v7413 = vunpack.c.l.s8.bf16 %v6706
    %v7414 = vunpack.c.l.s8.bf16 %v6707
    %v7415 = vunpack.c.l.s8.bf16 %v6708
    %v7416 = vunpack.c.l.s8.bf16 %v6709
    %v7417 = vunpack.c.l.s8.bf16 %v6710
    %v7418 = vunpack.c.l.s8.bf16 %v6711
    %v7419 = vunpack.c.h.s8.bf16 %v6705
    %v7420 = vunpack.c.h.s8.bf16 %v6706
    %v7421 = vunpack.c.h.s8.bf16 %v6707
    %v7422 = vunpack.c.h.s8.bf16 %v6708
    %v7423 = vunpack.c.h.s8.bf16 %v6709
    %v7424 = vunpack.c.h.s8.bf16 %v6710
    %v7425 = vunpack.c.h.s8.bf16 %v6711
    %v7426 = vunpack.c.l.s8.bf16 %v6712
    %v7427 = vunpack.c.l.s8.bf16 %v6713
    %v7428 = vunpack.c.l.s8.bf16 %v6714
    %v7429 = vunpack.c.l.s8.bf16 %v6715
    %v7430 = vunpack.c.l.s8.bf16 %v6716
    %v7431 = vunpack.c.l.s8.bf16 %v6717
    %v7432 = vunpack.c.l.s8.bf16 %v6718
    %v7433 = vunpack.c.h.s8.bf16 %v6712
    %v7434 = vunpack.c.h.s8.bf16 %v6713
    %v7435 = vunpack.c.h.s8.bf16 %v6714
    %v7436 = vunpack.c.h.s8.bf16 %v6715
    %v7437 = vunpack.c.h.s8.bf16 %v6716
    %v7438 = vunpack.c.h.s8.bf16 %v6717
    %v7439 = vunpack.c.h.s8.bf16 %v6718
    %v7440 = vunpack.c.l.s8.bf16 %v6719
    %v7441 = vunpack.c.l.s8.bf16 %v6720
    %v7442 = vunpack.c.l.s8.bf16 %v6721
    %v7443 = vunpack.c.l.s8.bf16 %v6722
    %v7444 = vunpack.c.l.s8.bf16 %v6723
    %v7445 = vunpack.c.l.s8.bf16 %v6724
    %v7446 = vunpack.c.l.s8.bf16 %v6725
    %v7447 = vunpack.c.h.s8.bf16 %v6719
    %v7448 = vunpack.c.h.s8.bf16 %v6720
    %v7449 = vunpack.c.h.s8.bf16 %v6721
    %v7450 = vunpack.c.h.s8.bf16 %v6722
    %v7451 = vunpack.c.h.s8.bf16 %v6723
    %v7452 = vunpack.c.h.s8.bf16 %v6724
    %v7453 = vunpack.c.h.s8.bf16 %v6725
    %v7454 = vunpack.c.l.s8.bf16 %v6726
    %v7455 = vunpack.c.l.s8.bf16 %v6727
    %v7456 = vunpack.c.l.s8.bf16 %v6728
    %v7457 = vunpack.c.l.s8.bf16 %v6729
    %v7458 = vunpack.c.l.s8.bf16 %v6730
    %v7459 = vunpack.c.l.s8.bf16 %v6731
    %v7460 = vunpack.c.l.s8.bf16 %v6732
    %v7461 = vunpack.c.h.s8.bf16 %v6726
    %v7462 = vunpack.c.h.s8.bf16 %v6727
    %v7463 = vunpack.c.h.s8.bf16 %v6728
    %v7464 = vunpack.c.h.s8.bf16 %v6729
    %v7465 = vunpack.c.h.s8.bf16 %v6730
    %v7466 = vunpack.c.h.s8.bf16 %v6731
    %v7467 = vunpack.c.h.s8.bf16 %v6732
    %v7468 = vunpack.c.l.s8.bf16 %v6733
    %v7469 = vunpack.c.l.s8.bf16 %v6734
    %v7470 = vunpack.c.l.s8.bf16 %v6735
    %v7471 = vunpack.c.l.s8.bf16 %v6736
    %v7472 = vunpack.c.l.s8.bf16 %v6737
    %v7473 = vunpack.c.l.s8.bf16 %v6738
    %v7474 = vunpack.c.l.s8.bf16 %v6739
    %v7475 = vunpack.c.h.s8.bf16 %v6733
    %v7476 = vunpack.c.h.s8.bf16 %v6734
    %v7477 = vunpack.c.h.s8.bf16 %v6735
    %v7478 = vunpack.c.h.s8.bf16 %v6736
    %v7479 = vunpack.c.h.s8.bf16 %v6737
    %v7480 = vunpack.c.h.s8.bf16 %v6738
    %v7481 = vunpack.c.h.s8.bf16 %v6739
    %v7482 = vunpack.c.l.s8.bf16 %v6740
    %v7483 = vunpack.c.l.s8.bf16 %v6741
    %v7484 = vunpack.c.l.s8.bf16 %v6742
    %v7485 = vunpack.c.l.s8.bf16 %v6743
    %v7486 = vunpack.c.l.s8.bf16 %v6744
    %v7487 = vunpack.c.l.s8.bf16 %v6745
    %v7488 = vunpack.c.l.s8.bf16 %v6746
    %v7489 = vunpack.c.h.s8.bf16 %v6740
    %v7490 = vunpack.c.h.s8.bf16 %v6741
    %v7491 = vunpack.c.h.s8.bf16 %v6742
    %v7492 = vunpack.c.h.s8.bf16 %v6743
    %v7493 = vunpack.c.h.s8.bf16 %v6744
    %v7494 = vunpack.c.h.s8.bf16 %v6745
    %v7495 = vunpack.c.h.s8.bf16 %v6746
    %v7496 = vunpack.c.l.s8.bf16 %v6747
    %v7497 = vunpack.c.l.s8.bf16 %v6748
    %v7498 = vunpack.c.l.s8.bf16 %v6749
    %v7499 = vunpack.c.l.s8.bf16 %v6750
    %v7500 = vunpack.c.l.s8.bf16 %v6751
    %v7501 = vunpack.c.l.s8.bf16 %v6752
    %v7502 = vunpack.c.l.s8.bf16 %v6753
    %v7503 = vunpack.c.h.s8.bf16 %v6747
    %v7504 = vunpack.c.h.s8.bf16 %v6748
    %v7505 = vunpack.c.h.s8.bf16 %v6749
    %v7506 = vunpack.c.h.s8.bf16 %v6750
    %v7507 = vunpack.c.h.s8.bf16 %v6751
    %v7508 = vunpack.c.h.s8.bf16 %v6752
    %v7509 = vunpack.c.h.s8.bf16 %v6753
    %v7510 = vunpack.c.l.s8.bf16 %v6754
    %v7511 = vunpack.c.l.s8.bf16 %v6755
    %v7512 = vunpack.c.l.s8.bf16 %v6756
    %v7513 = vunpack.c.l.s8.bf16 %v6757
    %v7514 = vunpack.c.l.s8.bf16 %v6758
    %v7515 = vunpack.c.l.s8.bf16 %v6759
    %v7516 = vunpack.c.l.s8.bf16 %v6760
    %v7517 = vunpack.c.h.s8.bf16 %v6754
    %v7518 = vunpack.c.h.s8.bf16 %v6755
    %v7519 = vunpack.c.h.s8.bf16 %v6756
    %v7520 = vunpack.c.h.s8.bf16 %v6757
    %v7521 = vunpack.c.h.s8.bf16 %v6758
    %v7522 = vunpack.c.h.s8.bf16 %v6759
    %v7523 = vunpack.c.h.s8.bf16 %v6760
    %v7524 = vunpack.c.l.s8.bf16 %v6761
    %v7525 = vunpack.c.l.s8.bf16 %v6762
    %v7526 = vunpack.c.l.s8.bf16 %v6763
    %v7527 = vunpack.c.l.s8.bf16 %v6764
    %v7528 = vunpack.c.l.s8.bf16 %v6765
    %v7529 = vunpack.c.l.s8.bf16 %v6766
    %v7530 = vunpack.c.l.s8.bf16 %v6767
    %v7531 = vunpack.c.h.s8.bf16 %v6761
    %v7532 = vunpack.c.h.s8.bf16 %v6762
    %v7533 = vunpack.c.h.s8.bf16 %v6763
    %v7534 = vunpack.c.h.s8.bf16 %v6764
    %v7535 = vunpack.c.h.s8.bf16 %v6765
    %v7536 = vunpack.c.h.s8.bf16 %v6766
    %v7537 = vunpack.c.h.s8.bf16 %v6767
    %v7538 = vunpack.c.l.s8.bf16 %v6768
    %v7539 = vunpack.c.l.s8.bf16 %v6769
    %v7540 = vunpack.c.l.s8.bf16 %v6770
    %v7541 = vunpack.c.l.s8.bf16 %v6771
    %v7542 = vunpack.c.l.s8.bf16 %v6772
    %v7543 = vunpack.c.l.s8.bf16 %v6773
    %v7544 = vunpack.c.l.s8.bf16 %v6774
    %v7545 = vunpack.c.h.s8.bf16 %v6768
    %v7546 = vunpack.c.h.s8.bf16 %v6769
    %v7547 = vunpack.c.h.s8.bf16 %v6770
    %v7548 = vunpack.c.h.s8.bf16 %v6771
    %v7549 = vunpack.c.h.s8.bf16 %v6772
    %v7550 = vunpack.c.h.s8.bf16 %v6773
    %v7551 = vunpack.c.h.s8.bf16 %v6774
    %v7552 = vunpack.c.l.s8.bf16 %v6775
    %v7553 = vunpack.c.l.s8.bf16 %v6776
    %v7554 = vunpack.c.l.s8.bf16 %v6777
    %v7555 = vunpack.c.l.s8.bf16 %v6778
    %v7556 = vunpack.c.l.s8.bf16 %v6779
    %v7557 = vunpack.c.l.s8.bf16 %v6780
    %v7558 = vunpack.c.l.s8.bf16 %v6781
    %v7559 = vunpack.c.h.s8.bf16 %v6775
    %v7560 = vunpack.c.h.s8.bf16 %v6776
    %v7561 = vunpack.c.h.s8.bf16 %v6777
    %v7562 = vunpack.c.h.s8.bf16 %v6778
    %v7563 = vunpack.c.h.s8.bf16 %v6779
    %v7564 = vunpack.c.h.s8.bf16 %v6780
    %v7565 = vunpack.c.h.s8.bf16 %v6781
    %v7566 = vunpack.c.l.s8.bf16 %v6782
    %v7567 = vunpack.c.l.s8.bf16 %v6783
    %v7568 = vunpack.c.l.s8.bf16 %v6784
    %v7569 = vunpack.c.l.s8.bf16 %v6785
    %v7570 = vunpack.c.l.s8.bf16 %v6786
    %v7571 = vunpack.c.l.s8.bf16 %v6787
    %v7572 = vunpack.c.l.s8.bf16 %v6788
    %v7573 = vunpack.c.h.s8.bf16 %v6782
    %v7574 = vunpack.c.h.s8.bf16 %v6783
    %v7575 = vunpack.c.h.s8.bf16 %v6784
    %v7576 = vunpack.c.h.s8.bf16 %v6785
    %v7577 = vunpack.c.h.s8.bf16 %v6786
    %v7578 = vunpack.c.h.s8.bf16 %v6787
    %v7579 = vunpack.c.h.s8.bf16 %v6788
    %v7580 = vunpack.c.l.s8.bf16 %v6789
    %v7581 = vunpack.c.l.s8.bf16 %v6790
    %v7582 = vunpack.c.l.s8.bf16 %v6791
    %v7583 = vunpack.c.l.s8.bf16 %v6792
    %v7584 = vunpack.c.l.s8.bf16 %v6793
    %v7585 = vunpack.c.l.s8.bf16 %v6794
    %v7586 = vunpack.c.l.s8.bf16 %v6795
    %v7587 = vunpack.c.h.s8.bf16 %v6789
    %v7588 = vunpack.c.h.s8.bf16 %v6790
    %v7589 = vunpack.c.h.s8.bf16 %v6791
    %v7590 = vunpack.c.h.s8.bf16 %v6792
    %v7591 = vunpack.c.h.s8.bf16 %v6793
    %v7592 = vunpack.c.h.s8.bf16 %v6794
    %v7593 = vunpack.c.h.s8.bf16 %v6795
    %v7594 = vunpack.c.l.s8.bf16 %v6796
    %v7595 = vunpack.c.l.s8.bf16 %v6797
    %v7596 = vunpack.c.l.s8.bf16 %v6798
    %v7597 = vunpack.c.l.s8.bf16 %v6799
    %v7598 = vunpack.c.l.s8.bf16 %v6800
    %v7599 = vunpack.c.l.s8.bf16 %v6801
    %v7600 = vunpack.c.l.s8.bf16 %v6802
    %v7601 = vunpack.c.h.s8.bf16 %v6796
    %v7602 = vunpack.c.h.s8.bf16 %v6797
    %v7603 = vunpack.c.h.s8.bf16 %v6798
    %v7604 = vunpack.c.h.s8.bf16 %v6799
    %v7605 = vunpack.c.h.s8.bf16 %v6800
    %v7606 = vunpack.c.h.s8.bf16 %v6801
    %v7607 = vunpack.c.h.s8.bf16 %v6802
    %v7608 = vunpack.c.l.s8.bf16 %v6803
    %v7609 = vunpack.c.l.s8.bf16 %v6804
    %v7610 = vunpack.c.l.s8.bf16 %v6805
    %v7611 = vunpack.c.l.s8.bf16 %v6806
    %v7612 = vunpack.c.l.s8.bf16 %v6807
    %v7613 = vunpack.c.l.s8.bf16 %v6808
    %v7614 = vunpack.c.l.s8.bf16 %v6809
    %v7615 = vunpack.c.h.s8.bf16 %v6803
    %v7616 = vunpack.c.h.s8.bf16 %v6804
    %v7617 = vunpack.c.h.s8.bf16 %v6805
    %v7618 = vunpack.c.h.s8.bf16 %v6806
    %v7619 = vunpack.c.h.s8.bf16 %v6807
    %v7620 = vunpack.c.h.s8.bf16 %v6808
    %v7621 = vunpack.c.h.s8.bf16 %v6809
    %v7622 = vunpack.c.l.s8.bf16 %v6810
    %v7623 = vunpack.c.l.s8.bf16 %v6811
    %v7624 = vunpack.c.l.s8.bf16 %v6812
    %v7625 = vunpack.c.l.s8.bf16 %v6813
    %v7626 = vunpack.c.l.s8.bf16 %v6814
    %v7627 = vunpack.c.l.s8.bf16 %v6815
    %v7628 = vunpack.c.l.s8.bf16 %v6816
    %v7629 = vunpack.c.h.s8.bf16 %v6810
    %v7630 = vunpack.c.h.s8.bf16 %v6811
    %v7631 = vunpack.c.h.s8.bf16 %v6812
    %v7632 = vunpack.c.h.s8.bf16 %v6813
    %v7633 = vunpack.c.h.s8.bf16 %v6814
    %v7634 = vunpack.c.h.s8.bf16 %v6815
    %v7635 = vunpack.c.h.s8.bf16 %v6816
    %v7636 = vunpack.c.l.s8.bf16 %v6817
    %v7637 = vunpack.c.l.s8.bf16 %v6818
    %v7638 = vunpack.c.l.s8.bf16 %v6819
    %v7639 = vunpack.c.l.s8.bf16 %v6820
    %v7640 = vunpack.c.l.s8.bf16 %v6821
    %v7641 = vunpack.c.l.s8.bf16 %v6822
    %v7642 = vunpack.c.l.s8.bf16 %v6823
    %v7643 = vunpack.c.h.s8.bf16 %v6817
    %v7644 = vunpack.c.h.s8.bf16 %v6818
    %v7645 = vunpack.c.h.s8.bf16 %v6819
    %v7646 = vunpack.c.h.s8.bf16 %v6820
    %v7647 = vunpack.c.h.s8.bf16 %v6821
    %v7648 = vunpack.c.h.s8.bf16 %v6822
    %v7649 = vunpack.c.h.s8.bf16 %v6823
    %v7650 = vunpack.c.l.s8.bf16 %v6824
    %v7651 = vunpack.c.l.s8.bf16 %v6825
    %v7652 = vunpack.c.l.s8.bf16 %v6826
    %v7653 = vunpack.c.l.s8.bf16 %v6827
    %v7654 = vunpack.c.l.s8.bf16 %v6828
    %v7655 = vunpack.c.l.s8.bf16 %v6829
    %v7656 = vunpack.c.l.s8.bf16 %v6830
    %v7657 = vunpack.c.h.s8.bf16 %v6824
    %v7658 = vunpack.c.h.s8.bf16 %v6825
    %v7659 = vunpack.c.h.s8.bf16 %v6826
    %v7660 = vunpack.c.h.s8.bf16 %v6827
    %v7661 = vunpack.c.h.s8.bf16 %v6828
    %v7662 = vunpack.c.h.s8.bf16 %v6829
    %v7663 = vunpack.c.h.s8.bf16 %v6830
    %v7664 = vunpack.c.l.s8.bf16 %v6831
    %v7665 = vunpack.c.l.s8.bf16 %v6832
    %v7666 = vunpack.c.l.s8.bf16 %v6833
    %v7667 = vunpack.c.l.s8.bf16 %v6834
    %v7668 = vunpack.c.l.s8.bf16 %v6835
    %v7669 = vunpack.c.l.s8.bf16 %v6836
    %v7670 = vunpack.c.l.s8.bf16 %v6837
    %v7671 = vunpack.c.h.s8.bf16 %v6831
    %v7672 = vunpack.c.h.s8.bf16 %v6832
    %v7673 = vunpack.c.h.s8.bf16 %v6833
    %v7674 = vunpack.c.h.s8.bf16 %v6834
    %v7675 = vunpack.c.h.s8.bf16 %v6835
    %v7676 = vunpack.c.h.s8.bf16 %v6836
    %v7677 = vunpack.c.h.s8.bf16 %v6837
    %v7678 = vunpack.c.l.s8.bf16 %v6838
    %v7679 = vunpack.c.l.s8.bf16 %v6839
    %v7680 = vunpack.c.l.s8.bf16 %v6840
    %v7681 = vunpack.c.l.s8.bf16 %v6841
    %v7682 = vunpack.c.l.s8.bf16 %v6842
    %v7683 = vunpack.c.l.s8.bf16 %v6843
    %v7684 = vunpack.c.l.s8.bf16 %v6844
    %v7685 = vunpack.c.h.s8.bf16 %v6838
    %v7686 = vunpack.c.h.s8.bf16 %v6839
    %v7687 = vunpack.c.h.s8.bf16 %v6840
    %v7688 = vunpack.c.h.s8.bf16 %v6841
    %v7689 = vunpack.c.h.s8.bf16 %v6842
    %v7690 = vunpack.c.h.s8.bf16 %v6843
    %v7691 = vunpack.c.h.s8.bf16 %v6844
    %v7692 = vunpack.c.l.s8.bf16 %v6845
    %v7693 = vunpack.c.l.s8.bf16 %v6846
    %v7694 = vunpack.c.l.s8.bf16 %v6847
    %v7695 = vunpack.c.l.s8.bf16 %v6848
    %v7696 = vunpack.c.l.s8.bf16 %v6849
    %v7697 = vunpack.c.l.s8.bf16 %v6850
    %v7698 = vunpack.c.l.s8.bf16 %v6851
    %v7699 = vunpack.c.h.s8.bf16 %v6845
    %v7700 = vunpack.c.h.s8.bf16 %v6846
    %v7701 = vunpack.c.h.s8.bf16 %v6847
    %v7702 = vunpack.c.h.s8.bf16 %v6848
    %v7703 = vunpack.c.h.s8.bf16 %v6849
    %v7704 = vunpack.c.h.s8.bf16 %v6850
    %v7705 = vunpack.c.h.s8.bf16 %v6851
    %v7706 = vunpack.c.l.s8.bf16 %v6852
    %v7707 = vunpack.c.l.s8.bf16 %v6853
    %v7708 = vunpack.c.l.s8.bf16 %v6854
    %v7709 = vunpack.c.l.s8.bf16 %v6855
    %v7710 = vunpack.c.l.s8.bf16 %v6856
    %v7711 = vunpack.c.l.s8.bf16 %v6857
    %v7712 = vunpack.c.l.s8.bf16 %v6858
    %v7713 = vunpack.c.h.s8.bf16 %v6852
    %v7714 = vunpack.c.h.s8.bf16 %v6853
    %v7715 = vunpack.c.h.s8.bf16 %v6854
    %v7716 = vunpack.c.h.s8.bf16 %v6855
    %v7717 = vunpack.c.h.s8.bf16 %v6856
    %v7718 = vunpack.c.h.s8.bf16 %v6857
    %v7719 = vunpack.c.h.s8.bf16 %v6858
    %v7720 = vunpack.c.l.s8.bf16 %v6859
    %v7721 = vunpack.c.l.s8.bf16 %v6860
    %v7722 = vunpack.c.l.s8.bf16 %v6861
    %v7723 = vunpack.c.l.s8.bf16 %v6862
    %v7724 = vunpack.c.l.s8.bf16 %v6863
    %v7725 = vunpack.c.l.s8.bf16 %v6864
    %v7726 = vunpack.c.l.s8.bf16 %v6865
    %v7727 = vunpack.c.h.s8.bf16 %v6859
    %v7728 = vunpack.c.h.s8.bf16 %v6860
    %v7729 = vunpack.c.h.s8.bf16 %v6861
    %v7730 = vunpack.c.h.s8.bf16 %v6862
    %v7731 = vunpack.c.h.s8.bf16 %v6863
    %v7732 = vunpack.c.h.s8.bf16 %v6864
    %v7733 = vunpack.c.h.s8.bf16 %v6865
    %v7734 = vunpack.c.l.s8.bf16 %v6866
    %v7735 = vunpack.c.l.s8.bf16 %v6867
    %v7736 = vunpack.c.l.s8.bf16 %v6868
    %v7737 = vunpack.c.l.s8.bf16 %v6869
    %v7738 = vunpack.c.l.s8.bf16 %v6870
    %v7739 = vunpack.c.l.s8.bf16 %v6871
    %v7740 = vunpack.c.l.s8.bf16 %v6872
    %v7741 = vunpack.c.h.s8.bf16 %v6866
    %v7742 = vunpack.c.h.s8.bf16 %v6867
    %v7743 = vunpack.c.h.s8.bf16 %v6868
    %v7744 = vunpack.c.h.s8.bf16 %v6869
    %v7745 = vunpack.c.h.s8.bf16 %v6870
    %v7746 = vunpack.c.h.s8.bf16 %v6871
    %v7747 = vunpack.c.h.s8.bf16 %v6872
    %v7748 = vunpack.c.l.s8.bf16 %v6873
    %v7749 = vunpack.c.l.s8.bf16 %v6874
    %v7750 = vunpack.c.l.s8.bf16 %v6875
    %v7751 = vunpack.c.l.s8.bf16 %v6876
    %v7752 = vunpack.c.l.s8.bf16 %v6877
    %v7753 = vunpack.c.l.s8.bf16 %v6878
    %v7754 = vunpack.c.l.s8.bf16 %v6879
    %v7755 = vunpack.c.h.s8.bf16 %v6873
    %v7756 = vunpack.c.h.s8.bf16 %v6874
    %v7757 = vunpack.c.h.s8.bf16 %v6875
    %v7758 = vunpack.c.h.s8.bf16 %v6876
    %v7759 = vunpack.c.h.s8.bf16 %v6877
    %v7760 = vunpack.c.h.s8.bf16 %v6878
    %v7761 = vunpack.c.h.s8.bf16 %v6879
    %v7762 = vunpack.c.l.s8.bf16 %v6880
    %v7763 = vunpack.c.l.s8.bf16 %v6881
    %v7764 = vunpack.c.l.s8.bf16 %v6882
    %v7765 = vunpack.c.l.s8.bf16 %v6883
    %v7766 = vunpack.c.l.s8.bf16 %v6884
    %v7767 = vunpack.c.l.s8.bf16 %v6885
    %v7768 = vunpack.c.l.s8.bf16 %v6886
    %v7769 = vunpack.c.h.s8.bf16 %v6880
    %v7770 = vunpack.c.h.s8.bf16 %v6881
    %v7771 = vunpack.c.h.s8.bf16 %v6882
    %v7772 = vunpack.c.h.s8.bf16 %v6883
    %v7773 = vunpack.c.h.s8.bf16 %v6884
    %v7774 = vunpack.c.h.s8.bf16 %v6885
    %v7775 = vunpack.c.h.s8.bf16 %v6886
    %v7776 = vunpack.c.l.s8.bf16 %v6887
    %v7777 = vunpack.c.l.s8.bf16 %v6888
    %v7778 = vunpack.c.l.s8.bf16 %v6889
    %v7779 = vunpack.c.l.s8.bf16 %v6890
    %v7780 = vunpack.c.l.s8.bf16 %v6891
    %v7781 = vunpack.c.l.s8.bf16 %v6892
    %v7782 = vunpack.c.l.s8.bf16 %v6893
    %v7783 = vunpack.c.h.s8.bf16 %v6887
    %v7784 = vunpack.c.h.s8.bf16 %v6888
    %v7785 = vunpack.c.h.s8.bf16 %v6889
    %v7786 = vunpack.c.h.s8.bf16 %v6890
    %v7787 = vunpack.c.h.s8.bf16 %v6891
    %v7788 = vunpack.c.h.s8.bf16 %v6892
    %v7789 = vunpack.c.h.s8.bf16 %v6893
    %v7790 = vpack.c.bf16 %v6430, %v6430
    %v7791 = vpack.c.bf16 %v6431, %v6431
    %v7792 = vpack.c.bf16 %v6432, %v6432
    %v7793 = vpack.c.bf16 %v6433, %v6433
    %v7794 = vpack.c.bf16 %v6434, %v6434
    %v7795 = vpack.c.bf16 %v6435, %v6435
    %v7796 = vpack.c.bf16 %v6436, %v6436
    %v7797 = vpack.c.bf16 %v6437, %v6437
    %v7798 = vpack.c.bf16 %v6438, %v6438
    %v7799 = vpack.c.bf16 %v6439, %v6439
    %v7800 = vpack.c.bf16 %v6440, %v6440
    %v7801 = vpack.c.bf16 %v6441, %v6441
    %v7802 = vpack.c.bf16 %v6442, %v6442
    %v7803 = vpack.c.bf16 %v6443, %v6443
    %v7804 = vpack.c.bf16 %v6444, %v6444
    %v7805 = vpack.c.bf16 %v6445, %v6445
    %7806 = vmatprep.subr.bf16.mxu0 %v6895
    %7807 = vmatpush1.bf16.msra.mxu0 %v6894
    %7808 = vmatprep.subr.bf16.mxu0 %v6902
    %7809 = vmatpush1.bf16.msra.mxu0 %v6901
    %7810 = vmatprep.subr.bf16.mxu0 %v6909
    %7811 = vmatpush1.bf16.msra.mxu0 %v6908
    %7812 = vmatprep.subr.bf16.mxu0 %v6916
    %7813 = vmatpush1.bf16.msra.mxu0 %v6915
    %7814 = vmatprep.subr.bf16.mxu0 %v6923
    %7815 = vmatpush1.bf16.msra.mxu0 %v6922
    %7816 = vmatprep.subr.bf16.mxu0 %v6930
    %7817 = vmatpush1.bf16.msra.mxu0 %v6929
    %7818 = vmatprep.subr.bf16.mxu0 %v6937
    %7819 = vmatpush1.bf16.msra.mxu0 %v6936
    %7820 = vmatprep.subr.bf16.mxu0 %v6944
    %7821 = vmatpush1.bf16.msra.mxu0 %v6943
    %7822 = vmatprep.subr.bf16.mxu0 %v6951
    %7823 = vmatpush1.bf16.msra.mxu0 %v6950
    %7824 = vmatprep.subr.bf16.mxu0 %v6958
    %7825 = vmatpush1.bf16.msra.mxu0 %v6957
    %7826 = vmatprep.subr.bf16.mxu0 %v6965
    %7827 = vmatpush1.bf16.msra.mxu0 %v6964
    %7828 = vmatprep.subr.bf16.mxu0 %v6972
    %7829 = vmatpush1.bf16.msra.mxu0 %v6971
    %7830 = vmatprep.subr.bf16.mxu0 %v6979
    %7831 = vmatpush1.bf16.msra.mxu0 %v6978
    %7832 = vmatprep.subr.bf16.mxu0 %v6986
    %7833 = vmatpush1.bf16.msra.mxu0 %v6985
    %7834 = vmatprep.subr.bf16.mxu0 %v6993
    %7835 = vmatpush1.bf16.msra.mxu0 %v6992
    %7836 = vmatprep.subr.bf16.mxu0 %v7000
    %7837 = vmatpush1.bf16.msra.mxu0 %v6999
    %7838 = vmatprep.mubr.bf16.mxu0 %v7791
    %7839 = vmatmul.mubr.bf16.gmra.mrb[0].mxu0 %v7790
    %v7840 = vpop.f32.mrb[0].mxu0
    %v7841 = vadd.f32 0.0, %v7840
    %v7842 = vpop.f32.mrb[0].mxu0
    %v7843 = vadd.f32 0.0, %v7842
    %v7844 = vpop.f32.mrb[0].mxu0
    %v7845 = vpop.f32.mrb[0].mxu0
    %7846 = vdwg.mxu0
    %7847 = vmatprep.subr.bf16.mxu0 %v7007
    %7848 = vmatpush1.bf16.msra.mxu0 %v7006
    %7849 = vmatprep.subr.bf16.mxu0 %v7014
    %7850 = vmatpush1.bf16.msra.mxu0 %v7013
    %7851 = vmatprep.subr.bf16.mxu0 %v7021
    %7852 = vmatpush1.bf16.msra.mxu0 %v7020
    %7853 = vmatprep.subr.bf16.mxu0 %v7028
    %7854 = vmatpush1.bf16.msra.mxu0 %v7027
    %7855 = vmatprep.subr.bf16.mxu0 %v7035
    %7856 = vmatpush1.bf16.msra.mxu0 %v7034
    %7857 = vmatprep.subr.bf16.mxu0 %v7042
    %7858 = vmatpush1.bf16.msra.mxu0 %v7041
    %7859 = vmatprep.subr.bf16.mxu0 %v7049
    %7860 = vmatpush1.bf16.msra.mxu0 %v7048
    %7861 = vmatprep.subr.bf16.mxu0 %v7056
    %7862 = vmatpush1.bf16.msra.mxu0 %v7055
    %7863 = vmatprep.subr.bf16.mxu0 %v7063
    %7864 = vmatpush1.bf16.msra.mxu0 %v7062
    %7865 = vmatprep.subr.bf16.mxu0 %v7070
    %7866 = vmatpush1.bf16.msra.mxu0 %v7069
    %7867 = vmatprep.subr.bf16.mxu0 %v7077
    %7868 = vmatpush1.bf16.msra.mxu0 %v7076
    %7869 = vmatprep.subr.bf16.mxu0 %v7084
    %7870 = vmatpush1.bf16.msra.mxu0 %v7083
    %7871 = vmatprep.subr.bf16.mxu0 %v7091
    %7872 = vmatpush1.bf16.msra.mxu0 %v7090
    %7873 = vmatprep.subr.bf16.mxu0 %v7098
    %7874 = vmatpush1.bf16.msra.mxu0 %v7097
    %7875 = vmatprep.subr.bf16.mxu0 %v7105
    %7876 = vmatpush1.bf16.msra.mxu0 %v7104
    %7877 = vmatprep.subr.bf16.mxu0 %v7112
    %7878 = vmatpush1.bf16.msra.mxu0 %v7111
    %7879 = vmatprep.mubr.bf16.mxu0 %v7793
    %7880 = vmatmul.mubr.bf16.gmra.mrb[0].mxu0 %v7792
    %v7881 = vpop.f32.mrb[0].mxu0
    %v7882 = vadd.f32 %v7841, %v7881
    %v7883 = vpop.f32.mrb[0].mxu0
    %v7884 = vadd.f32 %v7843, %v7883
    %v7885 = vpop.f32.mrb[0].mxu0
    %v7886 = vpop.f32.mrb[0].mxu0
    %7887 = vdwg.mxu0
    %7888 = vmatprep.subr.bf16.mxu0 %v7119
    %7889 = vmatpush1.bf16.msra.mxu0 %v7118
    %7890 = vmatprep.subr.bf16.mxu0 %v7126
    %7891 = vmatpush1.bf16.msra.mxu0 %v7125
    %7892 = vmatprep.subr.bf16.mxu0 %v7133
    %7893 = vmatpush1.bf16.msra.mxu0 %v7132
    %7894 = vmatprep.subr.bf16.mxu0 %v7140
    %7895 = vmatpush1.bf16.msra.mxu0 %v7139
    %7896 = vmatprep.subr.bf16.mxu0 %v7147
    %7897 = vmatpush1.bf16.msra.mxu0 %v7146
    %7898 = vmatprep.subr.bf16.mxu0 %v7154
    %7899 = vmatpush1.bf16.msra.mxu0 %v7153
    %7900 = vmatprep.subr.bf16.mxu0 %v7161
    %7901 = vmatpush1.bf16.msra.mxu0 %v7160
    %7902 = vmatprep.subr.bf16.mxu0 %v7168
    %7903 = vmatpush1.bf16.msra.mxu0 %v7167
    %7904 = vmatprep.subr.bf16.mxu0 %v7175
    %7905 = vmatpush1.bf16.msra.mxu0 %v7174
    %7906 = vmatprep.subr.bf16.mxu0 %v7182
    %7907 = vmatpush1.bf16.msra.mxu0 %v7181
    %7908 = vmatprep.subr.bf16.mxu0 %v7189
    %7909 = vmatpush1.bf16.msra.mxu0 %v7188
    %7910 = vmatprep.subr.bf16.mxu0 %v7196
    %7911 = vmatpush1.bf16.msra.mxu0 %v7195
    %7912 = vmatprep.subr.bf16.mxu0 %v7203
    %7913 = vmatpush1.bf16.msra.mxu0 %v7202
    %7914 = vmatprep.subr.bf16.mxu0 %v7210
    %7915 = vmatpush1.bf16.msra.mxu0 %v7209
    %7916 = vmatprep.subr.bf16.mxu0 %v7217
    %7917 = vmatpush1.bf16.msra.mxu0 %v7216
    %7918 = vmatprep.subr.bf16.mxu0 %v7224
    %7919 = vmatpush1.bf16.msra.mxu0 %v7223
    %7920 = vmatprep.mubr.bf16.mxu0 %v7795
    %7921 = vmatmul.mubr.bf16.gmra.mrb[0].mxu0 %v7794
    %v7922 = vpop.f32.mrb[0].mxu0
    %v7923 = vadd.f32 %v7882, %v7922
    %v7924 = vpop.f32.mrb[0].mxu0
    %v7925 = vadd.f32 %v7884, %v7924
    %v7926 = vpop.f32.mrb[0].mxu0
    %v7927 = vpop.f32.mrb[0].mxu0
    %7928 = vdwg.mxu0
    %7929 = vmatprep.subr.bf16.mxu0 %v7231
    %7930 = vmatpush1.bf16.msra.mxu0 %v7230
    %7931 = vmatprep.subr.bf16.mxu0 %v7238
    %7932 = vmatpush1.bf16.msra.mxu0 %v7237
    %7933 = vmatprep.subr.bf16.mxu0 %v7245
    %7934 = vmatpush1.bf16.msra.mxu0 %v7244
    %7935 = vmatprep.subr.bf16.mxu0 %v7252
    %7936 = vmatpush1.bf16.msra.mxu0 %v7251
    %7937 = vmatprep.subr.bf16.mxu0 %v7259
    %7938 = vmatpush1.bf16.msra.mxu0 %v7258
    %7939 = vmatprep.subr.bf16.mxu0 %v7266
    %7940 = vmatpush1.bf16.msra.mxu0 %v7265
    %7941 = vmatprep.subr.bf16.mxu0 %v7273
    %7942 = vmatpush1.bf16.msra.mxu0 %v7272
    %7943 = vmatprep.subr.bf16.mxu0 %v7280
    %7944 = vmatpush1.bf16.msra.mxu0 %v7279
    %7945 = vmatprep.subr.bf16.mxu0 %v7287
    %7946 = vmatpush1.bf16.msra.mxu0 %v7286
    %7947 = vmatprep.subr.bf16.mxu0 %v7294
    %7948 = vmatpush1.bf16.msra.mxu0 %v7293
    %7949 = vmatprep.subr.bf16.mxu0 %v7301
    %7950 = vmatpush1.bf16.msra.mxu0 %v7300
    %7951 = vmatprep.subr.bf16.mxu0 %v7308
    %7952 = vmatpush1.bf16.msra.mxu0 %v7307
    %7953 = vmatprep.subr.bf16.mxu0 %v7315
    %7954 = vmatpush1.bf16.msra.mxu0 %v7314
    %7955 = vmatprep.subr.bf16.mxu0 %v7322
    %7956 = vmatpush1.bf16.msra.mxu0 %v7321
    %7957 = vmatprep.subr.bf16.mxu0 %v7329
    %7958 = vmatpush1.bf16.msra.mxu0 %v7328
    %7959 = vmatprep.subr.bf16.mxu0 %v7336
    %7960 = vmatpush1.bf16.msra.mxu0 %v7335
    %7961 = vmatprep.mubr.bf16.mxu0 %v7797
    %7962 = vmatmul.mubr.bf16.gmra.mrb[0].mxu0 %v7796
    %v7963 = vpop.f32.mrb[0].mxu0
    %v7964 = vadd.f32 %v7923, %v7963
    %v7965 = vpop.f32.mrb[0].mxu0
    %v7966 = vadd.f32 %v7925, %v7965
    %v7967 = vpop.f32.mrb[0].mxu0
    %v7968 = vpop.f32.mrb[0].mxu0
    %7969 = vdwg.mxu0
    %7970 = vmatprep.subr.bf16.mxu0 %v7343
    %7971 = vmatpush1.bf16.msra.mxu0 %v7342
    %7972 = vmatprep.subr.bf16.mxu0 %v7350
    %7973 = vmatpush1.bf16.msra.mxu0 %v7349
    %7974 = vmatprep.subr.bf16.mxu0 %v7357
    %7975 = vmatpush1.bf16.msra.mxu0 %v7356
    %7976 = vmatprep.subr.bf16.mxu0 %v7364
    %7977 = vmatpush1.bf16.msra.mxu0 %v7363
    %7978 = vmatprep.subr.bf16.mxu0 %v7371
    %7979 = vmatpush1.bf16.msra.mxu0 %v7370
    %7980 = vmatprep.subr.bf16.mxu0 %v7378
    %7981 = vmatpush1.bf16.msra.mxu0 %v7377
    %7982 = vmatprep.subr.bf16.mxu0 %v7385
    %7983 = vmatpush1.bf16.msra.mxu0 %v7384
    %7984 = vmatprep.subr.bf16.mxu0 %v7392
    %7985 = vmatpush1.bf16.msra.mxu0 %v7391
    %7986 = vmatprep.subr.bf16.mxu0 %v7399
    %7987 = vmatpush1.bf16.msra.mxu0 %v7398
    %7988 = vmatprep.subr.bf16.mxu0 %v7406
    %7989 = vmatpush1.bf16.msra.mxu0 %v7405
    %7990 = vmatprep.subr.bf16.mxu0 %v7413
    %7991 = vmatpush1.bf16.msra.mxu0 %v7412
    %7992 = vmatprep.subr.bf16.mxu0 %v7420
    %7993 = vmatpush1.bf16.msra.mxu0 %v7419
    %7994 = vmatprep.subr.bf16.mxu0 %v7427
    %7995 = vmatpush1.bf16.msra.mxu0 %v7426
    %7996 = vmatprep.subr.bf16.mxu0 %v7434
    %7997 = vmatpush1.bf16.msra.mxu0 %v7433
    %7998 = vmatprep.subr.bf16.mxu0 %v7441
    %7999 = vmatpush1.bf16.msra.mxu0 %v7440
    %8000 = vmatprep.subr.bf16.mxu0 %v7448
    %8001 = vmatpush1.bf16.msra.mxu0 %v7447
    %8002 = vmatprep.mubr.bf16.mxu0 %v7799
    %8003 = vmatmul.mubr.bf16.gmra.mrb[0].mxu0 %v7798
    %v8004 = vpop.f32.mrb[0].mxu0
    %v8005 = vadd.f32 %v7964, %v8004
    %v8006 = vpop.f32.mrb[0].mxu0
    %v8007 = vadd.f32 %v7966, %v8006
    %v8008 = vpop.f32.mrb[0].mxu0
    %v8009 = vpop.f32.mrb[0].mxu0
    %8010 = vdwg.mxu0
    %8011 = vmatprep.subr.bf16.mxu0 %v7455
    %8012 = vmatpush1.bf16.msra.mxu0 %v7454
    %8013 = vmatprep.subr.bf16.mxu0 %v7462
    %8014 = vmatpush1.bf16.msra.mxu0 %v7461
    %8015 = vmatprep.subr.bf16.mxu0 %v7469
    %8016 = vmatpush1.bf16.msra.mxu0 %v7468
    %8017 = vmatprep.subr.bf16.mxu0 %v7476
    %8018 = vmatpush1.bf16.msra.mxu0 %v7475
    %8019 = vmatprep.subr.bf16.mxu0 %v7483
    %8020 = vmatpush1.bf16.msra.mxu0 %v7482
    %8021 = vmatprep.subr.bf16.mxu0 %v7490
    %8022 = vmatpush1.bf16.msra.mxu0 %v7489
    %8023 = vmatprep.subr.bf16.mxu0 %v7497
    %8024 = vmatpush1.bf16.msra.mxu0 %v7496
    %8025 = vmatprep.subr.bf16.mxu0 %v7504
    %8026 = vmatpush1.bf16.msra.mxu0 %v7503
    %8027 = vmatprep.subr.bf16.mxu0 %v7511
    %8028 = vmatpush1.bf16.msra.mxu0 %v7510
    %8029 = vmatprep.subr.bf16.mxu0 %v7518
    %8030 = vmatpush1.bf16.msra.mxu0 %v7517
    %8031 = vmatprep.subr.bf16.mxu0 %v7525
    %8032 = vmatpush1.bf16.msra.mxu0 %v7524
    %8033 = vmatprep.subr.bf16.mxu0 %v7532
    %8034 = vmatpush1.bf16.msra.mxu0 %v7531
    %8035 = vmatprep.subr.bf16.mxu0 %v7539
    %8036 = vmatpush1.bf16.msra.mxu0 %v7538
    %8037 = vmatprep.subr.bf16.mxu0 %v7546
    %8038 = vmatpush1.bf16.msra.mxu0 %v7545
    %8039 = vmatprep.subr.bf16.mxu0 %v7553
    %8040 = vmatpush1.bf16.msra.mxu0 %v7552
    %8041 = vmatprep.subr.bf16.mxu0 %v7560
    %8042 = vmatpush1.bf16.msra.mxu0 %v7559
    %8043 = vmatprep.mubr.bf16.mxu0 %v7801
    %8044 = vmatmul.mubr.bf16.gmra.mrb[0].mxu0 %v7800
    %v8045 = vpop.f32.mrb[0].mxu0
    %v8046 = vadd.f32 %v8005, %v8045
    %v8047 = vpop.f32.mrb[0].mxu0
    %v8048 = vadd.f32 %v8007, %v8047
    %v8049 = vpop.f32.mrb[0].mxu0
    %v8050 = vpop.f32.mrb[0].mxu0
    %8051 = vdwg.mxu0
    %8052 = vmatprep.subr.bf16.mxu0 %v7567
    %8053 = vmatpush1.bf16.msra.mxu0 %v7566
    %8054 = vmatprep.subr.bf16.mxu0 %v7574
    %8055 = vmatpush1.bf16.msra.mxu0 %v7573
    %8056 = vmatprep.subr.bf16.mxu0 %v7581
    %8057 = vmatpush1.bf16.msra.mxu0 %v7580
    %8058 = vmatprep.subr.bf16.mxu0 %v7588
    %8059 = vmatpush1.bf16.msra.mxu0 %v7587
    %8060 = vmatprep.subr.bf16.mxu0 %v7595
    %8061 = vmatpush1.bf16.msra.mxu0 %v7594
    %8062 = vmatprep.subr.bf16.mxu0 %v7602
    %8063 = vmatpush1.bf16.msra.mxu0 %v7601
    %8064 = vmatprep.subr.bf16.mxu0 %v7609
    %8065 = vmatpush1.bf16.msra.mxu0 %v7608
    %8066 = vmatprep.subr.bf16.mxu0 %v7616
    %8067 = vmatpush1.bf16.msra.mxu0 %v7615
    %8068 = vmatprep.subr.bf16.mxu0 %v7623
    %8069 = vmatpush1.bf16.msra.mxu0 %v7622
    %8070 = vmatprep.subr.bf16.mxu0 %v7630
    %8071 = vmatpush1.bf16.msra.mxu0 %v7629
    %8072 = vmatprep.subr.bf16.mxu0 %v7637
    %8073 = vmatpush1.bf16.msra.mxu0 %v7636
    %8074 = vmatprep.subr.bf16.mxu0 %v7644
    %8075 = vmatpush1.bf16.msra.mxu0 %v7643
    %8076 = vmatprep.subr.bf16.mxu0 %v7651
    %8077 = vmatpush1.bf16.msra.mxu0 %v7650
    %8078 = vmatprep.subr.bf16.mxu0 %v7658
    %8079 = vmatpush1.bf16.msra.mxu0 %v7657
    %8080 = vmatprep.subr.bf16.mxu0 %v7665
    %8081 = vmatpush1.bf16.msra.mxu0 %v7664
    %8082 = vmatprep.subr.bf16.mxu0 %v7672
    %8083 = vmatpush1.bf16.msra.mxu0 %v7671
    %8084 = vmatprep.mubr.bf16.mxu0 %v7803
    %8085 = vmatmul.mubr.bf16.gmra.mrb[0].mxu0 %v7802
    %v8086 = vpop.f32.mrb[0].mxu0
    %v8087 = vadd.f32 %v8046, %v8086
    %v8088 = vpop.f32.mrb[0].mxu0
    %v8089 = vadd.f32 %v8048, %v8088
    %v8090 = vpop.f32.mrb[0].mxu0
    %v8091 = vpop.f32.mrb[0].mxu0
    %8092 = vdwg.mxu0
    %8093 = vmatprep.subr.bf16.mxu0 %v7679
    %8094 = vmatpush1.bf16.msra.mxu0 %v7678
    %8095 = vmatprep.subr.bf16.mxu0 %v7686
    %8096 = vmatpush1.bf16.msra.mxu0 %v7685
    %8097 = vmatprep.subr.bf16.mxu0 %v7693
    %8098 = vmatpush1.bf16.msra.mxu0 %v7692
    %8099 = vmatprep.subr.bf16.mxu0 %v7700
    %8100 = vmatpush1.bf16.msra.mxu0 %v7699
    %8101 = vmatprep.subr.bf16.mxu0 %v7707
    %8102 = vmatpush1.bf16.msra.mxu0 %v7706
    %8103 = vmatprep.subr.bf16.mxu0 %v7714
    %8104 = vmatpush1.bf16.msra.mxu0 %v7713
    %8105 = vmatprep.subr.bf16.mxu0 %v7721
    %8106 = vmatpush1.bf16.msra.mxu0 %v7720
    %8107 = vmatprep.subr.bf16.mxu0 %v7728
    %8108 = vmatpush1.bf16.msra.mxu0 %v7727
    %8109 = vmatprep.subr.bf16.mxu0 %v7735
    %8110 = vmatpush1.bf16.msra.mxu0 %v7734
    %8111 = vmatprep.subr.bf16.mxu0 %v7742
    %8112 = vmatpush1.bf16.msra.mxu0 %v7741
    %8113 = vmatprep.subr.bf16.mxu0 %v7749
    %8114 = vmatpush1.bf16.msra.mxu0 %v7748
    %8115 = vmatprep.subr.bf16.mxu0 %v7756
    %8116 = vmatpush1.bf16.msra.mxu0 %v7755
    %8117 = vmatprep.subr.bf16.mxu0 %v7763
    %8118 = vmatpush1.bf16.msra.mxu0 %v7762
    %8119 = vmatprep.subr.bf16.mxu0 %v7770
    %8120 = vmatpush1.bf16.msra.mxu0 %v7769
    %8121 = vmatprep.subr.bf16.mxu0 %v7777
    %8122 = vmatpush1.bf16.msra.mxu0 %v7776
    %8123 = vmatprep.subr.bf16.mxu0 %v7784
    %8124 = vmatpush1.bf16.msra.mxu0 %v7783
    %8125 = vmatprep.mubr.bf16.mxu0 %v7805
    %8126 = vmatmul.mubr.bf16.gmra.mrb[0].mxu0 %v7804
    %v8127 = vpop.f32.mrb[0].mxu0
    %v8128 = vadd.f32 %v8087, %v8127
    %v8129 = vpop.f32.mrb[0].mxu0
    %v8130 = vadd.f32 %v8089, %v8129
    %v8131 = vpop.f32.mrb[0].mxu0
    %v8132 = vpop.f32.mrb[0].mxu0
    %8133 = vdwg.mxu0
    %8134 = vmatprep.subr.bf16.mxu0 %v6897
    %8135 = vmatpush1.bf16.msra.mxu0 %v6896
    %8136 = vmatprep.subr.bf16.mxu0 %v6904
    %8137 = vmatpush1.bf16.msra.mxu0 %v6903
    %8138 = vmatprep.subr.bf16.mxu0 %v6911
    %8139 = vmatpush1.bf16.msra.mxu0 %v6910
    %8140 = vmatprep.subr.bf16.mxu0 %v6918
    %8141 = vmatpush1.bf16.msra.mxu0 %v6917
    %8142 = vmatprep.subr.bf16.mxu0 %v6925
    %8143 = vmatpush1.bf16.msra.mxu0 %v6924
    %8144 = vmatprep.subr.bf16.mxu0 %v6932
    %8145 = vmatpush1.bf16.msra.mxu0 %v6931
    %8146 = vmatprep.subr.bf16.mxu0 %v6939
    %8147 = vmatpush1.bf16.msra.mxu0 %v6938
    %8148 = vmatprep.subr.bf16.mxu0 %v6946
    %8149 = vmatpush1.bf16.msra.mxu0 %v6945
    %8150 = vmatprep.subr.bf16.mxu0 %v6953
    %8151 = vmatpush1.bf16.msra.mxu0 %v6952
    %8152 = vmatprep.subr.bf16.mxu0 %v6960
    %8153 = vmatpush1.bf16.msra.mxu0 %v6959
    %8154 = vmatprep.subr.bf16.mxu0 %v6967
    %8155 = vmatpush1.bf16.msra.mxu0 %v6966
    %8156 = vmatprep.subr.bf16.mxu0 %v6974
    %8157 = vmatpush1.bf16.msra.mxu0 %v6973
    %8158 = vmatprep.subr.bf16.mxu0 %v6981
    %8159 = vmatpush1.bf16.msra.mxu0 %v6980
    %8160 = vmatprep.subr.bf16.mxu0 %v6988
    %8161 = vmatpush1.bf16.msra.mxu0 %v6987
    %8162 = vmatprep.subr.bf16.mxu0 %v6995
    %8163 = vmatpush1.bf16.msra.mxu0 %v6994
    %8164 = vmatprep.subr.bf16.mxu0 %v7002
    %8165 = vmatpush1.bf16.msra.mxu0 %v7001
    %8166 = vmatprep.mubr.bf16.mxu0 %v7791
    %8167 = vmatmul.mubr.bf16.gmra.mrb[0].mxu0 %v7790
    %v8168 = vpop.f32.mrb[0].mxu0
    %v8169 = vadd.f32 0.0, %v8168
    %v8170 = vpop.f32.mrb[0].mxu0
    %v8171 = vadd.f32 0.0, %v8170
    %v8172 = vpop.f32.mrb[0].mxu0
    %v8173 = vpop.f32.mrb[0].mxu0
    %8174 = vdwg.mxu0
    %8175 = vmatprep.subr.bf16.mxu0 %v7009
    %8176 = vmatpush1.bf16.msra.mxu0 %v7008
    %8177 = vmatprep.subr.bf16.mxu0 %v7016
    %8178 = vmatpush1.bf16.msra.mxu0 %v7015
    %8179 = vmatprep.subr.bf16.mxu0 %v7023
    %8180 = vmatpush1.bf16.msra.mxu0 %v7022
    %8181 = vmatprep.subr.bf16.mxu0 %v7030
    %8182 = vmatpush1.bf16.msra.mxu0 %v7029
    %8183 = vmatprep.subr.bf16.mxu0 %v7037
    %8184 = vmatpush1.bf16.msra.mxu0 %v7036
    %8185 = vmatprep.subr.bf16.mxu0 %v7044
    %8186 = vmatpush1.bf16.msra.mxu0 %v7043
    %8187 = vmatprep.subr.bf16.mxu0 %v7051
    %8188 = vmatpush1.bf16.msra.mxu0 %v7050
    %8189 = vmatprep.subr.bf16.mxu0 %v7058
    %8190 = vmatpush1.bf16.msra.mxu0 %v7057
    %8191 = vmatprep.subr.bf16.mxu0 %v7065
    %8192 = vmatpush1.bf16.msra.mxu0 %v7064
    %8193 = vmatprep.subr.bf16.mxu0 %v7072
    %8194 = vmatpush1.bf16.msra.mxu0 %v7071
    %8195 = vmatprep.subr.bf16.mxu0 %v7079
    %8196 = vmatpush1.bf16.msra.mxu0 %v7078
    %8197 = vmatprep.subr.bf16.mxu0 %v7086
    %8198 = vmatpush1.bf16.msra.mxu0 %v7085
    %8199 = vmatprep.subr.bf16.mxu0 %v7093
    %8200 = vmatpush1.bf16.msra.mxu0 %v7092
    %8201 = vmatprep.subr.bf16.mxu0 %v7100
    %8202 = vmatpush1.bf16.msra.mxu0 %v7099
    %8203 = vmatprep.subr.bf16.mxu0 %v7107
    %8204 = vmatpush1.bf16.msra.mxu0 %v7106
    %8205 = vmatprep.subr.bf16.mxu0 %v7114
    %8206 = vmatpush1.bf16.msra.mxu0 %v7113
    %8207 = vmatprep.mubr.bf16.mxu0 %v7793
    %8208 = vmatmul.mubr.bf16.gmra.mrb[0].mxu0 %v7792
    %v8209 = vpop.f32.mrb[0].mxu0
    %v8210 = vadd.f32 %v8169, %v8209
    %v8211 = vpop.f32.mrb[0].mxu0
    %v8212 = vadd.f32 %v8171, %v8211
    %v8213 = vpop.f32.mrb[0].mxu0
    %v8214 = vpop.f32.mrb[0].mxu0
    %8215 = vdwg.mxu0
    %8216 = vmatprep.subr.bf16.mxu0 %v7121
    %8217 = vmatpush1.bf16.msra.mxu0 %v7120
    %8218 = vmatprep.subr.bf16.mxu0 %v7128
    %8219 = vmatpush1.bf16.msra.mxu0 %v7127
    %8220 = vmatprep.subr.bf16.mxu0 %v7135
    %8221 = vmatpush1.bf16.msra.mxu0 %v7134
    %8222 = vmatprep.subr.bf16.mxu0 %v7142
    %8223 = vmatpush1.bf16.msra.mxu0 %v7141
    %8224 = vmatprep.subr.bf16.mxu0 %v7149
    %8225 = vmatpush1.bf16.msra.mxu0 %v7148
    %8226 = vmatprep.subr.bf16.mxu0 %v7156
    %8227 = vmatpush1.bf16.msra.mxu0 %v7155
    %8228 = vmatprep.subr.bf16.mxu0 %v7163
    %8229 = vmatpush1.bf16.msra.mxu0 %v7162
    %8230 = vmatprep.subr.bf16.mxu0 %v7170
    %8231 = vmatpush1.bf16.msra.mxu0 %v7169
    %8232 = vmatprep.subr.bf16.mxu0 %v7177
    %8233 = vmatpush1.bf16.msra.mxu0 %v7176
    %8234 = vmatprep.subr.bf16.mxu0 %v7184
    %8235 = vmatpush1.bf16.msra.mxu0 %v7183
    %8236 = vmatprep.subr.bf16.mxu0 %v7191
    %8237 = vmatpush1.bf16.msra.mxu0 %v7190
    %8238 = vmatprep.subr.bf16.mxu0 %v7198
    %8239 = vmatpush1.bf16.msra.mxu0 %v7197
    %8240 = vmatprep.subr.bf16.mxu0 %v7205
    %8241 = vmatpush1.bf16.msra.mxu0 %v7204
    %8242 = vmatprep.subr.bf16.mxu0 %v7212
    %8243 = vmatpush1.bf16.msra.mxu0 %v7211
    %8244 = vmatprep.subr.bf16.mxu0 %v7219
    %8245 = vmatpush1.bf16.msra.mxu0 %v7218
    %8246 = vmatprep.subr.bf16.mxu0 %v7226
    %8247 = vmatpush1.bf16.msra.mxu0 %v7225
    %8248 = vmatprep.mubr.bf16.mxu0 %v7795
    %8249 = vmatmul.mubr.bf16.gmra.mrb[0].mxu0 %v7794
    %v8250 = vpop.f32.mrb[0].mxu0
    %v8251 = vadd.f32 %v8210, %v8250
    %v8252 = vpop.f32.mrb[0].mxu0
    %v8253 = vadd.f32 %v8212, %v8252
    %v8254 = vpop.f32.mrb[0].mxu0
    %v8255 = vpop.f32.mrb[0].mxu0
    %8256 = vdwg.mxu0
    %8257 = vmatprep.subr.bf16.mxu0 %v7233
    %8258 = vmatpush1.bf16.msra.mxu0 %v7232
    %8259 = vmatprep.subr.bf16.mxu0 %v7240
    %8260 = vmatpush1.bf16.msra.mxu0 %v7239
    %8261 = vmatprep.subr.bf16.mxu0 %v7247
    %8262 = vmatpush1.bf16.msra.mxu0 %v7246
    %8263 = vmatprep.subr.bf16.mxu0 %v7254
    %8264 = vmatpush1.bf16.msra.mxu0 %v7253
    %8265 = vmatprep.subr.bf16.mxu0 %v7261
    %8266 = vmatpush1.bf16.msra.mxu0 %v7260
    %8267 = vmatprep.subr.bf16.mxu0 %v7268
    %8268 = vmatpush1.bf16.msra.mxu0 %v7267
    %8269 = vmatprep.subr.bf16.mxu0 %v7275
    %8270 = vmatpush1.bf16.msra.mxu0 %v7274
    %8271 = vmatprep.subr.bf16.mxu0 %v7282
    %8272 = vmatpush1.bf16.msra.mxu0 %v7281
    %8273 = vmatprep.subr.bf16.mxu0 %v7289
    %8274 = vmatpush1.bf16.msra.mxu0 %v7288
    %8275 = vmatprep.subr.bf16.mxu0 %v7296
    %8276 = vmatpush1.bf16.msra.mxu0 %v7295
    %8277 = vmatprep.subr.bf16.mxu0 %v7303
    %8278 = vmatpush1.bf16.msra.mxu0 %v7302
    %8279 = vmatprep.subr.bf16.mxu0 %v7310
    %8280 = vmatpush1.bf16.msra.mxu0 %v7309
    %8281 = vmatprep.subr.bf16.mxu0 %v7317
    %8282 = vmatpush1.bf16.msra.mxu0 %v7316
    %8283 = vmatprep.subr.bf16.mxu0 %v7324
    %8284 = vmatpush1.bf16.msra.mxu0 %v7323
    %8285 = vmatprep.subr.bf16.mxu0 %v7331
    %8286 = vmatpush1.bf16.msra.mxu0 %v7330
    %8287 = vmatprep.subr.bf16.mxu0 %v7338
    %8288 = vmatpush1.bf16.msra.mxu0 %v7337
    %8289 = vmatprep.mubr.bf16.mxu0 %v7797
    %8290 = vmatmul.mubr.bf16.gmra.mrb[0].mxu0 %v7796
    %v8291 = vpop.f32.mrb[0].mxu0
    %v8292 = vadd.f32 %v8251, %v8291
    %v8293 = vpop.f32.mrb[0].mxu0
    %v8294 = vadd.f32 %v8253, %v8293
    %v8295 = vpop.f32.mrb[0].mxu0
    %v8296 = vpop.f32.mrb[0].mxu0
    %8297 = vdwg.mxu0
    %8298 = vmatprep.subr.bf16.mxu0 %v7345
    %8299 = vmatpush1.bf16.msra.mxu0 %v7344
    %8300 = vmatprep.subr.bf16.mxu0 %v7352
    %8301 = vmatpush1.bf16.msra.mxu0 %v7351
    %8302 = vmatprep.subr.bf16.mxu0 %v7359
    %8303 = vmatpush1.bf16.msra.mxu0 %v7358
    %8304 = vmatprep.subr.bf16.mxu0 %v7366
    %8305 = vmatpush1.bf16.msra.mxu0 %v7365
    %8306 = vmatprep.subr.bf16.mxu0 %v7373
    %8307 = vmatpush1.bf16.msra.mxu0 %v7372
    %8308 = vmatprep.subr.bf16.mxu0 %v7380
    %8309 = vmatpush1.bf16.msra.mxu0 %v7379
    %8310 = vmatprep.subr.bf16.mxu0 %v7387
    %8311 = vmatpush1.bf16.msra.mxu0 %v7386
    %8312 = vmatprep.subr.bf16.mxu0 %v7394
    %8313 = vmatpush1.bf16.msra.mxu0 %v7393
    %8314 = vmatprep.subr.bf16.mxu0 %v7401
    %8315 = vmatpush1.bf16.msra.mxu0 %v7400
    %8316 = vmatprep.subr.bf16.mxu0 %v7408
    %8317 = vmatpush1.bf16.msra.mxu0 %v7407
    %8318 = vmatprep.subr.bf16.mxu0 %v7415
    %8319 = vmatpush1.bf16.msra.mxu0 %v7414
    %8320 = vmatprep.subr.bf16.mxu0 %v7422
    %8321 = vmatpush1.bf16.msra.mxu0 %v7421
    %8322 = vmatprep.subr.bf16.mxu0 %v7429
    %8323 = vmatpush1.bf16.msra.mxu0 %v7428
    %8324 = vmatprep.subr.bf16.mxu0 %v7436
    %8325 = vmatpush1.bf16.msra.mxu0 %v7435
    %8326 = vmatprep.subr.bf16.mxu0 %v7443
    %8327 = vmatpush1.bf16.msra.mxu0 %v7442
    %8328 = vmatprep.subr.bf16.mxu0 %v7450
    %8329 = vmatpush1.bf16.msra.mxu0 %v7449
    %8330 = vmatprep.mubr.bf16.mxu0 %v7799
    %8331 = vmatmul.mubr.bf16.gmra.mrb[0].mxu0 %v7798
    %v8332 = vpop.f32.mrb[0].mxu0
    %v8333 = vadd.f32 %v8292, %v8332
    %v8334 = vpop.f32.mrb[0].mxu0
    %v8335 = vadd.f32 %v8294, %v8334
    %v8336 = vpop.f32.mrb[0].mxu0
    %v8337 = vpop.f32.mrb[0].mxu0
    %8338 = vdwg.mxu0
    %8339 = vmatprep.subr.bf16.mxu0 %v7457
    %8340 = vmatpush1.bf16.msra.mxu0 %v7456
    %8341 = vmatprep.subr.bf16.mxu0 %v7464
    %8342 = vmatpush1.bf16.msra.mxu0 %v7463
    %8343 = vmatprep.subr.bf16.mxu0 %v7471
    %8344 = vmatpush1.bf16.msra.mxu0 %v7470
    %8345 = vmatprep.subr.bf16.mxu0 %v7478
    %8346 = vmatpush1.bf16.msra.mxu0 %v7477
    %8347 = vmatprep.subr.bf16.mxu0 %v7485
    %8348 = vmatpush1.bf16.msra.mxu0 %v7484
    %8349 = vmatprep.subr.bf16.mxu0 %v7492
    %8350 = vmatpush1.bf16.msra.mxu0 %v7491
    %8351 = vmatprep.subr.bf16.mxu0 %v7499
    %8352 = vmatpush1.bf16.msra.mxu0 %v7498
    %8353 = vmatprep.subr.bf16.mxu0 %v7506
    %8354 = vmatpush1.bf16.msra.mxu0 %v7505
    %8355 = vmatprep.subr.bf16.mxu0 %v7513
    %8356 = vmatpush1.bf16.msra.mxu0 %v7512
    %8357 = vmatprep.subr.bf16.mxu0 %v7520
    %8358 = vmatpush1.bf16.msra.mxu0 %v7519
    %8359 = vmatprep.subr.bf16.mxu0 %v7527
    %8360 = vmatpush1.bf16.msra.mxu0 %v7526
    %8361 = vmatprep.subr.bf16.mxu0 %v7534
    %8362 = vmatpush1.bf16.msra.mxu0 %v7533
    %8363 = vmatprep.subr.bf16.mxu0 %v7541
    %8364 = vmatpush1.bf16.msra.mxu0 %v7540
    %8365 = vmatprep.subr.bf16.mxu0 %v7548
    %8366 = vmatpush1.bf16.msra.mxu0 %v7547
    %8367 = vmatprep.subr.bf16.mxu0 %v7555
    %8368 = vmatpush1.bf16.msra.mxu0 %v7554
    %8369 = vmatprep.subr.bf16.mxu0 %v7562
    %8370 = vmatpush1.bf16.msra.mxu0 %v7561
    %8371 = vmatprep.mubr.bf16.mxu0 %v7801
    %8372 = vmatmul.mubr.bf16.gmra.mrb[0].mxu0 %v7800
    %v8373 = vpop.f32.mrb[0].mxu0
    %v8374 = vadd.f32 %v8333, %v8373
    %v8375 = vpop.f32.mrb[0].mxu0
    %v8376 = vadd.f32 %v8335, %v8375
    %v8377 = vpop.f32.mrb[0].mxu0
    %v8378 = vpop.f32.mrb[0].mxu0
    %8379 = vdwg.mxu0
    %8380 = vmatprep.subr.bf16.mxu0 %v7569
    %8381 = vmatpush1.bf16.msra.mxu0 %v7568
    %8382 = vmatprep.subr.bf16.mxu0 %v7576
    %8383 = vmatpush1.bf16.msra.mxu0 %v7575
    %8384 = vmatprep.subr.bf16.mxu0 %v7583
    %8385 = vmatpush1.bf16.msra.mxu0 %v7582
    %8386 = vmatprep.subr.bf16.mxu0 %v7590
    %8387 = vmatpush1.bf16.msra.mxu0 %v7589
    %8388 = vmatprep.subr.bf16.mxu0 %v7597
    %8389 = vmatpush1.bf16.msra.mxu0 %v7596
    %8390 = vmatprep.subr.bf16.mxu0 %v7604
    %8391 = vmatpush1.bf16.msra.mxu0 %v7603
    %8392 = vmatprep.subr.bf16.mxu0 %v7611
    %8393 = vmatpush1.bf16.msra.mxu0 %v7610
    %8394 = vmatprep.subr.bf16.mxu0 %v7618
    %8395 = vmatpush1.bf16.msra.mxu0 %v7617
    %8396 = vmatprep.subr.bf16.mxu0 %v7625
    %8397 = vmatpush1.bf16.msra.mxu0 %v7624
    %8398 = vmatprep.subr.bf16.mxu0 %v7632
    %8399 = vmatpush1.bf16.msra.mxu0 %v7631
    %8400 = vmatprep.subr.bf16.mxu0 %v7639
    %8401 = vmatpush1.bf16.msra.mxu0 %v7638
    %8402 = vmatprep.subr.bf16.mxu0 %v7646
    %8403 = vmatpush1.bf16.msra.mxu0 %v7645
    %8404 = vmatprep.subr.bf16.mxu0 %v7653
    %8405 = vmatpush1.bf16.msra.mxu0 %v7652
    %8406 = vmatprep.subr.bf16.mxu0 %v7660
    %8407 = vmatpush1.bf16.msra.mxu0 %v7659
    %8408 = vmatprep.subr.bf16.mxu0 %v7667
    %8409 = vmatpush1.bf16.msra.mxu0 %v7666
    %8410 = vmatprep.subr.bf16.mxu0 %v7674
    %8411 = vmatpush1.bf16.msra.mxu0 %v7673
    %8412 = vmatprep.mubr.bf16.mxu0 %v7803
    %8413 = vmatmul.mubr.bf16.gmra.mrb[0].mxu0 %v7802
    %v8414 = vpop.f32.mrb[0].mxu0
    %v8415 = vadd.f32 %v8374, %v8414
    %v8416 = vpop.f32.mrb[0].mxu0
    %v8417 = vadd.f32 %v8376, %v8416
    %v8418 = vpop.f32.mrb[0].mxu0
    %v8419 = vpop.f32.mrb[0].mxu0
    %8420 = vdwg.mxu0
    %8421 = vmatprep.subr.bf16.mxu0 %v7681
    %8422 = vmatpush1.bf16.msra.mxu0 %v7680
    %8423 = vmatprep.subr.bf16.mxu0 %v7688
    %8424 = vmatpush1.bf16.msra.mxu0 %v7687
    %8425 = vmatprep.subr.bf16.mxu0 %v7695
    %8426 = vmatpush1.bf16.msra.mxu0 %v7694
    %8427 = vmatprep.subr.bf16.mxu0 %v7702
    %8428 = vmatpush1.bf16.msra.mxu0 %v7701
    %8429 = vmatprep.subr.bf16.mxu0 %v7709
    %8430 = vmatpush1.bf16.msra.mxu0 %v7708
    %8431 = vmatprep.subr.bf16.mxu0 %v7716
    %8432 = vmatpush1.bf16.msra.mxu0 %v7715
    %8433 = vmatprep.subr.bf16.mxu0 %v7723
    %8434 = vmatpush1.bf16.msra.mxu0 %v7722
    %8435 = vmatprep.subr.bf16.mxu0 %v7730
    %8436 = vmatpush1.bf16.msra.mxu0 %v7729
    %8437 = vmatprep.subr.bf16.mxu0 %v7737
    %8438 = vmatpush1.bf16.msra.mxu0 %v7736
    %8439 = vmatprep.subr.bf16.mxu0 %v7744
    %8440 = vmatpush1.bf16.msra.mxu0 %v7743
    %8441 = vmatprep.subr.bf16.mxu0 %v7751
    %8442 = vmatpush1.bf16.msra.mxu0 %v7750
    %8443 = vmatprep.subr.bf16.mxu0 %v7758
    %8444 = vmatpush1.bf16.msra.mxu0 %v7757
    %8445 = vmatprep.subr.bf16.mxu0 %v7765
    %8446 = vmatpush1.bf16.msra.mxu0 %v7764
    %8447 = vmatprep.subr.bf16.mxu0 %v7772
    %8448 = vmatpush1.bf16.msra.mxu0 %v7771
    %8449 = vmatprep.subr.bf16.mxu0 %v7779
    %8450 = vmatpush1.bf16.msra.mxu0 %v7778
    %8451 = vmatprep.subr.bf16.mxu0 %v7786
    %8452 = vmatpush1.bf16.msra.mxu0 %v7785
    %8453 = vmatprep.mubr.bf16.mxu0 %v7805
    %8454 = vmatmul.mubr.bf16.gmra.mrb[0].mxu0 %v7804
    %v8455 = vpop.f32.mrb[0].mxu0
    %v8456 = vadd.f32 %v8415, %v8455
    %v8457 = vpop.f32.mrb[0].mxu0
    %v8458 = vadd.f32 %v8417, %v8457
    %v8459 = vpop.f32.mrb[0].mxu0
    %v8460 = vpop.f32.mrb[0].mxu0
    %8461 = vdwg.mxu0
    %8462 = vmatprep.subr.bf16.mxu0 %v6899
    %8463 = vmatpush1.bf16.msra.mxu0 %v6898
    %8464 = vmatprep.subr.bf16.mxu0 %v6906
    %8465 = vmatpush1.bf16.msra.mxu0 %v6905
    %8466 = vmatprep.subr.bf16.mxu0 %v6913
    %8467 = vmatpush1.bf16.msra.mxu0 %v6912
    %8468 = vmatprep.subr.bf16.mxu0 %v6920
    %8469 = vmatpush1.bf16.msra.mxu0 %v6919
    %8470 = vmatprep.subr.bf16.mxu0 %v6927
    %8471 = vmatpush1.bf16.msra.mxu0 %v6926
    %8472 = vmatprep.subr.bf16.mxu0 %v6934
    %8473 = vmatpush1.bf16.msra.mxu0 %v6933
    %8474 = vmatprep.subr.bf16.mxu0 %v6941
    %8475 = vmatpush1.bf16.msra.mxu0 %v6940
    %8476 = vmatprep.subr.bf16.mxu0 %v6948
    %8477 = vmatpush1.bf16.msra.mxu0 %v6947
    %8478 = vmatprep.subr.bf16.mxu0 %v6955
    %8479 = vmatpush1.bf16.msra.mxu0 %v6954
    %8480 = vmatprep.subr.bf16.mxu0 %v6962
    %8481 = vmatpush1.bf16.msra.mxu0 %v6961
    %8482 = vmatprep.subr.bf16.mxu0 %v6969
    %8483 = vmatpush1.bf16.msra.mxu0 %v6968
    %8484 = vmatprep.subr.bf16.mxu0 %v6976
    %8485 = vmatpush1.bf16.msra.mxu0 %v6975
    %8486 = vmatprep.subr.bf16.mxu0 %v6983
    %8487 = vmatpush1.bf16.msra.mxu0 %v6982
    %8488 = vmatprep.subr.bf16.mxu0 %v6990
    %8489 = vmatpush1.bf16.msra.mxu0 %v6989
    %8490 = vmatprep.subr.bf16.mxu0 %v6997
    %8491 = vmatpush1.bf16.msra.mxu0 %v6996
    %8492 = vmatprep.subr.bf16.mxu0 %v7004
    %8493 = vmatpush1.bf16.msra.mxu0 %v7003
    %8494 = vmatprep.mubr.bf16.mxu0 %v7791
    %8495 = vmatmul.mubr.bf16.gmra.mrb[0].mxu0 %v7790
    %v8496 = vpop.f32.mrb[0].mxu0
    %v8497 = vadd.f32 0.0, %v8496
    %v8498 = vpop.f32.mrb[0].mxu0
    %v8499 = vadd.f32 0.0, %v8498
    %v8500 = vpop.f32.mrb[0].mxu0
    %v8501 = vpop.f32.mrb[0].mxu0
    %8502 = vdwg.mxu0
    %8503 = vmatprep.subr.bf16.mxu0 %v7011
    %8504 = vmatpush1.bf16.msra.mxu0 %v7010
    %8505 = vmatprep.subr.bf16.mxu0 %v7018
    %8506 = vmatpush1.bf16.msra.mxu0 %v7017
    %8507 = vmatprep.subr.bf16.mxu0 %v7025
    %8508 = vmatpush1.bf16.msra.mxu0 %v7024
    %8509 = vmatprep.subr.bf16.mxu0 %v7032
    %8510 = vmatpush1.bf16.msra.mxu0 %v7031
    %8511 = vmatprep.subr.bf16.mxu0 %v7039
    %8512 = vmatpush1.bf16.msra.mxu0 %v7038
    %8513 = vmatprep.subr.bf16.mxu0 %v7046
    %8514 = vmatpush1.bf16.msra.mxu0 %v7045
    %8515 = vmatprep.subr.bf16.mxu0 %v7053
    %8516 = vmatpush1.bf16.msra.mxu0 %v7052
    %8517 = vmatprep.subr.bf16.mxu0 %v7060
    %8518 = vmatpush1.bf16.msra.mxu0 %v7059
    %8519 = vmatprep.subr.bf16.mxu0 %v7067
    %8520 = vmatpush1.bf16.msra.mxu0 %v7066
    %8521 = vmatprep.subr.bf16.mxu0 %v7074
    %8522 = vmatpush1.bf16.msra.mxu0 %v7073
    %8523 = vmatprep.subr.bf16.mxu0 %v7081
    %8524 = vmatpush1.bf16.msra.mxu0 %v7080
    %8525 = vmatprep.subr.bf16.mxu0 %v7088
    %8526 = vmatpush1.bf16.msra.mxu0 %v7087
    %8527 = vmatprep.subr.bf16.mxu0 %v7095
    %8528 = vmatpush1.bf16.msra.mxu0 %v7094
    %8529 = vmatprep.subr.bf16.mxu0 %v7102
    %8530 = vmatpush1.bf16.msra.mxu0 %v7101
    %8531 = vmatprep.subr.bf16.mxu0 %v7109
    %8532 = vmatpush1.bf16.msra.mxu0 %v7108
    %8533 = vmatprep.subr.bf16.mxu0 %v7116
    %8534 = vmatpush1.bf16.msra.mxu0 %v7115
    %8535 = vmatprep.mubr.bf16.mxu0 %v7793
    %8536 = vmatmul.mubr.bf16.gmra.mrb[0].mxu0 %v7792
    %v8537 = vpop.f32.mrb[0].mxu0
    %v8538 = vadd.f32 %v8497, %v8537
    %v8539 = vpop.f32.mrb[0].mxu0
    %v8540 = vadd.f32 %v8499, %v8539
    %v8541 = vpop.f32.mrb[0].mxu0
    %v8542 = vpop.f32.mrb[0].mxu0
    %8543 = vdwg.mxu0
    %8544 = vmatprep.subr.bf16.mxu0 %v7123
    %8545 = vmatpush1.bf16.msra.mxu0 %v7122
    %8546 = vmatprep.subr.bf16.mxu0 %v7130
    %8547 = vmatpush1.bf16.msra.mxu0 %v7129
    %8548 = vmatprep.subr.bf16.mxu0 %v7137
    %8549 = vmatpush1.bf16.msra.mxu0 %v7136
    %8550 = vmatprep.subr.bf16.mxu0 %v7144
    %8551 = vmatpush1.bf16.msra.mxu0 %v7143
    %8552 = vmatprep.subr.bf16.mxu0 %v7151
    %8553 = vmatpush1.bf16.msra.mxu0 %v7150
    %8554 = vmatprep.subr.bf16.mxu0 %v7158
    %8555 = vmatpush1.bf16.msra.mxu0 %v7157
    %8556 = vmatprep.subr.bf16.mxu0 %v7165
    %8557 = vmatpush1.bf16.msra.mxu0 %v7164
    %8558 = vmatprep.subr.bf16.mxu0 %v7172
    %8559 = vmatpush1.bf16.msra.mxu0 %v7171
    %8560 = vmatprep.subr.bf16.mxu0 %v7179
    %8561 = vmatpush1.bf16.msra.mxu0 %v7178
    %8562 = vmatprep.subr.bf16.mxu0 %v7186
    %8563 = vmatpush1.bf16.msra.mxu0 %v7185
    %8564 = vmatprep.subr.bf16.mxu0 %v7193
    %8565 = vmatpush1.bf16.msra.mxu0 %v7192
    %8566 = vmatprep.subr.bf16.mxu0 %v7200
    %8567 = vmatpush1.bf16.msra.mxu0 %v7199
    %8568 = vmatprep.subr.bf16.mxu0 %v7207
    %8569 = vmatpush1.bf16.msra.mxu0 %v7206
    %8570 = vmatprep.subr.bf16.mxu0 %v7214
    %8571 = vmatpush1.bf16.msra.mxu0 %v7213
    %8572 = vmatprep.subr.bf16.mxu0 %v7221
    %8573 = vmatpush1.bf16.msra.mxu0 %v7220
    %8574 = vmatprep.subr.bf16.mxu0 %v7228
    %8575 = vmatpush1.bf16.msra.mxu0 %v7227
    %8576 = vmatprep.mubr.bf16.mxu0 %v7795
    %8577 = vmatmul.mubr.bf16.gmra.mrb[0].mxu0 %v7794
    %v8578 = vpop.f32.mrb[0].mxu0
    %v8579 = vadd.f32 %v8538, %v8578
    %v8580 = vpop.f32.mrb[0].mxu0
    %v8581 = vadd.f32 %v8540, %v8580
    %v8582 = vpop.f32.mrb[0].mxu0
    %v8583 = vpop.f32.mrb[0].mxu0
    %8584 = vdwg.mxu0
    %8585 = vmatprep.subr.bf16.mxu0 %v7235
    %8586 = vmatpush1.bf16.msra.mxu0 %v7234
    %8587 = vmatprep.subr.bf16.mxu0 %v7242
    %8588 = vmatpush1.bf16.msra.mxu0 %v7241
    %8589 = vmatprep.subr.bf16.mxu0 %v7249
    %8590 = vmatpush1.bf16.msra.mxu0 %v7248
    %8591 = vmatprep.subr.bf16.mxu0 %v7256
    %8592 = vmatpush1.bf16.msra.mxu0 %v7255
    %8593 = vmatprep.subr.bf16.mxu0 %v7263
    %8594 = vmatpush1.bf16.msra.mxu0 %v7262
    %8595 = vmatprep.subr.bf16.mxu0 %v7270
    %8596 = vmatpush1.bf16.msra.mxu0 %v7269
    %8597 = vmatprep.subr.bf16.mxu0 %v7277
    %8598 = vmatpush1.bf16.msra.mxu0 %v7276
    %8599 = vmatprep.subr.bf16.mxu0 %v7284
    %8600 = vmatpush1.bf16.msra.mxu0 %v7283
    %8601 = vmatprep.subr.bf16.mxu0 %v7291
    %8602 = vmatpush1.bf16.msra.mxu0 %v7290
    %8603 = vmatprep.subr.bf16.mxu0 %v7298
    %8604 = vmatpush1.bf16.msra.mxu0 %v7297
    %8605 = vmatprep.subr.bf16.mxu0 %v7305
    %8606 = vmatpush1.bf16.msra.mxu0 %v7304
    %8607 = vmatprep.subr.bf16.mxu0 %v7312
    %8608 = vmatpush1.bf16.msra.mxu0 %v7311
    %8609 = vmatprep.subr.bf16.mxu0 %v7319
    %8610 = vmatpush1.bf16.msra.mxu0 %v7318
    %8611 = vmatprep.subr.bf16.mxu0 %v7326
    %8612 = vmatpush1.bf16.msra.mxu0 %v7325
    %8613 = vmatprep.subr.bf16.mxu0 %v7333
    %8614 = vmatpush1.bf16.msra.mxu0 %v7332
    %8615 = vmatprep.subr.bf16.mxu0 %v7340
    %8616 = vmatpush1.bf16.msra.mxu0 %v7339
    %8617 = vmatprep.mubr.bf16.mxu0 %v7797
    %8618 = vmatmul.mubr.bf16.gmra.mrb[0].mxu0 %v7796
    %v8619 = vpop.f32.mrb[0].mxu0
    %v8620 = vadd.f32 %v8579, %v8619
    %v8621 = vpop.f32.mrb[0].mxu0
    %v8622 = vadd.f32 %v8581, %v8621
    %v8623 = vpop.f32.mrb[0].mxu0
    %v8624 = vpop.f32.mrb[0].mxu0
    %8625 = vdwg.mxu0
    %8626 = vmatprep.subr.bf16.mxu0 %v7347
    %8627 = vmatpush1.bf16.msra.mxu0 %v7346
    %8628 = vmatprep.subr.bf16.mxu0 %v7354
    %8629 = vmatpush1.bf16.msra.mxu0 %v7353
    %8630 = vmatprep.subr.bf16.mxu0 %v7361
    %8631 = vmatpush1.bf16.msra.mxu0 %v7360
    %8632 = vmatprep.subr.bf16.mxu0 %v7368
    %8633 = vmatpush1.bf16.msra.mxu0 %v7367
    %8634 = vmatprep.subr.bf16.mxu0 %v7375
    %8635 = vmatpush1.bf16.msra.mxu0 %v7374
    %8636 = vmatprep.subr.bf16.mxu0 %v7382
    %8637 = vmatpush1.bf16.msra.mxu0 %v7381
    %8638 = vmatprep.subr.bf16.mxu0 %v7389
    %8639 = vmatpush1.bf16.msra.mxu0 %v7388
    %8640 = vmatprep.subr.bf16.mxu0 %v7396
    %8641 = vmatpush1.bf16.msra.mxu0 %v7395
    %8642 = vmatprep.subr.bf16.mxu0 %v7403
    %8643 = vmatpush1.bf16.msra.mxu0 %v7402
    %8644 = vmatprep.subr.bf16.mxu0 %v7410
    %8645 = vmatpush1.bf16.msra.mxu0 %v7409
    %8646 = vmatprep.subr.bf16.mxu0 %v7417
    %8647 = vmatpush1.bf16.msra.mxu0 %v7416
    %8648 = vmatprep.subr.bf16.mxu0 %v7424
    %8649 = vmatpush1.bf16.msra.mxu0 %v7423
    %8650 = vmatprep.subr.bf16.mxu0 %v7431
    %8651 = vmatpush1.bf16.msra.mxu0 %v7430
    %8652 = vmatprep.subr.bf16.mxu0 %v7438
    %8653 = vmatpush1.bf16.msra.mxu0 %v7437
    %8654 = vmatprep.subr.bf16.mxu0 %v7445
    %8655 = vmatpush1.bf16.msra.mxu0 %v7444
    %8656 = vmatprep.subr.bf16.mxu0 %v7452
    %8657 = vmatpush1.bf16.msra.mxu0 %v7451
    %8658 = vmatprep.mubr.bf16.mxu0 %v7799
    %8659 = vmatmul.mubr.bf16.gmra.mrb[0].mxu0 %v7798
    %v8660 = vpop.f32.mrb[0].mxu0
    %v8661 = vadd.f32 %v8620, %v8660
    %v8662 = vpop.f32.mrb[0].mxu0
    %v8663 = vadd.f32 %v8622, %v8662
    %v8664 = vpop.f32.mrb[0].mxu0
    %v8665 = vpop.f32.mrb[0].mxu0
    %8666 = vdwg.mxu0
    %8667 = vmatprep.subr.bf16.mxu0 %v7459
    %8668 = vmatpush1.bf16.msra.mxu0 %v7458
    %8669 = vmatprep.subr.bf16.mxu0 %v7466
    %8670 = vmatpush1.bf16.msra.mxu0 %v7465
    %8671 = vmatprep.subr.bf16.mxu0 %v7473
    %8672 = vmatpush1.bf16.msra.mxu0 %v7472
    %8673 = vmatprep.subr.bf16.mxu0 %v7480
    %8674 = vmatpush1.bf16.msra.mxu0 %v7479
    %8675 = vmatprep.subr.bf16.mxu0 %v7487
    %8676 = vmatpush1.bf16.msra.mxu0 %v7486
    %8677 = vmatprep.subr.bf16.mxu0 %v7494
    %8678 = vmatpush1.bf16.msra.mxu0 %v7493
    %8679 = vmatprep.subr.bf16.mxu0 %v7501
    %8680 = vmatpush1.bf16.msra.mxu0 %v7500
    %8681 = vmatprep.subr.bf16.mxu0 %v7508
    %8682 = vmatpush1.bf16.msra.mxu0 %v7507
    %8683 = vmatprep.subr.bf16.mxu0 %v7515
    %8684 = vmatpush1.bf16.msra.mxu0 %v7514
    %8685 = vmatprep.subr.bf16.mxu0 %v7522
    %8686 = vmatpush1.bf16.msra.mxu0 %v7521
    %8687 = vmatprep.subr.bf16.mxu0 %v7529
    %8688 = vmatpush1.bf16.msra.mxu0 %v7528
    %8689 = vmatprep.subr.bf16.mxu0 %v7536
    %8690 = vmatpush1.bf16.msra.mxu0 %v7535
    %8691 = vmatprep.subr.bf16.mxu0 %v7543
    %8692 = vmatpush1.bf16.msra.mxu0 %v7542
    %8693 = vmatprep.subr.bf16.mxu0 %v7550
    %8694 = vmatpush1.bf16.msra.mxu0 %v7549
    %8695 = vmatprep.subr.bf16.mxu0 %v7557
    %8696 = vmatpush1.bf16.msra.mxu0 %v7556
    %8697 = vmatprep.subr.bf16.mxu0 %v7564
    %8698 = vmatpush1.bf16.msra.mxu0 %v7563
    %8699 = vmatprep.mubr.bf16.mxu0 %v7801
    %8700 = vmatmul.mubr.bf16.gmra.mrb[0].mxu0 %v7800
    %v8701 = vpop.f32.mrb[0].mxu0
    %v8702 = vadd.f32 %v8661, %v8701
    %v8703 = vpop.f32.mrb[0].mxu0
    %v8704 = vadd.f32 %v8663, %v8703
    %v8705 = vpop.f32.mrb[0].mxu0
    %v8706 = vpop.f32.mrb[0].mxu0
    %8707 = vdwg.mxu0
    %8708 = vmatprep.subr.bf16.mxu0 %v7571
    %8709 = vmatpush1.bf16.msra.mxu0 %v7570
    %8710 = vmatprep.subr.bf16.mxu0 %v7578
    %8711 = vmatpush1.bf16.msra.mxu0 %v7577
    %8712 = vmatprep.subr.bf16.mxu0 %v7585
    %8713 = vmatpush1.bf16.msra.mxu0 %v7584
    %8714 = vmatprep.subr.bf16.mxu0 %v7592
    %8715 = vmatpush1.bf16.msra.mxu0 %v7591
    %8716 = vmatprep.subr.bf16.mxu0 %v7599
    %8717 = vmatpush1.bf16.msra.mxu0 %v7598
    %8718 = vmatprep.subr.bf16.mxu0 %v7606
    %8719 = vmatpush1.bf16.msra.mxu0 %v7605
    %8720 = vmatprep.subr.bf16.mxu0 %v7613
    %8721 = vmatpush1.bf16.msra.mxu0 %v7612
    %8722 = vmatprep.subr.bf16.mxu0 %v7620
    %8723 = vmatpush1.bf16.msra.mxu0 %v7619
    %8724 = vmatprep.subr.bf16.mxu0 %v7627
    %8725 = vmatpush1.bf16.msra.mxu0 %v7626
    %8726 = vmatprep.subr.bf16.mxu0 %v7634
    %8727 = vmatpush1.bf16.msra.mxu0 %v7633
    %8728 = vmatprep.subr.bf16.mxu0 %v7641
    %8729 = vmatpush1.bf16.msra.mxu0 %v7640
    %8730 = vmatprep.subr.bf16.mxu0 %v7648
    %8731 = vmatpush1.bf16.msra.mxu0 %v7647
    %8732 = vmatprep.subr.bf16.mxu0 %v7655
    %8733 = vmatpush1.bf16.msra.mxu0 %v7654
    %8734 = vmatprep.subr.bf16.mxu0 %v7662
    %8735 = vmatpush1.bf16.msra.mxu0 %v7661
    %8736 = vmatprep.subr.bf16.mxu0 %v7669
    %8737 = vmatpush1.bf16.msra.mxu0 %v7668
    %8738 = vmatprep.subr.bf16.mxu0 %v7676
    %8739 = vmatpush1.bf16.msra.mxu0 %v7675
    %8740 = vmatprep.mubr.bf16.mxu0 %v7803
    %8741 = vmatmul.mubr.bf16.gmra.mrb[0].mxu0 %v7802
    %v8742 = vpop.f32.mrb[0].mxu0
    %v8743 = vadd.f32 %v8702, %v8742
    %v8744 = vpop.f32.mrb[0].mxu0
    %v8745 = vadd.f32 %v8704, %v8744
    %v8746 = vpop.f32.mrb[0].mxu0
    %v8747 = vpop.f32.mrb[0].mxu0
    %8748 = vdwg.mxu0
    %8749 = vmatprep.subr.bf16.mxu0 %v7683
    %8750 = vmatpush1.bf16.msra.mxu0 %v7682
    %8751 = vmatprep.subr.bf16.mxu0 %v7690
    %8752 = vmatpush1.bf16.msra.mxu0 %v7689
    %8753 = vmatprep.subr.bf16.mxu0 %v7697
    %8754 = vmatpush1.bf16.msra.mxu0 %v7696
    %8755 = vmatprep.subr.bf16.mxu0 %v7704
    %8756 = vmatpush1.bf16.msra.mxu0 %v7703
    %8757 = vmatprep.subr.bf16.mxu0 %v7711
    %8758 = vmatpush1.bf16.msra.mxu0 %v7710
    %8759 = vmatprep.subr.bf16.mxu0 %v7718
    %8760 = vmatpush1.bf16.msra.mxu0 %v7717
    %8761 = vmatprep.subr.bf16.mxu0 %v7725
    %8762 = vmatpush1.bf16.msra.mxu0 %v7724
    %8763 = vmatprep.subr.bf16.mxu0 %v7732
    %8764 = vmatpush1.bf16.msra.mxu0 %v7731
    %8765 = vmatprep.subr.bf16.mxu0 %v7739
    %8766 = vmatpush1.bf16.msra.mxu0 %v7738
    %8767 = vmatprep.subr.bf16.mxu0 %v7746
    %8768 = vmatpush1.bf16.msra.mxu0 %v7745
    %8769 = vmatprep.subr.bf16.mxu0 %v7753
    %8770 = vmatpush1.bf16.msra.mxu0 %v7752
    %8771 = vmatprep.subr.bf16.mxu0 %v7760
    %8772 = vmatpush1.bf16.msra.mxu0 %v7759
    %8773 = vmatprep.subr.bf16.mxu0 %v7767
    %8774 = vmatpush1.bf16.msra.mxu0 %v7766
    %8775 = vmatprep.subr.bf16.mxu0 %v7774
    %8776 = vmatpush1.bf16.msra.mxu0 %v7773
    %8777 = vmatprep.subr.bf16.mxu0 %v7781
    %8778 = vmatpush1.bf16.msra.mxu0 %v7780
    %8779 = vmatprep.subr.bf16.mxu0 %v7788
    %8780 = vmatpush1.bf16.msra.mxu0 %v7787
    %8781 = vmatprep.mubr.bf16.mxu0 %v7805
    %8782 = vmatmul.mubr.bf16.gmra.mrb[0].mxu0 %v7804
    %v8783 = vpop.f32.mrb[0].mxu0
    %v8784 = vadd.f32 %v8743, %v8783
    %v8785 = vpop.f32.mrb[0].mxu0
    %v8786 = vadd.f32 %v8745, %v8785
    %v8787 = vpop.f32.mrb[0].mxu0
    %v8788 = vpop.f32.mrb[0].mxu0
    %8789 = vdwg.mxu0
    %8790 = vmatprep.subr.bf16.mxu0 0
    %8791 = vmatpush1.bf16.msra.mxu0 %v6900
    %8792 = vmatprep.subr.bf16.mxu0 0
    %8793 = vmatpush1.bf16.msra.mxu0 %v6907
    %8794 = vmatprep.subr.bf16.mxu0 0
    %8795 = vmatpush1.bf16.msra.mxu0 %v6914
    %8796 = vmatprep.subr.bf16.mxu0 0
    %8797 = vmatpush1.bf16.msra.mxu0 %v6921
    %8798 = vmatprep.subr.bf16.mxu0 0
    %8799 = vmatpush1.bf16.msra.mxu0 %v6928
    %8800 = vmatprep.subr.bf16.mxu0 0
    %8801 = vmatpush1.bf16.msra.mxu0 %v6935
    %8802 = vmatprep.subr.bf16.mxu0 0
    %8803 = vmatpush1.bf16.msra.mxu0 %v6942
    %8804 = vmatprep.subr.bf16.mxu0 0
    %8805 = vmatpush1.bf16.msra.mxu0 %v6949
    %8806 = vmatprep.subr.bf16.mxu0 0
    %8807 = vmatpush1.bf16.msra.mxu0 %v6956
    %8808 = vmatprep.subr.bf16.mxu0 0
    %8809 = vmatpush1.bf16.msra.mxu0 %v6963
    %8810 = vmatprep.subr.bf16.mxu0 0
    %8811 = vmatpush1.bf16.msra.mxu0 %v6970
    %8812 = vmatprep.subr.bf16.mxu0 0
    %8813 = vmatpush1.bf16.msra.mxu0 %v6977
    %8814 = vmatprep.subr.bf16.mxu0 0
    %8815 = vmatpush1.bf16.msra.mxu0 %v6984
    %8816 = vmatprep.subr.bf16.mxu0 0
    %8817 = vmatpush1.bf16.msra.mxu0 %v6991
    %8818 = vmatprep.subr.bf16.mxu0 0
    %8819 = vmatpush1.bf16.msra.mxu0 %v6998
    %8820 = vmatprep.subr.bf16.mxu0 0
    %8821 = vmatpush1.bf16.msra.mxu0 %v7005
    %8822 = vmatprep.mubr.bf16.mxu0 %v7791
    %8823 = vmatmul.mubr.bf16.gmra.mrb[0].mxu0 %v7790
    %v8824 = vpop.f32.mrb[0].mxu0
    %v8825 = vadd.f32 0.0, %v8824
    %v8826 = vpop.f32.mrb[0].mxu0
    %v8827 = vpop.f32.mrb[0].mxu0
    %v8828 = vpop.f32.mrb[0].mxu0
    %8829 = vdwg.mxu0
    %8830 = vmatprep.subr.bf16.mxu0 0
    %8831 = vmatpush1.bf16.msra.mxu0 %v7012
    %8832 = vmatprep.subr.bf16.mxu0 0
    %8833 = vmatpush1.bf16.msra.mxu0 %v7019
    %8834 = vmatprep.subr.bf16.mxu0 0
    %8835 = vmatpush1.bf16.msra.mxu0 %v7026
    %8836 = vmatprep.subr.bf16.mxu0 0
    %8837 = vmatpush1.bf16.msra.mxu0 %v7033
    %8838 = vmatprep.subr.bf16.mxu0 0
    %8839 = vmatpush1.bf16.msra.mxu0 %v7040
    %8840 = vmatprep.subr.bf16.mxu0 0
    %8841 = vmatpush1.bf16.msra.mxu0 %v7047
    %8842 = vmatprep.subr.bf16.mxu0 0
    %8843 = vmatpush1.bf16.msra.mxu0 %v7054
    %8844 = vmatprep.subr.bf16.mxu0 0
    %8845 = vmatpush1.bf16.msra.mxu0 %v7061
    %8846 = vmatprep.subr.bf16.mxu0 0
    %8847 = vmatpush1.bf16.msra.mxu0 %v7068
    %8848 = vmatprep.subr.bf16.mxu0 0
    %8849 = vmatpush1.bf16.msra.mxu0 %v7075
    %8850 = vmatprep.subr.bf16.mxu0 0
    %8851 = vmatpush1.bf16.msra.mxu0 %v7082
    %8852 = vmatprep.subr.bf16.mxu0 0
    %8853 = vmatpush1.bf16.msra.mxu0 %v7089
    %8854 = vmatprep.subr.bf16.mxu0 0
    %8855 = vmatpush1.bf16.msra.mxu0 %v7096
    %8856 = vmatprep.subr.bf16.mxu0 0
    %8857 = vmatpush1.bf16.msra.mxu0 %v7103
    %8858 = vmatprep.subr.bf16.mxu0 0
    %8859 = vmatpush1.bf16.msra.mxu0 %v7110
    %8860 = vmatprep.subr.bf16.mxu0 0
    %8861 = vmatpush1.bf16.msra.mxu0 %v7117
    %8862 = vmatprep.mubr.bf16.mxu0 %v7793
    %8863 = vmatmul.mubr.bf16.gmra.mrb[0].mxu0 %v7792
    %v8864 = vpop.f32.mrb[0].mxu0
    %v8865 = vadd.f32 %v8825, %v8864
    %v8866 = vpop.f32.mrb[0].mxu0
    %v8867 = vpop.f32.mrb[0].mxu0
    %v8868 = vpop.f32.mrb[0].mxu0
    %8869 = vdwg.mxu0
    %8870 = vmatprep.subr.bf16.mxu0 0
    %8871 = vmatpush1.bf16.msra.mxu0 %v7124
    %8872 = vmatprep.subr.bf16.mxu0 0
    %8873 = vmatpush1.bf16.msra.mxu0 %v7131
    %8874 = vmatprep.subr.bf16.mxu0 0
    %8875 = vmatpush1.bf16.msra.mxu0 %v7138
    %8876 = vmatprep.subr.bf16.mxu0 0
    %8877 = vmatpush1.bf16.msra.mxu0 %v7145
    %8878 = vmatprep.subr.bf16.mxu0 0
    %8879 = vmatpush1.bf16.msra.mxu0 %v7152
    %8880 = vmatprep.subr.bf16.mxu0 0
    %8881 = vmatpush1.bf16.msra.mxu0 %v7159
    %8882 = vmatprep.subr.bf16.mxu0 0
    %8883 = vmatpush1.bf16.msra.mxu0 %v7166
    %8884 = vmatprep.subr.bf16.mxu0 0
    %8885 = vmatpush1.bf16.msra.mxu0 %v7173
    %8886 = vmatprep.subr.bf16.mxu0 0
    %8887 = vmatpush1.bf16.msra.mxu0 %v7180
    %8888 = vmatprep.subr.bf16.mxu0 0
    %8889 = vmatpush1.bf16.msra.mxu0 %v7187
    %8890 = vmatprep.subr.bf16.mxu0 0
    %8891 = vmatpush1.bf16.msra.mxu0 %v7194
    %8892 = vmatprep.subr.bf16.mxu0 0
    %8893 = vmatpush1.bf16.msra.mxu0 %v7201
    %8894 = vmatprep.subr.bf16.mxu0 0
    %8895 = vmatpush1.bf16.msra.mxu0 %v7208
    %8896 = vmatprep.subr.bf16.mxu0 0
    %8897 = vmatpush1.bf16.msra.mxu0 %v7215
    %8898 = vmatprep.subr.bf16.mxu0 0
    %8899 = vmatpush1.bf16.msra.mxu0 %v7222
    %8900 = vmatprep.subr.bf16.mxu0 0
    %8901 = vmatpush1.bf16.msra.mxu0 %v7229
    %8902 = vmatprep.mubr.bf16.mxu0 %v7795
    %8903 = vmatmul.mubr.bf16.gmra.mrb[0].mxu0 %v7794
    %v8904 = vpop.f32.mrb[0].mxu0
    %v8905 = vadd.f32 %v8865, %v8904
    %v8906 = vpop.f32.mrb[0].mxu0
    %v8907 = vpop.f32.mrb[0].mxu0
    %v8908 = vpop.f32.mrb[0].mxu0
    %8909 = vdwg.mxu0
    %8910 = vmatprep.subr.bf16.mxu0 0
    %8911 = vmatpush1.bf16.msra.mxu0 %v7236
    %8912 = vmatprep.subr.bf16.mxu0 0
    %8913 = vmatpush1.bf16.msra.mxu0 %v7243
    %8914 = vmatprep.subr.bf16.mxu0 0
    %8915 = vmatpush1.bf16.msra.mxu0 %v7250
    %8916 = vmatprep.subr.bf16.mxu0 0
    %8917 = vmatpush1.bf16.msra.mxu0 %v7257
    %8918 = vmatprep.subr.bf16.mxu0 0
    %8919 = vmatpush1.bf16.msra.mxu0 %v7264
    %8920 = vmatprep.subr.bf16.mxu0 0
    %8921 = vmatpush1.bf16.msra.mxu0 %v7271
    %8922 = vmatprep.subr.bf16.mxu0 0
    %8923 = vmatpush1.bf16.msra.mxu0 %v7278
    %8924 = vmatprep.subr.bf16.mxu0 0
    %8925 = vmatpush1.bf16.msra.mxu0 %v7285
    %8926 = vmatprep.subr.bf16.mxu0 0
    %8927 = vmatpush1.bf16.msra.mxu0 %v7292
    %8928 = vmatprep.subr.bf16.mxu0 0
    %8929 = vmatpush1.bf16.msra.mxu0 %v7299
    %8930 = vmatprep.subr.bf16.mxu0 0
    %8931 = vmatpush1.bf16.msra.mxu0 %v7306
    %8932 = vmatprep.subr.bf16.mxu0 0
    %8933 = vmatpush1.bf16.msra.mxu0 %v7313
    %8934 = vmatprep.subr.bf16.mxu0 0
    %8935 = vmatpush1.bf16.msra.mxu0 %v7320
    %8936 = vmatprep.subr.bf16.mxu0 0
    %8937 = vmatpush1.bf16.msra.mxu0 %v7327
    %8938 = vmatprep.subr.bf16.mxu0 0
    %8939 = vmatpush1.bf16.msra.mxu0 %v7334
    %8940 = vmatprep.subr.bf16.mxu0 0
    %8941 = vmatpush1.bf16.msra.mxu0 %v7341
    %8942 = vmatprep.mubr.bf16.mxu0 %v7797
    %8943 = vmatmul.mubr.bf16.gmra.mrb[0].mxu0 %v7796
    %v8944 = vpop.f32.mrb[0].mxu0
    %v8945 = vadd.f32 %v8905, %v8944
    %v8946 = vpop.f32.mrb[0].mxu0
    %v8947 = vpop.f32.mrb[0].mxu0
    %v8948 = vpop.f32.mrb[0].mxu0
    %8949 = vdwg.mxu0
    %8950 = vmatprep.subr.bf16.mxu0 0
    %8951 = vmatpush1.bf16.msra.mxu0 %v7348
    %8952 = vmatprep.subr.bf16.mxu0 0
    %8953 = vmatpush1.bf16.msra.mxu0 %v7355
    %8954 = vmatprep.subr.bf16.mxu0 0
    %8955 = vmatpush1.bf16.msra.mxu0 %v7362
    %8956 = vmatprep.subr.bf16.mxu0 0
    %8957 = vmatpush1.bf16.msra.mxu0 %v7369
    %8958 = vmatprep.subr.bf16.mxu0 0
    %8959 = vmatpush1.bf16.msra.mxu0 %v7376
    %8960 = vmatprep.subr.bf16.mxu0 0
    %8961 = vmatpush1.bf16.msra.mxu0 %v7383
    %8962 = vmatprep.subr.bf16.mxu0 0
    %8963 = vmatpush1.bf16.msra.mxu0 %v7390
    %8964 = vmatprep.subr.bf16.mxu0 0
    %8965 = vmatpush1.bf16.msra.mxu0 %v7397
    %8966 = vmatprep.subr.bf16.mxu0 0
    %8967 = vmatpush1.bf16.msra.mxu0 %v7404
    %8968 = vmatprep.subr.bf16.mxu0 0
    %8969 = vmatpush1.bf16.msra.mxu0 %v7411
    %8970 = vmatprep.subr.bf16.mxu0 0
    %8971 = vmatpush1.bf16.msra.mxu0 %v7418
    %8972 = vmatprep.subr.bf16.mxu0 0
    %8973 = vmatpush1.bf16.msra.mxu0 %v7425
    %8974 = vmatprep.subr.bf16.mxu0 0
    %8975 = vmatpush1.bf16.msra.mxu0 %v7432
    %8976 = vmatprep.subr.bf16.mxu0 0
    %8977 = vmatpush1.bf16.msra.mxu0 %v7439
    %8978 = vmatprep.subr.bf16.mxu0 0
    %8979 = vmatpush1.bf16.msra.mxu0 %v7446
    %8980 = vmatprep.subr.bf16.mxu0 0
    %8981 = vmatpush1.bf16.msra.mxu0 %v7453
    %8982 = vmatprep.mubr.bf16.mxu0 %v7799
    %8983 = vmatmul.mubr.bf16.gmra.mrb[0].mxu0 %v7798
    %v8984 = vpop.f32.mrb[0].mxu0
    %v8985 = vadd.f32 %v8945, %v8984
    %v8986 = vpop.f32.mrb[0].mxu0
    %v8987 = vpop.f32.mrb[0].mxu0
    %v8988 = vpop.f32.mrb[0].mxu0
    %8989 = vdwg.mxu0
    %8990 = vmatprep.subr.bf16.mxu0 0
    %8991 = vmatpush1.bf16.msra.mxu0 %v7460
    %8992 = vmatprep.subr.bf16.mxu0 0
    %8993 = vmatpush1.bf16.msra.mxu0 %v7467
    %8994 = vmatprep.subr.bf16.mxu0 0
    %8995 = vmatpush1.bf16.msra.mxu0 %v7474
    %8996 = vmatprep.subr.bf16.mxu0 0
    %8997 = vmatpush1.bf16.msra.mxu0 %v7481
    %8998 = vmatprep.subr.bf16.mxu0 0
    %8999 = vmatpush1.bf16.msra.mxu0 %v7488
    %9000 = vmatprep.subr.bf16.mxu0 0
    %9001 = vmatpush1.bf16.msra.mxu0 %v7495
    %9002 = vmatprep.subr.bf16.mxu0 0
    %9003 = vmatpush1.bf16.msra.mxu0 %v7502
    %9004 = vmatprep.subr.bf16.mxu0 0
    %9005 = vmatpush1.bf16.msra.mxu0 %v7509
    %9006 = vmatprep.subr.bf16.mxu0 0
    %9007 = vmatpush1.bf16.msra.mxu0 %v7516
    %9008 = vmatprep.subr.bf16.mxu0 0
    %9009 = vmatpush1.bf16.msra.mxu0 %v7523
    %9010 = vmatprep.subr.bf16.mxu0 0
    %9011 = vmatpush1.bf16.msra.mxu0 %v7530
    %9012 = vmatprep.subr.bf16.mxu0 0
    %9013 = vmatpush1.bf16.msra.mxu0 %v7537
    %9014 = vmatprep.subr.bf16.mxu0 0
    %9015 = vmatpush1.bf16.msra.mxu0 %v7544
    %9016 = vmatprep.subr.bf16.mxu0 0
    %9017 = vmatpush1.bf16.msra.mxu0 %v7551
    %9018 = vmatprep.subr.bf16.mxu0 0
    %9019 = vmatpush1.bf16.msra.mxu0 %v7558
    %9020 = vmatprep.subr.bf16.mxu0 0
    %9021 = vmatpush1.bf16.msra.mxu0 %v7565
    %9022 = vmatprep.mubr.bf16.mxu0 %v7801
    %9023 = vmatmul.mubr.bf16.gmra.mrb[0].mxu0 %v7800
    %v9024 = vpop.f32.mrb[0].mxu0
    %v9025 = vadd.f32 %v8985, %v9024
    %v9026 = vpop.f32.mrb[0].mxu0
    %v9027 = vpop.f32.mrb[0].mxu0
    %v9028 = vpop.f32.mrb[0].mxu0
    %9029 = vdwg.mxu0
    %9030 = vmatprep.subr.bf16.mxu0 0
    %9031 = vmatpush1.bf16.msra.mxu0 %v7572
    %9032 = vmatprep.subr.bf16.mxu0 0
    %9033 = vmatpush1.bf16.msra.mxu0 %v7579
    %9034 = vmatprep.subr.bf16.mxu0 0
    %9035 = vmatpush1.bf16.msra.mxu0 %v7586
    %9036 = vmatprep.subr.bf16.mxu0 0
    %9037 = vmatpush1.bf16.msra.mxu0 %v7593
    %9038 = vmatprep.subr.bf16.mxu0 0
    %9039 = vmatpush1.bf16.msra.mxu0 %v7600
    %9040 = vmatprep.subr.bf16.mxu0 0
    %9041 = vmatpush1.bf16.msra.mxu0 %v7607
    %9042 = vmatprep.subr.bf16.mxu0 0
    %9043 = vmatpush1.bf16.msra.mxu0 %v7614
    %9044 = vmatprep.subr.bf16.mxu0 0
    %9045 = vmatpush1.bf16.msra.mxu0 %v7621
    %9046 = vmatprep.subr.bf16.mxu0 0
    %9047 = vmatpush1.bf16.msra.mxu0 %v7628
    %9048 = vmatprep.subr.bf16.mxu0 0
    %9049 = vmatpush1.bf16.msra.mxu0 %v7635
    %9050 = vmatprep.subr.bf16.mxu0 0
    %9051 = vmatpush1.bf16.msra.mxu0 %v7642
    %9052 = vmatprep.subr.bf16.mxu0 0
    %9053 = vmatpush1.bf16.msra.mxu0 %v7649
    %9054 = vmatprep.subr.bf16.mxu0 0
    %9055 = vmatpush1.bf16.msra.mxu0 %v7656
    %9056 = vmatprep.subr.bf16.mxu0 0
    %9057 = vmatpush1.bf16.msra.mxu0 %v7663
    %9058 = vmatprep.subr.bf16.mxu0 0
    %9059 = vmatpush1.bf16.msra.mxu0 %v7670
    %9060 = vmatprep.subr.bf16.mxu0 0
    %9061 = vmatpush1.bf16.msra.mxu0 %v7677
    %9062 = vmatprep.mubr.bf16.mxu0 %v7803
    %9063 = vmatmul.mubr.bf16.gmra.mrb[0].mxu0 %v7802
    %v9064 = vpop.f32.mrb[0].mxu0
    %v9065 = vadd.f32 %v9025, %v9064
    %v9066 = vpop.f32.mrb[0].mxu0
    %v9067 = vpop.f32.mrb[0].mxu0
    %v9068 = vpop.f32.mrb[0].mxu0
    %9069 = vdwg.mxu0
    %9070 = vmatprep.subr.bf16.mxu0 0
    %9071 = vmatpush1.bf16.msra.mxu0 %v7684
    %9072 = vmatprep.subr.bf16.mxu0 0
    %9073 = vmatpush1.bf16.msra.mxu0 %v7691
    %9074 = vmatprep.subr.bf16.mxu0 0
    %9075 = vmatpush1.bf16.msra.mxu0 %v7698
    %9076 = vmatprep.subr.bf16.mxu0 0
    %9077 = vmatpush1.bf16.msra.mxu0 %v7705
    %9078 = vmatprep.subr.bf16.mxu0 0
    %9079 = vmatpush1.bf16.msra.mxu0 %v7712
    %9080 = vmatprep.subr.bf16.mxu0 0
    %9081 = vmatpush1.bf16.msra.mxu0 %v7719
    %9082 = vmatprep.subr.bf16.mxu0 0
    %9083 = vmatpush1.bf16.msra.mxu0 %v7726
    %9084 = vmatprep.subr.bf16.mxu0 0
    %9085 = vmatpush1.bf16.msra.mxu0 %v7733
    %9086 = vmatprep.subr.bf16.mxu0 0
    %9087 = vmatpush1.bf16.msra.mxu0 %v7740
    %9088 = vmatprep.subr.bf16.mxu0 0
    %9089 = vmatpush1.bf16.msra.mxu0 %v7747
    %9090 = vmatprep.subr.bf16.mxu0 0
    %9091 = vmatpush1.bf16.msra.mxu0 %v7754
    %9092 = vmatprep.subr.bf16.mxu0 0
    %9093 = vmatpush1.bf16.msra.mxu0 %v7761
    %9094 = vmatprep.subr.bf16.mxu0 0
    %9095 = vmatpush1.bf16.msra.mxu0 %v7768
    %9096 = vmatprep.subr.bf16.mxu0 0
    %9097 = vmatpush1.bf16.msra.mxu0 %v7775
    %9098 = vmatprep.subr.bf16.mxu0 0
    %9099 = vmatpush1.bf16.msra.mxu0 %v7782
    %9100 = vmatprep.subr.bf16.mxu0 0
    %9101 = vmatpush1.bf16.msra.mxu0 %v7789
    %9102 = vmatprep.mubr.bf16.mxu0 %v7805
    %9103 = vmatmul.mubr.bf16.gmra.mrb[0].mxu0 %v7804
    %v9104 = vpop.f32.mrb[0].mxu0
    %v9105 = vadd.f32 %v9065, %v9104
    %v9106 = vpop.f32.mrb[0].mxu0
    %v9107 = vpop.f32.mrb[0].mxu0
    %v9108 = vpop.f32.mrb[0].mxu0
    %9109 = vdwg.mxu0
    %v9110 = vld [vmem:[%s12] sm:$0x7f]
    %v9112 = vlaneseq
    %v9113 = vshrl.u32 %v9112, 7
    %v9114 = vsub.s32 0, %v9113
    %v9115 = vrot.slane %v9110, %v9114
    %v9116 = vlaneseq
    %v9117 = vshrl.u32 %v9116, 7
    %v9118 = vsub.s32 1, %v9117
    %v9119 = vrot.slane %v9110, %v9118
    %v9120 = vlaneseq
    %v9121 = vshrl.u32 %v9120, 7
    %v9122 = vsub.s32 2, %v9121
    %v9123 = vrot.slane %v9110, %v9122
    %v9124 = vlaneseq
    %v9125 = vshrl.u32 %v9124, 7
    %v9126 = vsub.s32 3, %v9125
    %v9127 = vrot.slane %v9110, %v9126
    %v9128 = vlaneseq
    %v9129 = vshrl.u32 %v9128, 7
    %v9130 = vsub.s32 4, %v9129
    %v9131 = vrot.slane %v9110, %v9130
    %v9132 = vlaneseq
    %v9133 = vshrl.u32 %v9132, 7
    %v9134 = vsub.s32 5, %v9133
    %v9135 = vrot.slane %v9110, %v9134
    %v9136 = vlaneseq
    %v9137 = vshrl.u32 %v9136, 7
    %v9138 = vsub.s32 6, %v9137
    %v9139 = vrot.slane %v9110, %v9138
    %v9147 = vmul.f32 %v8128, %v9115
    %v9148 = vmul.f32 %v8130, %v9119
    %v9149 = vmul.f32 %v8456, %v9123
    %v9150 = vmul.f32 %v8458, %v9127
    %v9151 = vmul.f32 %v8784, %v9131
    %v9152 = vmul.f32 %v8786, %v9135
    %v9153 = vmul.f32 %v9105, %v9139
    %v9154 = vld [vmem:[%s13] sm:$0x7f]
    %v9156 = vlaneseq
    %v9157 = vshrl.u32 %v9156, 7
    %v9158 = vsub.s32 0, %v9157
    %v9159 = vrot.slane %v9154, %v9158
    %v9160 = vlaneseq
    %v9161 = vshrl.u32 %v9160, 7
    %v9162 = vsub.s32 1, %v9161
    %v9163 = vrot.slane %v9154, %v9162
    %v9164 = vlaneseq
    %v9165 = vshrl.u32 %v9164, 7
    %v9166 = vsub.s32 2, %v9165
    %v9167 = vrot.slane %v9154, %v9166
    %v9168 = vlaneseq
    %v9169 = vshrl.u32 %v9168, 7
    %v9170 = vsub.s32 3, %v9169
    %v9171 = vrot.slane %v9154, %v9170
    %v9172 = vlaneseq
    %v9173 = vshrl.u32 %v9172, 7
    %v9174 = vsub.s32 4, %v9173
    %v9175 = vrot.slane %v9154, %v9174
    %v9176 = vlaneseq
    %v9177 = vshrl.u32 %v9176, 7
    %v9178 = vsub.s32 5, %v9177
    %v9179 = vrot.slane %v9154, %v9178
    %v9180 = vlaneseq
    %v9181 = vshrl.u32 %v9180, 7
    %v9182 = vsub.s32 6, %v9181
    %v9183 = vrot.slane %v9154, %v9182
    %v9191 = vadd.f32 %v9147, %v9159
    %v9192 = vadd.f32 %v9148, %v9163
    %v9193 = vadd.f32 %v9149, %v9167
    %v9194 = vadd.f32 %v9150, %v9171
    %v9195 = vadd.f32 %v9151, %v9175
    %v9196 = vadd.f32 %v9152, %v9179
    %v9197 = vadd.f32 %v9153, %v9183
    %9198 = vst [vmem:[%s14] sm:$0xff] %v9191
    %9199 = vst [vmem:[%s14 + $0x8] sm:$0xff] %v9192
    %9200 = vst [vmem:[%s14 + $0x10] sm:$0xff] %v9193
    %9201 = vst [vmem:[%s14 + $0x18] sm:$0xff] %v9194
    %9202 = vst [vmem:[%s14 + $0x20] sm:$0xff] %v9195
    %9203 = vst [vmem:[%s14 + $0x28] sm:$0xff] %v9196
    %9204 = vst.msk [vmem:[%s14 + $0x30] sm:$0xff] %vm93, %v9197
    // Predicated region
    $region66: #{generator_w6_forward.1} parent=1 // pred_check
      _
    $region67: #{generator_w6_forward.1} parent=1 // pred_check_branch
      %9206 = sbr.rel (0) target = $region69
    $region68: #{generator_w6_forward.1} parent=1 // pred_region
      _
    $region69: #{generator_w6_forward.1} parent=1 // pred_fallthru
      _
    // Predicated region
    $region70: #{generator_w6_forward.1} parent=1 // pred_check
      _
    $region71: #{generator_w6_forward.1} parent=1 // pred_check_branch
      %9208 = sbr.rel (0) target = $region73
    $region72: #{generator_w6_forward.1} parent=1 // pred_region
      _
    $region73: #{generator_w6_forward.1} parent=1 // pred_fallthru
      _
    %9209 = vsyncpa [#allocation3], 1
    %9210 = vsyncpa [#allocation5], 1

</llo_original>
